<compile_context>
chip_gen: v7x
topology: tpu7x:2x2x1
jax: 0.10.0
libtpu: 0.0.40
codegen_flags: <defaults>
</compile_context>

<pallas_src>
import functools
import numpy as np
import jax
import jax.numpy as jnp
from jax.experimental import pallas as pl
from jax.experimental.pallas import tpu as pltpu


def _round_up(v, m):
    return (v + m - 1) // m * m


# --------------------------------------------------------------------------
# Pallas kernel 1: tiled matmul + bias, f32 VMEM accumulator (fc_in GEMM).
# --------------------------------------------------------------------------
def _matmul_bias_kernel(x_ref, w_ref, b_ref, o_ref, acc_ref):
    @pl.when(pl.program_id(2) == 0)
    def _():
        acc_ref[...] = jnp.zeros_like(acc_ref)

    acc_ref[...] += jnp.dot(x_ref[...], w_ref[...],
                            preferred_element_type=jnp.float32)

    @pl.when(pl.program_id(2) == pl.num_programs(2) - 1)
    def _():
        o_ref[...] = (acc_ref[...] + b_ref[...]).astype(o_ref.dtype)


def matmul_bias(x, w, b):
    """x: [M,K], w: [K,N], b: [N]  ->  [M,N] f32 (tiled, pipelined)."""
    M, K = x.shape
    N = w.shape[-1]
    tm = min(256, _round_up(M, 8))
    tn = min(128, _round_up(N, 128))
    tk = min(512, _round_up(K, 128))
    Mp, Kp, Np = _round_up(M, tm), _round_up(K, tk), _round_up(N, tn)
    xp = jnp.pad(x, ((0, Mp - M), (0, Kp - K))) if (Mp, Kp) != (M, K) else x
    wp = jnp.pad(w, ((0, Kp - K), (0, Np - N))) if (Kp, Np) != (K, N) else w
    bp = jnp.pad(b, ((0, Np - N),)) if Np != N else b

    out = pl.pallas_call(
        _matmul_bias_kernel,
        out_shape=jax.ShapeDtypeStruct((Mp, Np), jnp.float32),
        grid_spec=pltpu.PrefetchScalarGridSpec(
            num_scalar_prefetch=0,
            grid=(Mp // tm, Np // tn, Kp // tk),
            in_specs=[
                pl.BlockSpec((tm, tk), lambda i, j, k: (i, k)),
                pl.BlockSpec((tk, tn), lambda i, j, k: (k, j)),
                pl.BlockSpec((1, tn), lambda i, j, k: (0, j)),
            ],
            out_specs=pl.BlockSpec((tm, tn), lambda i, j, k: (i, j)),
            scratch_shapes=[pltpu.VMEM((tm, tn), jnp.float32)],
        ),
        compiler_params=pltpu.CompilerParams(
            dimension_semantics=("parallel", "parallel", "arbitrary"),
            vmem_limit_bytes=32 * 1024 * 1024,
        ),
    )(xp, wp, bp.reshape(1, Np))
    return out[:M, :N]


# --------------------------------------------------------------------------
# Pallas kernel 2: 3x3 'same' conv + ReLU, im2col fused in-kernel.
# The padded image is a 2-D [P, cinp] slab; each of the nine taps is a
# statically-offset contiguous row slice (length H*(W+2)) dotted with the
# tap's [cinp, cout] weight.  Output rows with col >= W are stale "wrap"
# rows and are dropped by the wrapper.
# --------------------------------------------------------------------------
def _conv3x3_relu_kernel(x_ref, w_ref, b_ref, o_ref, *, rows, w2, cinp, cout):
    acc = jnp.zeros((rows, cout), jnp.float32)
    for dy in range(3):
        for dx in range(3):
            off = dy * w2 + dx                     # static flat offset
            k = dy * 3 + dx
            patch = x_ref[off:off + rows, :]       # (rows, cinp)
            wk = w_ref[k * cinp:(k + 1) * cinp, :]  # (cinp, cout)
            acc = acc + jnp.dot(patch, wk, preferred_element_type=jnp.float32)
    o_ref[...] = jnp.maximum(acc + b_ref[...], 0.0)


def conv3x3_relu(x_nhwc, w, b):
    """x_nhwc: [N,H,W,Cin], w: [3,3,Cin,Cout] (HWIO), b: [Cout] -> [N,H,W,Cout]."""
    n, h, wd, cin = x_nhwc.shape
    cout = w.shape[-1]
    cinp = _round_up(cin, 8)            # sublane-aligned tap slices
    w2 = wd + 2
    rows = h * w2                       # output rows incl. 2 wrap cols per row
    P = (h + 3) * w2                    # +1 extra zero row: all tap slices in-bounds

    xp = jnp.pad(x_nhwc, ((0, 0), (1, 2), (1, 1), (0, cinp - cin)))
    xflat = xp.reshape(n, P, cinp)                              # free reshape
    wp = jnp.pad(w, ((0, 0), (0, 0), (0, cinp - cin), (0, 0))).reshape(9 * cinp, cout)

    kern = functools.partial(_conv3x3_relu_kernel,
                             rows=rows, w2=w2, cinp=cinp, cout=cout)
    out = pl.pallas_call(
        kern,
        out_shape=jax.ShapeDtypeStruct((n, rows, cout), jnp.float32),
        grid_spec=pltpu.PrefetchScalarGridSpec(
            num_scalar_prefetch=0,
            grid=(n,),
            in_specs=[
                pl.BlockSpec((None, P, cinp), lambda i: (i, 0, 0)),
                pl.BlockSpec((9 * cinp, cout), lambda i: (0, 0)),
                pl.BlockSpec((1, cout), lambda i: (0, 0)),
            ],
            out_specs=pl.BlockSpec((None, rows, cout), lambda i: (i, 0, 0)),
        ),
        compiler_params=pltpu.CompilerParams(
            dimension_semantics=("parallel",),
            vmem_limit_bytes=32 * 1024 * 1024,
        ),
    )(xflat, wp, b.reshape(1, cout))
    # drop the two stale wrap columns per output row
    return out.reshape(n, h, w2, cout)[:, :, :wd, :]


# --------------------------------------------------------------------------
# Pallas kernel 3: recurrent LIF scan, one pallas_call for all T timesteps.
# State/weights padded lane-dense (HP, OP multiples of 128; batch to 8).
# Betas are pre-clipped in prepare_params; broadcasts & weight loads hoisted.
# --------------------------------------------------------------------------
def _lif_scan_kernel(cur_ref,
                     wh_ref, bh_ref, wh2_ref, bh2_ref, wo_ref, bo_ref,
                     beta1_ref, thr1_ref, beta2_ref, thr2_ref,
                     beta4_ref, thr4_ref, beta3_ref,
                     o_ref, *, T, Bp, HP, OP):
    f32 = jnp.float32
    wh, bh = wh_ref[...], bh_ref[...]
    wh2, bh2 = wh2_ref[...], bh2_ref[...]
    wo, bo = wo_ref[...], bo_ref[...]
    beta1 = jnp.broadcast_to(beta1_ref[...], (Bp, HP))
    thr1 = jnp.broadcast_to(thr1_ref[...], (Bp, HP))
    beta2 = jnp.broadcast_to(beta2_ref[...], (Bp, HP))
    thr2 = jnp.broadcast_to(thr2_ref[...], (Bp, HP))
    beta4 = jnp.broadcast_to(beta4_ref[...], (Bp, HP))
    thr4 = jnp.broadcast_to(thr4_ref[...], (Bp, HP))
    beta3 = jnp.broadcast_to(beta3_ref[...], (Bp, OP))

    m1 = jnp.zeros((Bp, HP), f32)
    m2 = jnp.zeros((Bp, HP), f32)
    m4 = jnp.zeros((Bp, HP), f32)
    m3 = jnp.zeros((Bp, OP), f32)

    # Static unroll: T is compile-time; zero per-step grid/DMA overhead.
    # TODO(synk): for very large T, switch to a Tb-blocked grid with state carry.
    for t in range(T):
        cur_t = cur_ref[:, t, :]                               # (Bp, HP)
        # lif_in (subtract reset: reset from mem_prev, spike from mem_new)
        reset1 = (m1 > thr1).astype(f32)
        m1 = beta1 * m1 + cur_t - reset1 * thr1
        spk1 = (m1 > thr1).astype(f32)
        # fc_hidden + lif_hidden
        cur_h = jnp.dot(spk1, wh, preferred_element_type=f32) + bh
        reset2 = (m2 > thr2).astype(f32)
        m2 = beta2 * m2 + cur_h - reset2 * thr2
        spk2 = (m2 > thr2).astype(f32)
        # fc_hidden2 + lif_hidden2
        cur_h2 = jnp.dot(spk2, wh2, preferred_element_type=f32) + bh2
        reset4 = (m4 > thr4).astype(f32)
        m4 = beta4 * m4 + cur_h2 - reset4 * thr4
        spk4 = (m4 > thr4).astype(f32)
        # fc_out + li_out (reset_mechanism='none', default threshold 1.0)
        cur_o = jnp.dot(spk4, wo, preferred_element_type=f32) + bo
        m3 = beta3 * m3 + cur_o
        spk_o = (m3 > 1.0).astype(f32)
        o_ref[:, t, :] = spk_o          # lane-dense VMEM store; one HBM DMA at end


def lif_scan(cur_bth, pp, *, T, Bp, HP, OP):
    kern = functools.partial(_lif_scan_kernel, T=T, Bp=Bp, HP=HP, OP=OP)
    return pl.pallas_call(
        kern,
        out_shape=jax.ShapeDtypeStruct((Bp, T, OP), jnp.float32),
    )(
        cur_bth,
        pp["fc_hidden_w"], pp["fc_hidden_b"],
        pp["fc_hidden2_w"], pp["fc_hidden2_b"],
        pp["fc_out_w"], pp["fc_out_b"],
        pp["beta_in"], pp["thr_in"],
        pp["beta_hidden"], pp["thr_hidden"],
        pp["beta_hidden2"], pp["thr_hidden2"],
        pp["beta_out"],
    )


# --------------------------------------------------------------------------
# Module glue: parameters, one-time padding/permutation, temporal embedding.
# --------------------------------------------------------------------------
def create_temporal_embedding(length):
    center = length // 2
    sigma = length / 10
    positions = np.arange(length)
    emb = np.exp(-0.5 * ((positions - center) / sigma) ** 2)
    if length > 1 and emb.max() > emb.min():
        emb = (emb - emb.min()) / (emb.max() - emb.min())
    else:
        emb = np.ones_like(emb)     # guard T == 1 divide-by-zero
    return jnp.asarray(emb, dtype=jnp.float32).reshape(1, length, 1, 1, 1)


def init_params(key, hidden, output_size, H, W):
    """PyTorch-equivalent parameter init (fc_in_w rows in torch's CHW order)."""
    ks = jax.random.split(key, 13)
    uni = lambda k, shape, s: jax.random.uniform(k, shape, jnp.float32, -s, s)
    rnd = lambda k, shape: jax.random.uniform(k, shape, jnp.float32)
    d_in = 32 * H * W
    p = {
        "conv1_w": uni(ks[0], (3, 3, 3, 16), 1.0 / np.sqrt(3 * 9)),
        "conv1_b": uni(ks[1], (16,), 1.0 / np.sqrt(3 * 9)),
        "conv2_w": uni(ks[2], (3, 3, 16, 32), 1.0 / np.sqrt(16 * 9)),
        "conv2_b": uni(ks[3], (32,), 1.0 / np.sqrt(16 * 9)),
        "fc_in_w": uni(ks[4], (d_in, hidden), 1.0 / np.sqrt(d_in)),   # CHW rows
        "fc_in_b": uni(ks[5], (hidden,), 1.0 / np.sqrt(d_in)),
        "fc_hidden_w": uni(ks[6], (hidden, hidden), 1.0 / np.sqrt(hidden)),
        "fc_hidden_b": uni(ks[7], (hidden,), 1.0 / np.sqrt(hidden)),
        "fc_hidden2_w": uni(ks[8], (hidden, hidden), 1.0 / np.sqrt(hidden)),
        "fc_hidden2_b": uni(ks[9], (hidden,), 1.0 / np.sqrt(hidden)),
        "fc_out_w": uni(ks[10], (hidden, output_size), 1.0 / np.sqrt(hidden)),
        "fc_out_b": uni(ks[11], (output_size,), 1.0 / np.sqrt(hidden)),
    }
    kb = jax.random.split(ks[12], 7)
    p["beta_in"] = rnd(kb[0], (hidden,))
    p["thr_in"] = rnd(kb[1], (hidden,))
    p["beta_hidden"] = rnd(kb[2], (hidden,))
    p["thr_hidden"] = rnd(kb[3], (hidden,))
    p["beta_hidden2"] = rnd(kb[4], (hidden,))
    p["thr_hidden2"] = rnd(kb[5], (hidden,))
    p["beta_out"] = rnd(kb[6], (output_size,))
    return p


def prepare_params(p, *, hidden, output_size, H, W):
    """One-time weight permutation, lane padding and beta clipping (outside the
    forward).  Padded lanes get zero weight/bias/beta and zero threshold, so
    they remain exactly zero through the whole network."""
    HP = _round_up(hidden, 128)
    OP = _round_up(output_size, 128)
    C2 = 32
    # Static CHW -> HWC row permutation of fc_in_w: replaces the runtime
    # NHWC->NCHW transpose before flattening.
    hh, ww, cc = np.meshgrid(np.arange(H), np.arange(W), np.arange(C2),
                             indexing="ij")
    old_rows = (cc * H * W + hh * W + ww).reshape(-1)
    fc_in_w = jnp.asarray(p["fc_in_w"])[old_rows]            # (H*W*32, hidden)

    def padc(a, n):                                          # pad last dim to n
        return jnp.pad(a, [(0, 0)] * (a.ndim - 1) + [(0, n - a.shape[-1])])

    dh, do = HP - hidden, OP - output_size
    pp = {
        "conv1_w": p["conv1_w"], "conv1_b": p["conv1_b"],
        "conv2_w": p["conv2_w"], "conv2_b": p["conv2_b"],
        "fc_in_w": padc(fc_in_w, HP),
        "fc_in_b": padc(p["fc_in_b"], HP),
        "fc_hidden_w": jnp.pad(p["fc_hidden_w"], ((0, dh), (0, dh))),
        "fc_hidden_b": padc(p["fc_hidden_b"], HP).reshape(1, HP),
        "fc_hidden2_w": jnp.pad(p["fc_hidden2_w"], ((0, dh), (0, dh))),
        "fc_hidden2_b": padc(p["fc_hidden2_b"], HP).reshape(1, HP),
        "fc_out_w": jnp.pad(p["fc_out_w"], ((0, dh), (0, do))),
        "fc_out_b": padc(p["fc_out_b"], OP).reshape(1, OP),
        # clip betas once here (hoisted out of the per-timestep kernel body)
        "beta_in": padc(jnp.clip(p["beta_in"], 0.0, 1.0), HP).reshape(1, HP),
        "thr_in": padc(p["thr_in"], HP).reshape(1, HP),
        "beta_hidden": padc(jnp.clip(p["beta_hidden"], 0.0, 1.0), HP).reshape(1, HP),
        "thr_hidden": padc(p["thr_hidden"], HP).reshape(1, HP),
        "beta_hidden2": padc(jnp.clip(p["beta_hidden2"], 0.0, 1.0), HP).reshape(1, HP),
        "thr_hidden2": padc(p["thr_hidden2"], HP).reshape(1, HP),
        "beta_out": padc(jnp.clip(p["beta_out"], 0.0, 1.0), OP).reshape(1, OP),
    }
    return pp, HP, OP


def tonic_ssn_forward(x, pp, *, hidden, output_size, HP, OP):
    """x: [B, T, 3, H, W] float32  ->  spk_out_rec: [B, T, output_size]."""
    B, T, C, H, W = x.shape
    x = x * create_temporal_embedding(T)                 # apply_temporal_embedding

    # Per-timestep conv stack: fold (B, T) together (weights are shared).
    x_nhwc = jnp.transpose(x.reshape(B * T, C, H, W), (0, 2, 3, 1))  # NCHW->NHWC
    h1 = conv3x3_relu(x_nhwc, pp["conv1_w"], pp["conv1_b"])          # [BT,H,W,16]
    h2 = conv3x3_relu(h1, pp["conv2_w"], pp["conv2_b"])              # [BT,H,W,32]

    # NHWC flatten is free and matches the statically permuted fc_in weight.
    flat = h2.reshape(B * T, H * W * 32)
    cur = matmul_bias(flat, pp["fc_in_w"], pp["fc_in_b"])            # [BT, HP]

    # Free reshape into the LIF layout; pad batch to 8 sublanes.
    Bp = _round_up(B, 8)
    cur = cur.reshape(B, T, HP)
    if Bp != B:
        cur = jnp.pad(cur, ((0, Bp - B), (0, 0), (0, 0)))
    spk = lif_scan(cur, pp, T=T, Bp=Bp, HP=HP, OP=OP)                # [Bp,T,OP]
    return spk[:B, :, :output_size]                                  # [B,T,out]


if __name__ == "__main__":
    # Small shapes consistent with the module (spatial 8x8 instead of 60x80,
    # so fc_in in_features = 32*8*8).
    B, T, C, H, W = 2, 8, 3, 8, 8
    hidden, output_size = 32, 8

    key = jax.random.PRNGKey(0)
    kp, kx = jax.random.split(key)
    raw_params = init_params(kp, hidden, output_size, H, W)
    params, HP, OP = prepare_params(raw_params, hidden=hidden,
                                    output_size=output_size, H=H, W=W)
    x = jax.random.uniform(kx, (B, T, C, H, W), jnp.float32)

    fwd = jax.jit(functools.partial(tonic_ssn_forward, hidden=hidden,
                                    output_size=output_size, HP=HP, OP=OP))
    out = fwd(x, params)
    out = jax.block_until_ready(out)
    assert out.shape == (B, T, output_size), out.shape
    assert out.dtype == jnp.float32
    print("KERNEL_OK")
</pallas_src>

<mosaic_0001>
module attributes {stable_mosaic.version = 11 : i64} {
  func.func @_conv3x3_relu_kernel(%arg0: i32, %arg1: memref<1x110x8xf32, #tpu.memory_space<vmem>>, %arg2: memref<72x16xf32, #tpu.memory_space<vmem>>, %arg3: memref<1x16xf32, #tpu.memory_space<vmem>>, %arg4: memref<1x80x16xf32, #tpu.memory_space<vmem>>) attributes {dimension_semantics = [#tpu.dimension_semantics<parallel>], iteration_bounds = array<i64: 16>, scalar_prefetch = 0 : i64, scratch_operands = 0 : i64, tpu.core_type = #tpu.core_type<tc>, window_params = [{transform_indices = @transform_0, window_bounds = array<i64: 1, 110, 8>}, {pipeline_mode = #tpu.pipeline_mode<synchronous>, transform_indices = @transform_1, window_bounds = array<i64: 72, 16>}, {pipeline_mode = #tpu.pipeline_mode<synchronous>, transform_indices = @transform_2, window_bounds = array<i64: 1, 16>}, {transform_indices = @transform_3, window_bounds = array<i64: 1, 80, 16>}]} {
    %cst = arith.constant 0.000000e+00 : f32
    %0 = vector.broadcast %cst : f32 to vector<80x16xf32>
    %c0 = arith.constant 0 : index
    %c0_0 = arith.constant 0 : index
    %c0_1 = arith.constant 0 : index
    %1 = vector.load %arg1[%c0, %c0_0, %c0_1] : memref<1x110x8xf32, #tpu.memory_space<vmem>>, vector<1x80x8xf32>
    %2 = vector.shape_cast %1 : vector<1x80x8xf32> to vector<80x8xf32>
    %c0_2 = arith.constant 0 : index
    %c0_3 = arith.constant 0 : index
    %3 = vector.load %arg2[%c0_2, %c0_3] : memref<72x16xf32, #tpu.memory_space<vmem>>, vector<8x16xf32>
    %cst_4 = arith.constant dense<0.000000e+00> : vector<80x16xf32>
    %4 = tpu.matmul %2, %3, %cst_4 {dimension_numbers = #tpu.dot_dimension_numbers<[1], [0], [0], [1], [0, 0, 1, 1], [], []>} : vector<80x8xf32>, vector<8x16xf32>, vector<80x16xf32> -> vector<80x16xf32>
    %5 = arith.addf %0, %4 : vector<80x16xf32>
    %c0_5 = arith.constant 0 : index
    %c1 = arith.constant 1 : index
    %c0_6 = arith.constant 0 : index
    %6 = vector.load %arg1[%c0_5, %c1, %c0_6] : memref<1x110x8xf32, #tpu.memory_space<vmem>>, vector<1x80x8xf32>
    %7 = vector.shape_cast %6 : vector<1x80x8xf32> to vector<80x8xf32>
    %c8 = arith.constant 8 : index
    %c0_7 = arith.constant 0 : index
    %8 = vector.load %arg2[%c8, %c0_7] : memref<72x16xf32, #tpu.memory_space<vmem>>, vector<8x16xf32>
    %cst_8 = arith.constant dense<0.000000e+00> : vector<80x16xf32>
    %9 = tpu.matmul %7, %8, %cst_8 {dimension_numbers = #tpu.dot_dimension_numbers<[1], [0], [0], [1], [0, 0, 1, 1], [], []>} : vector<80x8xf32>, vector<8x16xf32>, vector<80x16xf32> -> vector<80x16xf32>
    %10 = arith.addf %5, %9 : vector<80x16xf32>
    %c0_9 = arith.constant 0 : index
    %c2 = arith.constant 2 : index
    %c0_10 = arith.constant 0 : index
    %11 = vector.load %arg1[%c0_9, %c2, %c0_10] : memref<1x110x8xf32, #tpu.memory_space<vmem>>, vector<1x80x8xf32>
    %12 = vector.shape_cast %11 : vector<1x80x8xf32> to vector<80x8xf32>
    %c16 = arith.constant 16 : index
    %c0_11 = arith.constant 0 : index
    %13 = vector.load %arg2[%c16, %c0_11] : memref<72x16xf32, #tpu.memory_space<vmem>>, vector<8x16xf32>
    %cst_12 = arith.constant dense<0.000000e+00> : vector<80x16xf32>
    %14 = tpu.matmul %12, %13, %cst_12 {dimension_numbers = #tpu.dot_dimension_numbers<[1], [0], [0], [1], [0, 0, 1, 1], [], []>} : vector<80x8xf32>, vector<8x16xf32>, vector<80x16xf32> -> vector<80x16xf32>
    %15 = arith.addf %10, %14 : vector<80x16xf32>
    %c0_13 = arith.constant 0 : index
    %c10 = arith.constant 10 : index
    %c0_14 = arith.constant 0 : index
    %16 = vector.load %arg1[%c0_13, %c10, %c0_14] : memref<1x110x8xf32, #tpu.memory_space<vmem>>, vector<1x80x8xf32>
    %17 = vector.shape_cast %16 : vector<1x80x8xf32> to vector<80x8xf32>
    %c24 = arith.constant 24 : index
    %c0_15 = arith.constant 0 : index
    %18 = vector.load %arg2[%c24, %c0_15] : memref<72x16xf32, #tpu.memory_space<vmem>>, vector<8x16xf32>
    %cst_16 = arith.constant dense<0.000000e+00> : vector<80x16xf32>
    %19 = tpu.matmul %17, %18, %cst_16 {dimension_numbers = #tpu.dot_dimension_numbers<[1], [0], [0], [1], [0, 0, 1, 1], [], []>} : vector<80x8xf32>, vector<8x16xf32>, vector<80x16xf32> -> vector<80x16xf32>
    %20 = arith.addf %15, %19 : vector<80x16xf32>
    %c0_17 = arith.constant 0 : index
    %c11 = arith.constant 11 : index
    %c0_18 = arith.constant 0 : index
    %21 = vector.load %arg1[%c0_17, %c11, %c0_18] : memref<1x110x8xf32, #tpu.memory_space<vmem>>, vector<1x80x8xf32>
    %22 = vector.shape_cast %21 : vector<1x80x8xf32> to vector<80x8xf32>
    %c32 = arith.constant 32 : index
    %c0_19 = arith.constant 0 : index
    %23 = vector.load %arg2[%c32, %c0_19] : memref<72x16xf32, #tpu.memory_space<vmem>>, vector<8x16xf32>
    %cst_20 = arith.constant dense<0.000000e+00> : vector<80x16xf32>
    %24 = tpu.matmul %22, %23, %cst_20 {dimension_numbers = #tpu.dot_dimension_numbers<[1], [0], [0], [1], [0, 0, 1, 1], [], []>} : vector<80x8xf32>, vector<8x16xf32>, vector<80x16xf32> -> vector<80x16xf32>
    %25 = arith.addf %20, %24 : vector<80x16xf32>
    %c0_21 = arith.constant 0 : index
    %c12 = arith.constant 12 : index
    %c0_22 = arith.constant 0 : index
    %26 = vector.load %arg1[%c0_21, %c12, %c0_22] : memref<1x110x8xf32, #tpu.memory_space<vmem>>, vector<1x80x8xf32>
    %27 = vector.shape_cast %26 : vector<1x80x8xf32> to vector<80x8xf32>
    %c40 = arith.constant 40 : index
    %c0_23 = arith.constant 0 : index
    %28 = vector.load %arg2[%c40, %c0_23] : memref<72x16xf32, #tpu.memory_space<vmem>>, vector<8x16xf32>
    %cst_24 = arith.constant dense<0.000000e+00> : vector<80x16xf32>
    %29 = tpu.matmul %27, %28, %cst_24 {dimension_numbers = #tpu.dot_dimension_numbers<[1], [0], [0], [1], [0, 0, 1, 1], [], []>} : vector<80x8xf32>, vector<8x16xf32>, vector<80x16xf32> -> vector<80x16xf32>
    %30 = arith.addf %25, %29 : vector<80x16xf32>
    %c0_25 = arith.constant 0 : index
    %c20 = arith.constant 20 : index
    %c0_26 = arith.constant 0 : index
    %31 = vector.load %arg1[%c0_25, %c20, %c0_26] : memref<1x110x8xf32, #tpu.memory_space<vmem>>, vector<1x80x8xf32>
    %32 = vector.shape_cast %31 : vector<1x80x8xf32> to vector<80x8xf32>
    %c48 = arith.constant 48 : index
    %c0_27 = arith.constant 0 : index
    %33 = vector.load %arg2[%c48, %c0_27] : memref<72x16xf32, #tpu.memory_space<vmem>>, vector<8x16xf32>
    %cst_28 = arith.constant dense<0.000000e+00> : vector<80x16xf32>
    %34 = tpu.matmul %32, %33, %cst_28 {dimension_numbers = #tpu.dot_dimension_numbers<[1], [0], [0], [1], [0, 0, 1, 1], [], []>} : vector<80x8xf32>, vector<8x16xf32>, vector<80x16xf32> -> vector<80x16xf32>
    %35 = arith.addf %30, %34 : vector<80x16xf32>
    %c0_29 = arith.constant 0 : index
    %c21 = arith.constant 21 : index
    %c0_30 = arith.constant 0 : index
    %36 = vector.load %arg1[%c0_29, %c21, %c0_30] : memref<1x110x8xf32, #tpu.memory_space<vmem>>, vector<1x80x8xf32>
    %37 = vector.shape_cast %36 : vector<1x80x8xf32> to vector<80x8xf32>
    %c56 = arith.constant 56 : index
    %c0_31 = arith.constant 0 : index
    %38 = vector.load %arg2[%c56, %c0_31] : memref<72x16xf32, #tpu.memory_space<vmem>>, vector<8x16xf32>
    %cst_32 = arith.constant dense<0.000000e+00> : vector<80x16xf32>
    %39 = tpu.matmul %37, %38, %cst_32 {dimension_numbers = #tpu.dot_dimension_numbers<[1], [0], [0], [1], [0, 0, 1, 1], [], []>} : vector<80x8xf32>, vector<8x16xf32>, vector<80x16xf32> -> vector<80x16xf32>
    %40 = arith.addf %35, %39 : vector<80x16xf32>
    %c0_33 = arith.constant 0 : index
    %c22 = arith.constant 22 : index
    %c0_34 = arith.constant 0 : index
    %41 = vector.load %arg1[%c0_33, %c22, %c0_34] : memref<1x110x8xf32, #tpu.memory_space<vmem>>, vector<1x80x8xf32>
    %42 = vector.shape_cast %41 : vector<1x80x8xf32> to vector<80x8xf32>
    %c64 = arith.constant 64 : index
    %c0_35 = arith.constant 0 : index
    %43 = vector.load %arg2[%c64, %c0_35] : memref<72x16xf32, #tpu.memory_space<vmem>>, vector<8x16xf32>
    %cst_36 = arith.constant dense<0.000000e+00> : vector<80x16xf32>
    %44 = tpu.matmul %42, %43, %cst_36 {dimension_numbers = #tpu.dot_dimension_numbers<[1], [0], [0], [1], [0, 0, 1, 1], [], []>} : vector<80x8xf32>, vector<8x16xf32>, vector<80x16xf32> -> vector<80x16xf32>
    %45 = arith.addf %40, %44 : vector<80x16xf32>
    %c0_37 = arith.constant 0 : index
    %c0_38 = arith.constant 0 : index
    %46 = vector.load %arg3[%c0_37, %c0_38] : memref<1x16xf32, #tpu.memory_space<vmem>>, vector<1x16xf32>
    %47 = vector.broadcast %46 : vector<1x16xf32> to vector<80x16xf32>
    %48 = arith.addf %45, %47 : vector<80x16xf32>
    %cst_39 = arith.constant 0.000000e+00 : f32
    %49 = vector.broadcast %cst_39 : f32 to vector<80x16xf32>
    %50 = arith.maximumf %48, %49 : vector<80x16xf32>
    %c0_40 = arith.constant 0 : index
    %c0_41 = arith.constant 0 : index
    %c0_42 = arith.constant 0 : index
    %51 = vector.load %arg4[%c0_40, %c0_41, %c0_42] : memref<1x80x16xf32, #tpu.memory_space<vmem>>, vector<1x80x16xf32>
    %52 = vector.shape_cast %51 : vector<1x80x16xf32> to vector<80x16xf32>
    %53 = vector.shape_cast %50 : vector<80x16xf32> to vector<1x80x16xf32>
    tpu.vector_store %arg4[%c0_40, %c0_41, %c0_42], %53 {strides = array<i32>} : memref<1x80x16xf32, #tpu.memory_space<vmem>>, vector<1x80x16xf32>,
    return
  }
  func.func @transform_0(%arg0: i32) -> (i32, i32, i32) {
    %c0_i32 = arith.constant 0 : i32
    %c0_i32_0 = arith.constant 0 : i32
    %c0_i32_1 = arith.constant 0 : i32
    return %arg0, %c0_i32, %c0_i32_0 : i32, i32, i32
  }
  func.func @transform_1(%arg0: i32) -> (i32, i32) {
    %c0_i32 = arith.constant 0 : i32
    %c0_i32_0 = arith.constant 0 : i32
    %c0_i32_1 = arith.constant 0 : i32
    return %c0_i32, %c0_i32_0 : i32, i32
  }
  func.func @transform_2(%arg0: i32) -> (i32, i32) {
    %c0_i32 = arith.constant 0 : i32
    %c0_i32_0 = arith.constant 0 : i32
    %c0_i32_1 = arith.constant 0 : i32
    return %c0_i32, %c0_i32_0 : i32, i32
  }
  func.func @transform_3(%arg0: i32) -> (i32, i32, i32) {
    %c0_i32 = arith.constant 0 : i32
    %c0_i32_0 = arith.constant 0 : i32
    %c0_i32_1 = arith.constant 0 : i32
    return %arg0, %c0_i32, %c0_i32_0 : i32, i32, i32
  }
}

module attributes {stable_mosaic.version = 11 : i64} {
  func.func @_conv3x3_relu_kernel(%arg0: i32, %arg1: memref<1x110x16xf32, #tpu.memory_space<vmem>>, %arg2: memref<144x32xf32, #tpu.memory_space<vmem>>, %arg3: memref<1x32xf32, #tpu.memory_space<vmem>>, %arg4: memref<1x80x32xf32, #tpu.memory_space<vmem>>) attributes {dimension_semantics = [#tpu.dimension_semantics<parallel>], iteration_bounds = array<i64: 16>, scalar_prefetch = 0 : i64, scratch_operands = 0 : i64, tpu.core_type = #tpu.core_type<tc>, window_params = [{transform_indices = @transform_0, window_bounds = array<i64: 1, 110, 16>}, {pipeline_mode = #tpu.pipeline_mode<synchronous>, transform_indices = @transform_1, window_bounds = array<i64: 144, 32>}, {pipeline_mode = #tpu.pipeline_mode<synchronous>, transform_indices = @transform_2, window_bounds = array<i64: 1, 32>}, {transform_indices = @transform_3, window_bounds = array<i64: 1, 80, 32>}]} {
    %cst = arith.constant 0.000000e+00 : f32
    %0 = vector.broadcast %cst : f32 to vector<80x32xf32>
    %c0 = arith.constant 0 : index
    %c0_0 = arith.constant 0 : index
    %c0_1 = arith.constant 0 : index
    %1 = vector.load %arg1[%c0, %c0_0, %c0_1] : memref<1x110x16xf32, #tpu.memory_space<vmem>>, vector<1x80x16xf32>
    %2 = vector.shape_cast %1 : vector<1x80x16xf32> to vector<80x16xf32>
    %c0_2 = arith.constant 0 : index
    %c0_3 = arith.constant 0 : index
    %3 = vector.load %arg2[%c0_2, %c0_3] : memref<144x32xf32, #tpu.memory_space<vmem>>, vector<16x32xf32>
    %cst_4 = arith.constant dense<0.000000e+00> : vector<80x32xf32>
    %4 = tpu.matmul %2, %3, %cst_4 {dimension_numbers = #tpu.dot_dimension_numbers<[1], [0], [0], [1], [0, 0, 1, 1], [], []>} : vector<80x16xf32>, vector<16x32xf32>, vector<80x32xf32> -> vector<80x32xf32>
    %5 = arith.addf %0, %4 : vector<80x32xf32>
    %c0_5 = arith.constant 0 : index
    %c1 = arith.constant 1 : index
    %c0_6 = arith.constant 0 : index
    %6 = vector.load %arg1[%c0_5, %c1, %c0_6] : memref<1x110x16xf32, #tpu.memory_space<vmem>>, vector<1x80x16xf32>
    %7 = vector.shape_cast %6 : vector<1x80x16xf32> to vector<80x16xf32>
    %c16 = arith.constant 16 : index
    %c0_7 = arith.constant 0 : index
    %8 = vector.load %arg2[%c16, %c0_7] : memref<144x32xf32, #tpu.memory_space<vmem>>, vector<16x32xf32>
    %cst_8 = arith.constant dense<0.000000e+00> : vector<80x32xf32>
    %9 = tpu.matmul %7, %8, %cst_8 {dimension_numbers = #tpu.dot_dimension_numbers<[1], [0], [0], [1], [0, 0, 1, 1], [], []>} : vector<80x16xf32>, vector<16x32xf32>, vector<80x32xf32> -> vector<80x32xf32>
    %10 = arith.addf %5, %9 : vector<80x32xf32>
    %c0_9 = arith.constant 0 : index
    %c2 = arith.constant 2 : index
    %c0_10 = arith.constant 0 : index
    %11 = vector.load %arg1[%c0_9, %c2, %c0_10] : memref<1x110x16xf32, #tpu.memory_space<vmem>>, vector<1x80x16xf32>
    %12 = vector.shape_cast %11 : vector<1x80x16xf32> to vector<80x16xf32>
    %c32 = arith.constant 32 : index
    %c0_11 = arith.constant 0 : index
    %13 = vector.load %arg2[%c32, %c0_11] : memref<144x32xf32, #tpu.memory_space<vmem>>, vector<16x32xf32>
    %cst_12 = arith.constant dense<0.000000e+00> : vector<80x32xf32>
    %14 = tpu.matmul %12, %13, %cst_12 {dimension_numbers = #tpu.dot_dimension_numbers<[1], [0], [0], [1], [0, 0, 1, 1], [], []>} : vector<80x16xf32>, vector<16x32xf32>, vector<80x32xf32> -> vector<80x32xf32>
    %15 = arith.addf %10, %14 : vector<80x32xf32>
    %c0_13 = arith.constant 0 : index
    %c10 = arith.constant 10 : index
    %c0_14 = arith.constant 0 : index
    %16 = vector.load %arg1[%c0_13, %c10, %c0_14] : memref<1x110x16xf32, #tpu.memory_space<vmem>>, vector<1x80x16xf32>
    %17 = vector.shape_cast %16 : vector<1x80x16xf32> to vector<80x16xf32>
    %c48 = arith.constant 48 : index
    %c0_15 = arith.constant 0 : index
    %18 = vector.load %arg2[%c48, %c0_15] : memref<144x32xf32, #tpu.memory_space<vmem>>, vector<16x32xf32>
    %cst_16 = arith.constant dense<0.000000e+00> : vector<80x32xf32>
    %19 = tpu.matmul %17, %18, %cst_16 {dimension_numbers = #tpu.dot_dimension_numbers<[1], [0], [0], [1], [0, 0, 1, 1], [], []>} : vector<80x16xf32>, vector<16x32xf32>, vector<80x32xf32> -> vector<80x32xf32>
    %20 = arith.addf %15, %19 : vector<80x32xf32>
    %c0_17 = arith.constant 0 : index
    %c11 = arith.constant 11 : index
    %c0_18 = arith.constant 0 : index
    %21 = vector.load %arg1[%c0_17, %c11, %c0_18] : memref<1x110x16xf32, #tpu.memory_space<vmem>>, vector<1x80x16xf32>
    %22 = vector.shape_cast %21 : vector<1x80x16xf32> to vector<80x16xf32>
    %c64 = arith.constant 64 : index
    %c0_19 = arith.constant 0 : index
    %23 = vector.load %arg2[%c64, %c0_19] : memref<144x32xf32, #tpu.memory_space<vmem>>, vector<16x32xf32>
    %cst_20 = arith.constant dense<0.000000e+00> : vector<80x32xf32>
    %24 = tpu.matmul %22, %23, %cst_20 {dimension_numbers = #tpu.dot_dimension_numbers<[1], [0], [0], [1], [0, 0, 1, 1], [], []>} : vector<80x16xf32>, vector<16x32xf32>, vector<80x32xf32> -> vector<80x32xf32>
    %25 = arith.addf %20, %24 : vector<80x32xf32>
    %c0_21 = arith.constant 0 : index
    %c12 = arith.constant 12 : index
    %c0_22 = arith.constant 0 : index
    %26 = vector.load %arg1[%c0_21, %c12, %c0_22] : memref<1x110x16xf32, #tpu.memory_space<vmem>>, vector<1x80x16xf32>
    %27 = vector.shape_cast %26 : vector<1x80x16xf32> to vector<80x16xf32>
    %c80 = arith.constant 80 : index
    %c0_23 = arith.constant 0 : index
    %28 = vector.load %arg2[%c80, %c0_23] : memref<144x32xf32, #tpu.memory_space<vmem>>, vector<16x32xf32>
    %cst_24 = arith.constant dense<0.000000e+00> : vector<80x32xf32>
    %29 = tpu.matmul %27, %28, %cst_24 {dimension_numbers = #tpu.dot_dimension_numbers<[1], [0], [0], [1], [0, 0, 1, 1], [], []>} : vector<80x16xf32>, vector<16x32xf32>, vector<80x32xf32> -> vector<80x32xf32>
    %30 = arith.addf %25, %29 : vector<80x32xf32>
    %c0_25 = arith.constant 0 : index
    %c20 = arith.constant 20 : index
    %c0_26 = arith.constant 0 : index
    %31 = vector.load %arg1[%c0_25, %c20, %c0_26] : memref<1x110x16xf32, #tpu.memory_space<vmem>>, vector<1x80x16xf32>
    %32 = vector.shape_cast %31 : vector<1x80x16xf32> to vector<80x16xf32>
    %c96 = arith.constant 96 : index
    %c0_27 = arith.constant 0 : index
    %33 = vector.load %arg2[%c96, %c0_27] : memref<144x32xf32, #tpu.memory_space<vmem>>, vector<16x32xf32>
    %cst_28 = arith.constant dense<0.000000e+00> : vector<80x32xf32>
    %34 = tpu.matmul %32, %33, %cst_28 {dimension_numbers = #tpu.dot_dimension_numbers<[1], [0], [0], [1], [0, 0, 1, 1], [], []>} : vector<80x16xf32>, vector<16x32xf32>, vector<80x32xf32> -> vector<80x32xf32>
    %35 = arith.addf %30, %34 : vector<80x32xf32>
    %c0_29 = arith.constant 0 : index
    %c21 = arith.constant 21 : index
    %c0_30 = arith.constant 0 : index
    %36 = vector.load %arg1[%c0_29, %c21, %c0_30] : memref<1x110x16xf32, #tpu.memory_space<vmem>>, vector<1x80x16xf32>
    %37 = vector.shape_cast %36 : vector<1x80x16xf32> to vector<80x16xf32>
    %c112 = arith.constant 112 : index
    %c0_31 = arith.constant 0 : index
    %38 = vector.load %arg2[%c112, %c0_31] : memref<144x32xf32, #tpu.memory_space<vmem>>, vector<16x32xf32>
    %cst_32 = arith.constant dense<0.000000e+00> : vector<80x32xf32>
    %39 = tpu.matmul %37, %38, %cst_32 {dimension_numbers = #tpu.dot_dimension_numbers<[1], [0], [0], [1], [0, 0, 1, 1], [], []>} : vector<80x16xf32>, vector<16x32xf32>, vector<80x32xf32> -> vector<80x32xf32>
    %40 = arith.addf %35, %39 : vector<80x32xf32>
    %c0_33 = arith.constant 0 : index
    %c22 = arith.constant 22 : index
    %c0_34 = arith.constant 0 : index
    %41 = vector.load %arg1[%c0_33, %c22, %c0_34] : memref<1x110x16xf32, #tpu.memory_space<vmem>>, vector<1x80x16xf32>
    %42 = vector.shape_cast %41 : vector<1x80x16xf32> to vector<80x16xf32>
    %c128 = arith.constant 128 : index
    %c0_35 = arith.constant 0 : index
    %43 = vector.load %arg2[%c128, %c0_35] : memref<144x32xf32, #tpu.memory_space<vmem>>, vector<16x32xf32>
    %cst_36 = arith.constant dense<0.000000e+00> : vector<80x32xf32>
    %44 = tpu.matmul %42, %43, %cst_36 {dimension_numbers = #tpu.dot_dimension_numbers<[1], [0], [0], [1], [0, 0, 1, 1], [], []>} : vector<80x16xf32>, vector<16x32xf32>, vector<80x32xf32> -> vector<80x32xf32>
    %45 = arith.addf %40, %44 : vector<80x32xf32>
    %c0_37 = arith.constant 0 : index
    %c0_38 = arith.constant 0 : index
    %46 = vector.load %arg3[%c0_37, %c0_38] : memref<1x32xf32, #tpu.memory_space<vmem>>, vector<1x32xf32>
    %47 = vector.broadcast %46 : vector<1x32xf32> to vector<80x32xf32>
    %48 = arith.addf %45, %47 : vector<80x32xf32>
    %cst_39 = arith.constant 0.000000e+00 : f32
    %49 = vector.broadcast %cst_39 : f32 to vector<80x32xf32>
    %50 = arith.maximumf %48, %49 : vector<80x32xf32>
    %c0_40 = arith.constant 0 : index
    %c0_41 = arith.constant 0 : index
    %c0_42 = arith.constant 0 : index
    %51 = vector.load %arg4[%c0_40, %c0_41, %c0_42] : memref<1x80x32xf32, #tpu.memory_space<vmem>>, vector<1x80x32xf32>
    %52 = vector.shape_cast %51 : vector<1x80x32xf32> to vector<80x32xf32>
    %53 = vector.shape_cast %50 : vector<80x32xf32> to vector<1x80x32xf32>
    tpu.vector_store %arg4[%c0_40, %c0_41, %c0_42], %53 {strides = array<i32>} : memref<1x80x32xf32, #tpu.memory_space<vmem>>, vector<1x80x32xf32>,
    return
  }
  func.func @transform_0(%arg0: i32) -> (i32, i32, i32) {
    %c0_i32 = arith.constant 0 : i32
    %c0_i32_0 = arith.constant 0 : i32
    %c0_i32_1 = arith.constant 0 : i32
    return %arg0, %c0_i32, %c0_i32_0 : i32, i32, i32
  }
  func.func @transform_1(%arg0: i32) -> (i32, i32) {
    %c0_i32 = arith.constant 0 : i32
    %c0_i32_0 = arith.constant 0 : i32
    %c0_i32_1 = arith.constant 0 : i32
    return %c0_i32, %c0_i32_0 : i32, i32
  }
  func.func @transform_2(%arg0: i32) -> (i32, i32) {
    %c0_i32 = arith.constant 0 : i32
    %c0_i32_0 = arith.constant 0 : i32
    %c0_i32_1 = arith.constant 0 : i32
    return %c0_i32, %c0_i32_0 : i32, i32
  }
  func.func @transform_3(%arg0: i32) -> (i32, i32, i32) {
    %c0_i32 = arith.constant 0 : i32
    %c0_i32_0 = arith.constant 0 : i32
    %c0_i32_1 = arith.constant 0 : i32
    return %arg0, %c0_i32, %c0_i32_0 : i32, i32, i32
  }
}

module attributes {stable_mosaic.version = 11 : i64} {
  func.func @_matmul_bias_kernel(%arg0: i32, %arg1: i32, %arg2: i32, %arg3: memref<16x512xf32, #tpu.memory_space<vmem>>, %arg4: memref<512x128xf32, #tpu.memory_space<vmem>>, %arg5: memref<1x128xf32, #tpu.memory_space<vmem>>, %arg6: memref<16x128xf32, #tpu.memory_space<vmem>>, %arg7: memref<16x128xf32, #tpu.memory_space<vmem>>) attributes {dimension_semantics = [#tpu.dimension_semantics<parallel>, #tpu.dimension_semantics<parallel>, #tpu.dimension_semantics<arbitrary>], iteration_bounds = array<i64: 1, 1, 4>, scalar_prefetch = 0 : i64, scratch_operands = 1 : i64, tpu.core_type = #tpu.core_type<tc>, window_params = [{transform_indices = @transform_0, window_bounds = array<i64: 16, 512>}, {transform_indices = @transform_1, window_bounds = array<i64: 512, 128>}, {transform_indices = @transform_2, window_bounds = array<i64: 1, 128>}, {transform_indices = @transform_3, window_bounds = array<i64: 16, 128>}]} {
    %c0_i32 = arith.constant 0 : i32
    %0 = arith.cmpi eq, %arg2, %c0_i32 : i32
    %1 = arith.extui %0 : i1 to i32
    %c0_i32_0 = arith.constant 0 : i32
    %2 = arith.cmpi ne, %1, %c0_i32_0 : i32
    scf.if %2 {
      %cst_9 = arith.constant 0.000000e+00 : f32
      %12 = vector.broadcast %cst_9 : f32 to vector<16x128xf32>
      %c0_10 = arith.constant 0 : index
      %c0_11 = arith.constant 0 : index
      %13 = vector.load %arg7[%c0_10, %c0_11] : memref<16x128xf32, #tpu.memory_space<vmem>>, vector<16x128xf32>
      tpu.vector_store %arg7[%c0_10, %c0_11], %12 {strides = array<i32>} : memref<16x128xf32, #tpu.memory_space<vmem>>, vector<16x128xf32>,
    } else {
    }
    %c0 = arith.constant 0 : index
    %c0_1 = arith.constant 0 : index
    %3 = vector.load %arg7[%c0, %c0_1] : memref<16x128xf32, #tpu.memory_space<vmem>>, vector<16x128xf32>
    %c0_2 = arith.constant 0 : index
    %c0_3 = arith.constant 0 : index
    %4 = vector.load %arg3[%c0_2, %c0_3] : memref<16x512xf32, #tpu.memory_space<vmem>>, vector<16x512xf32>
    %c0_4 = arith.constant 0 : index
    %c0_5 = arith.constant 0 : index
    %5 = vector.load %arg4[%c0_4, %c0_5] : memref<512x128xf32, #tpu.memory_space<vmem>>, vector<512x128xf32>
    %cst = arith.constant dense<0.000000e+00> : vector<16x128xf32>
    %6 = tpu.matmul %4, %5, %cst {dimension_numbers = #tpu.dot_dimension_numbers<[1], [0], [0], [1], [0, 0, 1, 1], [], []>} : vector<16x512xf32>, vector<512x128xf32>, vector<16x128xf32> -> vector<16x128xf32>
    %7 = arith.addf %3, %6 : vector<16x128xf32>
    %c0_6 = arith.constant 0 : index
    %c0_7 = arith.constant 0 : index
    %8 = vector.load %arg7[%c0_6, %c0_7] : memref<16x128xf32, #tpu.memory_space<vmem>>, vector<16x128xf32>
    tpu.vector_store %arg7[%c0_6, %c0_7], %7 {strides = array<i32>} : memref<16x128xf32, #tpu.memory_space<vmem>>, vector<16x128xf32>,
    %c3_i32 = arith.constant 3 : i32
    %9 = arith.cmpi eq, %arg2, %c3_i32 : i32
    %10 = arith.extui %9 : i1 to i32
    %c0_i32_8 = arith.constant 0 : i32
    %11 = arith.cmpi ne, %10, %c0_i32_8 : i32
    scf.if %11 {
      %c0_9 = arith.constant 0 : index
      %c0_10 = arith.constant 0 : index
      %12 = vector.load %arg7[%c0_9, %c0_10] : memref<16x128xf32, #tpu.memory_space<vmem>>, vector<16x128xf32>
      %c0_11 = arith.constant 0 : index
      %c0_12 = arith.constant 0 : index
      %13 = vector.load %arg5[%c0_11, %c0_12] : memref<1x128xf32, #tpu.memory_space<vmem>>, vector<1x128xf32>
      %14 = vector.broadcast %13 : vector<1x128xf32> to vector<16x128xf32>
      %15 = arith.addf %12, %14 : vector<16x128xf32>
      %c0_13 = arith.constant 0 : index
      %c0_14 = arith.constant 0 : index
      %16 = vector.load %arg6[%c0_13, %c0_14] : memref<16x128xf32, #tpu.memory_space<vmem>>, vector<16x128xf32>
      tpu.vector_store %arg6[%c0_13, %c0_14], %15 {strides = array<i32>} : memref<16x128xf32, #tpu.memory_space<vmem>>, vector<16x128xf32>,
    } else {
    }
    return
  }
  func.func @transform_0(%arg0: i32, %arg1: i32, %arg2: i32) -> (i32, i32) {
    %c0_i32 = arith.constant 0 : i32
    return %arg0, %arg2 : i32, i32
  }
  func.func @transform_1(%arg0: i32, %arg1: i32, %arg2: i32) -> (i32, i32) {
    %c0_i32 = arith.constant 0 : i32
    return %arg2, %arg1 : i32, i32
  }
  func.func @transform_2(%arg0: i32, %arg1: i32, %arg2: i32) -> (i32, i32) {
    %c0_i32 = arith.constant 0 : i32
    %c0_i32_0 = arith.constant 0 : i32
    return %c0_i32, %arg1 : i32, i32
  }
  func.func @transform_3(%arg0: i32, %arg1: i32, %arg2: i32) -> (i32, i32) {
    %c0_i32 = arith.constant 0 : i32
    return %arg0, %arg1 : i32, i32
  }
}

module attributes {stable_mosaic.version = 11 : i64} {
  func.func @_lif_scan_kernel(%arg0: memref<8x8x128xf32, #tpu.memory_space<vmem>>, %arg1: memref<128x128xf32, #tpu.memory_space<vmem>>, %arg2: memref<1x128xf32, #tpu.memory_space<vmem>>, %arg3: memref<128x128xf32, #tpu.memory_space<vmem>>, %arg4: memref<1x128xf32, #tpu.memory_space<vmem>>, %arg5: memref<128x128xf32, #tpu.memory_space<vmem>>, %arg6: memref<1x128xf32, #tpu.memory_space<vmem>>, %arg7: memref<1x128xf32, #tpu.memory_space<vmem>>, %arg8: memref<1x128xf32, #tpu.memory_space<vmem>>, %arg9: memref<1x128xf32, #tpu.memory_space<vmem>>, %arg10: memref<1x128xf32, #tpu.memory_space<vmem>>, %arg11: memref<1x128xf32, #tpu.memory_space<vmem>>, %arg12: memref<1x128xf32, #tpu.memory_space<vmem>>, %arg13: memref<1x128xf32, #tpu.memory_space<vmem>>, %arg14: memref<8x8x128xf32, #tpu.memory_space<vmem>>) attributes {dimension_semantics = [], scalar_prefetch = 0 : i64, scratch_operands = 0 : i64, tpu.core_type = #tpu.core_type<tc>} {
    %c0 = arith.constant 0 : index
    %c0_0 = arith.constant 0 : index
    %0 = vector.load %arg1[%c0, %c0_0] : memref<128x128xf32, #tpu.memory_space<vmem>>, vector<128x128xf32>
    %c0_1 = arith.constant 0 : index
    %c0_2 = arith.constant 0 : index
    %1 = vector.load %arg2[%c0_1, %c0_2] : memref<1x128xf32, #tpu.memory_space<vmem>>, vector<1x128xf32>
    %c0_3 = arith.constant 0 : index
    %c0_4 = arith.constant 0 : index
    %2 = vector.load %arg3[%c0_3, %c0_4] : memref<128x128xf32, #tpu.memory_space<vmem>>, vector<128x128xf32>
    %c0_5 = arith.constant 0 : index
    %c0_6 = arith.constant 0 : index
    %3 = vector.load %arg4[%c0_5, %c0_6] : memref<1x128xf32, #tpu.memory_space<vmem>>, vector<1x128xf32>
    %c0_7 = arith.constant 0 : index
    %c0_8 = arith.constant 0 : index
    %4 = vector.load %arg5[%c0_7, %c0_8] : memref<128x128xf32, #tpu.memory_space<vmem>>, vector<128x128xf32>
    %c0_9 = arith.constant 0 : index
    %c0_10 = arith.constant 0 : index
    %5 = vector.load %arg6[%c0_9, %c0_10] : memref<1x128xf32, #tpu.memory_space<vmem>>, vector<1x128xf32>
    %c0_11 = arith.constant 0 : index
    %c0_12 = arith.constant 0 : index
    %6 = vector.load %arg7[%c0_11, %c0_12] : memref<1x128xf32, #tpu.memory_space<vmem>>, vector<1x128xf32>
    %7 = vector.shape_cast %6 : vector<1x128xf32> to vector<1x128xf32>
    %8 = vector.broadcast %7 : vector<1x128xf32> to vector<8x128xf32>
    %c0_13 = arith.constant 0 : index
    %c0_14 = arith.constant 0 : index
    %9 = vector.load %arg8[%c0_13, %c0_14] : memref<1x128xf32, #tpu.memory_space<vmem>>, vector<1x128xf32>
    %10 = vector.shape_cast %9 : vector<1x128xf32> to vector<1x128xf32>
    %11 = vector.broadcast %10 : vector<1x128xf32> to vector<8x128xf32>
    %c0_15 = arith.constant 0 : index
    %c0_16 = arith.constant 0 : index
    %12 = vector.load %arg9[%c0_15, %c0_16] : memref<1x128xf32, #tpu.memory_space<vmem>>, vector<1x128xf32>
    %13 = vector.shape_cast %12 : vector<1x128xf32> to vector<1x128xf32>
    %14 = vector.broadcast %13 : vector<1x128xf32> to vector<8x128xf32>
    %c0_17 = arith.constant 0 : index
    %c0_18 = arith.constant 0 : index
    %15 = vector.load %arg10[%c0_17, %c0_18] : memref<1x128xf32, #tpu.memory_space<vmem>>, vector<1x128xf32>
    %16 = vector.shape_cast %15 : vector<1x128xf32> to vector<1x128xf32>
    %17 = vector.broadcast %16 : vector<1x128xf32> to vector<8x128xf32>
    %c0_19 = arith.constant 0 : index
    %c0_20 = arith.constant 0 : index
    %18 = vector.load %arg11[%c0_19, %c0_20] : memref<1x128xf32, #tpu.memory_space<vmem>>, vector<1x128xf32>
    %19 = vector.shape_cast %18 : vector<1x128xf32> to vector<1x128xf32>
    %20 = vector.broadcast %19 : vector<1x128xf32> to vector<8x128xf32>
    %c0_21 = arith.constant 0 : index
    %c0_22 = arith.constant 0 : index
    %21 = vector.load %arg12[%c0_21, %c0_22] : memref<1x128xf32, #tpu.memory_space<vmem>>, vector<1x128xf32>
    %22 = vector.shape_cast %21 : vector<1x128xf32> to vector<1x128xf32>
    %23 = vector.broadcast %22 : vector<1x128xf32> to vector<8x128xf32>
    %c0_23 = arith.constant 0 : index
    %c0_24 = arith.constant 0 : index
    %24 = vector.load %arg13[%c0_23, %c0_24] : memref<1x128xf32, #tpu.memory_space<vmem>>, vector<1x128xf32>
    %25 = vector.shape_cast %24 : vector<1x128xf32> to vector<1x128xf32>
    %26 = vector.broadcast %25 : vector<1x128xf32> to vector<8x128xf32>
    %cst = arith.constant 0.000000e+00 : f32
    %27 = vector.broadcast %cst : f32 to vector<8x128xf32>
    %cst_25 = arith.constant 0.000000e+00 : f32
    %28 = vector.broadcast %cst_25 : f32 to vector<8x128xf32>
    %cst_26 = arith.constant 0.000000e+00 : f32
    %29 = vector.broadcast %cst_26 : f32 to vector<8x128xf32>
    %cst_27 = arith.constant 0.000000e+00 : f32
    %30 = vector.broadcast %cst_27 : f32 to vector<8x128xf32>
    %c0_28 = arith.constant 0 : index
    %c0_29 = arith.constant 0 : index
    %c0_30 = arith.constant 0 : index
    %31 = vector.load %arg0[%c0_28, %c0_29, %c0_30] : memref<8x8x128xf32, #tpu.memory_space<vmem>>, vector<8x1x128xf32>
    %32 = vector.shape_cast %31 : vector<8x1x128xf32> to vector<8x128xf32>
    %33 = arith.cmpf ogt, %27, %11 : vector<8x128xf32>
    %34 = arith.extui %33 : vector<8x128xi1> to vector<8x128xi32>
    %35 = arith.sitofp %34 : vector<8x128xi32> to vector<8x128xf32>
    %36 = arith.mulf %8, %27 : vector<8x128xf32>
    %37 = arith.addf %36, %32 : vector<8x128xf32>
    %38 = arith.mulf %35, %11 : vector<8x128xf32>
    %39 = arith.subf %37, %38 : vector<8x128xf32>
    %40 = arith.cmpf ogt, %39, %11 : vector<8x128xf32>
    %41 = arith.extui %40 : vector<8x128xi1> to vector<8x128xi32>
    %42 = arith.sitofp %41 : vector<8x128xi32> to vector<8x128xf32>
    %cst_31 = arith.constant dense<0.000000e+00> : vector<8x128xf32>
    %43 = tpu.matmul %42, %0, %cst_31 {dimension_numbers = #tpu.dot_dimension_numbers<[1], [0], [0], [1], [0, 0, 1, 1], [], []>} : vector<8x128xf32>, vector<128x128xf32>, vector<8x128xf32> -> vector<8x128xf32>
    %44 = vector.broadcast %1 : vector<1x128xf32> to vector<8x128xf32>
    %45 = arith.addf %43, %44 : vector<8x128xf32>
    %46 = arith.cmpf ogt, %28, %17 : vector<8x128xf32>
    %47 = arith.extui %46 : vector<8x128xi1> to vector<8x128xi32>
    %48 = arith.sitofp %47 : vector<8x128xi32> to vector<8x128xf32>
    %49 = arith.mulf %14, %28 : vector<8x128xf32>
    %50 = arith.addf %49, %45 : vector<8x128xf32>
    %51 = arith.mulf %48, %17 : vector<8x128xf32>
    %52 = arith.subf %50, %51 : vector<8x128xf32>
    %53 = arith.cmpf ogt, %52, %17 : vector<8x128xf32>
    %54 = arith.extui %53 : vector<8x128xi1> to vector<8x128xi32>
    %55 = arith.sitofp %54 : vector<8x128xi32> to vector<8x128xf32>
    %cst_32 = arith.constant dense<0.000000e+00> : vector<8x128xf32>
    %56 = tpu.matmul %55, %2, %cst_32 {dimension_numbers = #tpu.dot_dimension_numbers<[1], [0], [0], [1], [0, 0, 1, 1], [], []>} : vector<8x128xf32>, vector<128x128xf32>, vector<8x128xf32> -> vector<8x128xf32>
    %57 = vector.broadcast %3 : vector<1x128xf32> to vector<8x128xf32>
    %58 = arith.addf %56, %57 : vector<8x128xf32>
    %59 = arith.cmpf ogt, %29, %23 : vector<8x128xf32>
    %60 = arith.extui %59 : vector<8x128xi1> to vector<8x128xi32>
    %61 = arith.sitofp %60 : vector<8x128xi32> to vector<8x128xf32>
    %62 = arith.mulf %20, %29 : vector<8x128xf32>
    %63 = arith.addf %62, %58 : vector<8x128xf32>
    %64 = arith.mulf %61, %23 : vector<8x128xf32>
    %65 = arith.subf %63, %64 : vector<8x128xf32>
    %66 = arith.cmpf ogt, %65, %23 : vector<8x128xf32>
    %67 = arith.extui %66 : vector<8x128xi1> to vector<8x128xi32>
    %68 = arith.sitofp %67 : vector<8x128xi32> to vector<8x128xf32>
    %cst_33 = arith.constant dense<0.000000e+00> : vector<8x128xf32>
    %69 = tpu.matmul %68, %4, %cst_33 {dimension_numbers = #tpu.dot_dimension_numbers<[1], [0], [0], [1], [0, 0, 1, 1], [], []>} : vector<8x128xf32>, vector<128x128xf32>, vector<8x128xf32> -> vector<8x128xf32>
    %70 = vector.broadcast %5 : vector<1x128xf32> to vector<8x128xf32>
    %71 = arith.addf %69, %70 : vector<8x128xf32>
    %72 = arith.mulf %26, %30 : vector<8x128xf32>
    %73 = arith.addf %72, %71 : vector<8x128xf32>
    %cst_34 = arith.constant 1.000000e+00 : f32
    %74 = vector.broadcast %cst_34 : f32 to vector<8x128xf32>
    %75 = arith.cmpf ogt, %73, %74 : vector<8x128xf32>
    %76 = arith.extui %75 : vector<8x128xi1> to vector<8x128xi32>
    %77 = arith.sitofp %76 : vector<8x128xi32> to vector<8x128xf32>
    %c0_35 = arith.constant 0 : index
    %c0_36 = arith.constant 0 : index
    %c0_37 = arith.constant 0 : index
    %78 = vector.load %arg14[%c0_35, %c0_36, %c0_37] : memref<8x8x128xf32, #tpu.memory_space<vmem>>, vector<8x1x128xf32>
    %79 = vector.shape_cast %78 : vector<8x1x128xf32> to vector<8x128xf32>
    %80 = vector.shape_cast %77 : vector<8x128xf32> to vector<8x1x128xf32>
    tpu.vector_store %arg14[%c0_35, %c0_36, %c0_37], %80 {strides = array<i32>} : memref<8x8x128xf32, #tpu.memory_space<vmem>>, vector<8x1x128xf32>,
    %c0_38 = arith.constant 0 : index
    %c1 = arith.constant 1 : index
    %c0_39 = arith.constant 0 : index
    %81 = vector.load %arg0[%c0_38, %c1, %c0_39] : memref<8x8x128xf32, #tpu.memory_space<vmem>>, vector<8x1x128xf32>
    %82 = vector.shape_cast %81 : vector<8x1x128xf32> to vector<8x128xf32>
    %83 = arith.cmpf ogt, %39, %11 : vector<8x128xf32>
    %84 = arith.extui %83 : vector<8x128xi1> to vector<8x128xi32>
    %85 = arith.sitofp %84 : vector<8x128xi32> to vector<8x128xf32>
    %86 = arith.mulf %8, %39 : vector<8x128xf32>
    %87 = arith.addf %86, %82 : vector<8x128xf32>
    %88 = arith.mulf %85, %11 : vector<8x128xf32>
    %89 = arith.subf %87, %88 : vector<8x128xf32>
    %90 = arith.cmpf ogt, %89, %11 : vector<8x128xf32>
    %91 = arith.extui %90 : vector<8x128xi1> to vector<8x128xi32>
    %92 = arith.sitofp %91 : vector<8x128xi32> to vector<8x128xf32>
    %cst_40 = arith.constant dense<0.000000e+00> : vector<8x128xf32>
    %93 = tpu.matmul %92, %0, %cst_40 {dimension_numbers = #tpu.dot_dimension_numbers<[1], [0], [0], [1], [0, 0, 1, 1], [], []>} : vector<8x128xf32>, vector<128x128xf32>, vector<8x128xf32> -> vector<8x128xf32>
    %94 = vector.broadcast %1 : vector<1x128xf32> to vector<8x128xf32>
    %95 = arith.addf %93, %94 : vector<8x128xf32>
    %96 = arith.cmpf ogt, %52, %17 : vector<8x128xf32>
    %97 = arith.extui %96 : vector<8x128xi1> to vector<8x128xi32>
    %98 = arith.sitofp %97 : vector<8x128xi32> to vector<8x128xf32>
    %99 = arith.mulf %14, %52 : vector<8x128xf32>
    %100 = arith.addf %99, %95 : vector<8x128xf32>
    %101 = arith.mulf %98, %17 : vector<8x128xf32>
    %102 = arith.subf %100, %101 : vector<8x128xf32>
    %103 = arith.cmpf ogt, %102, %17 : vector<8x128xf32>
    %104 = arith.extui %103 : vector<8x128xi1> to vector<8x128xi32>
    %105 = arith.sitofp %104 : vector<8x128xi32> to vector<8x128xf32>
    %cst_41 = arith.constant dense<0.000000e+00> : vector<8x128xf32>
    %106 = tpu.matmul %105, %2, %cst_41 {dimension_numbers = #tpu.dot_dimension_numbers<[1], [0], [0], [1], [0, 0, 1, 1], [], []>} : vector<8x128xf32>, vector<128x128xf32>, vector<8x128xf32> -> vector<8x128xf32>
    %107 = vector.broadcast %3 : vector<1x128xf32> to vector<8x128xf32>
    %108 = arith.addf %106, %107 : vector<8x128xf32>
    %109 = arith.cmpf ogt, %65, %23 : vector<8x128xf32>
    %110 = arith.extui %109 : vector<8x128xi1> to vector<8x128xi32>
    %111 = arith.sitofp %110 : vector<8x128xi32> to vector<8x128xf32>
    %112 = arith.mulf %20, %65 : vector<8x128xf32>
    %113 = arith.addf %112, %108 : vector<8x128xf32>
    %114 = arith.mulf %111, %23 : vector<8x128xf32>
    %115 = arith.subf %113, %114 : vector<8x128xf32>
    %116 = arith.cmpf ogt, %115, %23 : vector<8x128xf32>
    %117 = arith.extui %116 : vector<8x128xi1> to vector<8x128xi32>
    %118 = arith.sitofp %117 : vector<8x128xi32> to vector<8x128xf32>
    %cst_42 = arith.constant dense<0.000000e+00> : vector<8x128xf32>
    %119 = tpu.matmul %118, %4, %cst_42 {dimension_numbers = #tpu.dot_dimension_numbers<[1], [0], [0], [1], [0, 0, 1, 1], [], []>} : vector<8x128xf32>, vector<128x128xf32>, vector<8x128xf32> -> vector<8x128xf32>
    %120 = vector.broadcast %5 : vector<1x128xf32> to vector<8x128xf32>
    %121 = arith.addf %119, %120 : vector<8x128xf32>
    %122 = arith.mulf %26, %73 : vector<8x128xf32>
    %123 = arith.addf %122, %121 : vector<8x128xf32>
    %cst_43 = arith.constant 1.000000e+00 : f32
    %124 = vector.broadcast %cst_43 : f32 to vector<8x128xf32>
    %125 = arith.cmpf ogt, %123, %124 : vector<8x128xf32>
    %126 = arith.extui %125 : vector<8x128xi1> to vector<8x128xi32>
    %127 = arith.sitofp %126 : vector<8x128xi32> to vector<8x128xf32>
    %c0_44 = arith.constant 0 : index
    %c1_45 = arith.constant 1 : index
    %c0_46 = arith.constant 0 : index
    %128 = vector.load %arg14[%c0_44, %c1_45, %c0_46] : memref<8x8x128xf32, #tpu.memory_space<vmem>>, vector<8x1x128xf32>
    %129 = vector.shape_cast %128 : vector<8x1x128xf32> to vector<8x128xf32>
    %130 = vector.shape_cast %127 : vector<8x128xf32> to vector<8x1x128xf32>
    tpu.vector_store %arg14[%c0_44, %c1_45, %c0_46], %130 {strides = array<i32>} : memref<8x8x128xf32, #tpu.memory_space<vmem>>, vector<8x1x128xf32>,
    %c0_47 = arith.constant 0 : index
    %c2 = arith.constant 2 : index
    %c0_48 = arith.constant 0 : index
    %131 = vector.load %arg0[%c0_47, %c2, %c0_48] : memref<8x8x128xf32, #tpu.memory_space<vmem>>, vector<8x1x128xf32>
    %132 = vector.shape_cast %131 : vector<8x1x128xf32> to vector<8x128xf32>
    %133 = arith.cmpf ogt, %89, %11 : vector<8x128xf32>
    %134 = arith.extui %133 : vector<8x128xi1> to vector<8x128xi32>
    %135 = arith.sitofp %134 : vector<8x128xi32> to vector<8x128xf32>
    %136 = arith.mulf %8, %89 : vector<8x128xf32>
    %137 = arith.addf %136, %132 : vector<8x128xf32>
    %138 = arith.mulf %135, %11 : vector<8x128xf32>
    %139 = arith.subf %137, %138 : vector<8x128xf32>
    %140 = arith.cmpf ogt, %139, %11 : vector<8x128xf32>
    %141 = arith.extui %140 : vector<8x128xi1> to vector<8x128xi32>
    %142 = arith.sitofp %141 : vector<8x128xi32> to vector<8x128xf32>
    %cst_49 = arith.constant dense<0.000000e+00> : vector<8x128xf32>
    %143 = tpu.matmul %142, %0, %cst_49 {dimension_numbers = #tpu.dot_dimension_numbers<[1], [0], [0], [1], [0, 0, 1, 1], [], []>} : vector<8x128xf32>, vector<128x128xf32>, vector<8x128xf32> -> vector<8x128xf32>
    %144 = vector.broadcast %1 : vector<1x128xf32> to vector<8x128xf32>
    %145 = arith.addf %143, %144 : vector<8x128xf32>
    %146 = arith.cmpf ogt, %102, %17 : vector<8x128xf32>
    %147 = arith.extui %146 : vector<8x128xi1> to vector<8x128xi32>
    %148 = arith.sitofp %147 : vector<8x128xi32> to vector<8x128xf32>
    %149 = arith.mulf %14, %102 : vector<8x128xf32>
    %150 = arith.addf %149, %145 : vector<8x128xf32>
    %151 = arith.mulf %148, %17 : vector<8x128xf32>
    %152 = arith.subf %150, %151 : vector<8x128xf32>
    %153 = arith.cmpf ogt, %152, %17 : vector<8x128xf32>
    %154 = arith.extui %153 : vector<8x128xi1> to vector<8x128xi32>
    %155 = arith.sitofp %154 : vector<8x128xi32> to vector<8x128xf32>
    %cst_50 = arith.constant dense<0.000000e+00> : vector<8x128xf32>
    %156 = tpu.matmul %155, %2, %cst_50 {dimension_numbers = #tpu.dot_dimension_numbers<[1], [0], [0], [1], [0, 0, 1, 1], [], []>} : vector<8x128xf32>, vector<128x128xf32>, vector<8x128xf32> -> vector<8x128xf32>
    %157 = vector.broadcast %3 : vector<1x128xf32> to vector<8x128xf32>
    %158 = arith.addf %156, %157 : vector<8x128xf32>
    %159 = arith.cmpf ogt, %115, %23 : vector<8x128xf32>
    %160 = arith.extui %159 : vector<8x128xi1> to vector<8x128xi32>
    %161 = arith.sitofp %160 : vector<8x128xi32> to vector<8x128xf32>
    %162 = arith.mulf %20, %115 : vector<8x128xf32>
    %163 = arith.addf %162, %158 : vector<8x128xf32>
    %164 = arith.mulf %161, %23 : vector<8x128xf32>
    %165 = arith.subf %163, %164 : vector<8x128xf32>
    %166 = arith.cmpf ogt, %165, %23 : vector<8x128xf32>
    %167 = arith.extui %166 : vector<8x128xi1> to vector<8x128xi32>
    %168 = arith.sitofp %167 : vector<8x128xi32> to vector<8x128xf32>
    %cst_51 = arith.constant dense<0.000000e+00> : vector<8x128xf32>
    %169 = tpu.matmul %168, %4, %cst_51 {dimension_numbers = #tpu.dot_dimension_numbers<[1], [0], [0], [1], [0, 0, 1, 1], [], []>} : vector<8x128xf32>, vector<128x128xf32>, vector<8x128xf32> -> vector<8x128xf32>
    %170 = vector.broadcast %5 : vector<1x128xf32> to vector<8x128xf32>
    %171 = arith.addf %169, %170 : vector<8x128xf32>
    %172 = arith.mulf %26, %123 : vector<8x128xf32>
    %173 = arith.addf %172, %171 : vector<8x128xf32>
    %cst_52 = arith.constant 1.000000e+00 : f32
    %174 = vector.broadcast %cst_52 : f32 to vector<8x128xf32>
    %175 = arith.cmpf ogt, %173, %174 : vector<8x128xf32>
    %176 = arith.extui %175 : vector<8x128xi1> to vector<8x128xi32>
    %177 = arith.sitofp %176 : vector<8x128xi32> to vector<8x128xf32>
    %c0_53 = arith.constant 0 : index
    %c2_54 = arith.constant 2 : index
    %c0_55 = arith.constant 0 : index
    %178 = vector.load %arg14[%c0_53, %c2_54, %c0_55] : memref<8x8x128xf32, #tpu.memory_space<vmem>>, vector<8x1x128xf32>
    %179 = vector.shape_cast %178 : vector<8x1x128xf32> to vector<8x128xf32>
    %180 = vector.shape_cast %177 : vector<8x128xf32> to vector<8x1x128xf32>
    tpu.vector_store %arg14[%c0_53, %c2_54, %c0_55], %180 {strides = array<i32>} : memref<8x8x128xf32, #tpu.memory_space<vmem>>, vector<8x1x128xf32>,
    %c0_56 = arith.constant 0 : index
    %c3 = arith.constant 3 : index
    %c0_57 = arith.constant 0 : index
    %181 = vector.load %arg0[%c0_56, %c3, %c0_57] : memref<8x8x128xf32, #tpu.memory_space<vmem>>, vector<8x1x128xf32>
    %182 = vector.shape_cast %181 : vector<8x1x128xf32> to vector<8x128xf32>
    %183 = arith.cmpf ogt, %139, %11 : vector<8x128xf32>
    %184 = arith.extui %183 : vector<8x128xi1> to vector<8x128xi32>
    %185 = arith.sitofp %184 : vector<8x128xi32> to vector<8x128xf32>
    %186 = arith.mulf %8, %139 : vector<8x128xf32>
    %187 = arith.addf %186, %182 : vector<8x128xf32>
    %188 = arith.mulf %185, %11 : vector<8x128xf32>
    %189 = arith.subf %187, %188 : vector<8x128xf32>
    %190 = arith.cmpf ogt, %189, %11 : vector<8x128xf32>
    %191 = arith.extui %190 : vector<8x128xi1> to vector<8x128xi32>
    %192 = arith.sitofp %191 : vector<8x128xi32> to vector<8x128xf32>
    %cst_58 = arith.constant dense<0.000000e+00> : vector<8x128xf32>
    %193 = tpu.matmul %192, %0, %cst_58 {dimension_numbers = #tpu.dot_dimension_numbers<[1], [0], [0], [1], [0, 0, 1, 1], [], []>} : vector<8x128xf32>, vector<128x128xf32>, vector<8x128xf32> -> vector<8x128xf32>
    %194 = vector.broadcast %1 : vector<1x128xf32> to vector<8x128xf32>
    %195 = arith.addf %193, %194 : vector<8x128xf32>
    %196 = arith.cmpf ogt, %152, %17 : vector<8x128xf32>
    %197 = arith.extui %196 : vector<8x128xi1> to vector<8x128xi32>
    %198 = arith.sitofp %197 : vector<8x128xi32> to vector<8x128xf32>
    %199 = arith.mulf %14, %152 : vector<8x128xf32>
    %200 = arith.addf %199, %195 : vector<8x128xf32>
    %201 = arith.mulf %198, %17 : vector<8x128xf32>
    %202 = arith.subf %200, %201 : vector<8x128xf32>
    %203 = arith.cmpf ogt, %202, %17 : vector<8x128xf32>
    %204 = arith.extui %203 : vector<8x128xi1> to vector<8x128xi32>
    %205 = arith.sitofp %204 : vector<8x128xi32> to vector<8x128xf32>
    %cst_59 = arith.constant dense<0.000000e+00> : vector<8x128xf32>
    %206 = tpu.matmul %205, %2, %cst_59 {dimension_numbers = #tpu.dot_dimension_numbers<[1], [0], [0], [1], [0, 0, 1, 1], [], []>} : vector<8x128xf32>, vector<128x128xf32>, vector<8x128xf32> -> vector<8x128xf32>
    %207 = vector.broadcast %3 : vector<1x128xf32> to vector<8x128xf32>
    %208 = arith.addf %206, %207 : vector<8x128xf32>
    %209 = arith.cmpf ogt, %165, %23 : vector<8x128xf32>
    %210 = arith.extui %209 : vector<8x128xi1> to vector<8x128xi32>
    %211 = arith.sitofp %210 : vector<8x128xi32> to vector<8x128xf32>
    %212 = arith.mulf %20, %165 : vector<8x128xf32>
    %213 = arith.addf %212, %208 : vector<8x128xf32>
    %214 = arith.mulf %211, %23 : vector<8x128xf32>
    %215 = arith.subf %213, %214 : vector<8x128xf32>
    %216 = arith.cmpf ogt, %215, %23 : vector<8x128xf32>
    %217 = arith.extui %216 : vector<8x128xi1> to vector<8x128xi32>
    %218 = arith.sitofp %217 : vector<8x128xi32> to vector<8x128xf32>
    %cst_60 = arith.constant dense<0.000000e+00> : vector<8x128xf32>
    %219 = tpu.matmul %218, %4, %cst_60 {dimension_numbers = #tpu.dot_dimension_numbers<[1], [0], [0], [1], [0, 0, 1, 1], [], []>} : vector<8x128xf32>, vector<128x128xf32>, vector<8x128xf32> -> vector<8x128xf32>
    %220 = vector.broadcast %5 : vector<1x128xf32> to vector<8x128xf32>
    %221 = arith.addf %219, %220 : vector<8x128xf32>
    %222 = arith.mulf %26, %173 : vector<8x128xf32>
    %223 = arith.addf %222, %221 : vector<8x128xf32>
    %cst_61 = arith.constant 1.000000e+00 : f32
    %224 = vector.broadcast %cst_61 : f32 to vector<8x128xf32>
    %225 = arith.cmpf ogt, %223, %224 : vector<8x128xf32>
    %226 = arith.extui %225 : vector<8x128xi1> to vector<8x128xi32>
    %227 = arith.sitofp %226 : vector<8x128xi32> to vector<8x128xf32>
    %c0_62 = arith.constant 0 : index
    %c3_63 = arith.constant 3 : index
    %c0_64 = arith.constant 0 : index
    %228 = vector.load %arg14[%c0_62, %c3_63, %c0_64] : memref<8x8x128xf32, #tpu.memory_space<vmem>>, vector<8x1x128xf32>
    %229 = vector.shape_cast %228 : vector<8x1x128xf32> to vector<8x128xf32>
    %230 = vector.shape_cast %227 : vector<8x128xf32> to vector<8x1x128xf32>
    tpu.vector_store %arg14[%c0_62, %c3_63, %c0_64], %230 {strides = array<i32>} : memref<8x8x128xf32, #tpu.memory_space<vmem>>, vector<8x1x128xf32>,
    %c0_65 = arith.constant 0 : index
    %c4 = arith.constant 4 : index
    %c0_66 = arith.constant 0 : index
    %231 = vector.load %arg0[%c0_65, %c4, %c0_66] : memref<8x8x128xf32, #tpu.memory_space<vmem>>, vector<8x1x128xf32>
    %232 = vector.shape_cast %231 : vector<8x1x128xf32> to vector<8x128xf32>
    %233 = arith.cmpf ogt, %189, %11 : vector<8x128xf32>
    %234 = arith.extui %233 : vector<8x128xi1> to vector<8x128xi32>
    %235 = arith.sitofp %234 : vector<8x128xi32> to vector<8x128xf32>
    %236 = arith.mulf %8, %189 : vector<8x128xf32>
    %237 = arith.addf %236, %232 : vector<8x128xf32>
    %238 = arith.mulf %235, %11 : vector<8x128xf32>
    %239 = arith.subf %237, %238 : vector<8x128xf32>
    %240 = arith.cmpf ogt, %239, %11 : vector<8x128xf32>
    %241 = arith.extui %240 : vector<8x128xi1> to vector<8x128xi32>
    %242 = arith.sitofp %241 : vector<8x128xi32> to vector<8x128xf32>
    %cst_67 = arith.constant dense<0.000000e+00> : vector<8x128xf32>
    %243 = tpu.matmul %242, %0, %cst_67 {dimension_numbers = #tpu.dot_dimension_numbers<[1], [0], [0], [1], [0, 0, 1, 1], [], []>} : vector<8x128xf32>, vector<128x128xf32>, vector<8x128xf32> -> vector<8x128xf32>
    %244 = vector.broadcast %1 : vector<1x128xf32> to vector<8x128xf32>
    %245 = arith.addf %243, %244 : vector<8x128xf32>
    %246 = arith.cmpf ogt, %202, %17 : vector<8x128xf32>
    %247 = arith.extui %246 : vector<8x128xi1> to vector<8x128xi32>
    %248 = arith.sitofp %247 : vector<8x128xi32> to vector<8x128xf32>
    %249 = arith.mulf %14, %202 : vector<8x128xf32>
    %250 = arith.addf %249, %245 : vector<8x128xf32>
    %251 = arith.mulf %248, %17 : vector<8x128xf32>
    %252 = arith.subf %250, %251 : vector<8x128xf32>
    %253 = arith.cmpf ogt, %252, %17 : vector<8x128xf32>
    %254 = arith.extui %253 : vector<8x128xi1> to vector<8x128xi32>
    %255 = arith.sitofp %254 : vector<8x128xi32> to vector<8x128xf32>
    %cst_68 = arith.constant dense<0.000000e+00> : vector<8x128xf32>
    %256 = tpu.matmul %255, %2, %cst_68 {dimension_numbers = #tpu.dot_dimension_numbers<[1], [0], [0], [1], [0, 0, 1, 1], [], []>} : vector<8x128xf32>, vector<128x128xf32>, vector<8x128xf32> -> vector<8x128xf32>
    %257 = vector.broadcast %3 : vector<1x128xf32> to vector<8x128xf32>
    %258 = arith.addf %256, %257 : vector<8x128xf32>
    %259 = arith.cmpf ogt, %215, %23 : vector<8x128xf32>
    %260 = arith.extui %259 : vector<8x128xi1> to vector<8x128xi32>
    %261 = arith.sitofp %260 : vector<8x128xi32> to vector<8x128xf32>
    %262 = arith.mulf %20, %215 : vector<8x128xf32>
    %263 = arith.addf %262, %258 : vector<8x128xf32>
    %264 = arith.mulf %261, %23 : vector<8x128xf32>
    %265 = arith.subf %263, %264 : vector<8x128xf32>
    %266 = arith.cmpf ogt, %265, %23 : vector<8x128xf32>
    %267 = arith.extui %266 : vector<8x128xi1> to vector<8x128xi32>
    %268 = arith.sitofp %267 : vector<8x128xi32> to vector<8x128xf32>
    %cst_69 = arith.constant dense<0.000000e+00> : vector<8x128xf32>
    %269 = tpu.matmul %268, %4, %cst_69 {dimension_numbers = #tpu.dot_dimension_numbers<[1], [0], [0], [1], [0, 0, 1, 1], [], []>} : vector<8x128xf32>, vector<128x128xf32>, vector<8x128xf32> -> vector<8x128xf32>
    %270 = vector.broadcast %5 : vector<1x128xf32> to vector<8x128xf32>
    %271 = arith.addf %269, %270 : vector<8x128xf32>
    %272 = arith.mulf %26, %223 : vector<8x128xf32>
    %273 = arith.addf %272, %271 : vector<8x128xf32>
    %cst_70 = arith.constant 1.000000e+00 : f32
    %274 = vector.broadcast %cst_70 : f32 to vector<8x128xf32>
    %275 = arith.cmpf ogt, %273, %274 : vector<8x128xf32>
    %276 = arith.extui %275 : vector<8x128xi1> to vector<8x128xi32>
    %277 = arith.sitofp %276 : vector<8x128xi32> to vector<8x128xf32>
    %c0_71 = arith.constant 0 : index
    %c4_72 = arith.constant 4 : index
    %c0_73 = arith.constant 0 : index
    %278 = vector.load %arg14[%c0_71, %c4_72, %c0_73] : memref<8x8x128xf32, #tpu.memory_space<vmem>>, vector<8x1x128xf32>
    %279 = vector.shape_cast %278 : vector<8x1x128xf32> to vector<8x128xf32>
    %280 = vector.shape_cast %277 : vector<8x128xf32> to vector<8x1x128xf32>
    tpu.vector_store %arg14[%c0_71, %c4_72, %c0_73], %280 {strides = array<i32>} : memref<8x8x128xf32, #tpu.memory_space<vmem>>, vector<8x1x128xf32>,
    %c0_74 = arith.constant 0 : index
    %c5 = arith.constant 5 : index
    %c0_75 = arith.constant 0 : index
    %281 = vector.load %arg0[%c0_74, %c5, %c0_75] : memref<8x8x128xf32, #tpu.memory_space<vmem>>, vector<8x1x128xf32>
    %282 = vector.shape_cast %281 : vector<8x1x128xf32> to vector<8x128xf32>
    %283 = arith.cmpf ogt, %239, %11 : vector<8x128xf32>
    %284 = arith.extui %283 : vector<8x128xi1> to vector<8x128xi32>
    %285 = arith.sitofp %284 : vector<8x128xi32> to vector<8x128xf32>
    %286 = arith.mulf %8, %239 : vector<8x128xf32>
    %287 = arith.addf %286, %282 : vector<8x128xf32>
    %288 = arith.mulf %285, %11 : vector<8x128xf32>
    %289 = arith.subf %287, %288 : vector<8x128xf32>
    %290 = arith.cmpf ogt, %289, %11 : vector<8x128xf32>
    %291 = arith.extui %290 : vector<8x128xi1> to vector<8x128xi32>
    %292 = arith.sitofp %291 : vector<8x128xi32> to vector<8x128xf32>
    %cst_76 = arith.constant dense<0.000000e+00> : vector<8x128xf32>
    %293 = tpu.matmul %292, %0, %cst_76 {dimension_numbers = #tpu.dot_dimension_numbers<[1], [0], [0], [1], [0, 0, 1, 1], [], []>} : vector<8x128xf32>, vector<128x128xf32>, vector<8x128xf32> -> vector<8x128xf32>
    %294 = vector.broadcast %1 : vector<1x128xf32> to vector<8x128xf32>
    %295 = arith.addf %293, %294 : vector<8x128xf32>
    %296 = arith.cmpf ogt, %252, %17 : vector<8x128xf32>
    %297 = arith.extui %296 : vector<8x128xi1> to vector<8x128xi32>
    %298 = arith.sitofp %297 : vector<8x128xi32> to vector<8x128xf32>
    %299 = arith.mulf %14, %252 : vector<8x128xf32>
    %300 = arith.addf %299, %295 : vector<8x128xf32>
    %301 = arith.mulf %298, %17 : vector<8x128xf32>
    %302 = arith.subf %300, %301 : vector<8x128xf32>
    %303 = arith.cmpf ogt, %302, %17 : vector<8x128xf32>
    %304 = arith.extui %303 : vector<8x128xi1> to vector<8x128xi32>
    %305 = arith.sitofp %304 : vector<8x128xi32> to vector<8x128xf32>
    %cst_77 = arith.constant dense<0.000000e+00> : vector<8x128xf32>
    %306 = tpu.matmul %305, %2, %cst_77 {dimension_numbers = #tpu.dot_dimension_numbers<[1], [0], [0], [1], [0, 0, 1, 1], [], []>} : vector<8x128xf32>, vector<128x128xf32>, vector<8x128xf32> -> vector<8x128xf32>
    %307 = vector.broadcast %3 : vector<1x128xf32> to vector<8x128xf32>
    %308 = arith.addf %306, %307 : vector<8x128xf32>
    %309 = arith.cmpf ogt, %265, %23 : vector<8x128xf32>
    %310 = arith.extui %309 : vector<8x128xi1> to vector<8x128xi32>
    %311 = arith.sitofp %310 : vector<8x128xi32> to vector<8x128xf32>
    %312 = arith.mulf %20, %265 : vector<8x128xf32>
    %313 = arith.addf %312, %308 : vector<8x128xf32>
    %314 = arith.mulf %311, %23 : vector<8x128xf32>
    %315 = arith.subf %313, %314 : vector<8x128xf32>
    %316 = arith.cmpf ogt, %315, %23 : vector<8x128xf32>
    %317 = arith.extui %316 : vector<8x128xi1> to vector<8x128xi32>
    %318 = arith.sitofp %317 : vector<8x128xi32> to vector<8x128xf32>
    %cst_78 = arith.constant dense<0.000000e+00> : vector<8x128xf32>
    %319 = tpu.matmul %318, %4, %cst_78 {dimension_numbers = #tpu.dot_dimension_numbers<[1], [0], [0], [1], [0, 0, 1, 1], [], []>} : vector<8x128xf32>, vector<128x128xf32>, vector<8x128xf32> -> vector<8x128xf32>
    %320 = vector.broadcast %5 : vector<1x128xf32> to vector<8x128xf32>
    %321 = arith.addf %319, %320 : vector<8x128xf32>
    %322 = arith.mulf %26, %273 : vector<8x128xf32>
    %323 = arith.addf %322, %321 : vector<8x128xf32>
    %cst_79 = arith.constant 1.000000e+00 : f32
    %324 = vector.broadcast %cst_79 : f32 to vector<8x128xf32>
    %325 = arith.cmpf ogt, %323, %324 : vector<8x128xf32>
    %326 = arith.extui %325 : vector<8x128xi1> to vector<8x128xi32>
    %327 = arith.sitofp %326 : vector<8x128xi32> to vector<8x128xf32>
    %c0_80 = arith.constant 0 : index
    %c5_81 = arith.constant 5 : index
    %c0_82 = arith.constant 0 : index
    %328 = vector.load %arg14[%c0_80, %c5_81, %c0_82] : memref<8x8x128xf32, #tpu.memory_space<vmem>>, vector<8x1x128xf32>
    %329 = vector.shape_cast %328 : vector<8x1x128xf32> to vector<8x128xf32>
    %330 = vector.shape_cast %327 : vector<8x128xf32> to vector<8x1x128xf32>
    tpu.vector_store %arg14[%c0_80, %c5_81, %c0_82], %330 {strides = array<i32>} : memref<8x8x128xf32, #tpu.memory_space<vmem>>, vector<8x1x128xf32>,
    %c0_83 = arith.constant 0 : index
    %c6 = arith.constant 6 : index
    %c0_84 = arith.constant 0 : index
    %331 = vector.load %arg0[%c0_83, %c6, %c0_84] : memref<8x8x128xf32, #tpu.memory_space<vmem>>, vector<8x1x128xf32>
    %332 = vector.shape_cast %331 : vector<8x1x128xf32> to vector<8x128xf32>
    %333 = arith.cmpf ogt, %289, %11 : vector<8x128xf32>
    %334 = arith.extui %333 : vector<8x128xi1> to vector<8x128xi32>
    %335 = arith.sitofp %334 : vector<8x128xi32> to vector<8x128xf32>
    %336 = arith.mulf %8, %289 : vector<8x128xf32>
    %337 = arith.addf %336, %332 : vector<8x128xf32>
    %338 = arith.mulf %335, %11 : vector<8x128xf32>
    %339 = arith.subf %337, %338 : vector<8x128xf32>
    %340 = arith.cmpf ogt, %339, %11 : vector<8x128xf32>
    %341 = arith.extui %340 : vector<8x128xi1> to vector<8x128xi32>
    %342 = arith.sitofp %341 : vector<8x128xi32> to vector<8x128xf32>
    %cst_85 = arith.constant dense<0.000000e+00> : vector<8x128xf32>
    %343 = tpu.matmul %342, %0, %cst_85 {dimension_numbers = #tpu.dot_dimension_numbers<[1], [0], [0], [1], [0, 0, 1, 1], [], []>} : vector<8x128xf32>, vector<128x128xf32>, vector<8x128xf32> -> vector<8x128xf32>
    %344 = vector.broadcast %1 : vector<1x128xf32> to vector<8x128xf32>
    %345 = arith.addf %343, %344 : vector<8x128xf32>
    %346 = arith.cmpf ogt, %302, %17 : vector<8x128xf32>
    %347 = arith.extui %346 : vector<8x128xi1> to vector<8x128xi32>
    %348 = arith.sitofp %347 : vector<8x128xi32> to vector<8x128xf32>
    %349 = arith.mulf %14, %302 : vector<8x128xf32>
    %350 = arith.addf %349, %345 : vector<8x128xf32>
    %351 = arith.mulf %348, %17 : vector<8x128xf32>
    %352 = arith.subf %350, %351 : vector<8x128xf32>
    %353 = arith.cmpf ogt, %352, %17 : vector<8x128xf32>
    %354 = arith.extui %353 : vector<8x128xi1> to vector<8x128xi32>
    %355 = arith.sitofp %354 : vector<8x128xi32> to vector<8x128xf32>
    %cst_86 = arith.constant dense<0.000000e+00> : vector<8x128xf32>
    %356 = tpu.matmul %355, %2, %cst_86 {dimension_numbers = #tpu.dot_dimension_numbers<[1], [0], [0], [1], [0, 0, 1, 1], [], []>} : vector<8x128xf32>, vector<128x128xf32>, vector<8x128xf32> -> vector<8x128xf32>
    %357 = vector.broadcast %3 : vector<1x128xf32> to vector<8x128xf32>
    %358 = arith.addf %356, %357 : vector<8x128xf32>
    %359 = arith.cmpf ogt, %315, %23 : vector<8x128xf32>
    %360 = arith.extui %359 : vector<8x128xi1> to vector<8x128xi32>
    %361 = arith.sitofp %360 : vector<8x128xi32> to vector<8x128xf32>
    %362 = arith.mulf %20, %315 : vector<8x128xf32>
    %363 = arith.addf %362, %358 : vector<8x128xf32>
    %364 = arith.mulf %361, %23 : vector<8x128xf32>
    %365 = arith.subf %363, %364 : vector<8x128xf32>
    %366 = arith.cmpf ogt, %365, %23 : vector<8x128xf32>
    %367 = arith.extui %366 : vector<8x128xi1> to vector<8x128xi32>
    %368 = arith.sitofp %367 : vector<8x128xi32> to vector<8x128xf32>
    %cst_87 = arith.constant dense<0.000000e+00> : vector<8x128xf32>
    %369 = tpu.matmul %368, %4, %cst_87 {dimension_numbers = #tpu.dot_dimension_numbers<[1], [0], [0], [1], [0, 0, 1, 1], [], []>} : vector<8x128xf32>, vector<128x128xf32>, vector<8x128xf32> -> vector<8x128xf32>
    %370 = vector.broadcast %5 : vector<1x128xf32> to vector<8x128xf32>
    %371 = arith.addf %369, %370 : vector<8x128xf32>
    %372 = arith.mulf %26, %323 : vector<8x128xf32>
    %373 = arith.addf %372, %371 : vector<8x128xf32>
    %cst_88 = arith.constant 1.000000e+00 : f32
    %374 = vector.broadcast %cst_88 : f32 to vector<8x128xf32>
    %375 = arith.cmpf ogt, %373, %374 : vector<8x128xf32>
    %376 = arith.extui %375 : vector<8x128xi1> to vector<8x128xi32>
    %377 = arith.sitofp %376 : vector<8x128xi32> to vector<8x128xf32>
    %c0_89 = arith.constant 0 : index
    %c6_90 = arith.constant 6 : index
    %c0_91 = arith.constant 0 : index
    %378 = vector.load %arg14[%c0_89, %c6_90, %c0_91] : memref<8x8x128xf32, #tpu.memory_space<vmem>>, vector<8x1x128xf32>
    %379 = vector.shape_cast %378 : vector<8x1x128xf32> to vector<8x128xf32>
    %380 = vector.shape_cast %377 : vector<8x128xf32> to vector<8x1x128xf32>
    tpu.vector_store %arg14[%c0_89, %c6_90, %c0_91], %380 {strides = array<i32>} : memref<8x8x128xf32, #tpu.memory_space<vmem>>, vector<8x1x128xf32>,
    %c0_92 = arith.constant 0 : index
    %c7 = arith.constant 7 : index
    %c0_93 = arith.constant 0 : index
    %381 = vector.load %arg0[%c0_92, %c7, %c0_93] : memref<8x8x128xf32, #tpu.memory_space<vmem>>, vector<8x1x128xf32>
    %382 = vector.shape_cast %381 : vector<8x1x128xf32> to vector<8x128xf32>
    %383 = arith.cmpf ogt, %339, %11 : vector<8x128xf32>
    %384 = arith.extui %383 : vector<8x128xi1> to vector<8x128xi32>
    %385 = arith.sitofp %384 : vector<8x128xi32> to vector<8x128xf32>
    %386 = arith.mulf %8, %339 : vector<8x128xf32>
    %387 = arith.addf %386, %382 : vector<8x128xf32>
    %388 = arith.mulf %385, %11 : vector<8x128xf32>
    %389 = arith.subf %387, %388 : vector<8x128xf32>
    %390 = arith.cmpf ogt, %389, %11 : vector<8x128xf32>
    %391 = arith.extui %390 : vector<8x128xi1> to vector<8x128xi32>
    %392 = arith.sitofp %391 : vector<8x128xi32> to vector<8x128xf32>
    %cst_94 = arith.constant dense<0.000000e+00> : vector<8x128xf32>
    %393 = tpu.matmul %392, %0, %cst_94 {dimension_numbers = #tpu.dot_dimension_numbers<[1], [0], [0], [1], [0, 0, 1, 1], [], []>} : vector<8x128xf32>, vector<128x128xf32>, vector<8x128xf32> -> vector<8x128xf32>
    %394 = vector.broadcast %1 : vector<1x128xf32> to vector<8x128xf32>
    %395 = arith.addf %393, %394 : vector<8x128xf32>
    %396 = arith.cmpf ogt, %352, %17 : vector<8x128xf32>
    %397 = arith.extui %396 : vector<8x128xi1> to vector<8x128xi32>
    %398 = arith.sitofp %397 : vector<8x128xi32> to vector<8x128xf32>
    %399 = arith.mulf %14, %352 : vector<8x128xf32>
    %400 = arith.addf %399, %395 : vector<8x128xf32>
    %401 = arith.mulf %398, %17 : vector<8x128xf32>
    %402 = arith.subf %400, %401 : vector<8x128xf32>
    %403 = arith.cmpf ogt, %402, %17 : vector<8x128xf32>
    %404 = arith.extui %403 : vector<8x128xi1> to vector<8x128xi32>
    %405 = arith.sitofp %404 : vector<8x128xi32> to vector<8x128xf32>
    %cst_95 = arith.constant dense<0.000000e+00> : vector<8x128xf32>
    %406 = tpu.matmul %405, %2, %cst_95 {dimension_numbers = #tpu.dot_dimension_numbers<[1], [0], [0], [1], [0, 0, 1, 1], [], []>} : vector<8x128xf32>, vector<128x128xf32>, vector<8x128xf32> -> vector<8x128xf32>
    %407 = vector.broadcast %3 : vector<1x128xf32> to vector<8x128xf32>
    %408 = arith.addf %406, %407 : vector<8x128xf32>
    %409 = arith.cmpf ogt, %365, %23 : vector<8x128xf32>
    %410 = arith.extui %409 : vector<8x128xi1> to vector<8x128xi32>
    %411 = arith.sitofp %410 : vector<8x128xi32> to vector<8x128xf32>
    %412 = arith.mulf %20, %365 : vector<8x128xf32>
    %413 = arith.addf %412, %408 : vector<8x128xf32>
    %414 = arith.mulf %411, %23 : vector<8x128xf32>
    %415 = arith.subf %413, %414 : vector<8x128xf32>
    %416 = arith.cmpf ogt, %415, %23 : vector<8x128xf32>
    %417 = arith.extui %416 : vector<8x128xi1> to vector<8x128xi32>
    %418 = arith.sitofp %417 : vector<8x128xi32> to vector<8x128xf32>
    %cst_96 = arith.constant dense<0.000000e+00> : vector<8x128xf32>
    %419 = tpu.matmul %418, %4, %cst_96 {dimension_numbers = #tpu.dot_dimension_numbers<[1], [0], [0], [1], [0, 0, 1, 1], [], []>} : vector<8x128xf32>, vector<128x128xf32>, vector<8x128xf32> -> vector<8x128xf32>
    %420 = vector.broadcast %5 : vector<1x128xf32> to vector<8x128xf32>
    %421 = arith.addf %419, %420 : vector<8x128xf32>
    %422 = arith.mulf %26, %373 : vector<8x128xf32>
    %423 = arith.addf %422, %421 : vector<8x128xf32>
    %cst_97 = arith.constant 1.000000e+00 : f32
    %424 = vector.broadcast %cst_97 : f32 to vector<8x128xf32>
    %425 = arith.cmpf ogt, %423, %424 : vector<8x128xf32>
    %426 = arith.extui %425 : vector<8x128xi1> to vector<8x128xi32>
    %427 = arith.sitofp %426 : vector<8x128xi32> to vector<8x128xf32>
    %c0_98 = arith.constant 0 : index
    %c7_99 = arith.constant 7 : index
    %c0_100 = arith.constant 0 : index
    %428 = vector.load %arg14[%c0_98, %c7_99, %c0_100] : memref<8x8x128xf32, #tpu.memory_space<vmem>>, vector<8x1x128xf32>
    %429 = vector.shape_cast %428 : vector<8x1x128xf32> to vector<8x128xf32>
    %430 = vector.shape_cast %427 : vector<8x128xf32> to vector<8x1x128xf32>
    tpu.vector_store %arg14[%c0_98, %c7_99, %c0_100], %430 {strides = array<i32>} : memref<8x8x128xf32, #tpu.memory_space<vmem>>, vector<8x1x128xf32>,
    return
  }
}

</mosaic_0001>

<llo_original>
// kernel: tonic_ssn_forward.4
$region0: #{tonic_ssn_forward.4}
  #allocation0 [shape = 'u32[]', space=smem, size = 0x4, offset = 0x4, fixed_abs, tag = 'smem constant byte address 0x4 - core index']
  #allocation1 [shape = 'u32[144,128]{1,0:T(1,128)}', space=vmem, size = 0x12000, scoped, tag = 'internal scratch']
  %s0 = inlined_call_operand.vmem [shape: f32[16,110,8], index: 0, kind: input, shape index: {}]
  %s1 = inlined_call_operand.vmem [shape: f32[72,16], index: 1, kind: input, shape index: {}]
  %s2 = inlined_call_operand.vmem [shape: f32[1,16], index: 2, kind: input, shape index: {}]
  %s3 = inlined_call_operand.vmem [shape: f32[16,80,16], index: 3, kind: output, shape index: {}]
  %s4 = sld [smem:[#allocation0]]
  $region45: #{tonic_ssn_forward.4} parent=0
    _
  %s6 = ssub.s32 1, %s4
  %s7 = scalar_select 0, %s6, %s4
  loop: start=0, step=1, limit=18
  $region2: #{tonic_ssn_forward.4} parent=0 // loop_pre_header
    _
  $region3: #{tonic_ssn_forward.4} parent=0 // loop_header
    %s9 = sphi 0, %s13
    %p10 = scmp.ge.s32.totalorder %s9, 18
    %s19 = sphi 0, %s21
    %s22 = sphi 0, %s19
    %s23 = sphi 0, %s22
    %s39 = sphi 0, %s23
    %s43 = sphi 0, %s43
    %s45 = sphi 0, %s43
    %s46 = sphi 0, %s45
    %s60 = sphi 0, %s46
    %s64 = sphi 0, %s64
    %s66 = sphi 0, %s64
    %s67 = sphi 0, %s66
    %s81 = sphi 0, %s67
    %s87 = sphi 0, %s89
    %s90 = sphi 0, %s87
    %s91 = sphi 0, %s90
    %s107 = sphi 0, %s91
  $region4: #{tonic_ssn_forward.4} parent=0 // loop_header_branch
    %12 = sbr.rel (%p10) target = $region8
  $region5: #{tonic_ssn_forward.4} parent=0 // loop_body
    %s14 = ssub.s32 %s9, 1
    %s15 = ssub.s32 %s9, 2
    %s16 = sadd.s32 %s9, 1
    %s17 = ssub.s32 %s9, %s16
    %p18 = scmp.eq.s32.totalorder %s17, 0
    %s20 = sadd.s32 %s19, 1
    %s21 = scalar_select %p18, %s19, %s20
    %p24 = pneg %p18
    %p25 = scmp.eq.s32.totalorder %s9, 15
    %p26 = por %p24, %p25
    %p27 = scmp.ne.s32.totalorder %s19, %s22
    %p28 = scmp.eq.s32.totalorder %s9, 0
    %p29 = por %p27, %p28
    %p30 = scmp.ne.s32.totalorder %s19, %s22
    %p31 = scmp.eq.s32.totalorder %s14, 15
    %p32 = por %p30, %p31
    %p33 = scmp.ne.s32.totalorder %s22, %s23
    %p34 = scmp.eq.s32.totalorder %s14, 0
    %p35 = por %p33, %p34
    %p36 = scmp.ne.s32.totalorder %s22, %s23
    %p37 = scmp.eq.s32.totalorder %s15, 15
    %p38 = por %p36, %p37
    %p40 = scmp.ne.s32.totalorder %s23, %s39
    %p41 = scmp.eq.s32.totalorder %s15, 0
    %p42 = por %p40, %p41
    %s44 = sadd.s32 %s43, 1
    %p47 = scmp.eq.s32.totalorder %s9, 15
    %p48 = scmp.ne.s32.totalorder %s43, %s45
    %p49 = scmp.eq.s32.totalorder %s9, 0
    %p50 = por %p48, %p49
    %p51 = scmp.ne.s32.totalorder %s43, %s45
    %p52 = scmp.eq.s32.totalorder %s14, 15
    %p53 = por %p51, %p52
    %p54 = scmp.ne.s32.totalorder %s45, %s46
    %p55 = scmp.eq.s32.totalorder %s14, 0
    %p56 = por %p54, %p55
    %p57 = scmp.ne.s32.totalorder %s45, %s46
    %p58 = scmp.eq.s32.totalorder %s15, 15
    %p59 = por %p57, %p58
    %p61 = scmp.ne.s32.totalorder %s46, %s60
    %p62 = scmp.eq.s32.totalorder %s15, 0
    %p63 = por %p61, %p62
    %s65 = sadd.s32 %s64, 1
    %p68 = scmp.eq.s32.totalorder %s9, 15
    %p69 = scmp.ne.s32.totalorder %s64, %s66
    %p70 = scmp.eq.s32.totalorder %s9, 0
    %p71 = por %p69, %p70
    %p72 = scmp.ne.s32.totalorder %s64, %s66
    %p73 = scmp.eq.s32.totalorder %s14, 15
    %p74 = por %p72, %p73
    %p75 = scmp.ne.s32.totalorder %s66, %s67
    %p76 = scmp.eq.s32.totalorder %s14, 0
    %p77 = por %p75, %p76
    %p78 = scmp.ne.s32.totalorder %s66, %s67
    %p79 = scmp.eq.s32.totalorder %s15, 15
    %p80 = por %p78, %p79
    %p82 = scmp.ne.s32.totalorder %s67, %s81
    %p83 = scmp.eq.s32.totalorder %s15, 0
    %p84 = por %p82, %p83
    %s85 = ssub.s32 %s9, %s16
    %p86 = scmp.eq.s32.totalorder %s85, 0
    %s88 = sadd.s32 %s87, 1
    %s89 = scalar_select %p86, %s87, %s88
    %p92 = pneg %p86
    %p93 = scmp.eq.s32.totalorder %s9, 15
    %p94 = por %p92, %p93
    %p95 = scmp.ne.s32.totalorder %s87, %s90
    %p96 = scmp.eq.s32.totalorder %s9, 0
    %p97 = por %p95, %p96
    %p98 = scmp.ne.s32.totalorder %s87, %s90
    %p99 = scmp.eq.s32.totalorder %s14, 15
    %p100 = por %p98, %p99
    %p101 = scmp.ne.s32.totalorder %s90, %s91
    %p102 = scmp.eq.s32.totalorder %s14, 0
    %p103 = por %p101, %p102
    %p104 = scmp.ne.s32.totalorder %s90, %s91
    %p105 = scmp.eq.s32.totalorder %s15, 15
    %p106 = por %p104, %p105
    %p108 = scmp.ne.s32.totalorder %s91, %s107
    %p109 = scmp.eq.s32.totalorder %s15, 0
    %p110 = por %p108, %p109
    %p111 = scmp.le.s32.totalorder 1, %s9
    %p112 = scmp.lt.s32.totalorder %s9, 17
    %p113 = pnand %p111, %p112
    %p114 = pneg %p113
    // Predicated region
    $region9: #{tonic_ssn_forward.4} parent=5 // pred_check
      _
    $region10: #{tonic_ssn_forward.4} parent=5 // pred_check_branch
      %116 = sbr.rel (%p113) target = $region12
    $region11: #{tonic_ssn_forward.4} parent=5 // pred_region
      %s117 = ssub.s32 %s9, 1
      // Predicated region
      $region13: #{tonic_ssn_forward.4} parent=11 // pred_check
        %p118 = pneg %p56
      $region14: #{tonic_ssn_forward.4} parent=11 // pred_check_branch
        %120 = sbr.rel (%p118) target = $region16
      $region15: #{tonic_ssn_forward.4} parent=11 // pred_region
        _
      $region16: #{tonic_ssn_forward.4} parent=11 // pred_fallthru
        _
      // Predicated region
      $region17: #{tonic_ssn_forward.4} parent=11 // pred_check
        %p121 = pneg %p77
      $region18: #{tonic_ssn_forward.4} parent=11 // pred_check_branch
        %123 = sbr.rel (%p121) target = $region20
      $region19: #{tonic_ssn_forward.4} parent=11 // pred_region
        _
      $region20: #{tonic_ssn_forward.4} parent=11 // pred_fallthru
        _
    $region12: #{tonic_ssn_forward.4} parent=5 // pred_fallthru
      _
    %p124 = scmp.lt.s32.totalorder %s9, 16
    // Predicated region
    $region21: #{tonic_ssn_forward.4} parent=5 // pred_check
      %p125 = pneg %p124
    $region22: #{tonic_ssn_forward.4} parent=5 // pred_check_branch
      %127 = sbr.rel (%p125) target = $region24
    $region23: #{tonic_ssn_forward.4} parent=5 // pred_region
      // Predicated region
      $region25: #{tonic_ssn_forward.4} parent=23 // pred_check
        %p128 = pneg %p29
      $region26: #{tonic_ssn_forward.4} parent=23 // pred_check_branch
        %130 = sbr.rel (%p128) target = $region28
      $region27: #{tonic_ssn_forward.4} parent=23 // pred_region
        %p131 = scmp.lt.s32.totalorder %s9, 15
        %s132 = scalar_select %p131, %s9, 15
        %s133 = smul.addr %s132, 14
        %s134 = smul.addr %s133, 8
        %s135 = scalar_lea.vmem %s0, %s134
      $region28: #{tonic_ssn_forward.4} parent=23 // pred_fallthru
        _
    $region24: #{tonic_ssn_forward.4} parent=5 // pred_fallthru
      _
    %p136 = scmp.le.s32.totalorder 1, %s9
    %p137 = scmp.lt.s32.totalorder %s9, 17
    %p138 = pnand %p136, %p137
    %p139 = pneg %p138
    // Predicated region
    $region29: #{tonic_ssn_forward.4} parent=5 // pred_check
      _
    $region30: #{tonic_ssn_forward.4} parent=5 // pred_check_branch
      %141 = sbr.rel (%p138) target = $region32
    $region31: #{tonic_ssn_forward.4} parent=5 // pred_region
      %s142 = ssub.s32 %s9, 1
      %p143 = scmp.lt.s32.totalorder %s14, 15
      %s144 = scalar_select %p143, %s14, 15
      %s145 = smul.addr %s144, 14
      %s146 = smul.addr %s145, 8
      %s147 = scalar_lea.vmem %s0, %s146
      %p148 = pneg %p35
      %p149 = pneg %p32
      %p150 = pneg %p56
      %p151 = pneg %p53
      %p152 = pneg %p77
      %p153 = pneg %p74
      %p154 = pneg %p103
      %p155 = pneg %p100
      %p156 = scmp.lt.s32.totalorder %s14, 15
      %s157 = scalar_select %p156, %s14, 15
      %s158 = smul.addr %s157, 10
      %s159 = smul.addr %s158, 8
      %s160 = scalar_lea.vmem %s3, %s159
      %p161 = scmp.lt.s32.totalorder %s14, 15
      %s162 = scalar_select %p161, %s14, 15
      %s163 = smul.addr %s162, 14
      %s164 = smul.addr %s163, 8
      %s165 = scalar_lea.vmem %s0, %s164
      %p166 = scmp.lt.s32.totalorder %s14, 15
      %s167 = scalar_select %p166, %s14, 15
      %s168 = smul.addr %s167, 10
      %s169 = smul.addr %s168, 8
      %s170 = scalar_lea.vmem %s3, %s169
      %v171 = vld [vmem:[%s165] sm:$0xff]
      %v172 = vld [vmem:[%s165 + $0x8] sm:$0xff]
      %v173 = vld [vmem:[%s165 + $0x10] sm:$0xff]
      %v174 = vld [vmem:[%s165 + $0x18] sm:$0xff]
      %v175 = vld [vmem:[%s165 + $0x20] sm:$0xff]
      %v176 = vld [vmem:[%s165 + $0x28] sm:$0xff]
      %v177 = vld [vmem:[%s165 + $0x30] sm:$0xff]
      %v178 = vld [vmem:[%s165 + $0x38] sm:$0xff]
      %v179 = vld [vmem:[%s165 + $0x40] sm:$0xff]
      %v180 = vld [vmem:[%s165 + $0x48] sm:$0xff]
      %v181 = vld [vmem:[%s1] sm:$0xff]
      %v182 = vld [vmem:[%s165 + $0x1] sm:$0xff]
      %v183 = vld [vmem:[%s165 + $0x9] sm:$0xff]
      %v184 = vld [vmem:[%s165 + $0x11] sm:$0xff]
      %v185 = vld [vmem:[%s165 + $0x19] sm:$0xff]
      %v186 = vld [vmem:[%s165 + $0x21] sm:$0xff]
      %v187 = vld [vmem:[%s165 + $0x29] sm:$0xff]
      %v188 = vld [vmem:[%s165 + $0x31] sm:$0xff]
      %v189 = vld [vmem:[%s165 + $0x39] sm:$0xff]
      %v190 = vld [vmem:[%s165 + $0x41] sm:$0xff]
      %v191 = vld [vmem:[%s165 + $0x49] sm:$0xff]
      %v192 = vld [vmem:[%s1 + $0x8] sm:$0xff]
      %vm193 = vcmask 64512
      %v195 = vsel %vm193, %v182, 0
      %v198 = vsel %vm193, %v183, 0
      %v201 = vsel %vm193, %v184, 0
      %v204 = vsel %vm193, %v185, 0
      %v207 = vsel %vm193, %v186, 0
      %v210 = vsel %vm193, %v187, 0
      %v213 = vsel %vm193, %v188, 0
      %v216 = vsel %vm193, %v189, 0
      %v219 = vsel %vm193, %v190, 0
      %v222 = vsel %vm193, %v191, 0
      %224 = vmatprep.subr.mxu0 0.0
      %225 = vmatpush1.msra.mxu0 %v192
      %226 = vmatprep.subr.mxu0 0.0
      %227 = vmatpush1.msra.mxu0 0.0
      %228 = vmatprep.subr.mxu0 0.0
      %229 = vmatpush1.msra.mxu0 0.0
      %230 = vmatprep.subr.mxu0 0.0
      %231 = vmatpush1.msra.mxu0 0.0
      %232 = vmatprep.subr.mxu0 0.0
      %233 = vmatpush1.msra.mxu0 0.0
      %234 = vmatprep.subr.mxu0 0.0
      %235 = vmatpush1.msra.mxu0 0.0
      %236 = vmatprep.subr.mxu0 0.0
      %237 = vmatpush1.msra.mxu0 0.0
      %238 = vmatprep.subr.mxu0 0.0
      %239 = vmatpush1.msra.mxu0 0.0
      %240 = vmatprep.subr.mxu0 0.0
      %241 = vmatpush1.msra.mxu0 0.0
      %242 = vmatprep.subr.mxu0 0.0
      %243 = vmatpush1.msra.mxu0 0.0
      %244 = vmatprep.subr.mxu0 0.0
      %245 = vmatpush1.msra.mxu0 0.0
      %246 = vmatprep.subr.mxu0 0.0
      %247 = vmatpush1.msra.mxu0 0.0
      %248 = vmatprep.subr.mxu0 0.0
      %249 = vmatpush1.msra.mxu0 0.0
      %250 = vmatprep.subr.mxu0 0.0
      %251 = vmatpush1.msra.mxu0 0.0
      %252 = vmatprep.subr.mxu0 0.0
      %253 = vmatpush1.msra.mxu0 0.0
      %254 = vmatprep.subr.mxu0 0.0
      %255 = vmatpush1.msra.mxu0 0.0
      %256 = vmatprep.subr.mxu0 0.0
      %257 = vmatpush1.msra.mxu0 0.0
      %258 = vmatprep.subr.mxu0 0.0
      %259 = vmatpush1.msra.mxu0 0.0
      %260 = vmatprep.subr.mxu0 0.0
      %261 = vmatpush1.msra.mxu0 0.0
      %262 = vmatprep.subr.mxu0 0.0
      %263 = vmatpush1.msra.mxu0 0.0
      %264 = vmatprep.subr.mxu0 0.0
      %265 = vmatpush1.msra.mxu0 0.0
      %266 = vmatprep.subr.mxu0 0.0
      %267 = vmatpush1.msra.mxu0 0.0
      %268 = vmatprep.subr.mxu0 0.0
      %269 = vmatpush1.msra.mxu0 0.0
      %270 = vmatprep.subr.mxu0 0.0
      %271 = vmatpush1.msra.mxu0 0.0
      %272 = vmatprep.subr.mxu0 0.0
      %273 = vmatpush1.msra.mxu0 0.0
      %274 = vmatprep.subr.mxu0 0.0
      %275 = vmatpush1.msra.mxu0 0.0
      %276 = vmatprep.subr.mxu0 0.0
      %277 = vmatpush1.msra.mxu0 0.0
      %278 = vmatprep.subr.mxu0 0.0
      %279 = vmatpush1.msra.mxu0 0.0
      %280 = vmatprep.subr.mxu0 0.0
      %281 = vmatpush1.msra.mxu0 0.0
      %282 = vmatprep.subr.mxu0 0.0
      %283 = vmatpush1.msra.mxu0 0.0
      %284 = vmatprep.subr.mxu0 0.0
      %285 = vmatpush1.msra.mxu0 0.0
      %286 = vmatprep.subr.mxu0 0.0
      %287 = vmatpush1.msra.mxu0 0.0
      %288 = vmatprep.mubr.f32.mxu0 0.0
      %289 = vmatmul.mubr.f32.gmra.mrb[0].mxu0 %v195
      %v290 = vpop.f32.mrb[0].mxu0
      %v291 = vadd.f32 0.0, %v290
      %v292 = vpop.f32.mrb[0].mxu0
      %293 = vmatprep.mubr.f32.mxu0 0.0
      %294 = vmatmul.mubr.f32.gmra.mrb[0].mxu0 %v198
      %v295 = vpop.f32.mrb[0].mxu0
      %v296 = vadd.f32 0.0, %v295
      %v297 = vpop.f32.mrb[0].mxu0
      %298 = vmatprep.mubr.f32.mxu0 0.0
      %299 = vmatmul.mubr.f32.gmra.mrb[0].mxu0 %v201
      %v300 = vpop.f32.mrb[0].mxu0
      %v301 = vadd.f32 0.0, %v300
      %v302 = vpop.f32.mrb[0].mxu0
      %303 = vmatprep.mubr.f32.mxu0 0.0
      %304 = vmatmul.mubr.f32.gmra.mrb[0].mxu0 %v204
      %v305 = vpop.f32.mrb[0].mxu0
      %v306 = vadd.f32 0.0, %v305
      %v307 = vpop.f32.mrb[0].mxu0
      %308 = vmatprep.mubr.f32.mxu0 0.0
      %309 = vmatmul.mubr.f32.gmra.mrb[0].mxu0 %v207
      %v310 = vpop.f32.mrb[0].mxu0
      %v311 = vadd.f32 0.0, %v310
      %v312 = vpop.f32.mrb[0].mxu0
      %313 = vmatprep.mubr.f32.mxu0 0.0
      %314 = vmatmul.mubr.f32.gmra.mrb[0].mxu0 %v210
      %v315 = vpop.f32.mrb[0].mxu0
      %v316 = vadd.f32 0.0, %v315
      %v317 = vpop.f32.mrb[0].mxu0
      %318 = vmatprep.mubr.f32.mxu0 0.0
      %319 = vmatmul.mubr.f32.gmra.mrb[0].mxu0 %v213
      %v320 = vpop.f32.mrb[0].mxu0
      %v321 = vadd.f32 0.0, %v320
      %v322 = vpop.f32.mrb[0].mxu0
      %323 = vmatprep.mubr.f32.mxu0 0.0
      %324 = vmatmul.mubr.f32.gmra.mrb[0].mxu0 %v216
      %v325 = vpop.f32.mrb[0].mxu0
      %v326 = vadd.f32 0.0, %v325
      %v327 = vpop.f32.mrb[0].mxu0
      %328 = vmatprep.mubr.f32.mxu0 0.0
      %329 = vmatmul.mubr.f32.gmra.mrb[0].mxu0 %v219
      %v330 = vpop.f32.mrb[0].mxu0
      %v331 = vadd.f32 0.0, %v330
      %v332 = vpop.f32.mrb[0].mxu0
      %333 = vmatprep.mubr.f32.mxu0 0.0
      %334 = vmatmul.mubr.f32.gmra.mrb[0].mxu0 %v222
      %v335 = vpop.f32.mrb[0].mxu0
      %v336 = vadd.f32 0.0, %v335
      %v337 = vpop.f32.mrb[0].mxu0
      %338 = vdwg.mxu0
      %v340 = vsel %vm193, %v171, 0
      %v343 = vsel %vm193, %v172, 0
      %v346 = vsel %vm193, %v173, 0
      %v349 = vsel %vm193, %v174, 0
      %v352 = vsel %vm193, %v175, 0
      %v355 = vsel %vm193, %v176, 0
      %v358 = vsel %vm193, %v177, 0
      %v361 = vsel %vm193, %v178, 0
      %v364 = vsel %vm193, %v179, 0
      %v367 = vsel %vm193, %v180, 0
      %369 = vmatprep.subr.mxu0 0.0
      %370 = vmatpush1.msra.mxu0 %v181
      %371 = vmatprep.subr.mxu0 0.0
      %372 = vmatpush1.msra.mxu0 0.0
      %373 = vmatprep.subr.mxu0 0.0
      %374 = vmatpush1.msra.mxu0 0.0
      %375 = vmatprep.subr.mxu0 0.0
      %376 = vmatpush1.msra.mxu0 0.0
      %377 = vmatprep.subr.mxu0 0.0
      %378 = vmatpush1.msra.mxu0 0.0
      %379 = vmatprep.subr.mxu0 0.0
      %380 = vmatpush1.msra.mxu0 0.0
      %381 = vmatprep.subr.mxu0 0.0
      %382 = vmatpush1.msra.mxu0 0.0
      %383 = vmatprep.subr.mxu0 0.0
      %384 = vmatpush1.msra.mxu0 0.0
      %385 = vmatprep.subr.mxu0 0.0
      %386 = vmatpush1.msra.mxu0 0.0
      %387 = vmatprep.subr.mxu0 0.0
      %388 = vmatpush1.msra.mxu0 0.0
      %389 = vmatprep.subr.mxu0 0.0
      %390 = vmatpush1.msra.mxu0 0.0
      %391 = vmatprep.subr.mxu0 0.0
      %392 = vmatpush1.msra.mxu0 0.0
      %393 = vmatprep.subr.mxu0 0.0
      %394 = vmatpush1.msra.mxu0 0.0
      %395 = vmatprep.subr.mxu0 0.0
      %396 = vmatpush1.msra.mxu0 0.0
      %397 = vmatprep.subr.mxu0 0.0
      %398 = vmatpush1.msra.mxu0 0.0
      %399 = vmatprep.subr.mxu0 0.0
      %400 = vmatpush1.msra.mxu0 0.0
      %401 = vmatprep.subr.mxu0 0.0
      %402 = vmatpush1.msra.mxu0 0.0
      %403 = vmatprep.subr.mxu0 0.0
      %404 = vmatpush1.msra.mxu0 0.0
      %405 = vmatprep.subr.mxu0 0.0
      %406 = vmatpush1.msra.mxu0 0.0
      %407 = vmatprep.subr.mxu0 0.0
      %408 = vmatpush1.msra.mxu0 0.0
      %409 = vmatprep.subr.mxu0 0.0
      %410 = vmatpush1.msra.mxu0 0.0
      %411 = vmatprep.subr.mxu0 0.0
      %412 = vmatpush1.msra.mxu0 0.0
      %413 = vmatprep.subr.mxu0 0.0
      %414 = vmatpush1.msra.mxu0 0.0
      %415 = vmatprep.subr.mxu0 0.0
      %416 = vmatpush1.msra.mxu0 0.0
      %417 = vmatprep.subr.mxu0 0.0
      %418 = vmatpush1.msra.mxu0 0.0
      %419 = vmatprep.subr.mxu0 0.0
      %420 = vmatpush1.msra.mxu0 0.0
      %421 = vmatprep.subr.mxu0 0.0
      %422 = vmatpush1.msra.mxu0 0.0
      %423 = vmatprep.subr.mxu0 0.0
      %424 = vmatpush1.msra.mxu0 0.0
      %425 = vmatprep.subr.mxu0 0.0
      %426 = vmatpush1.msra.mxu0 0.0
      %427 = vmatprep.subr.mxu0 0.0
      %428 = vmatpush1.msra.mxu0 0.0
      %429 = vmatprep.subr.mxu0 0.0
      %430 = vmatpush1.msra.mxu0 0.0
      %431 = vmatprep.subr.mxu0 0.0
      %432 = vmatpush1.msra.mxu0 0.0
      %433 = vmatprep.mubr.f32.mxu0 0.0
      %434 = vmatmul.mubr.f32.gmra.mrb[0].mxu0 %v340
      %v435 = vpop.f32.mrb[0].mxu0
      %v436 = vadd.f32 %v291, %v435
      %v437 = vpop.f32.mrb[0].mxu0
      %438 = vmatprep.mubr.f32.mxu0 0.0
      %439 = vmatmul.mubr.f32.gmra.mrb[0].mxu0 %v343
      %v440 = vpop.f32.mrb[0].mxu0
      %v441 = vadd.f32 %v296, %v440
      %v442 = vpop.f32.mrb[0].mxu0
      %443 = vmatprep.mubr.f32.mxu0 0.0
      %444 = vmatmul.mubr.f32.gmra.mrb[0].mxu0 %v346
      %v445 = vpop.f32.mrb[0].mxu0
      %v446 = vadd.f32 %v301, %v445
      %v447 = vpop.f32.mrb[0].mxu0
      %448 = vmatprep.mubr.f32.mxu0 0.0
      %449 = vmatmul.mubr.f32.gmra.mrb[0].mxu0 %v349
      %v450 = vpop.f32.mrb[0].mxu0
      %v451 = vadd.f32 %v306, %v450
      %v452 = vpop.f32.mrb[0].mxu0
      %453 = vmatprep.mubr.f32.mxu0 0.0
      %454 = vmatmul.mubr.f32.gmra.mrb[0].mxu0 %v352
      %v455 = vpop.f32.mrb[0].mxu0
      %v456 = vadd.f32 %v311, %v455
      %v457 = vpop.f32.mrb[0].mxu0
      %458 = vmatprep.mubr.f32.mxu0 0.0
      %459 = vmatmul.mubr.f32.gmra.mrb[0].mxu0 %v355
      %v460 = vpop.f32.mrb[0].mxu0
      %v461 = vadd.f32 %v316, %v460
      %v462 = vpop.f32.mrb[0].mxu0
      %463 = vmatprep.mubr.f32.mxu0 0.0
      %464 = vmatmul.mubr.f32.gmra.mrb[0].mxu0 %v358
      %v465 = vpop.f32.mrb[0].mxu0
      %v466 = vadd.f32 %v321, %v465
      %v467 = vpop.f32.mrb[0].mxu0
      %468 = vmatprep.mubr.f32.mxu0 0.0
      %469 = vmatmul.mubr.f32.gmra.mrb[0].mxu0 %v361
      %v470 = vpop.f32.mrb[0].mxu0
      %v471 = vadd.f32 %v326, %v470
      %v472 = vpop.f32.mrb[0].mxu0
      %473 = vmatprep.mubr.f32.mxu0 0.0
      %474 = vmatmul.mubr.f32.gmra.mrb[0].mxu0 %v364
      %v475 = vpop.f32.mrb[0].mxu0
      %v476 = vadd.f32 %v331, %v475
      %v477 = vpop.f32.mrb[0].mxu0
      %478 = vmatprep.mubr.f32.mxu0 0.0
      %479 = vmatmul.mubr.f32.gmra.mrb[0].mxu0 %v367
      %v480 = vpop.f32.mrb[0].mxu0
      %v481 = vadd.f32 %v336, %v480
      %v482 = vpop.f32.mrb[0].mxu0
      %483 = vdwg.mxu0
      %v484 = vld [vmem:[%s165 + $0x2] sm:$0xff]
      %v485 = vld [vmem:[%s165 + $0xa] sm:$0xff]
      %v486 = vld [vmem:[%s165 + $0x12] sm:$0xff]
      %v487 = vld [vmem:[%s165 + $0x1a] sm:$0xff]
      %v488 = vld [vmem:[%s165 + $0x22] sm:$0xff]
      %v489 = vld [vmem:[%s165 + $0x2a] sm:$0xff]
      %v490 = vld [vmem:[%s165 + $0x32] sm:$0xff]
      %v491 = vld [vmem:[%s165 + $0x3a] sm:$0xff]
      %v492 = vld [vmem:[%s165 + $0x42] sm:$0xff]
      %v493 = vld [vmem:[%s165 + $0x4a] sm:$0xff]
      %v494 = vld [vmem:[%s1 + $0x10] sm:$0xff]
      %v496 = vsel %vm193, %v484, 0
      %v499 = vsel %vm193, %v485, 0
      %v502 = vsel %vm193, %v486, 0
      %v505 = vsel %vm193, %v487, 0
      %v508 = vsel %vm193, %v488, 0
      %v511 = vsel %vm193, %v489, 0
      %v514 = vsel %vm193, %v490, 0
      %v517 = vsel %vm193, %v491, 0
      %v520 = vsel %vm193, %v492, 0
      %v523 = vsel %vm193, %v493, 0
      %525 = vmatprep.subr.mxu0 0.0
      %526 = vmatpush1.msra.mxu0 %v494
      %527 = vmatprep.subr.mxu0 0.0
      %528 = vmatpush1.msra.mxu0 0.0
      %529 = vmatprep.subr.mxu0 0.0
      %530 = vmatpush1.msra.mxu0 0.0
      %531 = vmatprep.subr.mxu0 0.0
      %532 = vmatpush1.msra.mxu0 0.0
      %533 = vmatprep.subr.mxu0 0.0
      %534 = vmatpush1.msra.mxu0 0.0
      %535 = vmatprep.subr.mxu0 0.0
      %536 = vmatpush1.msra.mxu0 0.0
      %537 = vmatprep.subr.mxu0 0.0
      %538 = vmatpush1.msra.mxu0 0.0
      %539 = vmatprep.subr.mxu0 0.0
      %540 = vmatpush1.msra.mxu0 0.0
      %541 = vmatprep.subr.mxu0 0.0
      %542 = vmatpush1.msra.mxu0 0.0
      %543 = vmatprep.subr.mxu0 0.0
      %544 = vmatpush1.msra.mxu0 0.0
      %545 = vmatprep.subr.mxu0 0.0
      %546 = vmatpush1.msra.mxu0 0.0
      %547 = vmatprep.subr.mxu0 0.0
      %548 = vmatpush1.msra.mxu0 0.0
      %549 = vmatprep.subr.mxu0 0.0
      %550 = vmatpush1.msra.mxu0 0.0
      %551 = vmatprep.subr.mxu0 0.0
      %552 = vmatpush1.msra.mxu0 0.0
      %553 = vmatprep.subr.mxu0 0.0
      %554 = vmatpush1.msra.mxu0 0.0
      %555 = vmatprep.subr.mxu0 0.0
      %556 = vmatpush1.msra.mxu0 0.0
      %557 = vmatprep.subr.mxu0 0.0
      %558 = vmatpush1.msra.mxu0 0.0
      %559 = vmatprep.subr.mxu0 0.0
      %560 = vmatpush1.msra.mxu0 0.0
      %561 = vmatprep.subr.mxu0 0.0
      %562 = vmatpush1.msra.mxu0 0.0
      %563 = vmatprep.subr.mxu0 0.0
      %564 = vmatpush1.msra.mxu0 0.0
      %565 = vmatprep.subr.mxu0 0.0
      %566 = vmatpush1.msra.mxu0 0.0
      %567 = vmatprep.subr.mxu0 0.0
      %568 = vmatpush1.msra.mxu0 0.0
      %569 = vmatprep.subr.mxu0 0.0
      %570 = vmatpush1.msra.mxu0 0.0
      %571 = vmatprep.subr.mxu0 0.0
      %572 = vmatpush1.msra.mxu0 0.0
      %573 = vmatprep.subr.mxu0 0.0
      %574 = vmatpush1.msra.mxu0 0.0
      %575 = vmatprep.subr.mxu0 0.0
      %576 = vmatpush1.msra.mxu0 0.0
      %577 = vmatprep.subr.mxu0 0.0
      %578 = vmatpush1.msra.mxu0 0.0
      %579 = vmatprep.subr.mxu0 0.0
      %580 = vmatpush1.msra.mxu0 0.0
      %581 = vmatprep.subr.mxu0 0.0
      %582 = vmatpush1.msra.mxu0 0.0
      %583 = vmatprep.subr.mxu0 0.0
      %584 = vmatpush1.msra.mxu0 0.0
      %585 = vmatprep.subr.mxu0 0.0
      %586 = vmatpush1.msra.mxu0 0.0
      %587 = vmatprep.subr.mxu0 0.0
      %588 = vmatpush1.msra.mxu0 0.0
      %589 = vmatprep.mubr.f32.mxu0 0.0
      %590 = vmatmul.mubr.f32.gmra.mrb[0].mxu0 %v496
      %v591 = vpop.f32.mrb[0].mxu0
      %v592 = vadd.f32 0.0, %v591
      %v593 = vpop.f32.mrb[0].mxu0
      %594 = vmatprep.mubr.f32.mxu0 0.0
      %595 = vmatmul.mubr.f32.gmra.mrb[0].mxu0 %v499
      %v596 = vpop.f32.mrb[0].mxu0
      %v597 = vadd.f32 0.0, %v596
      %v598 = vpop.f32.mrb[0].mxu0
      %599 = vmatprep.mubr.f32.mxu0 0.0
      %600 = vmatmul.mubr.f32.gmra.mrb[0].mxu0 %v502
      %v601 = vpop.f32.mrb[0].mxu0
      %v602 = vadd.f32 0.0, %v601
      %v603 = vpop.f32.mrb[0].mxu0
      %604 = vmatprep.mubr.f32.mxu0 0.0
      %605 = vmatmul.mubr.f32.gmra.mrb[0].mxu0 %v505
      %v606 = vpop.f32.mrb[0].mxu0
      %v607 = vadd.f32 0.0, %v606
      %v608 = vpop.f32.mrb[0].mxu0
      %609 = vmatprep.mubr.f32.mxu0 0.0
      %610 = vmatmul.mubr.f32.gmra.mrb[0].mxu0 %v508
      %v611 = vpop.f32.mrb[0].mxu0
      %v612 = vadd.f32 0.0, %v611
      %v613 = vpop.f32.mrb[0].mxu0
      %614 = vmatprep.mubr.f32.mxu0 0.0
      %615 = vmatmul.mubr.f32.gmra.mrb[0].mxu0 %v511
      %v616 = vpop.f32.mrb[0].mxu0
      %v617 = vadd.f32 0.0, %v616
      %v618 = vpop.f32.mrb[0].mxu0
      %619 = vmatprep.mubr.f32.mxu0 0.0
      %620 = vmatmul.mubr.f32.gmra.mrb[0].mxu0 %v514
      %v621 = vpop.f32.mrb[0].mxu0
      %v622 = vadd.f32 0.0, %v621
      %v623 = vpop.f32.mrb[0].mxu0
      %624 = vmatprep.mubr.f32.mxu0 0.0
      %625 = vmatmul.mubr.f32.gmra.mrb[0].mxu0 %v517
      %v626 = vpop.f32.mrb[0].mxu0
      %v627 = vadd.f32 0.0, %v626
      %v628 = vpop.f32.mrb[0].mxu0
      %629 = vmatprep.mubr.f32.mxu0 0.0
      %630 = vmatmul.mubr.f32.gmra.mrb[0].mxu0 %v520
      %v631 = vpop.f32.mrb[0].mxu0
      %v632 = vadd.f32 0.0, %v631
      %v633 = vpop.f32.mrb[0].mxu0
      %634 = vmatprep.mubr.f32.mxu0 0.0
      %635 = vmatmul.mubr.f32.gmra.mrb[0].mxu0 %v523
      %v636 = vpop.f32.mrb[0].mxu0
      %v637 = vadd.f32 0.0, %v636
      %v638 = vpop.f32.mrb[0].mxu0
      %639 = vdwg.mxu0
      %v640 = vadd.f32 %v436, %v592
      %v641 = vadd.f32 %v441, %v597
      %v642 = vadd.f32 %v446, %v602
      %v643 = vadd.f32 %v451, %v607
      %v644 = vadd.f32 %v456, %v612
      %v645 = vadd.f32 %v461, %v617
      %v646 = vadd.f32 %v466, %v622
      %v647 = vadd.f32 %v471, %v627
      %v648 = vadd.f32 %v476, %v632
      %v649 = vadd.f32 %v481, %v637
      %v650 = vld [vmem:[%s165 + $0xa] sm:$0xff]
      %v651 = vld [vmem:[%s165 + $0x12] sm:$0xff]
      %v652 = vld [vmem:[%s165 + $0x1a] sm:$0xff]
      %v653 = vld [vmem:[%s165 + $0x22] sm:$0xff]
      %v654 = vld [vmem:[%s165 + $0x2a] sm:$0xff]
      %v655 = vld [vmem:[%s165 + $0x32] sm:$0xff]
      %v656 = vld [vmem:[%s165 + $0x3a] sm:$0xff]
      %v657 = vld [vmem:[%s165 + $0x42] sm:$0xff]
      %v658 = vld [vmem:[%s165 + $0x4a] sm:$0xff]
      %v659 = vld [vmem:[%s165 + $0x52] sm:$0xff]
      %v660 = vld [vmem:[%s1 + $0x18] sm:$0xff]
      %v662 = vsel %vm193, %v650, 0
      %v665 = vsel %vm193, %v651, 0
      %v668 = vsel %vm193, %v652, 0
      %v671 = vsel %vm193, %v653, 0
      %v674 = vsel %vm193, %v654, 0
      %v677 = vsel %vm193, %v655, 0
      %v680 = vsel %vm193, %v656, 0
      %v683 = vsel %vm193, %v657, 0
      %v686 = vsel %vm193, %v658, 0
      %v689 = vsel %vm193, %v659, 0
      %691 = vmatprep.subr.mxu0 0.0
      %692 = vmatpush1.msra.mxu0 %v660
      %693 = vmatprep.subr.mxu0 0.0
      %694 = vmatpush1.msra.mxu0 0.0
      %695 = vmatprep.subr.mxu0 0.0
      %696 = vmatpush1.msra.mxu0 0.0
      %697 = vmatprep.subr.mxu0 0.0
      %698 = vmatpush1.msra.mxu0 0.0
      %699 = vmatprep.subr.mxu0 0.0
      %700 = vmatpush1.msra.mxu0 0.0
      %701 = vmatprep.subr.mxu0 0.0
      %702 = vmatpush1.msra.mxu0 0.0
      %703 = vmatprep.subr.mxu0 0.0
      %704 = vmatpush1.msra.mxu0 0.0
      %705 = vmatprep.subr.mxu0 0.0
      %706 = vmatpush1.msra.mxu0 0.0
      %707 = vmatprep.subr.mxu0 0.0
      %708 = vmatpush1.msra.mxu0 0.0
      %709 = vmatprep.subr.mxu0 0.0
      %710 = vmatpush1.msra.mxu0 0.0
      %711 = vmatprep.subr.mxu0 0.0
      %712 = vmatpush1.msra.mxu0 0.0
      %713 = vmatprep.subr.mxu0 0.0
      %714 = vmatpush1.msra.mxu0 0.0
      %715 = vmatprep.subr.mxu0 0.0
      %716 = vmatpush1.msra.mxu0 0.0
      %717 = vmatprep.subr.mxu0 0.0
      %718 = vmatpush1.msra.mxu0 0.0
      %719 = vmatprep.subr.mxu0 0.0
      %720 = vmatpush1.msra.mxu0 0.0
      %721 = vmatprep.subr.mxu0 0.0
      %722 = vmatpush1.msra.mxu0 0.0
      %723 = vmatprep.subr.mxu0 0.0
      %724 = vmatpush1.msra.mxu0 0.0
      %725 = vmatprep.subr.mxu0 0.0
      %726 = vmatpush1.msra.mxu0 0.0
      %727 = vmatprep.subr.mxu0 0.0
      %728 = vmatpush1.msra.mxu0 0.0
      %729 = vmatprep.subr.mxu0 0.0
      %730 = vmatpush1.msra.mxu0 0.0
      %731 = vmatprep.subr.mxu0 0.0
      %732 = vmatpush1.msra.mxu0 0.0
      %733 = vmatprep.subr.mxu0 0.0
      %734 = vmatpush1.msra.mxu0 0.0
      %735 = vmatprep.subr.mxu0 0.0
      %736 = vmatpush1.msra.mxu0 0.0
      %737 = vmatprep.subr.mxu0 0.0
      %738 = vmatpush1.msra.mxu0 0.0
      %739 = vmatprep.subr.mxu0 0.0
      %740 = vmatpush1.msra.mxu0 0.0
      %741 = vmatprep.subr.mxu0 0.0
      %742 = vmatpush1.msra.mxu0 0.0
      %743 = vmatprep.subr.mxu0 0.0
      %744 = vmatpush1.msra.mxu0 0.0
      %745 = vmatprep.subr.mxu0 0.0
      %746 = vmatpush1.msra.mxu0 0.0
      %747 = vmatprep.subr.mxu0 0.0
      %748 = vmatpush1.msra.mxu0 0.0
      %749 = vmatprep.subr.mxu0 0.0
      %750 = vmatpush1.msra.mxu0 0.0
      %751 = vmatprep.subr.mxu0 0.0
      %752 = vmatpush1.msra.mxu0 0.0
      %753 = vmatprep.subr.mxu0 0.0
      %754 = vmatpush1.msra.mxu0 0.0
      %755 = vmatprep.mubr.f32.mxu0 0.0
      %756 = vmatmul.mubr.f32.gmra.mrb[0].mxu0 %v662
      %v757 = vpop.f32.mrb[0].mxu0
      %v758 = vadd.f32 0.0, %v757
      %v759 = vpop.f32.mrb[0].mxu0
      %760 = vmatprep.mubr.f32.mxu0 0.0
      %761 = vmatmul.mubr.f32.gmra.mrb[0].mxu0 %v665
      %v762 = vpop.f32.mrb[0].mxu0
      %v763 = vadd.f32 0.0, %v762
      %v764 = vpop.f32.mrb[0].mxu0
      %765 = vmatprep.mubr.f32.mxu0 0.0
      %766 = vmatmul.mubr.f32.gmra.mrb[0].mxu0 %v668
      %v767 = vpop.f32.mrb[0].mxu0
      %v768 = vadd.f32 0.0, %v767
      %v769 = vpop.f32.mrb[0].mxu0
      %770 = vmatprep.mubr.f32.mxu0 0.0
      %771 = vmatmul.mubr.f32.gmra.mrb[0].mxu0 %v671
      %v772 = vpop.f32.mrb[0].mxu0
      %v773 = vadd.f32 0.0, %v772
      %v774 = vpop.f32.mrb[0].mxu0
      %775 = vmatprep.mubr.f32.mxu0 0.0
      %776 = vmatmul.mubr.f32.gmra.mrb[0].mxu0 %v674
      %v777 = vpop.f32.mrb[0].mxu0
      %v778 = vadd.f32 0.0, %v777
      %v779 = vpop.f32.mrb[0].mxu0
      %780 = vmatprep.mubr.f32.mxu0 0.0
      %781 = vmatmul.mubr.f32.gmra.mrb[0].mxu0 %v677
      %v782 = vpop.f32.mrb[0].mxu0
      %v783 = vadd.f32 0.0, %v782
      %v784 = vpop.f32.mrb[0].mxu0
      %785 = vmatprep.mubr.f32.mxu0 0.0
      %786 = vmatmul.mubr.f32.gmra.mrb[0].mxu0 %v680
      %v787 = vpop.f32.mrb[0].mxu0
      %v788 = vadd.f32 0.0, %v787
      %v789 = vpop.f32.mrb[0].mxu0
      %790 = vmatprep.mubr.f32.mxu0 0.0
      %791 = vmatmul.mubr.f32.gmra.mrb[0].mxu0 %v683
      %v792 = vpop.f32.mrb[0].mxu0
      %v793 = vadd.f32 0.0, %v792
      %v794 = vpop.f32.mrb[0].mxu0
      %795 = vmatprep.mubr.f32.mxu0 0.0
      %796 = vmatmul.mubr.f32.gmra.mrb[0].mxu0 %v686
      %v797 = vpop.f32.mrb[0].mxu0
      %v798 = vadd.f32 0.0, %v797
      %v799 = vpop.f32.mrb[0].mxu0
      %800 = vmatprep.mubr.f32.mxu0 0.0
      %801 = vmatmul.mubr.f32.gmra.mrb[0].mxu0 %v689
      %v802 = vpop.f32.mrb[0].mxu0
      %v803 = vadd.f32 0.0, %v802
      %v804 = vpop.f32.mrb[0].mxu0
      %805 = vdwg.mxu0
      %v806 = vadd.f32 %v640, %v758
      %v807 = vadd.f32 %v641, %v763
      %v808 = vadd.f32 %v642, %v768
      %v809 = vadd.f32 %v643, %v773
      %v810 = vadd.f32 %v644, %v778
      %v811 = vadd.f32 %v645, %v783
      %v812 = vadd.f32 %v646, %v788
      %v813 = vadd.f32 %v647, %v793
      %v814 = vadd.f32 %v648, %v798
      %v815 = vadd.f32 %v649, %v803
      %v816 = vld [vmem:[%s165 + $0xb] sm:$0xff]
      %v817 = vld [vmem:[%s165 + $0x13] sm:$0xff]
      %v818 = vld [vmem:[%s165 + $0x1b] sm:$0xff]
      %v819 = vld [vmem:[%s165 + $0x23] sm:$0xff]
      %v820 = vld [vmem:[%s165 + $0x2b] sm:$0xff]
      %v821 = vld [vmem:[%s165 + $0x33] sm:$0xff]
      %v822 = vld [vmem:[%s165 + $0x3b] sm:$0xff]
      %v823 = vld [vmem:[%s165 + $0x43] sm:$0xff]
      %v824 = vld [vmem:[%s165 + $0x4b] sm:$0xff]
      %v825 = vld [vmem:[%s165 + $0x53] sm:$0xff]
      %v826 = vld [vmem:[%s1 + $0x20] sm:$0xff]
      %v828 = vsel %vm193, %v816, 0
      %v831 = vsel %vm193, %v817, 0
      %v834 = vsel %vm193, %v818, 0
      %v837 = vsel %vm193, %v819, 0
      %v840 = vsel %vm193, %v820, 0
      %v843 = vsel %vm193, %v821, 0
      %v846 = vsel %vm193, %v822, 0
      %v849 = vsel %vm193, %v823, 0
      %v852 = vsel %vm193, %v824, 0
      %v855 = vsel %vm193, %v825, 0
      %857 = vmatprep.subr.mxu0 0.0
      %858 = vmatpush1.msra.mxu0 %v826
      %859 = vmatprep.subr.mxu0 0.0
      %860 = vmatpush1.msra.mxu0 0.0
      %861 = vmatprep.subr.mxu0 0.0
      %862 = vmatpush1.msra.mxu0 0.0
      %863 = vmatprep.subr.mxu0 0.0
      %864 = vmatpush1.msra.mxu0 0.0
      %865 = vmatprep.subr.mxu0 0.0
      %866 = vmatpush1.msra.mxu0 0.0
      %867 = vmatprep.subr.mxu0 0.0
      %868 = vmatpush1.msra.mxu0 0.0
      %869 = vmatprep.subr.mxu0 0.0
      %870 = vmatpush1.msra.mxu0 0.0
      %871 = vmatprep.subr.mxu0 0.0
      %872 = vmatpush1.msra.mxu0 0.0
      %873 = vmatprep.subr.mxu0 0.0
      %874 = vmatpush1.msra.mxu0 0.0
      %875 = vmatprep.subr.mxu0 0.0
      %876 = vmatpush1.msra.mxu0 0.0
      %877 = vmatprep.subr.mxu0 0.0
      %878 = vmatpush1.msra.mxu0 0.0
      %879 = vmatprep.subr.mxu0 0.0
      %880 = vmatpush1.msra.mxu0 0.0
      %881 = vmatprep.subr.mxu0 0.0
      %882 = vmatpush1.msra.mxu0 0.0
      %883 = vmatprep.subr.mxu0 0.0
      %884 = vmatpush1.msra.mxu0 0.0
      %885 = vmatprep.subr.mxu0 0.0
      %886 = vmatpush1.msra.mxu0 0.0
      %887 = vmatprep.subr.mxu0 0.0
      %888 = vmatpush1.msra.mxu0 0.0
      %889 = vmatprep.subr.mxu0 0.0
      %890 = vmatpush1.msra.mxu0 0.0
      %891 = vmatprep.subr.mxu0 0.0
      %892 = vmatpush1.msra.mxu0 0.0
      %893 = vmatprep.subr.mxu0 0.0
      %894 = vmatpush1.msra.mxu0 0.0
      %895 = vmatprep.subr.mxu0 0.0
      %896 = vmatpush1.msra.mxu0 0.0
      %897 = vmatprep.subr.mxu0 0.0
      %898 = vmatpush1.msra.mxu0 0.0
      %899 = vmatprep.subr.mxu0 0.0
      %900 = vmatpush1.msra.mxu0 0.0
      %901 = vmatprep.subr.mxu0 0.0
      %902 = vmatpush1.msra.mxu0 0.0
      %903 = vmatprep.subr.mxu0 0.0
      %904 = vmatpush1.msra.mxu0 0.0
      %905 = vmatprep.subr.mxu0 0.0
      %906 = vmatpush1.msra.mxu0 0.0
      %907 = vmatprep.subr.mxu0 0.0
      %908 = vmatpush1.msra.mxu0 0.0
      %909 = vmatprep.subr.mxu0 0.0
      %910 = vmatpush1.msra.mxu0 0.0
      %911 = vmatprep.subr.mxu0 0.0
      %912 = vmatpush1.msra.mxu0 0.0
      %913 = vmatprep.subr.mxu0 0.0
      %914 = vmatpush1.msra.mxu0 0.0
      %915 = vmatprep.subr.mxu0 0.0
      %916 = vmatpush1.msra.mxu0 0.0
      %917 = vmatprep.subr.mxu0 0.0
      %918 = vmatpush1.msra.mxu0 0.0
      %919 = vmatprep.subr.mxu0 0.0
      %920 = vmatpush1.msra.mxu0 0.0
      %921 = vmatprep.mubr.f32.mxu0 0.0
      %922 = vmatmul.mubr.f32.gmra.mrb[0].mxu0 %v828
      %v923 = vpop.f32.mrb[0].mxu0
      %v924 = vadd.f32 0.0, %v923
      %v925 = vpop.f32.mrb[0].mxu0
      %926 = vmatprep.mubr.f32.mxu0 0.0
      %927 = vmatmul.mubr.f32.gmra.mrb[0].mxu0 %v831
      %v928 = vpop.f32.mrb[0].mxu0
      %v929 = vadd.f32 0.0, %v928
      %v930 = vpop.f32.mrb[0].mxu0
      %931 = vmatprep.mubr.f32.mxu0 0.0
      %932 = vmatmul.mubr.f32.gmra.mrb[0].mxu0 %v834
      %v933 = vpop.f32.mrb[0].mxu0
      %v934 = vadd.f32 0.0, %v933
      %v935 = vpop.f32.mrb[0].mxu0
      %936 = vmatprep.mubr.f32.mxu0 0.0
      %937 = vmatmul.mubr.f32.gmra.mrb[0].mxu0 %v837
      %v938 = vpop.f32.mrb[0].mxu0
      %v939 = vadd.f32 0.0, %v938
      %v940 = vpop.f32.mrb[0].mxu0
      %941 = vmatprep.mubr.f32.mxu0 0.0
      %942 = vmatmul.mubr.f32.gmra.mrb[0].mxu0 %v840
      %v943 = vpop.f32.mrb[0].mxu0
      %v944 = vadd.f32 0.0, %v943
      %v945 = vpop.f32.mrb[0].mxu0
      %946 = vmatprep.mubr.f32.mxu0 0.0
      %947 = vmatmul.mubr.f32.gmra.mrb[0].mxu0 %v843
      %v948 = vpop.f32.mrb[0].mxu0
      %v949 = vadd.f32 0.0, %v948
      %v950 = vpop.f32.mrb[0].mxu0
      %951 = vmatprep.mubr.f32.mxu0 0.0
      %952 = vmatmul.mubr.f32.gmra.mrb[0].mxu0 %v846
      %v953 = vpop.f32.mrb[0].mxu0
      %v954 = vadd.f32 0.0, %v953
      %v955 = vpop.f32.mrb[0].mxu0
      %956 = vmatprep.mubr.f32.mxu0 0.0
      %957 = vmatmul.mubr.f32.gmra.mrb[0].mxu0 %v849
      %v958 = vpop.f32.mrb[0].mxu0
      %v959 = vadd.f32 0.0, %v958
      %v960 = vpop.f32.mrb[0].mxu0
      %961 = vmatprep.mubr.f32.mxu0 0.0
      %962 = vmatmul.mubr.f32.gmra.mrb[0].mxu0 %v852
      %v963 = vpop.f32.mrb[0].mxu0
      %v964 = vadd.f32 0.0, %v963
      %v965 = vpop.f32.mrb[0].mxu0
      %966 = vmatprep.mubr.f32.mxu0 0.0
      %967 = vmatmul.mubr.f32.gmra.mrb[0].mxu0 %v855
      %v968 = vpop.f32.mrb[0].mxu0
      %v969 = vadd.f32 0.0, %v968
      %v970 = vpop.f32.mrb[0].mxu0
      %971 = vdwg.mxu0
      %v972 = vadd.f32 %v806, %v924
      %v973 = vadd.f32 %v807, %v929
      %v974 = vadd.f32 %v808, %v934
      %v975 = vadd.f32 %v809, %v939
      %v976 = vadd.f32 %v810, %v944
      %v977 = vadd.f32 %v811, %v949
      %v978 = vadd.f32 %v812, %v954
      %v979 = vadd.f32 %v813, %v959
      %v980 = vadd.f32 %v814, %v964
      %v981 = vadd.f32 %v815, %v969
      %v982 = vld [vmem:[%s165 + $0xc] sm:$0xff]
      %v983 = vld [vmem:[%s165 + $0x14] sm:$0xff]
      %v984 = vld [vmem:[%s165 + $0x1c] sm:$0xff]
      %v985 = vld [vmem:[%s165 + $0x24] sm:$0xff]
      %v986 = vld [vmem:[%s165 + $0x2c] sm:$0xff]
      %v987 = vld [vmem:[%s165 + $0x34] sm:$0xff]
      %v988 = vld [vmem:[%s165 + $0x3c] sm:$0xff]
      %v989 = vld [vmem:[%s165 + $0x44] sm:$0xff]
      %v990 = vld [vmem:[%s165 + $0x4c] sm:$0xff]
      %v991 = vld [vmem:[%s165 + $0x54] sm:$0xff]
      %v992 = vld [vmem:[%s1 + $0x28] sm:$0xff]
      %v994 = vsel %vm193, %v982, 0
      %v997 = vsel %vm193, %v983, 0
      %v1000 = vsel %vm193, %v984, 0
      %v1003 = vsel %vm193, %v985, 0
      %v1006 = vsel %vm193, %v986, 0
      %v1009 = vsel %vm193, %v987, 0
      %v1012 = vsel %vm193, %v988, 0
      %v1015 = vsel %vm193, %v989, 0
      %v1018 = vsel %vm193, %v990, 0
      %v1021 = vsel %vm193, %v991, 0
      %1023 = vmatprep.subr.mxu0 0.0
      %1024 = vmatpush1.msra.mxu0 %v992
      %1025 = vmatprep.subr.mxu0 0.0
      %1026 = vmatpush1.msra.mxu0 0.0
      %1027 = vmatprep.subr.mxu0 0.0
      %1028 = vmatpush1.msra.mxu0 0.0
      %1029 = vmatprep.subr.mxu0 0.0
      %1030 = vmatpush1.msra.mxu0 0.0
      %1031 = vmatprep.subr.mxu0 0.0
      %1032 = vmatpush1.msra.mxu0 0.0
      %1033 = vmatprep.subr.mxu0 0.0
      %1034 = vmatpush1.msra.mxu0 0.0
      %1035 = vmatprep.subr.mxu0 0.0
      %1036 = vmatpush1.msra.mxu0 0.0
      %1037 = vmatprep.subr.mxu0 0.0
      %1038 = vmatpush1.msra.mxu0 0.0
      %1039 = vmatprep.subr.mxu0 0.0
      %1040 = vmatpush1.msra.mxu0 0.0
      %1041 = vmatprep.subr.mxu0 0.0
      %1042 = vmatpush1.msra.mxu0 0.0
      %1043 = vmatprep.subr.mxu0 0.0
      %1044 = vmatpush1.msra.mxu0 0.0
      %1045 = vmatprep.subr.mxu0 0.0
      %1046 = vmatpush1.msra.mxu0 0.0
      %1047 = vmatprep.subr.mxu0 0.0
      %1048 = vmatpush1.msra.mxu0 0.0
      %1049 = vmatprep.subr.mxu0 0.0
      %1050 = vmatpush1.msra.mxu0 0.0
      %1051 = vmatprep.subr.mxu0 0.0
      %1052 = vmatpush1.msra.mxu0 0.0
      %1053 = vmatprep.subr.mxu0 0.0
      %1054 = vmatpush1.msra.mxu0 0.0
      %1055 = vmatprep.subr.mxu0 0.0
      %1056 = vmatpush1.msra.mxu0 0.0
      %1057 = vmatprep.subr.mxu0 0.0
      %1058 = vmatpush1.msra.mxu0 0.0
      %1059 = vmatprep.subr.mxu0 0.0
      %1060 = vmatpush1.msra.mxu0 0.0
      %1061 = vmatprep.subr.mxu0 0.0
      %1062 = vmatpush1.msra.mxu0 0.0
      %1063 = vmatprep.subr.mxu0 0.0
      %1064 = vmatpush1.msra.mxu0 0.0
      %1065 = vmatprep.subr.mxu0 0.0
      %1066 = vmatpush1.msra.mxu0 0.0
      %1067 = vmatprep.subr.mxu0 0.0
      %1068 = vmatpush1.msra.mxu0 0.0
      %1069 = vmatprep.subr.mxu0 0.0
      %1070 = vmatpush1.msra.mxu0 0.0
      %1071 = vmatprep.subr.mxu0 0.0
      %1072 = vmatpush1.msra.mxu0 0.0
      %1073 = vmatprep.subr.mxu0 0.0
      %1074 = vmatpush1.msra.mxu0 0.0
      %1075 = vmatprep.subr.mxu0 0.0
      %1076 = vmatpush1.msra.mxu0 0.0
      %1077 = vmatprep.subr.mxu0 0.0
      %1078 = vmatpush1.msra.mxu0 0.0
      %1079 = vmatprep.subr.mxu0 0.0
      %1080 = vmatpush1.msra.mxu0 0.0
      %1081 = vmatprep.subr.mxu0 0.0
      %1082 = vmatpush1.msra.mxu0 0.0
      %1083 = vmatprep.subr.mxu0 0.0
      %1084 = vmatpush1.msra.mxu0 0.0
      %1085 = vmatprep.subr.mxu0 0.0
      %1086 = vmatpush1.msra.mxu0 0.0
      %1087 = vmatprep.mubr.f32.mxu0 0.0
      %1088 = vmatmul.mubr.f32.gmra.mrb[0].mxu0 %v994
      %v1089 = vpop.f32.mrb[0].mxu0
      %v1090 = vadd.f32 0.0, %v1089
      %v1091 = vpop.f32.mrb[0].mxu0
      %1092 = vmatprep.mubr.f32.mxu0 0.0
      %1093 = vmatmul.mubr.f32.gmra.mrb[0].mxu0 %v997
      %v1094 = vpop.f32.mrb[0].mxu0
      %v1095 = vadd.f32 0.0, %v1094
      %v1096 = vpop.f32.mrb[0].mxu0
      %1097 = vmatprep.mubr.f32.mxu0 0.0
      %1098 = vmatmul.mubr.f32.gmra.mrb[0].mxu0 %v1000
      %v1099 = vpop.f32.mrb[0].mxu0
      %v1100 = vadd.f32 0.0, %v1099
      %v1101 = vpop.f32.mrb[0].mxu0
      %1102 = vmatprep.mubr.f32.mxu0 0.0
      %1103 = vmatmul.mubr.f32.gmra.mrb[0].mxu0 %v1003
      %v1104 = vpop.f32.mrb[0].mxu0
      %v1105 = vadd.f32 0.0, %v1104
      %v1106 = vpop.f32.mrb[0].mxu0
      %1107 = vmatprep.mubr.f32.mxu0 0.0
      %1108 = vmatmul.mubr.f32.gmra.mrb[0].mxu0 %v1006
      %v1109 = vpop.f32.mrb[0].mxu0
      %v1110 = vadd.f32 0.0, %v1109
      %v1111 = vpop.f32.mrb[0].mxu0
      %1112 = vmatprep.mubr.f32.mxu0 0.0
      %1113 = vmatmul.mubr.f32.gmra.mrb[0].mxu0 %v1009
      %v1114 = vpop.f32.mrb[0].mxu0
      %v1115 = vadd.f32 0.0, %v1114
      %v1116 = vpop.f32.mrb[0].mxu0
      %1117 = vmatprep.mubr.f32.mxu0 0.0
      %1118 = vmatmul.mubr.f32.gmra.mrb[0].mxu0 %v1012
      %v1119 = vpop.f32.mrb[0].mxu0
      %v1120 = vadd.f32 0.0, %v1119
      %v1121 = vpop.f32.mrb[0].mxu0
      %1122 = vmatprep.mubr.f32.mxu0 0.0
      %1123 = vmatmul.mubr.f32.gmra.mrb[0].mxu0 %v1015
      %v1124 = vpop.f32.mrb[0].mxu0
      %v1125 = vadd.f32 0.0, %v1124
      %v1126 = vpop.f32.mrb[0].mxu0
      %1127 = vmatprep.mubr.f32.mxu0 0.0
      %1128 = vmatmul.mubr.f32.gmra.mrb[0].mxu0 %v1018
      %v1129 = vpop.f32.mrb[0].mxu0
      %v1130 = vadd.f32 0.0, %v1129
      %v1131 = vpop.f32.mrb[0].mxu0
      %1132 = vmatprep.mubr.f32.mxu0 0.0
      %1133 = vmatmul.mubr.f32.gmra.mrb[0].mxu0 %v1021
      %v1134 = vpop.f32.mrb[0].mxu0
      %v1135 = vadd.f32 0.0, %v1134
      %v1136 = vpop.f32.mrb[0].mxu0
      %1137 = vdwg.mxu0
      %v1138 = vadd.f32 %v972, %v1090
      %v1139 = vadd.f32 %v973, %v1095
      %v1140 = vadd.f32 %v974, %v1100
      %v1141 = vadd.f32 %v975, %v1105
      %v1142 = vadd.f32 %v976, %v1110
      %v1143 = vadd.f32 %v977, %v1115
      %v1144 = vadd.f32 %v978, %v1120
      %v1145 = vadd.f32 %v979, %v1125
      %v1146 = vadd.f32 %v980, %v1130
      %v1147 = vadd.f32 %v981, %v1135
      %v1148 = vld [vmem:[%s165 + $0x14] sm:$0xff]
      %v1149 = vld [vmem:[%s165 + $0x1c] sm:$0xff]
      %v1150 = vld [vmem:[%s165 + $0x24] sm:$0xff]
      %v1151 = vld [vmem:[%s165 + $0x2c] sm:$0xff]
      %v1152 = vld [vmem:[%s165 + $0x34] sm:$0xff]
      %v1153 = vld [vmem:[%s165 + $0x3c] sm:$0xff]
      %v1154 = vld [vmem:[%s165 + $0x44] sm:$0xff]
      %v1155 = vld [vmem:[%s165 + $0x4c] sm:$0xff]
      %v1156 = vld [vmem:[%s165 + $0x54] sm:$0xff]
      %v1157 = vld [vmem:[%s165 + $0x5c] sm:$0xff]
      %v1158 = vld [vmem:[%s1 + $0x30] sm:$0xff]
      %v1160 = vsel %vm193, %v1148, 0
      %v1163 = vsel %vm193, %v1149, 0
      %v1166 = vsel %vm193, %v1150, 0
      %v1169 = vsel %vm193, %v1151, 0
      %v1172 = vsel %vm193, %v1152, 0
      %v1175 = vsel %vm193, %v1153, 0
      %v1178 = vsel %vm193, %v1154, 0
      %v1181 = vsel %vm193, %v1155, 0
      %v1184 = vsel %vm193, %v1156, 0
      %v1187 = vsel %vm193, %v1157, 0
      %1189 = vmatprep.subr.mxu0 0.0
      %1190 = vmatpush1.msra.mxu0 %v1158
      %1191 = vmatprep.subr.mxu0 0.0
      %1192 = vmatpush1.msra.mxu0 0.0
      %1193 = vmatprep.subr.mxu0 0.0
      %1194 = vmatpush1.msra.mxu0 0.0
      %1195 = vmatprep.subr.mxu0 0.0
      %1196 = vmatpush1.msra.mxu0 0.0
      %1197 = vmatprep.subr.mxu0 0.0
      %1198 = vmatpush1.msra.mxu0 0.0
      %1199 = vmatprep.subr.mxu0 0.0
      %1200 = vmatpush1.msra.mxu0 0.0
      %1201 = vmatprep.subr.mxu0 0.0
      %1202 = vmatpush1.msra.mxu0 0.0
      %1203 = vmatprep.subr.mxu0 0.0
      %1204 = vmatpush1.msra.mxu0 0.0
      %1205 = vmatprep.subr.mxu0 0.0
      %1206 = vmatpush1.msra.mxu0 0.0
      %1207 = vmatprep.subr.mxu0 0.0
      %1208 = vmatpush1.msra.mxu0 0.0
      %1209 = vmatprep.subr.mxu0 0.0
      %1210 = vmatpush1.msra.mxu0 0.0
      %1211 = vmatprep.subr.mxu0 0.0
      %1212 = vmatpush1.msra.mxu0 0.0
      %1213 = vmatprep.subr.mxu0 0.0
      %1214 = vmatpush1.msra.mxu0 0.0
      %1215 = vmatprep.subr.mxu0 0.0
      %1216 = vmatpush1.msra.mxu0 0.0
      %1217 = vmatprep.subr.mxu0 0.0
      %1218 = vmatpush1.msra.mxu0 0.0
      %1219 = vmatprep.subr.mxu0 0.0
      %1220 = vmatpush1.msra.mxu0 0.0
      %1221 = vmatprep.subr.mxu0 0.0
      %1222 = vmatpush1.msra.mxu0 0.0
      %1223 = vmatprep.subr.mxu0 0.0
      %1224 = vmatpush1.msra.mxu0 0.0
      %1225 = vmatprep.subr.mxu0 0.0
      %1226 = vmatpush1.msra.mxu0 0.0
      %1227 = vmatprep.subr.mxu0 0.0
      %1228 = vmatpush1.msra.mxu0 0.0
      %1229 = vmatprep.subr.mxu0 0.0
      %1230 = vmatpush1.msra.mxu0 0.0
      %1231 = vmatprep.subr.mxu0 0.0
      %1232 = vmatpush1.msra.mxu0 0.0
      %1233 = vmatprep.subr.mxu0 0.0
      %1234 = vmatpush1.msra.mxu0 0.0
      %1235 = vmatprep.subr.mxu0 0.0
      %1236 = vmatpush1.msra.mxu0 0.0
      %1237 = vmatprep.subr.mxu0 0.0
      %1238 = vmatpush1.msra.mxu0 0.0
      %1239 = vmatprep.subr.mxu0 0.0
      %1240 = vmatpush1.msra.mxu0 0.0
      %1241 = vmatprep.subr.mxu0 0.0
      %1242 = vmatpush1.msra.mxu0 0.0
      %1243 = vmatprep.subr.mxu0 0.0
      %1244 = vmatpush1.msra.mxu0 0.0
      %1245 = vmatprep.subr.mxu0 0.0
      %1246 = vmatpush1.msra.mxu0 0.0
      %1247 = vmatprep.subr.mxu0 0.0
      %1248 = vmatpush1.msra.mxu0 0.0
      %1249 = vmatprep.subr.mxu0 0.0
      %1250 = vmatpush1.msra.mxu0 0.0
      %1251 = vmatprep.subr.mxu0 0.0
      %1252 = vmatpush1.msra.mxu0 0.0
      %1253 = vmatprep.mubr.f32.mxu0 0.0
      %1254 = vmatmul.mubr.f32.gmra.mrb[0].mxu0 %v1160
      %v1255 = vpop.f32.mrb[0].mxu0
      %v1256 = vadd.f32 0.0, %v1255
      %v1257 = vpop.f32.mrb[0].mxu0
      %1258 = vmatprep.mubr.f32.mxu0 0.0
      %1259 = vmatmul.mubr.f32.gmra.mrb[0].mxu0 %v1163
      %v1260 = vpop.f32.mrb[0].mxu0
      %v1261 = vadd.f32 0.0, %v1260
      %v1262 = vpop.f32.mrb[0].mxu0
      %1263 = vmatprep.mubr.f32.mxu0 0.0
      %1264 = vmatmul.mubr.f32.gmra.mrb[0].mxu0 %v1166
      %v1265 = vpop.f32.mrb[0].mxu0
      %v1266 = vadd.f32 0.0, %v1265
      %v1267 = vpop.f32.mrb[0].mxu0
      %1268 = vmatprep.mubr.f32.mxu0 0.0
      %1269 = vmatmul.mubr.f32.gmra.mrb[0].mxu0 %v1169
      %v1270 = vpop.f32.mrb[0].mxu0
      %v1271 = vadd.f32 0.0, %v1270
      %v1272 = vpop.f32.mrb[0].mxu0
      %1273 = vmatprep.mubr.f32.mxu0 0.0
      %1274 = vmatmul.mubr.f32.gmra.mrb[0].mxu0 %v1172
      %v1275 = vpop.f32.mrb[0].mxu0
      %v1276 = vadd.f32 0.0, %v1275
      %v1277 = vpop.f32.mrb[0].mxu0
      %1278 = vmatprep.mubr.f32.mxu0 0.0
      %1279 = vmatmul.mubr.f32.gmra.mrb[0].mxu0 %v1175
      %v1280 = vpop.f32.mrb[0].mxu0
      %v1281 = vadd.f32 0.0, %v1280
      %v1282 = vpop.f32.mrb[0].mxu0
      %1283 = vmatprep.mubr.f32.mxu0 0.0
      %1284 = vmatmul.mubr.f32.gmra.mrb[0].mxu0 %v1178
      %v1285 = vpop.f32.mrb[0].mxu0
      %v1286 = vadd.f32 0.0, %v1285
      %v1287 = vpop.f32.mrb[0].mxu0
      %1288 = vmatprep.mubr.f32.mxu0 0.0
      %1289 = vmatmul.mubr.f32.gmra.mrb[0].mxu0 %v1181
      %v1290 = vpop.f32.mrb[0].mxu0
      %v1291 = vadd.f32 0.0, %v1290
      %v1292 = vpop.f32.mrb[0].mxu0
      %1293 = vmatprep.mubr.f32.mxu0 0.0
      %1294 = vmatmul.mubr.f32.gmra.mrb[0].mxu0 %v1184
      %v1295 = vpop.f32.mrb[0].mxu0
      %v1296 = vadd.f32 0.0, %v1295
      %v1297 = vpop.f32.mrb[0].mxu0
      %1298 = vmatprep.mubr.f32.mxu0 0.0
      %1299 = vmatmul.mubr.f32.gmra.mrb[0].mxu0 %v1187
      %v1300 = vpop.f32.mrb[0].mxu0
      %v1301 = vadd.f32 0.0, %v1300
      %v1302 = vpop.f32.mrb[0].mxu0
      %1303 = vdwg.mxu0
      %v1304 = vadd.f32 %v1138, %v1256
      %v1305 = vadd.f32 %v1139, %v1261
      %v1306 = vadd.f32 %v1140, %v1266
      %v1307 = vadd.f32 %v1141, %v1271
      %v1308 = vadd.f32 %v1142, %v1276
      %v1309 = vadd.f32 %v1143, %v1281
      %v1310 = vadd.f32 %v1144, %v1286
      %v1311 = vadd.f32 %v1145, %v1291
      %v1312 = vadd.f32 %v1146, %v1296
      %v1313 = vadd.f32 %v1147, %v1301
      %v1314 = vld [vmem:[%s165 + $0x15] sm:$0xff]
      %v1315 = vld [vmem:[%s165 + $0x1d] sm:$0xff]
      %v1316 = vld [vmem:[%s165 + $0x25] sm:$0xff]
      %v1317 = vld [vmem:[%s165 + $0x2d] sm:$0xff]
      %v1318 = vld [vmem:[%s165 + $0x35] sm:$0xff]
      %v1319 = vld [vmem:[%s165 + $0x3d] sm:$0xff]
      %v1320 = vld [vmem:[%s165 + $0x45] sm:$0xff]
      %v1321 = vld [vmem:[%s165 + $0x4d] sm:$0xff]
      %v1322 = vld [vmem:[%s165 + $0x55] sm:$0xff]
      %v1323 = vld [vmem:[%s165 + $0x5d] sm:$0xff]
      %v1324 = vld [vmem:[%s1 + $0x38] sm:$0xff]
      %v1326 = vsel %vm193, %v1314, 0
      %v1329 = vsel %vm193, %v1315, 0
      %v1332 = vsel %vm193, %v1316, 0
      %v1335 = vsel %vm193, %v1317, 0
      %v1338 = vsel %vm193, %v1318, 0
      %v1341 = vsel %vm193, %v1319, 0
      %v1344 = vsel %vm193, %v1320, 0
      %v1347 = vsel %vm193, %v1321, 0
      %v1350 = vsel %vm193, %v1322, 0
      %v1353 = vsel %vm193, %v1323, 0
      %1355 = vmatprep.subr.mxu0 0.0
      %1356 = vmatpush1.msra.mxu0 %v1324
      %1357 = vmatprep.subr.mxu0 0.0
      %1358 = vmatpush1.msra.mxu0 0.0
      %1359 = vmatprep.subr.mxu0 0.0
      %1360 = vmatpush1.msra.mxu0 0.0
      %1361 = vmatprep.subr.mxu0 0.0
      %1362 = vmatpush1.msra.mxu0 0.0
      %1363 = vmatprep.subr.mxu0 0.0
      %1364 = vmatpush1.msra.mxu0 0.0
      %1365 = vmatprep.subr.mxu0 0.0
      %1366 = vmatpush1.msra.mxu0 0.0
      %1367 = vmatprep.subr.mxu0 0.0
      %1368 = vmatpush1.msra.mxu0 0.0
      %1369 = vmatprep.subr.mxu0 0.0
      %1370 = vmatpush1.msra.mxu0 0.0
      %1371 = vmatprep.subr.mxu0 0.0
      %1372 = vmatpush1.msra.mxu0 0.0
      %1373 = vmatprep.subr.mxu0 0.0
      %1374 = vmatpush1.msra.mxu0 0.0
      %1375 = vmatprep.subr.mxu0 0.0
      %1376 = vmatpush1.msra.mxu0 0.0
      %1377 = vmatprep.subr.mxu0 0.0
      %1378 = vmatpush1.msra.mxu0 0.0
      %1379 = vmatprep.subr.mxu0 0.0
      %1380 = vmatpush1.msra.mxu0 0.0
      %1381 = vmatprep.subr.mxu0 0.0
      %1382 = vmatpush1.msra.mxu0 0.0
      %1383 = vmatprep.subr.mxu0 0.0
      %1384 = vmatpush1.msra.mxu0 0.0
      %1385 = vmatprep.subr.mxu0 0.0
      %1386 = vmatpush1.msra.mxu0 0.0
      %1387 = vmatprep.subr.mxu0 0.0
      %1388 = vmatpush1.msra.mxu0 0.0
      %1389 = vmatprep.subr.mxu0 0.0
      %1390 = vmatpush1.msra.mxu0 0.0
      %1391 = vmatprep.subr.mxu0 0.0
      %1392 = vmatpush1.msra.mxu0 0.0
      %1393 = vmatprep.subr.mxu0 0.0
      %1394 = vmatpush1.msra.mxu0 0.0
      %1395 = vmatprep.subr.mxu0 0.0
      %1396 = vmatpush1.msra.mxu0 0.0
      %1397 = vmatprep.subr.mxu0 0.0
      %1398 = vmatpush1.msra.mxu0 0.0
      %1399 = vmatprep.subr.mxu0 0.0
      %1400 = vmatpush1.msra.mxu0 0.0
      %1401 = vmatprep.subr.mxu0 0.0
      %1402 = vmatpush1.msra.mxu0 0.0
      %1403 = vmatprep.subr.mxu0 0.0
      %1404 = vmatpush1.msra.mxu0 0.0
      %1405 = vmatprep.subr.mxu0 0.0
      %1406 = vmatpush1.msra.mxu0 0.0
      %1407 = vmatprep.subr.mxu0 0.0
      %1408 = vmatpush1.msra.mxu0 0.0
      %1409 = vmatprep.subr.mxu0 0.0
      %1410 = vmatpush1.msra.mxu0 0.0
      %1411 = vmatprep.subr.mxu0 0.0
      %1412 = vmatpush1.msra.mxu0 0.0
      %1413 = vmatprep.subr.mxu0 0.0
      %1414 = vmatpush1.msra.mxu0 0.0
      %1415 = vmatprep.subr.mxu0 0.0
      %1416 = vmatpush1.msra.mxu0 0.0
      %1417 = vmatprep.subr.mxu0 0.0
      %1418 = vmatpush1.msra.mxu0 0.0
      %1419 = vmatprep.mubr.f32.mxu0 0.0
      %1420 = vmatmul.mubr.f32.gmra.mrb[0].mxu0 %v1326
      %v1421 = vpop.f32.mrb[0].mxu0
      %v1422 = vadd.f32 0.0, %v1421
      %v1423 = vpop.f32.mrb[0].mxu0
      %1424 = vmatprep.mubr.f32.mxu0 0.0
      %1425 = vmatmul.mubr.f32.gmra.mrb[0].mxu0 %v1329
      %v1426 = vpop.f32.mrb[0].mxu0
      %v1427 = vadd.f32 0.0, %v1426
      %v1428 = vpop.f32.mrb[0].mxu0
      %1429 = vmatprep.mubr.f32.mxu0 0.0
      %1430 = vmatmul.mubr.f32.gmra.mrb[0].mxu0 %v1332
      %v1431 = vpop.f32.mrb[0].mxu0
      %v1432 = vadd.f32 0.0, %v1431
      %v1433 = vpop.f32.mrb[0].mxu0
      %1434 = vmatprep.mubr.f32.mxu0 0.0
      %1435 = vmatmul.mubr.f32.gmra.mrb[0].mxu0 %v1335
      %v1436 = vpop.f32.mrb[0].mxu0
      %v1437 = vadd.f32 0.0, %v1436
      %v1438 = vpop.f32.mrb[0].mxu0
      %1439 = vmatprep.mubr.f32.mxu0 0.0
      %1440 = vmatmul.mubr.f32.gmra.mrb[0].mxu0 %v1338
      %v1441 = vpop.f32.mrb[0].mxu0
      %v1442 = vadd.f32 0.0, %v1441
      %v1443 = vpop.f32.mrb[0].mxu0
      %1444 = vmatprep.mubr.f32.mxu0 0.0
      %1445 = vmatmul.mubr.f32.gmra.mrb[0].mxu0 %v1341
      %v1446 = vpop.f32.mrb[0].mxu0
      %v1447 = vadd.f32 0.0, %v1446
      %v1448 = vpop.f32.mrb[0].mxu0
      %1449 = vmatprep.mubr.f32.mxu0 0.0
      %1450 = vmatmul.mubr.f32.gmra.mrb[0].mxu0 %v1344
      %v1451 = vpop.f32.mrb[0].mxu0
      %v1452 = vadd.f32 0.0, %v1451
      %v1453 = vpop.f32.mrb[0].mxu0
      %1454 = vmatprep.mubr.f32.mxu0 0.0
      %1455 = vmatmul.mubr.f32.gmra.mrb[0].mxu0 %v1347
      %v1456 = vpop.f32.mrb[0].mxu0
      %v1457 = vadd.f32 0.0, %v1456
      %v1458 = vpop.f32.mrb[0].mxu0
      %1459 = vmatprep.mubr.f32.mxu0 0.0
      %1460 = vmatmul.mubr.f32.gmra.mrb[0].mxu0 %v1350
      %v1461 = vpop.f32.mrb[0].mxu0
      %v1462 = vadd.f32 0.0, %v1461
      %v1463 = vpop.f32.mrb[0].mxu0
      %1464 = vmatprep.mubr.f32.mxu0 0.0
      %1465 = vmatmul.mubr.f32.gmra.mrb[0].mxu0 %v1353
      %v1466 = vpop.f32.mrb[0].mxu0
      %v1467 = vadd.f32 0.0, %v1466
      %v1468 = vpop.f32.mrb[0].mxu0
      %1469 = vdwg.mxu0
      %v1470 = vadd.f32 %v1304, %v1422
      %v1471 = vadd.f32 %v1305, %v1427
      %v1472 = vadd.f32 %v1306, %v1432
      %v1473 = vadd.f32 %v1307, %v1437
      %v1474 = vadd.f32 %v1308, %v1442
      %v1475 = vadd.f32 %v1309, %v1447
      %v1476 = vadd.f32 %v1310, %v1452
      %v1477 = vadd.f32 %v1311, %v1457
      %v1478 = vadd.f32 %v1312, %v1462
      %v1479 = vadd.f32 %v1313, %v1467
      %v1480 = vld [vmem:[%s165 + $0x16] sm:$0xff]
      %v1481 = vld [vmem:[%s165 + $0x1e] sm:$0xff]
      %v1482 = vld [vmem:[%s165 + $0x26] sm:$0xff]
      %v1483 = vld [vmem:[%s165 + $0x2e] sm:$0xff]
      %v1484 = vld [vmem:[%s165 + $0x36] sm:$0xff]
      %v1485 = vld [vmem:[%s165 + $0x3e] sm:$0xff]
      %v1486 = vld [vmem:[%s165 + $0x46] sm:$0xff]
      %v1487 = vld [vmem:[%s165 + $0x4e] sm:$0xff]
      %v1488 = vld [vmem:[%s165 + $0x56] sm:$0xff]
      %v1489 = vld [vmem:[%s165 + $0x5e] sm:$0xff]
      %v1490 = vld [vmem:[%s1 + $0x40] sm:$0xff]
      %v1492 = vsel %vm193, %v1480, 0
      %v1495 = vsel %vm193, %v1481, 0
      %v1498 = vsel %vm193, %v1482, 0
      %v1501 = vsel %vm193, %v1483, 0
      %v1504 = vsel %vm193, %v1484, 0
      %v1507 = vsel %vm193, %v1485, 0
      %v1510 = vsel %vm193, %v1486, 0
      %v1513 = vsel %vm193, %v1487, 0
      %v1516 = vsel %vm193, %v1488, 0
      %v1519 = vsel %vm193, %v1489, 0
      %1521 = vmatprep.subr.mxu0 0.0
      %1522 = vmatpush1.msra.mxu0 %v1490
      %1523 = vmatprep.subr.mxu0 0.0
      %1524 = vmatpush1.msra.mxu0 0.0
      %1525 = vmatprep.subr.mxu0 0.0
      %1526 = vmatpush1.msra.mxu0 0.0
      %1527 = vmatprep.subr.mxu0 0.0
      %1528 = vmatpush1.msra.mxu0 0.0
      %1529 = vmatprep.subr.mxu0 0.0
      %1530 = vmatpush1.msra.mxu0 0.0
      %1531 = vmatprep.subr.mxu0 0.0
      %1532 = vmatpush1.msra.mxu0 0.0
      %1533 = vmatprep.subr.mxu0 0.0
      %1534 = vmatpush1.msra.mxu0 0.0
      %1535 = vmatprep.subr.mxu0 0.0
      %1536 = vmatpush1.msra.mxu0 0.0
      %1537 = vmatprep.subr.mxu0 0.0
      %1538 = vmatpush1.msra.mxu0 0.0
      %1539 = vmatprep.subr.mxu0 0.0
      %1540 = vmatpush1.msra.mxu0 0.0
      %1541 = vmatprep.subr.mxu0 0.0
      %1542 = vmatpush1.msra.mxu0 0.0
      %1543 = vmatprep.subr.mxu0 0.0
      %1544 = vmatpush1.msra.mxu0 0.0
      %1545 = vmatprep.subr.mxu0 0.0
      %1546 = vmatpush1.msra.mxu0 0.0
      %1547 = vmatprep.subr.mxu0 0.0
      %1548 = vmatpush1.msra.mxu0 0.0
      %1549 = vmatprep.subr.mxu0 0.0
      %1550 = vmatpush1.msra.mxu0 0.0
      %1551 = vmatprep.subr.mxu0 0.0
      %1552 = vmatpush1.msra.mxu0 0.0
      %1553 = vmatprep.subr.mxu0 0.0
      %1554 = vmatpush1.msra.mxu0 0.0
      %1555 = vmatprep.subr.mxu0 0.0
      %1556 = vmatpush1.msra.mxu0 0.0
      %1557 = vmatprep.subr.mxu0 0.0
      %1558 = vmatpush1.msra.mxu0 0.0
      %1559 = vmatprep.subr.mxu0 0.0
      %1560 = vmatpush1.msra.mxu0 0.0
      %1561 = vmatprep.subr.mxu0 0.0
      %1562 = vmatpush1.msra.mxu0 0.0
      %1563 = vmatprep.subr.mxu0 0.0
      %1564 = vmatpush1.msra.mxu0 0.0
      %1565 = vmatprep.subr.mxu0 0.0
      %1566 = vmatpush1.msra.mxu0 0.0
      %1567 = vmatprep.subr.mxu0 0.0
      %1568 = vmatpush1.msra.mxu0 0.0
      %1569 = vmatprep.subr.mxu0 0.0
      %1570 = vmatpush1.msra.mxu0 0.0
      %1571 = vmatprep.subr.mxu0 0.0
      %1572 = vmatpush1.msra.mxu0 0.0
      %1573 = vmatprep.subr.mxu0 0.0
      %1574 = vmatpush1.msra.mxu0 0.0
      %1575 = vmatprep.subr.mxu0 0.0
      %1576 = vmatpush1.msra.mxu0 0.0
      %1577 = vmatprep.subr.mxu0 0.0
      %1578 = vmatpush1.msra.mxu0 0.0
      %1579 = vmatprep.subr.mxu0 0.0
      %1580 = vmatpush1.msra.mxu0 0.0
      %1581 = vmatprep.subr.mxu0 0.0
      %1582 = vmatpush1.msra.mxu0 0.0
      %1583 = vmatprep.subr.mxu0 0.0
      %1584 = vmatpush1.msra.mxu0 0.0
      %1585 = vmatprep.mubr.f32.mxu0 0.0
      %1586 = vmatmul.mubr.f32.gmra.mrb[0].mxu0 %v1492
      %v1587 = vpop.f32.mrb[0].mxu0
      %v1588 = vadd.f32 0.0, %v1587
      %v1589 = vpop.f32.mrb[0].mxu0
      %1590 = vmatprep.mubr.f32.mxu0 0.0
      %1591 = vmatmul.mubr.f32.gmra.mrb[0].mxu0 %v1495
      %v1592 = vpop.f32.mrb[0].mxu0
      %v1593 = vadd.f32 0.0, %v1592
      %v1594 = vpop.f32.mrb[0].mxu0
      %1595 = vmatprep.mubr.f32.mxu0 0.0
      %1596 = vmatmul.mubr.f32.gmra.mrb[0].mxu0 %v1498
      %v1597 = vpop.f32.mrb[0].mxu0
      %v1598 = vadd.f32 0.0, %v1597
      %v1599 = vpop.f32.mrb[0].mxu0
      %1600 = vmatprep.mubr.f32.mxu0 0.0
      %1601 = vmatmul.mubr.f32.gmra.mrb[0].mxu0 %v1501
      %v1602 = vpop.f32.mrb[0].mxu0
      %v1603 = vadd.f32 0.0, %v1602
      %v1604 = vpop.f32.mrb[0].mxu0
      %1605 = vmatprep.mubr.f32.mxu0 0.0
      %1606 = vmatmul.mubr.f32.gmra.mrb[0].mxu0 %v1504
      %v1607 = vpop.f32.mrb[0].mxu0
      %v1608 = vadd.f32 0.0, %v1607
      %v1609 = vpop.f32.mrb[0].mxu0
      %1610 = vmatprep.mubr.f32.mxu0 0.0
      %1611 = vmatmul.mubr.f32.gmra.mrb[0].mxu0 %v1507
      %v1612 = vpop.f32.mrb[0].mxu0
      %v1613 = vadd.f32 0.0, %v1612
      %v1614 = vpop.f32.mrb[0].mxu0
      %1615 = vmatprep.mubr.f32.mxu0 0.0
      %1616 = vmatmul.mubr.f32.gmra.mrb[0].mxu0 %v1510
      %v1617 = vpop.f32.mrb[0].mxu0
      %v1618 = vadd.f32 0.0, %v1617
      %v1619 = vpop.f32.mrb[0].mxu0
      %1620 = vmatprep.mubr.f32.mxu0 0.0
      %1621 = vmatmul.mubr.f32.gmra.mrb[0].mxu0 %v1513
      %v1622 = vpop.f32.mrb[0].mxu0
      %v1623 = vadd.f32 0.0, %v1622
      %v1624 = vpop.f32.mrb[0].mxu0
      %1625 = vmatprep.mubr.f32.mxu0 0.0
      %1626 = vmatmul.mubr.f32.gmra.mrb[0].mxu0 %v1516
      %v1627 = vpop.f32.mrb[0].mxu0
      %v1628 = vadd.f32 0.0, %v1627
      %v1629 = vpop.f32.mrb[0].mxu0
      %1630 = vmatprep.mubr.f32.mxu0 0.0
      %1631 = vmatmul.mubr.f32.gmra.mrb[0].mxu0 %v1519
      %v1632 = vpop.f32.mrb[0].mxu0
      %v1633 = vadd.f32 0.0, %v1632
      %v1634 = vpop.f32.mrb[0].mxu0
      %1635 = vdwg.mxu0
      %v1636 = vadd.f32 %v1470, %v1588
      %v1637 = vadd.f32 %v1471, %v1593
      %v1638 = vadd.f32 %v1472, %v1598
      %v1639 = vadd.f32 %v1473, %v1603
      %v1640 = vadd.f32 %v1474, %v1608
      %v1641 = vadd.f32 %v1475, %v1613
      %v1642 = vadd.f32 %v1476, %v1618
      %v1643 = vadd.f32 %v1477, %v1623
      %v1644 = vadd.f32 %v1478, %v1628
      %v1645 = vadd.f32 %v1479, %v1633
      %v1646 = vld [vmem:[%s2] sm:$0x1]
      %v1648 = vlaneseq
      %v1649 = vshrl.u32 %v1648, 7
      %v1650 = vsub.s32 0, %v1649
      %v1651 = vrot.slane %v1646, %v1650
      %v1653 = vadd.f32 %v1636, %v1651
      %v1654 = vadd.f32 %v1637, %v1651
      %v1655 = vadd.f32 %v1638, %v1651
      %v1656 = vadd.f32 %v1639, %v1651
      %v1657 = vadd.f32 %v1640, %v1651
      %v1658 = vadd.f32 %v1641, %v1651
      %v1659 = vadd.f32 %v1642, %v1651
      %v1660 = vadd.f32 %v1643, %v1651
      %v1661 = vadd.f32 %v1644, %v1651
      %v1662 = vadd.f32 %v1645, %v1651
      %v1663 = vmax.f32 %v1653, 0.0
      %v1664 = vmax.f32 %v1654, 0.0
      %v1665 = vmax.f32 %v1655, 0.0
      %v1666 = vmax.f32 %v1656, 0.0
      %v1667 = vmax.f32 %v1657, 0.0
      %v1668 = vmax.f32 %v1658, 0.0
      %v1669 = vmax.f32 %v1659, 0.0
      %v1670 = vmax.f32 %v1660, 0.0
      %v1671 = vmax.f32 %v1661, 0.0
      %v1672 = vmax.f32 %v1662, 0.0
      %vm1673 = vcmask 130048
      %1674 = vst.msk [vmem:[%s170] sm:$0xff] %vm1673, %v1663
      %1675 = vst.msk [vmem:[%s170 + $0x8] sm:$0xff] %vm1673, %v1664
      %1676 = vst.msk [vmem:[%s170 + $0x10] sm:$0xff] %vm1673, %v1665
      %1677 = vst.msk [vmem:[%s170 + $0x18] sm:$0xff] %vm1673, %v1666
      %1678 = vst.msk [vmem:[%s170 + $0x20] sm:$0xff] %vm1673, %v1667
      %1679 = vst.msk [vmem:[%s170 + $0x28] sm:$0xff] %vm1673, %v1668
      %1680 = vst.msk [vmem:[%s170 + $0x30] sm:$0xff] %vm1673, %v1669
      %1681 = vst.msk [vmem:[%s170 + $0x38] sm:$0xff] %vm1673, %v1670
      %1682 = vst.msk [vmem:[%s170 + $0x40] sm:$0xff] %vm1673, %v1671
      %1683 = vst.msk [vmem:[%s170 + $0x48] sm:$0xff] %vm1673, %v1672
      %p1684 = scmp.lt.s32.totalorder %s14, 15
      %s1685 = scalar_select %p1684, %s14, 15
      %s1686 = smul.addr %s1685, 10
      %s1687 = smul.addr %s1686, 8
      %s1688 = scalar_lea.vmem %s3, %s1687
      // Predicated region
      $region33: #{tonic_ssn_forward.4} parent=31 // pred_check
        %p1689 = pneg %p100
      $region34: #{tonic_ssn_forward.4} parent=31 // pred_check_branch
        %1691 = sbr.rel (%p1689) target = $region36
      $region35: #{tonic_ssn_forward.4} parent=31 // pred_region
        _
      $region36: #{tonic_ssn_forward.4} parent=31 // pred_fallthru
        _
    $region32: #{tonic_ssn_forward.4} parent=5 // pred_fallthru
      _
    %p1692 = scmp.le.s32.totalorder 2, %s9
    // Predicated region
    $region37: #{tonic_ssn_forward.4} parent=5 // pred_check
      %p1693 = pneg %p1692
    $region38: #{tonic_ssn_forward.4} parent=5 // pred_check_branch
      %1695 = sbr.rel (%p1693) target = $region40
    $region39: #{tonic_ssn_forward.4} parent=5 // pred_region
      %s1696 = ssub.s32 %s9, 2
      // Predicated region
      $region41: #{tonic_ssn_forward.4} parent=39 // pred_check
        %p1697 = pneg %p106
      $region42: #{tonic_ssn_forward.4} parent=39 // pred_check_branch
        %1699 = sbr.rel (%p1697) target = $region44
      $region43: #{tonic_ssn_forward.4} parent=39 // pred_region
        %p1700 = scmp.lt.s32.totalorder %s15, 15
        %s1701 = scalar_select %p1700, %s15, 15
        %s1702 = smul.addr %s1701, 10
        %s1703 = smul.addr %s1702, 8
        %s1704 = scalar_lea.vmem %s3, %s1703
      $region44: #{tonic_ssn_forward.4} parent=39 // pred_fallthru
        _
    $region40: #{tonic_ssn_forward.4} parent=5 // pred_fallthru
      _
  $region6: #{tonic_ssn_forward.4} parent=0 // loop_footer
    %s13 = sadd.s32 1, %s9
  $region7: #{tonic_ssn_forward.4} parent=0 // loop_footer_branch
    %8 = sbr.rel target = $region3
  $region8: #{tonic_ssn_forward.4} parent=0 // loop_exit
    _

// kernel: tonic_ssn_forward.5
$region0: #{tonic_ssn_forward.5}
  #allocation0 [shape = 'u32[]', space=smem, size = 0x4, offset = 0x4, fixed_abs, tag = 'smem constant byte address 0x4 - core index']
  #allocation1 [shape = 'u32[144,128]{1,0:T(1,128)}', space=vmem, size = 0x12000, scoped, tag = 'internal scratch']
  %s0 = inlined_call_operand.vmem [shape: f32[16,110,16], index: 0, kind: input, shape index: {}]
  %s1 = inlined_call_operand.vmem [shape: f32[144,32], index: 1, kind: input, shape index: {}]
  %s2 = inlined_call_operand.vmem [shape: f32[1,32], index: 2, kind: input, shape index: {}]
  %s3 = inlined_call_operand.vmem [shape: f32[16,80,32], index: 3, kind: output, shape index: {}]
  %s4 = sld [smem:[#allocation0]]
  $region45: #{tonic_ssn_forward.5} parent=0
    _
  %s6 = ssub.s32 1, %s4
  %s7 = scalar_select 0, %s6, %s4
  loop: start=0, step=1, limit=18
  $region2: #{tonic_ssn_forward.5} parent=0 // loop_pre_header
    _
  $region3: #{tonic_ssn_forward.5} parent=0 // loop_header
    %s9 = sphi 0, %s13
    %p10 = scmp.ge.s32.totalorder %s9, 18
    %s19 = sphi 0, %s21
    %s22 = sphi 0, %s19
    %s23 = sphi 0, %s22
    %s39 = sphi 0, %s23
    %s43 = sphi 0, %s43
    %s45 = sphi 0, %s43
    %s46 = sphi 0, %s45
    %s60 = sphi 0, %s46
    %s64 = sphi 0, %s64
    %s66 = sphi 0, %s64
    %s67 = sphi 0, %s66
    %s81 = sphi 0, %s67
    %s87 = sphi 0, %s89
    %s90 = sphi 0, %s87
    %s91 = sphi 0, %s90
    %s107 = sphi 0, %s91
  $region4: #{tonic_ssn_forward.5} parent=0 // loop_header_branch
    %12 = sbr.rel (%p10) target = $region8
  $region5: #{tonic_ssn_forward.5} parent=0 // loop_body
    %s14 = ssub.s32 %s9, 1
    %s15 = ssub.s32 %s9, 2
    %s16 = sadd.s32 %s9, 1
    %s17 = ssub.s32 %s9, %s16
    %p18 = scmp.eq.s32.totalorder %s17, 0
    %s20 = sadd.s32 %s19, 1
    %s21 = scalar_select %p18, %s19, %s20
    %p24 = pneg %p18
    %p25 = scmp.eq.s32.totalorder %s9, 15
    %p26 = por %p24, %p25
    %p27 = scmp.ne.s32.totalorder %s19, %s22
    %p28 = scmp.eq.s32.totalorder %s9, 0
    %p29 = por %p27, %p28
    %p30 = scmp.ne.s32.totalorder %s19, %s22
    %p31 = scmp.eq.s32.totalorder %s14, 15
    %p32 = por %p30, %p31
    %p33 = scmp.ne.s32.totalorder %s22, %s23
    %p34 = scmp.eq.s32.totalorder %s14, 0
    %p35 = por %p33, %p34
    %p36 = scmp.ne.s32.totalorder %s22, %s23
    %p37 = scmp.eq.s32.totalorder %s15, 15
    %p38 = por %p36, %p37
    %p40 = scmp.ne.s32.totalorder %s23, %s39
    %p41 = scmp.eq.s32.totalorder %s15, 0
    %p42 = por %p40, %p41
    %s44 = sadd.s32 %s43, 1
    %p47 = scmp.eq.s32.totalorder %s9, 15
    %p48 = scmp.ne.s32.totalorder %s43, %s45
    %p49 = scmp.eq.s32.totalorder %s9, 0
    %p50 = por %p48, %p49
    %p51 = scmp.ne.s32.totalorder %s43, %s45
    %p52 = scmp.eq.s32.totalorder %s14, 15
    %p53 = por %p51, %p52
    %p54 = scmp.ne.s32.totalorder %s45, %s46
    %p55 = scmp.eq.s32.totalorder %s14, 0
    %p56 = por %p54, %p55
    %p57 = scmp.ne.s32.totalorder %s45, %s46
    %p58 = scmp.eq.s32.totalorder %s15, 15
    %p59 = por %p57, %p58
    %p61 = scmp.ne.s32.totalorder %s46, %s60
    %p62 = scmp.eq.s32.totalorder %s15, 0
    %p63 = por %p61, %p62
    %s65 = sadd.s32 %s64, 1
    %p68 = scmp.eq.s32.totalorder %s9, 15
    %p69 = scmp.ne.s32.totalorder %s64, %s66
    %p70 = scmp.eq.s32.totalorder %s9, 0
    %p71 = por %p69, %p70
    %p72 = scmp.ne.s32.totalorder %s64, %s66
    %p73 = scmp.eq.s32.totalorder %s14, 15
    %p74 = por %p72, %p73
    %p75 = scmp.ne.s32.totalorder %s66, %s67
    %p76 = scmp.eq.s32.totalorder %s14, 0
    %p77 = por %p75, %p76
    %p78 = scmp.ne.s32.totalorder %s66, %s67
    %p79 = scmp.eq.s32.totalorder %s15, 15
    %p80 = por %p78, %p79
    %p82 = scmp.ne.s32.totalorder %s67, %s81
    %p83 = scmp.eq.s32.totalorder %s15, 0
    %p84 = por %p82, %p83
    %s85 = ssub.s32 %s9, %s16
    %p86 = scmp.eq.s32.totalorder %s85, 0
    %s88 = sadd.s32 %s87, 1
    %s89 = scalar_select %p86, %s87, %s88
    %p92 = pneg %p86
    %p93 = scmp.eq.s32.totalorder %s9, 15
    %p94 = por %p92, %p93
    %p95 = scmp.ne.s32.totalorder %s87, %s90
    %p96 = scmp.eq.s32.totalorder %s9, 0
    %p97 = por %p95, %p96
    %p98 = scmp.ne.s32.totalorder %s87, %s90
    %p99 = scmp.eq.s32.totalorder %s14, 15
    %p100 = por %p98, %p99
    %p101 = scmp.ne.s32.totalorder %s90, %s91
    %p102 = scmp.eq.s32.totalorder %s14, 0
    %p103 = por %p101, %p102
    %p104 = scmp.ne.s32.totalorder %s90, %s91
    %p105 = scmp.eq.s32.totalorder %s15, 15
    %p106 = por %p104, %p105
    %p108 = scmp.ne.s32.totalorder %s91, %s107
    %p109 = scmp.eq.s32.totalorder %s15, 0
    %p110 = por %p108, %p109
    %p111 = scmp.le.s32.totalorder 1, %s9
    %p112 = scmp.lt.s32.totalorder %s9, 17
    %p113 = pnand %p111, %p112
    %p114 = pneg %p113
    // Predicated region
    $region9: #{tonic_ssn_forward.5} parent=5 // pred_check
      _
    $region10: #{tonic_ssn_forward.5} parent=5 // pred_check_branch
      %116 = sbr.rel (%p113) target = $region12
    $region11: #{tonic_ssn_forward.5} parent=5 // pred_region
      %s117 = ssub.s32 %s9, 1
      // Predicated region
      $region13: #{tonic_ssn_forward.5} parent=11 // pred_check
        %p118 = pneg %p56
      $region14: #{tonic_ssn_forward.5} parent=11 // pred_check_branch
        %120 = sbr.rel (%p118) target = $region16
      $region15: #{tonic_ssn_forward.5} parent=11 // pred_region
        _
      $region16: #{tonic_ssn_forward.5} parent=11 // pred_fallthru
        _
      // Predicated region
      $region17: #{tonic_ssn_forward.5} parent=11 // pred_check
        %p121 = pneg %p77
      $region18: #{tonic_ssn_forward.5} parent=11 // pred_check_branch
        %123 = sbr.rel (%p121) target = $region20
      $region19: #{tonic_ssn_forward.5} parent=11 // pred_region
        _
      $region20: #{tonic_ssn_forward.5} parent=11 // pred_fallthru
        _
    $region12: #{tonic_ssn_forward.5} parent=5 // pred_fallthru
      _
    %p124 = scmp.lt.s32.totalorder %s9, 16
    // Predicated region
    $region21: #{tonic_ssn_forward.5} parent=5 // pred_check
      %p125 = pneg %p124
    $region22: #{tonic_ssn_forward.5} parent=5 // pred_check_branch
      %127 = sbr.rel (%p125) target = $region24
    $region23: #{tonic_ssn_forward.5} parent=5 // pred_region
      // Predicated region
      $region25: #{tonic_ssn_forward.5} parent=23 // pred_check
        %p128 = pneg %p29
      $region26: #{tonic_ssn_forward.5} parent=23 // pred_check_branch
        %130 = sbr.rel (%p128) target = $region28
      $region27: #{tonic_ssn_forward.5} parent=23 // pred_region
        %p131 = scmp.lt.s32.totalorder %s9, 15
        %s132 = scalar_select %p131, %s9, 15
        %s133 = smul.addr %s132, 14
        %s134 = smul.addr %s133, 8
        %s135 = scalar_lea.vmem %s0, %s134
      $region28: #{tonic_ssn_forward.5} parent=23 // pred_fallthru
        _
    $region24: #{tonic_ssn_forward.5} parent=5 // pred_fallthru
      _
    %p136 = scmp.le.s32.totalorder 1, %s9
    %p137 = scmp.lt.s32.totalorder %s9, 17
    %p138 = pnand %p136, %p137
    %p139 = pneg %p138
    // Predicated region
    $region29: #{tonic_ssn_forward.5} parent=5 // pred_check
      _
    $region30: #{tonic_ssn_forward.5} parent=5 // pred_check_branch
      %141 = sbr.rel (%p138) target = $region32
    $region31: #{tonic_ssn_forward.5} parent=5 // pred_region
      %s142 = ssub.s32 %s9, 1
      %p143 = scmp.lt.s32.totalorder %s14, 15
      %s144 = scalar_select %p143, %s14, 15
      %s145 = smul.addr %s144, 14
      %s146 = smul.addr %s145, 8
      %s147 = scalar_lea.vmem %s0, %s146
      %p148 = pneg %p35
      %p149 = pneg %p32
      %p150 = pneg %p56
      %p151 = pneg %p53
      %p152 = pneg %p77
      %p153 = pneg %p74
      %p154 = pneg %p103
      %p155 = pneg %p100
      %p156 = scmp.lt.s32.totalorder %s14, 15
      %s157 = scalar_select %p156, %s14, 15
      %s158 = smul.addr %s157, 10
      %s159 = smul.addr %s158, 8
      %s160 = scalar_lea.vmem %s3, %s159
      %p161 = scmp.lt.s32.totalorder %s14, 15
      %s162 = scalar_select %p161, %s14, 15
      %s163 = smul.addr %s162, 14
      %s164 = smul.addr %s163, 8
      %s165 = scalar_lea.vmem %s0, %s164
      %p166 = scmp.lt.s32.totalorder %s14, 15
      %s167 = scalar_select %p166, %s14, 15
      %s168 = smul.addr %s167, 10
      %s169 = smul.addr %s168, 8
      %s170 = scalar_lea.vmem %s3, %s169
      %v171 = vld [vmem:[%s165] sm:$0xff]
      %v172 = vld [vmem:[%s165 + $0x8] sm:$0xff]
      %v173 = vld [vmem:[%s165 + $0x10] sm:$0xff]
      %v174 = vld [vmem:[%s165 + $0x18] sm:$0xff]
      %v175 = vld [vmem:[%s165 + $0x20] sm:$0xff]
      %v176 = vld [vmem:[%s165 + $0x28] sm:$0xff]
      %v177 = vld [vmem:[%s165 + $0x30] sm:$0xff]
      %v178 = vld [vmem:[%s165 + $0x38] sm:$0xff]
      %v179 = vld [vmem:[%s165 + $0x40] sm:$0xff]
      %v180 = vld [vmem:[%s165 + $0x48] sm:$0xff]
      %v181 = vld [vmem:[%s1] sm:$0xff]
      %v182 = vld [vmem:[%s1 + $0x8] sm:$0xff]
      %v183 = vld [vmem:[%s165 + $0x1] sm:$0xff]
      %v184 = vld [vmem:[%s165 + $0x9] sm:$0xff]
      %v185 = vld [vmem:[%s165 + $0x11] sm:$0xff]
      %v186 = vld [vmem:[%s165 + $0x19] sm:$0xff]
      %v187 = vld [vmem:[%s165 + $0x21] sm:$0xff]
      %v188 = vld [vmem:[%s165 + $0x29] sm:$0xff]
      %v189 = vld [vmem:[%s165 + $0x31] sm:$0xff]
      %v190 = vld [vmem:[%s165 + $0x39] sm:$0xff]
      %v191 = vld [vmem:[%s165 + $0x41] sm:$0xff]
      %v192 = vld [vmem:[%s165 + $0x49] sm:$0xff]
      %v193 = vld [vmem:[%s1 + $0x10] sm:$0xff]
      %v194 = vld [vmem:[%s1 + $0x18] sm:$0xff]
      %vm195 = vcmask 130048
      %v197 = vsel %vm195, %v183, 0
      %v200 = vsel %vm195, %v184, 0
      %v203 = vsel %vm195, %v185, 0
      %v206 = vsel %vm195, %v186, 0
      %v209 = vsel %vm195, %v187, 0
      %v212 = vsel %vm195, %v188, 0
      %v215 = vsel %vm195, %v189, 0
      %v218 = vsel %vm195, %v190, 0
      %v221 = vsel %vm195, %v191, 0
      %v224 = vsel %vm195, %v192, 0
      %226 = vmatprep.subr.mxu0 0.0
      %227 = vmatpush1.msra.mxu0 %v193
      %228 = vmatprep.subr.mxu0 0.0
      %229 = vmatpush1.msra.mxu0 %v194
      %230 = vmatprep.subr.mxu0 0.0
      %231 = vmatpush1.msra.mxu0 0.0
      %232 = vmatprep.subr.mxu0 0.0
      %233 = vmatpush1.msra.mxu0 0.0
      %234 = vmatprep.subr.mxu0 0.0
      %235 = vmatpush1.msra.mxu0 0.0
      %236 = vmatprep.subr.mxu0 0.0
      %237 = vmatpush1.msra.mxu0 0.0
      %238 = vmatprep.subr.mxu0 0.0
      %239 = vmatpush1.msra.mxu0 0.0
      %240 = vmatprep.subr.mxu0 0.0
      %241 = vmatpush1.msra.mxu0 0.0
      %242 = vmatprep.subr.mxu0 0.0
      %243 = vmatpush1.msra.mxu0 0.0
      %244 = vmatprep.subr.mxu0 0.0
      %245 = vmatpush1.msra.mxu0 0.0
      %246 = vmatprep.subr.mxu0 0.0
      %247 = vmatpush1.msra.mxu0 0.0
      %248 = vmatprep.subr.mxu0 0.0
      %249 = vmatpush1.msra.mxu0 0.0
      %250 = vmatprep.subr.mxu0 0.0
      %251 = vmatpush1.msra.mxu0 0.0
      %252 = vmatprep.subr.mxu0 0.0
      %253 = vmatpush1.msra.mxu0 0.0
      %254 = vmatprep.subr.mxu0 0.0
      %255 = vmatpush1.msra.mxu0 0.0
      %256 = vmatprep.subr.mxu0 0.0
      %257 = vmatpush1.msra.mxu0 0.0
      %258 = vmatprep.subr.mxu0 0.0
      %259 = vmatpush1.msra.mxu0 0.0
      %260 = vmatprep.subr.mxu0 0.0
      %261 = vmatpush1.msra.mxu0 0.0
      %262 = vmatprep.subr.mxu0 0.0
      %263 = vmatpush1.msra.mxu0 0.0
      %264 = vmatprep.subr.mxu0 0.0
      %265 = vmatpush1.msra.mxu0 0.0
      %266 = vmatprep.subr.mxu0 0.0
      %267 = vmatpush1.msra.mxu0 0.0
      %268 = vmatprep.subr.mxu0 0.0
      %269 = vmatpush1.msra.mxu0 0.0
      %270 = vmatprep.subr.mxu0 0.0
      %271 = vmatpush1.msra.mxu0 0.0
      %272 = vmatprep.subr.mxu0 0.0
      %273 = vmatpush1.msra.mxu0 0.0
      %274 = vmatprep.subr.mxu0 0.0
      %275 = vmatpush1.msra.mxu0 0.0
      %276 = vmatprep.subr.mxu0 0.0
      %277 = vmatpush1.msra.mxu0 0.0
      %278 = vmatprep.subr.mxu0 0.0
      %279 = vmatpush1.msra.mxu0 0.0
      %280 = vmatprep.subr.mxu0 0.0
      %281 = vmatpush1.msra.mxu0 0.0
      %282 = vmatprep.subr.mxu0 0.0
      %283 = vmatpush1.msra.mxu0 0.0
      %284 = vmatprep.subr.mxu0 0.0
      %285 = vmatpush1.msra.mxu0 0.0
      %286 = vmatprep.subr.mxu0 0.0
      %287 = vmatpush1.msra.mxu0 0.0
      %288 = vmatprep.subr.mxu0 0.0
      %289 = vmatpush1.msra.mxu0 0.0
      %290 = vmatprep.mubr.f32.mxu0 0.0
      %291 = vmatmul.mubr.f32.gmra.mrb[0].mxu0 %v197
      %v292 = vpop.f32.mrb[0].mxu0
      %v293 = vadd.f32 0.0, %v292
      %v294 = vpop.f32.mrb[0].mxu0
      %295 = vmatprep.mubr.f32.mxu0 0.0
      %296 = vmatmul.mubr.f32.gmra.mrb[0].mxu0 %v200
      %v297 = vpop.f32.mrb[0].mxu0
      %v298 = vadd.f32 0.0, %v297
      %v299 = vpop.f32.mrb[0].mxu0
      %300 = vmatprep.mubr.f32.mxu0 0.0
      %301 = vmatmul.mubr.f32.gmra.mrb[0].mxu0 %v203
      %v302 = vpop.f32.mrb[0].mxu0
      %v303 = vadd.f32 0.0, %v302
      %v304 = vpop.f32.mrb[0].mxu0
      %305 = vmatprep.mubr.f32.mxu0 0.0
      %306 = vmatmul.mubr.f32.gmra.mrb[0].mxu0 %v206
      %v307 = vpop.f32.mrb[0].mxu0
      %v308 = vadd.f32 0.0, %v307
      %v309 = vpop.f32.mrb[0].mxu0
      %310 = vmatprep.mubr.f32.mxu0 0.0
      %311 = vmatmul.mubr.f32.gmra.mrb[0].mxu0 %v209
      %v312 = vpop.f32.mrb[0].mxu0
      %v313 = vadd.f32 0.0, %v312
      %v314 = vpop.f32.mrb[0].mxu0
      %315 = vmatprep.mubr.f32.mxu0 0.0
      %316 = vmatmul.mubr.f32.gmra.mrb[0].mxu0 %v212
      %v317 = vpop.f32.mrb[0].mxu0
      %v318 = vadd.f32 0.0, %v317
      %v319 = vpop.f32.mrb[0].mxu0
      %320 = vmatprep.mubr.f32.mxu0 0.0
      %321 = vmatmul.mubr.f32.gmra.mrb[0].mxu0 %v215
      %v322 = vpop.f32.mrb[0].mxu0
      %v323 = vadd.f32 0.0, %v322
      %v324 = vpop.f32.mrb[0].mxu0
      %325 = vmatprep.mubr.f32.mxu0 0.0
      %326 = vmatmul.mubr.f32.gmra.mrb[0].mxu0 %v218
      %v327 = vpop.f32.mrb[0].mxu0
      %v328 = vadd.f32 0.0, %v327
      %v329 = vpop.f32.mrb[0].mxu0
      %330 = vmatprep.mubr.f32.mxu0 0.0
      %331 = vmatmul.mubr.f32.gmra.mrb[0].mxu0 %v221
      %v332 = vpop.f32.mrb[0].mxu0
      %v333 = vadd.f32 0.0, %v332
      %v334 = vpop.f32.mrb[0].mxu0
      %335 = vmatprep.mubr.f32.mxu0 0.0
      %336 = vmatmul.mubr.f32.gmra.mrb[0].mxu0 %v224
      %v337 = vpop.f32.mrb[0].mxu0
      %v338 = vadd.f32 0.0, %v337
      %v339 = vpop.f32.mrb[0].mxu0
      %340 = vdwg.mxu0
      %v342 = vsel %vm195, %v171, 0
      %v345 = vsel %vm195, %v172, 0
      %v348 = vsel %vm195, %v173, 0
      %v351 = vsel %vm195, %v174, 0
      %v354 = vsel %vm195, %v175, 0
      %v357 = vsel %vm195, %v176, 0
      %v360 = vsel %vm195, %v177, 0
      %v363 = vsel %vm195, %v178, 0
      %v366 = vsel %vm195, %v179, 0
      %v369 = vsel %vm195, %v180, 0
      %371 = vmatprep.subr.mxu0 0.0
      %372 = vmatpush1.msra.mxu0 %v181
      %373 = vmatprep.subr.mxu0 0.0
      %374 = vmatpush1.msra.mxu0 %v182
      %375 = vmatprep.subr.mxu0 0.0
      %376 = vmatpush1.msra.mxu0 0.0
      %377 = vmatprep.subr.mxu0 0.0
      %378 = vmatpush1.msra.mxu0 0.0
      %379 = vmatprep.subr.mxu0 0.0
      %380 = vmatpush1.msra.mxu0 0.0
      %381 = vmatprep.subr.mxu0 0.0
      %382 = vmatpush1.msra.mxu0 0.0
      %383 = vmatprep.subr.mxu0 0.0
      %384 = vmatpush1.msra.mxu0 0.0
      %385 = vmatprep.subr.mxu0 0.0
      %386 = vmatpush1.msra.mxu0 0.0
      %387 = vmatprep.subr.mxu0 0.0
      %388 = vmatpush1.msra.mxu0 0.0
      %389 = vmatprep.subr.mxu0 0.0
      %390 = vmatpush1.msra.mxu0 0.0
      %391 = vmatprep.subr.mxu0 0.0
      %392 = vmatpush1.msra.mxu0 0.0
      %393 = vmatprep.subr.mxu0 0.0
      %394 = vmatpush1.msra.mxu0 0.0
      %395 = vmatprep.subr.mxu0 0.0
      %396 = vmatpush1.msra.mxu0 0.0
      %397 = vmatprep.subr.mxu0 0.0
      %398 = vmatpush1.msra.mxu0 0.0
      %399 = vmatprep.subr.mxu0 0.0
      %400 = vmatpush1.msra.mxu0 0.0
      %401 = vmatprep.subr.mxu0 0.0
      %402 = vmatpush1.msra.mxu0 0.0
      %403 = vmatprep.subr.mxu0 0.0
      %404 = vmatpush1.msra.mxu0 0.0
      %405 = vmatprep.subr.mxu0 0.0
      %406 = vmatpush1.msra.mxu0 0.0
      %407 = vmatprep.subr.mxu0 0.0
      %408 = vmatpush1.msra.mxu0 0.0
      %409 = vmatprep.subr.mxu0 0.0
      %410 = vmatpush1.msra.mxu0 0.0
      %411 = vmatprep.subr.mxu0 0.0
      %412 = vmatpush1.msra.mxu0 0.0
      %413 = vmatprep.subr.mxu0 0.0
      %414 = vmatpush1.msra.mxu0 0.0
      %415 = vmatprep.subr.mxu0 0.0
      %416 = vmatpush1.msra.mxu0 0.0
      %417 = vmatprep.subr.mxu0 0.0
      %418 = vmatpush1.msra.mxu0 0.0
      %419 = vmatprep.subr.mxu0 0.0
      %420 = vmatpush1.msra.mxu0 0.0
      %421 = vmatprep.subr.mxu0 0.0
      %422 = vmatpush1.msra.mxu0 0.0
      %423 = vmatprep.subr.mxu0 0.0
      %424 = vmatpush1.msra.mxu0 0.0
      %425 = vmatprep.subr.mxu0 0.0
      %426 = vmatpush1.msra.mxu0 0.0
      %427 = vmatprep.subr.mxu0 0.0
      %428 = vmatpush1.msra.mxu0 0.0
      %429 = vmatprep.subr.mxu0 0.0
      %430 = vmatpush1.msra.mxu0 0.0
      %431 = vmatprep.subr.mxu0 0.0
      %432 = vmatpush1.msra.mxu0 0.0
      %433 = vmatprep.subr.mxu0 0.0
      %434 = vmatpush1.msra.mxu0 0.0
      %435 = vmatprep.mubr.f32.mxu0 0.0
      %436 = vmatmul.mubr.f32.gmra.mrb[0].mxu0 %v342
      %v437 = vpop.f32.mrb[0].mxu0
      %v438 = vadd.f32 %v293, %v437
      %v439 = vpop.f32.mrb[0].mxu0
      %440 = vmatprep.mubr.f32.mxu0 0.0
      %441 = vmatmul.mubr.f32.gmra.mrb[0].mxu0 %v345
      %v442 = vpop.f32.mrb[0].mxu0
      %v443 = vadd.f32 %v298, %v442
      %v444 = vpop.f32.mrb[0].mxu0
      %445 = vmatprep.mubr.f32.mxu0 0.0
      %446 = vmatmul.mubr.f32.gmra.mrb[0].mxu0 %v348
      %v447 = vpop.f32.mrb[0].mxu0
      %v448 = vadd.f32 %v303, %v447
      %v449 = vpop.f32.mrb[0].mxu0
      %450 = vmatprep.mubr.f32.mxu0 0.0
      %451 = vmatmul.mubr.f32.gmra.mrb[0].mxu0 %v351
      %v452 = vpop.f32.mrb[0].mxu0
      %v453 = vadd.f32 %v308, %v452
      %v454 = vpop.f32.mrb[0].mxu0
      %455 = vmatprep.mubr.f32.mxu0 0.0
      %456 = vmatmul.mubr.f32.gmra.mrb[0].mxu0 %v354
      %v457 = vpop.f32.mrb[0].mxu0
      %v458 = vadd.f32 %v313, %v457
      %v459 = vpop.f32.mrb[0].mxu0
      %460 = vmatprep.mubr.f32.mxu0 0.0
      %461 = vmatmul.mubr.f32.gmra.mrb[0].mxu0 %v357
      %v462 = vpop.f32.mrb[0].mxu0
      %v463 = vadd.f32 %v318, %v462
      %v464 = vpop.f32.mrb[0].mxu0
      %465 = vmatprep.mubr.f32.mxu0 0.0
      %466 = vmatmul.mubr.f32.gmra.mrb[0].mxu0 %v360
      %v467 = vpop.f32.mrb[0].mxu0
      %v468 = vadd.f32 %v323, %v467
      %v469 = vpop.f32.mrb[0].mxu0
      %470 = vmatprep.mubr.f32.mxu0 0.0
      %471 = vmatmul.mubr.f32.gmra.mrb[0].mxu0 %v363
      %v472 = vpop.f32.mrb[0].mxu0
      %v473 = vadd.f32 %v328, %v472
      %v474 = vpop.f32.mrb[0].mxu0
      %475 = vmatprep.mubr.f32.mxu0 0.0
      %476 = vmatmul.mubr.f32.gmra.mrb[0].mxu0 %v366
      %v477 = vpop.f32.mrb[0].mxu0
      %v478 = vadd.f32 %v333, %v477
      %v479 = vpop.f32.mrb[0].mxu0
      %480 = vmatprep.mubr.f32.mxu0 0.0
      %481 = vmatmul.mubr.f32.gmra.mrb[0].mxu0 %v369
      %v482 = vpop.f32.mrb[0].mxu0
      %v483 = vadd.f32 %v338, %v482
      %v484 = vpop.f32.mrb[0].mxu0
      %485 = vdwg.mxu0
      %v486 = vld [vmem:[%s165 + $0x2] sm:$0xff]
      %v487 = vld [vmem:[%s165 + $0xa] sm:$0xff]
      %v488 = vld [vmem:[%s165 + $0x12] sm:$0xff]
      %v489 = vld [vmem:[%s165 + $0x1a] sm:$0xff]
      %v490 = vld [vmem:[%s165 + $0x22] sm:$0xff]
      %v491 = vld [vmem:[%s165 + $0x2a] sm:$0xff]
      %v492 = vld [vmem:[%s165 + $0x32] sm:$0xff]
      %v493 = vld [vmem:[%s165 + $0x3a] sm:$0xff]
      %v494 = vld [vmem:[%s165 + $0x42] sm:$0xff]
      %v495 = vld [vmem:[%s165 + $0x4a] sm:$0xff]
      %v496 = vld [vmem:[%s1 + $0x20] sm:$0xff]
      %v497 = vld [vmem:[%s1 + $0x28] sm:$0xff]
      %v499 = vsel %vm195, %v486, 0
      %v502 = vsel %vm195, %v487, 0
      %v505 = vsel %vm195, %v488, 0
      %v508 = vsel %vm195, %v489, 0
      %v511 = vsel %vm195, %v490, 0
      %v514 = vsel %vm195, %v491, 0
      %v517 = vsel %vm195, %v492, 0
      %v520 = vsel %vm195, %v493, 0
      %v523 = vsel %vm195, %v494, 0
      %v526 = vsel %vm195, %v495, 0
      %528 = vmatprep.subr.mxu0 0.0
      %529 = vmatpush1.msra.mxu0 %v496
      %530 = vmatprep.subr.mxu0 0.0
      %531 = vmatpush1.msra.mxu0 %v497
      %532 = vmatprep.subr.mxu0 0.0
      %533 = vmatpush1.msra.mxu0 0.0
      %534 = vmatprep.subr.mxu0 0.0
      %535 = vmatpush1.msra.mxu0 0.0
      %536 = vmatprep.subr.mxu0 0.0
      %537 = vmatpush1.msra.mxu0 0.0
      %538 = vmatprep.subr.mxu0 0.0
      %539 = vmatpush1.msra.mxu0 0.0
      %540 = vmatprep.subr.mxu0 0.0
      %541 = vmatpush1.msra.mxu0 0.0
      %542 = vmatprep.subr.mxu0 0.0
      %543 = vmatpush1.msra.mxu0 0.0
      %544 = vmatprep.subr.mxu0 0.0
      %545 = vmatpush1.msra.mxu0 0.0
      %546 = vmatprep.subr.mxu0 0.0
      %547 = vmatpush1.msra.mxu0 0.0
      %548 = vmatprep.subr.mxu0 0.0
      %549 = vmatpush1.msra.mxu0 0.0
      %550 = vmatprep.subr.mxu0 0.0
      %551 = vmatpush1.msra.mxu0 0.0
      %552 = vmatprep.subr.mxu0 0.0
      %553 = vmatpush1.msra.mxu0 0.0
      %554 = vmatprep.subr.mxu0 0.0
      %555 = vmatpush1.msra.mxu0 0.0
      %556 = vmatprep.subr.mxu0 0.0
      %557 = vmatpush1.msra.mxu0 0.0
      %558 = vmatprep.subr.mxu0 0.0
      %559 = vmatpush1.msra.mxu0 0.0
      %560 = vmatprep.subr.mxu0 0.0
      %561 = vmatpush1.msra.mxu0 0.0
      %562 = vmatprep.subr.mxu0 0.0
      %563 = vmatpush1.msra.mxu0 0.0
      %564 = vmatprep.subr.mxu0 0.0
      %565 = vmatpush1.msra.mxu0 0.0
      %566 = vmatprep.subr.mxu0 0.0
      %567 = vmatpush1.msra.mxu0 0.0
      %568 = vmatprep.subr.mxu0 0.0
      %569 = vmatpush1.msra.mxu0 0.0
      %570 = vmatprep.subr.mxu0 0.0
      %571 = vmatpush1.msra.mxu0 0.0
      %572 = vmatprep.subr.mxu0 0.0
      %573 = vmatpush1.msra.mxu0 0.0
      %574 = vmatprep.subr.mxu0 0.0
      %575 = vmatpush1.msra.mxu0 0.0
      %576 = vmatprep.subr.mxu0 0.0
      %577 = vmatpush1.msra.mxu0 0.0
      %578 = vmatprep.subr.mxu0 0.0
      %579 = vmatpush1.msra.mxu0 0.0
      %580 = vmatprep.subr.mxu0 0.0
      %581 = vmatpush1.msra.mxu0 0.0
      %582 = vmatprep.subr.mxu0 0.0
      %583 = vmatpush1.msra.mxu0 0.0
      %584 = vmatprep.subr.mxu0 0.0
      %585 = vmatpush1.msra.mxu0 0.0
      %586 = vmatprep.subr.mxu0 0.0
      %587 = vmatpush1.msra.mxu0 0.0
      %588 = vmatprep.subr.mxu0 0.0
      %589 = vmatpush1.msra.mxu0 0.0
      %590 = vmatprep.subr.mxu0 0.0
      %591 = vmatpush1.msra.mxu0 0.0
      %592 = vmatprep.mubr.f32.mxu0 0.0
      %593 = vmatmul.mubr.f32.gmra.mrb[0].mxu0 %v499
      %v594 = vpop.f32.mrb[0].mxu0
      %v595 = vadd.f32 0.0, %v594
      %v596 = vpop.f32.mrb[0].mxu0
      %597 = vmatprep.mubr.f32.mxu0 0.0
      %598 = vmatmul.mubr.f32.gmra.mrb[0].mxu0 %v502
      %v599 = vpop.f32.mrb[0].mxu0
      %v600 = vadd.f32 0.0, %v599
      %v601 = vpop.f32.mrb[0].mxu0
      %602 = vmatprep.mubr.f32.mxu0 0.0
      %603 = vmatmul.mubr.f32.gmra.mrb[0].mxu0 %v505
      %v604 = vpop.f32.mrb[0].mxu0
      %v605 = vadd.f32 0.0, %v604
      %v606 = vpop.f32.mrb[0].mxu0
      %607 = vmatprep.mubr.f32.mxu0 0.0
      %608 = vmatmul.mubr.f32.gmra.mrb[0].mxu0 %v508
      %v609 = vpop.f32.mrb[0].mxu0
      %v610 = vadd.f32 0.0, %v609
      %v611 = vpop.f32.mrb[0].mxu0
      %612 = vmatprep.mubr.f32.mxu0 0.0
      %613 = vmatmul.mubr.f32.gmra.mrb[0].mxu0 %v511
      %v614 = vpop.f32.mrb[0].mxu0
      %v615 = vadd.f32 0.0, %v614
      %v616 = vpop.f32.mrb[0].mxu0
      %617 = vmatprep.mubr.f32.mxu0 0.0
      %618 = vmatmul.mubr.f32.gmra.mrb[0].mxu0 %v514
      %v619 = vpop.f32.mrb[0].mxu0
      %v620 = vadd.f32 0.0, %v619
      %v621 = vpop.f32.mrb[0].mxu0
      %622 = vmatprep.mubr.f32.mxu0 0.0
      %623 = vmatmul.mubr.f32.gmra.mrb[0].mxu0 %v517
      %v624 = vpop.f32.mrb[0].mxu0
      %v625 = vadd.f32 0.0, %v624
      %v626 = vpop.f32.mrb[0].mxu0
      %627 = vmatprep.mubr.f32.mxu0 0.0
      %628 = vmatmul.mubr.f32.gmra.mrb[0].mxu0 %v520
      %v629 = vpop.f32.mrb[0].mxu0
      %v630 = vadd.f32 0.0, %v629
      %v631 = vpop.f32.mrb[0].mxu0
      %632 = vmatprep.mubr.f32.mxu0 0.0
      %633 = vmatmul.mubr.f32.gmra.mrb[0].mxu0 %v523
      %v634 = vpop.f32.mrb[0].mxu0
      %v635 = vadd.f32 0.0, %v634
      %v636 = vpop.f32.mrb[0].mxu0
      %637 = vmatprep.mubr.f32.mxu0 0.0
      %638 = vmatmul.mubr.f32.gmra.mrb[0].mxu0 %v526
      %v639 = vpop.f32.mrb[0].mxu0
      %v640 = vadd.f32 0.0, %v639
      %v641 = vpop.f32.mrb[0].mxu0
      %642 = vdwg.mxu0
      %v643 = vadd.f32 %v438, %v595
      %v644 = vadd.f32 %v443, %v600
      %v645 = vadd.f32 %v448, %v605
      %v646 = vadd.f32 %v453, %v610
      %v647 = vadd.f32 %v458, %v615
      %v648 = vadd.f32 %v463, %v620
      %v649 = vadd.f32 %v468, %v625
      %v650 = vadd.f32 %v473, %v630
      %v651 = vadd.f32 %v478, %v635
      %v652 = vadd.f32 %v483, %v640
      %v653 = vld [vmem:[%s165 + $0xa] sm:$0xff]
      %v654 = vld [vmem:[%s165 + $0x12] sm:$0xff]
      %v655 = vld [vmem:[%s165 + $0x1a] sm:$0xff]
      %v656 = vld [vmem:[%s165 + $0x22] sm:$0xff]
      %v657 = vld [vmem:[%s165 + $0x2a] sm:$0xff]
      %v658 = vld [vmem:[%s165 + $0x32] sm:$0xff]
      %v659 = vld [vmem:[%s165 + $0x3a] sm:$0xff]
      %v660 = vld [vmem:[%s165 + $0x42] sm:$0xff]
      %v661 = vld [vmem:[%s165 + $0x4a] sm:$0xff]
      %v662 = vld [vmem:[%s165 + $0x52] sm:$0xff]
      %v663 = vld [vmem:[%s1 + $0x30] sm:$0xff]
      %v664 = vld [vmem:[%s1 + $0x38] sm:$0xff]
      %v666 = vsel %vm195, %v653, 0
      %v669 = vsel %vm195, %v654, 0
      %v672 = vsel %vm195, %v655, 0
      %v675 = vsel %vm195, %v656, 0
      %v678 = vsel %vm195, %v657, 0
      %v681 = vsel %vm195, %v658, 0
      %v684 = vsel %vm195, %v659, 0
      %v687 = vsel %vm195, %v660, 0
      %v690 = vsel %vm195, %v661, 0
      %v693 = vsel %vm195, %v662, 0
      %695 = vmatprep.subr.mxu0 0.0
      %696 = vmatpush1.msra.mxu0 %v663
      %697 = vmatprep.subr.mxu0 0.0
      %698 = vmatpush1.msra.mxu0 %v664
      %699 = vmatprep.subr.mxu0 0.0
      %700 = vmatpush1.msra.mxu0 0.0
      %701 = vmatprep.subr.mxu0 0.0
      %702 = vmatpush1.msra.mxu0 0.0
      %703 = vmatprep.subr.mxu0 0.0
      %704 = vmatpush1.msra.mxu0 0.0
      %705 = vmatprep.subr.mxu0 0.0
      %706 = vmatpush1.msra.mxu0 0.0
      %707 = vmatprep.subr.mxu0 0.0
      %708 = vmatpush1.msra.mxu0 0.0
      %709 = vmatprep.subr.mxu0 0.0
      %710 = vmatpush1.msra.mxu0 0.0
      %711 = vmatprep.subr.mxu0 0.0
      %712 = vmatpush1.msra.mxu0 0.0
      %713 = vmatprep.subr.mxu0 0.0
      %714 = vmatpush1.msra.mxu0 0.0
      %715 = vmatprep.subr.mxu0 0.0
      %716 = vmatpush1.msra.mxu0 0.0
      %717 = vmatprep.subr.mxu0 0.0
      %718 = vmatpush1.msra.mxu0 0.0
      %719 = vmatprep.subr.mxu0 0.0
      %720 = vmatpush1.msra.mxu0 0.0
      %721 = vmatprep.subr.mxu0 0.0
      %722 = vmatpush1.msra.mxu0 0.0
      %723 = vmatprep.subr.mxu0 0.0
      %724 = vmatpush1.msra.mxu0 0.0
      %725 = vmatprep.subr.mxu0 0.0
      %726 = vmatpush1.msra.mxu0 0.0
      %727 = vmatprep.subr.mxu0 0.0
      %728 = vmatpush1.msra.mxu0 0.0
      %729 = vmatprep.subr.mxu0 0.0
      %730 = vmatpush1.msra.mxu0 0.0
      %731 = vmatprep.subr.mxu0 0.0
      %732 = vmatpush1.msra.mxu0 0.0
      %733 = vmatprep.subr.mxu0 0.0
      %734 = vmatpush1.msra.mxu0 0.0
      %735 = vmatprep.subr.mxu0 0.0
      %736 = vmatpush1.msra.mxu0 0.0
      %737 = vmatprep.subr.mxu0 0.0
      %738 = vmatpush1.msra.mxu0 0.0
      %739 = vmatprep.subr.mxu0 0.0
      %740 = vmatpush1.msra.mxu0 0.0
      %741 = vmatprep.subr.mxu0 0.0
      %742 = vmatpush1.msra.mxu0 0.0
      %743 = vmatprep.subr.mxu0 0.0
      %744 = vmatpush1.msra.mxu0 0.0
      %745 = vmatprep.subr.mxu0 0.0
      %746 = vmatpush1.msra.mxu0 0.0
      %747 = vmatprep.subr.mxu0 0.0
      %748 = vmatpush1.msra.mxu0 0.0
      %749 = vmatprep.subr.mxu0 0.0
      %750 = vmatpush1.msra.mxu0 0.0
      %751 = vmatprep.subr.mxu0 0.0
      %752 = vmatpush1.msra.mxu0 0.0
      %753 = vmatprep.subr.mxu0 0.0
      %754 = vmatpush1.msra.mxu0 0.0
      %755 = vmatprep.subr.mxu0 0.0
      %756 = vmatpush1.msra.mxu0 0.0
      %757 = vmatprep.subr.mxu0 0.0
      %758 = vmatpush1.msra.mxu0 0.0
      %759 = vmatprep.mubr.f32.mxu0 0.0
      %760 = vmatmul.mubr.f32.gmra.mrb[0].mxu0 %v666
      %v761 = vpop.f32.mrb[0].mxu0
      %v762 = vadd.f32 0.0, %v761
      %v763 = vpop.f32.mrb[0].mxu0
      %764 = vmatprep.mubr.f32.mxu0 0.0
      %765 = vmatmul.mubr.f32.gmra.mrb[0].mxu0 %v669
      %v766 = vpop.f32.mrb[0].mxu0
      %v767 = vadd.f32 0.0, %v766
      %v768 = vpop.f32.mrb[0].mxu0
      %769 = vmatprep.mubr.f32.mxu0 0.0
      %770 = vmatmul.mubr.f32.gmra.mrb[0].mxu0 %v672
      %v771 = vpop.f32.mrb[0].mxu0
      %v772 = vadd.f32 0.0, %v771
      %v773 = vpop.f32.mrb[0].mxu0
      %774 = vmatprep.mubr.f32.mxu0 0.0
      %775 = vmatmul.mubr.f32.gmra.mrb[0].mxu0 %v675
      %v776 = vpop.f32.mrb[0].mxu0
      %v777 = vadd.f32 0.0, %v776
      %v778 = vpop.f32.mrb[0].mxu0
      %779 = vmatprep.mubr.f32.mxu0 0.0
      %780 = vmatmul.mubr.f32.gmra.mrb[0].mxu0 %v678
      %v781 = vpop.f32.mrb[0].mxu0
      %v782 = vadd.f32 0.0, %v781
      %v783 = vpop.f32.mrb[0].mxu0
      %784 = vmatprep.mubr.f32.mxu0 0.0
      %785 = vmatmul.mubr.f32.gmra.mrb[0].mxu0 %v681
      %v786 = vpop.f32.mrb[0].mxu0
      %v787 = vadd.f32 0.0, %v786
      %v788 = vpop.f32.mrb[0].mxu0
      %789 = vmatprep.mubr.f32.mxu0 0.0
      %790 = vmatmul.mubr.f32.gmra.mrb[0].mxu0 %v684
      %v791 = vpop.f32.mrb[0].mxu0
      %v792 = vadd.f32 0.0, %v791
      %v793 = vpop.f32.mrb[0].mxu0
      %794 = vmatprep.mubr.f32.mxu0 0.0
      %795 = vmatmul.mubr.f32.gmra.mrb[0].mxu0 %v687
      %v796 = vpop.f32.mrb[0].mxu0
      %v797 = vadd.f32 0.0, %v796
      %v798 = vpop.f32.mrb[0].mxu0
      %799 = vmatprep.mubr.f32.mxu0 0.0
      %800 = vmatmul.mubr.f32.gmra.mrb[0].mxu0 %v690
      %v801 = vpop.f32.mrb[0].mxu0
      %v802 = vadd.f32 0.0, %v801
      %v803 = vpop.f32.mrb[0].mxu0
      %804 = vmatprep.mubr.f32.mxu0 0.0
      %805 = vmatmul.mubr.f32.gmra.mrb[0].mxu0 %v693
      %v806 = vpop.f32.mrb[0].mxu0
      %v807 = vadd.f32 0.0, %v806
      %v808 = vpop.f32.mrb[0].mxu0
      %809 = vdwg.mxu0
      %v810 = vadd.f32 %v643, %v762
      %v811 = vadd.f32 %v644, %v767
      %v812 = vadd.f32 %v645, %v772
      %v813 = vadd.f32 %v646, %v777
      %v814 = vadd.f32 %v647, %v782
      %v815 = vadd.f32 %v648, %v787
      %v816 = vadd.f32 %v649, %v792
      %v817 = vadd.f32 %v650, %v797
      %v818 = vadd.f32 %v651, %v802
      %v819 = vadd.f32 %v652, %v807
      %v820 = vld [vmem:[%s165 + $0xb] sm:$0xff]
      %v821 = vld [vmem:[%s165 + $0x13] sm:$0xff]
      %v822 = vld [vmem:[%s165 + $0x1b] sm:$0xff]
      %v823 = vld [vmem:[%s165 + $0x23] sm:$0xff]
      %v824 = vld [vmem:[%s165 + $0x2b] sm:$0xff]
      %v825 = vld [vmem:[%s165 + $0x33] sm:$0xff]
      %v826 = vld [vmem:[%s165 + $0x3b] sm:$0xff]
      %v827 = vld [vmem:[%s165 + $0x43] sm:$0xff]
      %v828 = vld [vmem:[%s165 + $0x4b] sm:$0xff]
      %v829 = vld [vmem:[%s165 + $0x53] sm:$0xff]
      %v830 = vld [vmem:[%s1 + $0x40] sm:$0xff]
      %v831 = vld [vmem:[%s1 + $0x48] sm:$0xff]
      %v833 = vsel %vm195, %v820, 0
      %v836 = vsel %vm195, %v821, 0
      %v839 = vsel %vm195, %v822, 0
      %v842 = vsel %vm195, %v823, 0
      %v845 = vsel %vm195, %v824, 0
      %v848 = vsel %vm195, %v825, 0
      %v851 = vsel %vm195, %v826, 0
      %v854 = vsel %vm195, %v827, 0
      %v857 = vsel %vm195, %v828, 0
      %v860 = vsel %vm195, %v829, 0
      %862 = vmatprep.subr.mxu0 0.0
      %863 = vmatpush1.msra.mxu0 %v830
      %864 = vmatprep.subr.mxu0 0.0
      %865 = vmatpush1.msra.mxu0 %v831
      %866 = vmatprep.subr.mxu0 0.0
      %867 = vmatpush1.msra.mxu0 0.0
      %868 = vmatprep.subr.mxu0 0.0
      %869 = vmatpush1.msra.mxu0 0.0
      %870 = vmatprep.subr.mxu0 0.0
      %871 = vmatpush1.msra.mxu0 0.0
      %872 = vmatprep.subr.mxu0 0.0
      %873 = vmatpush1.msra.mxu0 0.0
      %874 = vmatprep.subr.mxu0 0.0
      %875 = vmatpush1.msra.mxu0 0.0
      %876 = vmatprep.subr.mxu0 0.0
      %877 = vmatpush1.msra.mxu0 0.0
      %878 = vmatprep.subr.mxu0 0.0
      %879 = vmatpush1.msra.mxu0 0.0
      %880 = vmatprep.subr.mxu0 0.0
      %881 = vmatpush1.msra.mxu0 0.0
      %882 = vmatprep.subr.mxu0 0.0
      %883 = vmatpush1.msra.mxu0 0.0
      %884 = vmatprep.subr.mxu0 0.0
      %885 = vmatpush1.msra.mxu0 0.0
      %886 = vmatprep.subr.mxu0 0.0
      %887 = vmatpush1.msra.mxu0 0.0
      %888 = vmatprep.subr.mxu0 0.0
      %889 = vmatpush1.msra.mxu0 0.0
      %890 = vmatprep.subr.mxu0 0.0
      %891 = vmatpush1.msra.mxu0 0.0
      %892 = vmatprep.subr.mxu0 0.0
      %893 = vmatpush1.msra.mxu0 0.0
      %894 = vmatprep.subr.mxu0 0.0
      %895 = vmatpush1.msra.mxu0 0.0
      %896 = vmatprep.subr.mxu0 0.0
      %897 = vmatpush1.msra.mxu0 0.0
      %898 = vmatprep.subr.mxu0 0.0
      %899 = vmatpush1.msra.mxu0 0.0
      %900 = vmatprep.subr.mxu0 0.0
      %901 = vmatpush1.msra.mxu0 0.0
      %902 = vmatprep.subr.mxu0 0.0
      %903 = vmatpush1.msra.mxu0 0.0
      %904 = vmatprep.subr.mxu0 0.0
      %905 = vmatpush1.msra.mxu0 0.0
      %906 = vmatprep.subr.mxu0 0.0
      %907 = vmatpush1.msra.mxu0 0.0
      %908 = vmatprep.subr.mxu0 0.0
      %909 = vmatpush1.msra.mxu0 0.0
      %910 = vmatprep.subr.mxu0 0.0
      %911 = vmatpush1.msra.mxu0 0.0
      %912 = vmatprep.subr.mxu0 0.0
      %913 = vmatpush1.msra.mxu0 0.0
      %914 = vmatprep.subr.mxu0 0.0
      %915 = vmatpush1.msra.mxu0 0.0
      %916 = vmatprep.subr.mxu0 0.0
      %917 = vmatpush1.msra.mxu0 0.0
      %918 = vmatprep.subr.mxu0 0.0
      %919 = vmatpush1.msra.mxu0 0.0
      %920 = vmatprep.subr.mxu0 0.0
      %921 = vmatpush1.msra.mxu0 0.0
      %922 = vmatprep.subr.mxu0 0.0
      %923 = vmatpush1.msra.mxu0 0.0
      %924 = vmatprep.subr.mxu0 0.0
      %925 = vmatpush1.msra.mxu0 0.0
      %926 = vmatprep.mubr.f32.mxu0 0.0
      %927 = vmatmul.mubr.f32.gmra.mrb[0].mxu0 %v833
      %v928 = vpop.f32.mrb[0].mxu0
      %v929 = vadd.f32 0.0, %v928
      %v930 = vpop.f32.mrb[0].mxu0
      %931 = vmatprep.mubr.f32.mxu0 0.0
      %932 = vmatmul.mubr.f32.gmra.mrb[0].mxu0 %v836
      %v933 = vpop.f32.mrb[0].mxu0
      %v934 = vadd.f32 0.0, %v933
      %v935 = vpop.f32.mrb[0].mxu0
      %936 = vmatprep.mubr.f32.mxu0 0.0
      %937 = vmatmul.mubr.f32.gmra.mrb[0].mxu0 %v839
      %v938 = vpop.f32.mrb[0].mxu0
      %v939 = vadd.f32 0.0, %v938
      %v940 = vpop.f32.mrb[0].mxu0
      %941 = vmatprep.mubr.f32.mxu0 0.0
      %942 = vmatmul.mubr.f32.gmra.mrb[0].mxu0 %v842
      %v943 = vpop.f32.mrb[0].mxu0
      %v944 = vadd.f32 0.0, %v943
      %v945 = vpop.f32.mrb[0].mxu0
      %946 = vmatprep.mubr.f32.mxu0 0.0
      %947 = vmatmul.mubr.f32.gmra.mrb[0].mxu0 %v845
      %v948 = vpop.f32.mrb[0].mxu0
      %v949 = vadd.f32 0.0, %v948
      %v950 = vpop.f32.mrb[0].mxu0
      %951 = vmatprep.mubr.f32.mxu0 0.0
      %952 = vmatmul.mubr.f32.gmra.mrb[0].mxu0 %v848
      %v953 = vpop.f32.mrb[0].mxu0
      %v954 = vadd.f32 0.0, %v953
      %v955 = vpop.f32.mrb[0].mxu0
      %956 = vmatprep.mubr.f32.mxu0 0.0
      %957 = vmatmul.mubr.f32.gmra.mrb[0].mxu0 %v851
      %v958 = vpop.f32.mrb[0].mxu0
      %v959 = vadd.f32 0.0, %v958
      %v960 = vpop.f32.mrb[0].mxu0
      %961 = vmatprep.mubr.f32.mxu0 0.0
      %962 = vmatmul.mubr.f32.gmra.mrb[0].mxu0 %v854
      %v963 = vpop.f32.mrb[0].mxu0
      %v964 = vadd.f32 0.0, %v963
      %v965 = vpop.f32.mrb[0].mxu0
      %966 = vmatprep.mubr.f32.mxu0 0.0
      %967 = vmatmul.mubr.f32.gmra.mrb[0].mxu0 %v857
      %v968 = vpop.f32.mrb[0].mxu0
      %v969 = vadd.f32 0.0, %v968
      %v970 = vpop.f32.mrb[0].mxu0
      %971 = vmatprep.mubr.f32.mxu0 0.0
      %972 = vmatmul.mubr.f32.gmra.mrb[0].mxu0 %v860
      %v973 = vpop.f32.mrb[0].mxu0
      %v974 = vadd.f32 0.0, %v973
      %v975 = vpop.f32.mrb[0].mxu0
      %976 = vdwg.mxu0
      %v977 = vadd.f32 %v810, %v929
      %v978 = vadd.f32 %v811, %v934
      %v979 = vadd.f32 %v812, %v939
      %v980 = vadd.f32 %v813, %v944
      %v981 = vadd.f32 %v814, %v949
      %v982 = vadd.f32 %v815, %v954
      %v983 = vadd.f32 %v816, %v959
      %v984 = vadd.f32 %v817, %v964
      %v985 = vadd.f32 %v818, %v969
      %v986 = vadd.f32 %v819, %v974
      %v987 = vld [vmem:[%s165 + $0xc] sm:$0xff]
      %v988 = vld [vmem:[%s165 + $0x14] sm:$0xff]
      %v989 = vld [vmem:[%s165 + $0x1c] sm:$0xff]
      %v990 = vld [vmem:[%s165 + $0x24] sm:$0xff]
      %v991 = vld [vmem:[%s165 + $0x2c] sm:$0xff]
      %v992 = vld [vmem:[%s165 + $0x34] sm:$0xff]
      %v993 = vld [vmem:[%s165 + $0x3c] sm:$0xff]
      %v994 = vld [vmem:[%s165 + $0x44] sm:$0xff]
      %v995 = vld [vmem:[%s165 + $0x4c] sm:$0xff]
      %v996 = vld [vmem:[%s165 + $0x54] sm:$0xff]
      %v997 = vld [vmem:[%s1 + $0x50] sm:$0xff]
      %v998 = vld [vmem:[%s1 + $0x58] sm:$0xff]
      %v1000 = vsel %vm195, %v987, 0
      %v1003 = vsel %vm195, %v988, 0
      %v1006 = vsel %vm195, %v989, 0
      %v1009 = vsel %vm195, %v990, 0
      %v1012 = vsel %vm195, %v991, 0
      %v1015 = vsel %vm195, %v992, 0
      %v1018 = vsel %vm195, %v993, 0
      %v1021 = vsel %vm195, %v994, 0
      %v1024 = vsel %vm195, %v995, 0
      %v1027 = vsel %vm195, %v996, 0
      %1029 = vmatprep.subr.mxu0 0.0
      %1030 = vmatpush1.msra.mxu0 %v997
      %1031 = vmatprep.subr.mxu0 0.0
      %1032 = vmatpush1.msra.mxu0 %v998
      %1033 = vmatprep.subr.mxu0 0.0
      %1034 = vmatpush1.msra.mxu0 0.0
      %1035 = vmatprep.subr.mxu0 0.0
      %1036 = vmatpush1.msra.mxu0 0.0
      %1037 = vmatprep.subr.mxu0 0.0
      %1038 = vmatpush1.msra.mxu0 0.0
      %1039 = vmatprep.subr.mxu0 0.0
      %1040 = vmatpush1.msra.mxu0 0.0
      %1041 = vmatprep.subr.mxu0 0.0
      %1042 = vmatpush1.msra.mxu0 0.0
      %1043 = vmatprep.subr.mxu0 0.0
      %1044 = vmatpush1.msra.mxu0 0.0
      %1045 = vmatprep.subr.mxu0 0.0
      %1046 = vmatpush1.msra.mxu0 0.0
      %1047 = vmatprep.subr.mxu0 0.0
      %1048 = vmatpush1.msra.mxu0 0.0
      %1049 = vmatprep.subr.mxu0 0.0
      %1050 = vmatpush1.msra.mxu0 0.0
      %1051 = vmatprep.subr.mxu0 0.0
      %1052 = vmatpush1.msra.mxu0 0.0
      %1053 = vmatprep.subr.mxu0 0.0
      %1054 = vmatpush1.msra.mxu0 0.0
      %1055 = vmatprep.subr.mxu0 0.0
      %1056 = vmatpush1.msra.mxu0 0.0
      %1057 = vmatprep.subr.mxu0 0.0
      %1058 = vmatpush1.msra.mxu0 0.0
      %1059 = vmatprep.subr.mxu0 0.0
      %1060 = vmatpush1.msra.mxu0 0.0
      %1061 = vmatprep.subr.mxu0 0.0
      %1062 = vmatpush1.msra.mxu0 0.0
      %1063 = vmatprep.subr.mxu0 0.0
      %1064 = vmatpush1.msra.mxu0 0.0
      %1065 = vmatprep.subr.mxu0 0.0
      %1066 = vmatpush1.msra.mxu0 0.0
      %1067 = vmatprep.subr.mxu0 0.0
      %1068 = vmatpush1.msra.mxu0 0.0
      %1069 = vmatprep.subr.mxu0 0.0
      %1070 = vmatpush1.msra.mxu0 0.0
      %1071 = vmatprep.subr.mxu0 0.0
      %1072 = vmatpush1.msra.mxu0 0.0
      %1073 = vmatprep.subr.mxu0 0.0
      %1074 = vmatpush1.msra.mxu0 0.0
      %1075 = vmatprep.subr.mxu0 0.0
      %1076 = vmatpush1.msra.mxu0 0.0
      %1077 = vmatprep.subr.mxu0 0.0
      %1078 = vmatpush1.msra.mxu0 0.0
      %1079 = vmatprep.subr.mxu0 0.0
      %1080 = vmatpush1.msra.mxu0 0.0
      %1081 = vmatprep.subr.mxu0 0.0
      %1082 = vmatpush1.msra.mxu0 0.0
      %1083 = vmatprep.subr.mxu0 0.0
      %1084 = vmatpush1.msra.mxu0 0.0
      %1085 = vmatprep.subr.mxu0 0.0
      %1086 = vmatpush1.msra.mxu0 0.0
      %1087 = vmatprep.subr.mxu0 0.0
      %1088 = vmatpush1.msra.mxu0 0.0
      %1089 = vmatprep.subr.mxu0 0.0
      %1090 = vmatpush1.msra.mxu0 0.0
      %1091 = vmatprep.subr.mxu0 0.0
      %1092 = vmatpush1.msra.mxu0 0.0
      %1093 = vmatprep.mubr.f32.mxu0 0.0
      %1094 = vmatmul.mubr.f32.gmra.mrb[0].mxu0 %v1000
      %v1095 = vpop.f32.mrb[0].mxu0
      %v1096 = vadd.f32 0.0, %v1095
      %v1097 = vpop.f32.mrb[0].mxu0
      %1098 = vmatprep.mubr.f32.mxu0 0.0
      %1099 = vmatmul.mubr.f32.gmra.mrb[0].mxu0 %v1003
      %v1100 = vpop.f32.mrb[0].mxu0
      %v1101 = vadd.f32 0.0, %v1100
      %v1102 = vpop.f32.mrb[0].mxu0
      %1103 = vmatprep.mubr.f32.mxu0 0.0
      %1104 = vmatmul.mubr.f32.gmra.mrb[0].mxu0 %v1006
      %v1105 = vpop.f32.mrb[0].mxu0
      %v1106 = vadd.f32 0.0, %v1105
      %v1107 = vpop.f32.mrb[0].mxu0
      %1108 = vmatprep.mubr.f32.mxu0 0.0
      %1109 = vmatmul.mubr.f32.gmra.mrb[0].mxu0 %v1009
      %v1110 = vpop.f32.mrb[0].mxu0
      %v1111 = vadd.f32 0.0, %v1110
      %v1112 = vpop.f32.mrb[0].mxu0
      %1113 = vmatprep.mubr.f32.mxu0 0.0
      %1114 = vmatmul.mubr.f32.gmra.mrb[0].mxu0 %v1012
      %v1115 = vpop.f32.mrb[0].mxu0
      %v1116 = vadd.f32 0.0, %v1115
      %v1117 = vpop.f32.mrb[0].mxu0
      %1118 = vmatprep.mubr.f32.mxu0 0.0
      %1119 = vmatmul.mubr.f32.gmra.mrb[0].mxu0 %v1015
      %v1120 = vpop.f32.mrb[0].mxu0
      %v1121 = vadd.f32 0.0, %v1120
      %v1122 = vpop.f32.mrb[0].mxu0
      %1123 = vmatprep.mubr.f32.mxu0 0.0
      %1124 = vmatmul.mubr.f32.gmra.mrb[0].mxu0 %v1018
      %v1125 = vpop.f32.mrb[0].mxu0
      %v1126 = vadd.f32 0.0, %v1125
      %v1127 = vpop.f32.mrb[0].mxu0
      %1128 = vmatprep.mubr.f32.mxu0 0.0
      %1129 = vmatmul.mubr.f32.gmra.mrb[0].mxu0 %v1021
      %v1130 = vpop.f32.mrb[0].mxu0
      %v1131 = vadd.f32 0.0, %v1130
      %v1132 = vpop.f32.mrb[0].mxu0
      %1133 = vmatprep.mubr.f32.mxu0 0.0
      %1134 = vmatmul.mubr.f32.gmra.mrb[0].mxu0 %v1024
      %v1135 = vpop.f32.mrb[0].mxu0
      %v1136 = vadd.f32 0.0, %v1135
      %v1137 = vpop.f32.mrb[0].mxu0
      %1138 = vmatprep.mubr.f32.mxu0 0.0
      %1139 = vmatmul.mubr.f32.gmra.mrb[0].mxu0 %v1027
      %v1140 = vpop.f32.mrb[0].mxu0
      %v1141 = vadd.f32 0.0, %v1140
      %v1142 = vpop.f32.mrb[0].mxu0
      %1143 = vdwg.mxu0
      %v1144 = vadd.f32 %v977, %v1096
      %v1145 = vadd.f32 %v978, %v1101
      %v1146 = vadd.f32 %v979, %v1106
      %v1147 = vadd.f32 %v980, %v1111
      %v1148 = vadd.f32 %v981, %v1116
      %v1149 = vadd.f32 %v982, %v1121
      %v1150 = vadd.f32 %v983, %v1126
      %v1151 = vadd.f32 %v984, %v1131
      %v1152 = vadd.f32 %v985, %v1136
      %v1153 = vadd.f32 %v986, %v1141
      %v1154 = vld [vmem:[%s165 + $0x14] sm:$0xff]
      %v1155 = vld [vmem:[%s165 + $0x1c] sm:$0xff]
      %v1156 = vld [vmem:[%s165 + $0x24] sm:$0xff]
      %v1157 = vld [vmem:[%s165 + $0x2c] sm:$0xff]
      %v1158 = vld [vmem:[%s165 + $0x34] sm:$0xff]
      %v1159 = vld [vmem:[%s165 + $0x3c] sm:$0xff]
      %v1160 = vld [vmem:[%s165 + $0x44] sm:$0xff]
      %v1161 = vld [vmem:[%s165 + $0x4c] sm:$0xff]
      %v1162 = vld [vmem:[%s165 + $0x54] sm:$0xff]
      %v1163 = vld [vmem:[%s165 + $0x5c] sm:$0xff]
      %v1164 = vld [vmem:[%s1 + $0x60] sm:$0xff]
      %v1165 = vld [vmem:[%s1 + $0x68] sm:$0xff]
      %v1167 = vsel %vm195, %v1154, 0
      %v1170 = vsel %vm195, %v1155, 0
      %v1173 = vsel %vm195, %v1156, 0
      %v1176 = vsel %vm195, %v1157, 0
      %v1179 = vsel %vm195, %v1158, 0
      %v1182 = vsel %vm195, %v1159, 0
      %v1185 = vsel %vm195, %v1160, 0
      %v1188 = vsel %vm195, %v1161, 0
      %v1191 = vsel %vm195, %v1162, 0
      %v1194 = vsel %vm195, %v1163, 0
      %1196 = vmatprep.subr.mxu0 0.0
      %1197 = vmatpush1.msra.mxu0 %v1164
      %1198 = vmatprep.subr.mxu0 0.0
      %1199 = vmatpush1.msra.mxu0 %v1165
      %1200 = vmatprep.subr.mxu0 0.0
      %1201 = vmatpush1.msra.mxu0 0.0
      %1202 = vmatprep.subr.mxu0 0.0
      %1203 = vmatpush1.msra.mxu0 0.0
      %1204 = vmatprep.subr.mxu0 0.0
      %1205 = vmatpush1.msra.mxu0 0.0
      %1206 = vmatprep.subr.mxu0 0.0
      %1207 = vmatpush1.msra.mxu0 0.0
      %1208 = vmatprep.subr.mxu0 0.0
      %1209 = vmatpush1.msra.mxu0 0.0
      %1210 = vmatprep.subr.mxu0 0.0
      %1211 = vmatpush1.msra.mxu0 0.0
      %1212 = vmatprep.subr.mxu0 0.0
      %1213 = vmatpush1.msra.mxu0 0.0
      %1214 = vmatprep.subr.mxu0 0.0
      %1215 = vmatpush1.msra.mxu0 0.0
      %1216 = vmatprep.subr.mxu0 0.0
      %1217 = vmatpush1.msra.mxu0 0.0
      %1218 = vmatprep.subr.mxu0 0.0
      %1219 = vmatpush1.msra.mxu0 0.0
      %1220 = vmatprep.subr.mxu0 0.0
      %1221 = vmatpush1.msra.mxu0 0.0
      %1222 = vmatprep.subr.mxu0 0.0
      %1223 = vmatpush1.msra.mxu0 0.0
      %1224 = vmatprep.subr.mxu0 0.0
      %1225 = vmatpush1.msra.mxu0 0.0
      %1226 = vmatprep.subr.mxu0 0.0
      %1227 = vmatpush1.msra.mxu0 0.0
      %1228 = vmatprep.subr.mxu0 0.0
      %1229 = vmatpush1.msra.mxu0 0.0
      %1230 = vmatprep.subr.mxu0 0.0
      %1231 = vmatpush1.msra.mxu0 0.0
      %1232 = vmatprep.subr.mxu0 0.0
      %1233 = vmatpush1.msra.mxu0 0.0
      %1234 = vmatprep.subr.mxu0 0.0
      %1235 = vmatpush1.msra.mxu0 0.0
      %1236 = vmatprep.subr.mxu0 0.0
      %1237 = vmatpush1.msra.mxu0 0.0
      %1238 = vmatprep.subr.mxu0 0.0
      %1239 = vmatpush1.msra.mxu0 0.0
      %1240 = vmatprep.subr.mxu0 0.0
      %1241 = vmatpush1.msra.mxu0 0.0
      %1242 = vmatprep.subr.mxu0 0.0
      %1243 = vmatpush1.msra.mxu0 0.0
      %1244 = vmatprep.subr.mxu0 0.0
      %1245 = vmatpush1.msra.mxu0 0.0
      %1246 = vmatprep.subr.mxu0 0.0
      %1247 = vmatpush1.msra.mxu0 0.0
      %1248 = vmatprep.subr.mxu0 0.0
      %1249 = vmatpush1.msra.mxu0 0.0
      %1250 = vmatprep.subr.mxu0 0.0
      %1251 = vmatpush1.msra.mxu0 0.0
      %1252 = vmatprep.subr.mxu0 0.0
      %1253 = vmatpush1.msra.mxu0 0.0
      %1254 = vmatprep.subr.mxu0 0.0
      %1255 = vmatpush1.msra.mxu0 0.0
      %1256 = vmatprep.subr.mxu0 0.0
      %1257 = vmatpush1.msra.mxu0 0.0
      %1258 = vmatprep.subr.mxu0 0.0
      %1259 = vmatpush1.msra.mxu0 0.0
      %1260 = vmatprep.mubr.f32.mxu0 0.0
      %1261 = vmatmul.mubr.f32.gmra.mrb[0].mxu0 %v1167
      %v1262 = vpop.f32.mrb[0].mxu0
      %v1263 = vadd.f32 0.0, %v1262
      %v1264 = vpop.f32.mrb[0].mxu0
      %1265 = vmatprep.mubr.f32.mxu0 0.0
      %1266 = vmatmul.mubr.f32.gmra.mrb[0].mxu0 %v1170
      %v1267 = vpop.f32.mrb[0].mxu0
      %v1268 = vadd.f32 0.0, %v1267
      %v1269 = vpop.f32.mrb[0].mxu0
      %1270 = vmatprep.mubr.f32.mxu0 0.0
      %1271 = vmatmul.mubr.f32.gmra.mrb[0].mxu0 %v1173
      %v1272 = vpop.f32.mrb[0].mxu0
      %v1273 = vadd.f32 0.0, %v1272
      %v1274 = vpop.f32.mrb[0].mxu0
      %1275 = vmatprep.mubr.f32.mxu0 0.0
      %1276 = vmatmul.mubr.f32.gmra.mrb[0].mxu0 %v1176
      %v1277 = vpop.f32.mrb[0].mxu0
      %v1278 = vadd.f32 0.0, %v1277
      %v1279 = vpop.f32.mrb[0].mxu0
      %1280 = vmatprep.mubr.f32.mxu0 0.0
      %1281 = vmatmul.mubr.f32.gmra.mrb[0].mxu0 %v1179
      %v1282 = vpop.f32.mrb[0].mxu0
      %v1283 = vadd.f32 0.0, %v1282
      %v1284 = vpop.f32.mrb[0].mxu0
      %1285 = vmatprep.mubr.f32.mxu0 0.0
      %1286 = vmatmul.mubr.f32.gmra.mrb[0].mxu0 %v1182
      %v1287 = vpop.f32.mrb[0].mxu0
      %v1288 = vadd.f32 0.0, %v1287
      %v1289 = vpop.f32.mrb[0].mxu0
      %1290 = vmatprep.mubr.f32.mxu0 0.0
      %1291 = vmatmul.mubr.f32.gmra.mrb[0].mxu0 %v1185
      %v1292 = vpop.f32.mrb[0].mxu0
      %v1293 = vadd.f32 0.0, %v1292
      %v1294 = vpop.f32.mrb[0].mxu0
      %1295 = vmatprep.mubr.f32.mxu0 0.0
      %1296 = vmatmul.mubr.f32.gmra.mrb[0].mxu0 %v1188
      %v1297 = vpop.f32.mrb[0].mxu0
      %v1298 = vadd.f32 0.0, %v1297
      %v1299 = vpop.f32.mrb[0].mxu0
      %1300 = vmatprep.mubr.f32.mxu0 0.0
      %1301 = vmatmul.mubr.f32.gmra.mrb[0].mxu0 %v1191
      %v1302 = vpop.f32.mrb[0].mxu0
      %v1303 = vadd.f32 0.0, %v1302
      %v1304 = vpop.f32.mrb[0].mxu0
      %1305 = vmatprep.mubr.f32.mxu0 0.0
      %1306 = vmatmul.mubr.f32.gmra.mrb[0].mxu0 %v1194
      %v1307 = vpop.f32.mrb[0].mxu0
      %v1308 = vadd.f32 0.0, %v1307
      %v1309 = vpop.f32.mrb[0].mxu0
      %1310 = vdwg.mxu0
      %v1311 = vadd.f32 %v1144, %v1263
      %v1312 = vadd.f32 %v1145, %v1268
      %v1313 = vadd.f32 %v1146, %v1273
      %v1314 = vadd.f32 %v1147, %v1278
      %v1315 = vadd.f32 %v1148, %v1283
      %v1316 = vadd.f32 %v1149, %v1288
      %v1317 = vadd.f32 %v1150, %v1293
      %v1318 = vadd.f32 %v1151, %v1298
      %v1319 = vadd.f32 %v1152, %v1303
      %v1320 = vadd.f32 %v1153, %v1308
      %v1321 = vld [vmem:[%s165 + $0x15] sm:$0xff]
      %v1322 = vld [vmem:[%s165 + $0x1d] sm:$0xff]
      %v1323 = vld [vmem:[%s165 + $0x25] sm:$0xff]
      %v1324 = vld [vmem:[%s165 + $0x2d] sm:$0xff]
      %v1325 = vld [vmem:[%s165 + $0x35] sm:$0xff]
      %v1326 = vld [vmem:[%s165 + $0x3d] sm:$0xff]
      %v1327 = vld [vmem:[%s165 + $0x45] sm:$0xff]
      %v1328 = vld [vmem:[%s165 + $0x4d] sm:$0xff]
      %v1329 = vld [vmem:[%s165 + $0x55] sm:$0xff]
      %v1330 = vld [vmem:[%s165 + $0x5d] sm:$0xff]
      %v1331 = vld [vmem:[%s1 + $0x70] sm:$0xff]
      %v1332 = vld [vmem:[%s1 + $0x78] sm:$0xff]
      %v1334 = vsel %vm195, %v1321, 0
      %v1337 = vsel %vm195, %v1322, 0
      %v1340 = vsel %vm195, %v1323, 0
      %v1343 = vsel %vm195, %v1324, 0
      %v1346 = vsel %vm195, %v1325, 0
      %v1349 = vsel %vm195, %v1326, 0
      %v1352 = vsel %vm195, %v1327, 0
      %v1355 = vsel %vm195, %v1328, 0
      %v1358 = vsel %vm195, %v1329, 0
      %v1361 = vsel %vm195, %v1330, 0
      %1363 = vmatprep.subr.mxu0 0.0
      %1364 = vmatpush1.msra.mxu0 %v1331
      %1365 = vmatprep.subr.mxu0 0.0
      %1366 = vmatpush1.msra.mxu0 %v1332
      %1367 = vmatprep.subr.mxu0 0.0
      %1368 = vmatpush1.msra.mxu0 0.0
      %1369 = vmatprep.subr.mxu0 0.0
      %1370 = vmatpush1.msra.mxu0 0.0
      %1371 = vmatprep.subr.mxu0 0.0
      %1372 = vmatpush1.msra.mxu0 0.0
      %1373 = vmatprep.subr.mxu0 0.0
      %1374 = vmatpush1.msra.mxu0 0.0
      %1375 = vmatprep.subr.mxu0 0.0
      %1376 = vmatpush1.msra.mxu0 0.0
      %1377 = vmatprep.subr.mxu0 0.0
      %1378 = vmatpush1.msra.mxu0 0.0
      %1379 = vmatprep.subr.mxu0 0.0
      %1380 = vmatpush1.msra.mxu0 0.0
      %1381 = vmatprep.subr.mxu0 0.0
      %1382 = vmatpush1.msra.mxu0 0.0
      %1383 = vmatprep.subr.mxu0 0.0
      %1384 = vmatpush1.msra.mxu0 0.0
      %1385 = vmatprep.subr.mxu0 0.0
      %1386 = vmatpush1.msra.mxu0 0.0
      %1387 = vmatprep.subr.mxu0 0.0
      %1388 = vmatpush1.msra.mxu0 0.0
      %1389 = vmatprep.subr.mxu0 0.0
      %1390 = vmatpush1.msra.mxu0 0.0
      %1391 = vmatprep.subr.mxu0 0.0
      %1392 = vmatpush1.msra.mxu0 0.0
      %1393 = vmatprep.subr.mxu0 0.0
      %1394 = vmatpush1.msra.mxu0 0.0
      %1395 = vmatprep.subr.mxu0 0.0
      %1396 = vmatpush1.msra.mxu0 0.0
      %1397 = vmatprep.subr.mxu0 0.0
      %1398 = vmatpush1.msra.mxu0 0.0
      %1399 = vmatprep.subr.mxu0 0.0
      %1400 = vmatpush1.msra.mxu0 0.0
      %1401 = vmatprep.subr.mxu0 0.0
      %1402 = vmatpush1.msra.mxu0 0.0
      %1403 = vmatprep.subr.mxu0 0.0
      %1404 = vmatpush1.msra.mxu0 0.0
      %1405 = vmatprep.subr.mxu0 0.0
      %1406 = vmatpush1.msra.mxu0 0.0
      %1407 = vmatprep.subr.mxu0 0.0
      %1408 = vmatpush1.msra.mxu0 0.0
      %1409 = vmatprep.subr.mxu0 0.0
      %1410 = vmatpush1.msra.mxu0 0.0
      %1411 = vmatprep.subr.mxu0 0.0
      %1412 = vmatpush1.msra.mxu0 0.0
      %1413 = vmatprep.subr.mxu0 0.0
      %1414 = vmatpush1.msra.mxu0 0.0
      %1415 = vmatprep.subr.mxu0 0.0
      %1416 = vmatpush1.msra.mxu0 0.0
      %1417 = vmatprep.subr.mxu0 0.0
      %1418 = vmatpush1.msra.mxu0 0.0
      %1419 = vmatprep.subr.mxu0 0.0
      %1420 = vmatpush1.msra.mxu0 0.0
      %1421 = vmatprep.subr.mxu0 0.0
      %1422 = vmatpush1.msra.mxu0 0.0
      %1423 = vmatprep.subr.mxu0 0.0
      %1424 = vmatpush1.msra.mxu0 0.0
      %1425 = vmatprep.subr.mxu0 0.0
      %1426 = vmatpush1.msra.mxu0 0.0
      %1427 = vmatprep.mubr.f32.mxu0 0.0
      %1428 = vmatmul.mubr.f32.gmra.mrb[0].mxu0 %v1334
      %v1429 = vpop.f32.mrb[0].mxu0
      %v1430 = vadd.f32 0.0, %v1429
      %v1431 = vpop.f32.mrb[0].mxu0
      %1432 = vmatprep.mubr.f32.mxu0 0.0
      %1433 = vmatmul.mubr.f32.gmra.mrb[0].mxu0 %v1337
      %v1434 = vpop.f32.mrb[0].mxu0
      %v1435 = vadd.f32 0.0, %v1434
      %v1436 = vpop.f32.mrb[0].mxu0
      %1437 = vmatprep.mubr.f32.mxu0 0.0
      %1438 = vmatmul.mubr.f32.gmra.mrb[0].mxu0 %v1340
      %v1439 = vpop.f32.mrb[0].mxu0
      %v1440 = vadd.f32 0.0, %v1439
      %v1441 = vpop.f32.mrb[0].mxu0
      %1442 = vmatprep.mubr.f32.mxu0 0.0
      %1443 = vmatmul.mubr.f32.gmra.mrb[0].mxu0 %v1343
      %v1444 = vpop.f32.mrb[0].mxu0
      %v1445 = vadd.f32 0.0, %v1444
      %v1446 = vpop.f32.mrb[0].mxu0
      %1447 = vmatprep.mubr.f32.mxu0 0.0
      %1448 = vmatmul.mubr.f32.gmra.mrb[0].mxu0 %v1346
      %v1449 = vpop.f32.mrb[0].mxu0
      %v1450 = vadd.f32 0.0, %v1449
      %v1451 = vpop.f32.mrb[0].mxu0
      %1452 = vmatprep.mubr.f32.mxu0 0.0
      %1453 = vmatmul.mubr.f32.gmra.mrb[0].mxu0 %v1349
      %v1454 = vpop.f32.mrb[0].mxu0
      %v1455 = vadd.f32 0.0, %v1454
      %v1456 = vpop.f32.mrb[0].mxu0
      %1457 = vmatprep.mubr.f32.mxu0 0.0
      %1458 = vmatmul.mubr.f32.gmra.mrb[0].mxu0 %v1352
      %v1459 = vpop.f32.mrb[0].mxu0
      %v1460 = vadd.f32 0.0, %v1459
      %v1461 = vpop.f32.mrb[0].mxu0
      %1462 = vmatprep.mubr.f32.mxu0 0.0
      %1463 = vmatmul.mubr.f32.gmra.mrb[0].mxu0 %v1355
      %v1464 = vpop.f32.mrb[0].mxu0
      %v1465 = vadd.f32 0.0, %v1464
      %v1466 = vpop.f32.mrb[0].mxu0
      %1467 = vmatprep.mubr.f32.mxu0 0.0
      %1468 = vmatmul.mubr.f32.gmra.mrb[0].mxu0 %v1358
      %v1469 = vpop.f32.mrb[0].mxu0
      %v1470 = vadd.f32 0.0, %v1469
      %v1471 = vpop.f32.mrb[0].mxu0
      %1472 = vmatprep.mubr.f32.mxu0 0.0
      %1473 = vmatmul.mubr.f32.gmra.mrb[0].mxu0 %v1361
      %v1474 = vpop.f32.mrb[0].mxu0
      %v1475 = vadd.f32 0.0, %v1474
      %v1476 = vpop.f32.mrb[0].mxu0
      %1477 = vdwg.mxu0
      %v1478 = vadd.f32 %v1311, %v1430
      %v1479 = vadd.f32 %v1312, %v1435
      %v1480 = vadd.f32 %v1313, %v1440
      %v1481 = vadd.f32 %v1314, %v1445
      %v1482 = vadd.f32 %v1315, %v1450
      %v1483 = vadd.f32 %v1316, %v1455
      %v1484 = vadd.f32 %v1317, %v1460
      %v1485 = vadd.f32 %v1318, %v1465
      %v1486 = vadd.f32 %v1319, %v1470
      %v1487 = vadd.f32 %v1320, %v1475
      %v1488 = vld [vmem:[%s165 + $0x16] sm:$0xff]
      %v1489 = vld [vmem:[%s165 + $0x1e] sm:$0xff]
      %v1490 = vld [vmem:[%s165 + $0x26] sm:$0xff]
      %v1491 = vld [vmem:[%s165 + $0x2e] sm:$0xff]
      %v1492 = vld [vmem:[%s165 + $0x36] sm:$0xff]
      %v1493 = vld [vmem:[%s165 + $0x3e] sm:$0xff]
      %v1494 = vld [vmem:[%s165 + $0x46] sm:$0xff]
      %v1495 = vld [vmem:[%s165 + $0x4e] sm:$0xff]
      %v1496 = vld [vmem:[%s165 + $0x56] sm:$0xff]
      %v1497 = vld [vmem:[%s165 + $0x5e] sm:$0xff]
      %v1498 = vld [vmem:[%s1 + $0x80] sm:$0xff]
      %v1499 = vld [vmem:[%s1 + $0x88] sm:$0xff]
      %v1501 = vsel %vm195, %v1488, 0
      %v1504 = vsel %vm195, %v1489, 0
      %v1507 = vsel %vm195, %v1490, 0
      %v1510 = vsel %vm195, %v1491, 0
      %v1513 = vsel %vm195, %v1492, 0
      %v1516 = vsel %vm195, %v1493, 0
      %v1519 = vsel %vm195, %v1494, 0
      %v1522 = vsel %vm195, %v1495, 0
      %v1525 = vsel %vm195, %v1496, 0
      %v1528 = vsel %vm195, %v1497, 0
      %1530 = vmatprep.subr.mxu0 0.0
      %1531 = vmatpush1.msra.mxu0 %v1498
      %1532 = vmatprep.subr.mxu0 0.0
      %1533 = vmatpush1.msra.mxu0 %v1499
      %1534 = vmatprep.subr.mxu0 0.0
      %1535 = vmatpush1.msra.mxu0 0.0
      %1536 = vmatprep.subr.mxu0 0.0
      %1537 = vmatpush1.msra.mxu0 0.0
      %1538 = vmatprep.subr.mxu0 0.0
      %1539 = vmatpush1.msra.mxu0 0.0
      %1540 = vmatprep.subr.mxu0 0.0
      %1541 = vmatpush1.msra.mxu0 0.0
      %1542 = vmatprep.subr.mxu0 0.0
      %1543 = vmatpush1.msra.mxu0 0.0
      %1544 = vmatprep.subr.mxu0 0.0
      %1545 = vmatpush1.msra.mxu0 0.0
      %1546 = vmatprep.subr.mxu0 0.0
      %1547 = vmatpush1.msra.mxu0 0.0
      %1548 = vmatprep.subr.mxu0 0.0
      %1549 = vmatpush1.msra.mxu0 0.0
      %1550 = vmatprep.subr.mxu0 0.0
      %1551 = vmatpush1.msra.mxu0 0.0
      %1552 = vmatprep.subr.mxu0 0.0
      %1553 = vmatpush1.msra.mxu0 0.0
      %1554 = vmatprep.subr.mxu0 0.0
      %1555 = vmatpush1.msra.mxu0 0.0
      %1556 = vmatprep.subr.mxu0 0.0
      %1557 = vmatpush1.msra.mxu0 0.0
      %1558 = vmatprep.subr.mxu0 0.0
      %1559 = vmatpush1.msra.mxu0 0.0
      %1560 = vmatprep.subr.mxu0 0.0
      %1561 = vmatpush1.msra.mxu0 0.0
      %1562 = vmatprep.subr.mxu0 0.0
      %1563 = vmatpush1.msra.mxu0 0.0
      %1564 = vmatprep.subr.mxu0 0.0
      %1565 = vmatpush1.msra.mxu0 0.0
      %1566 = vmatprep.subr.mxu0 0.0
      %1567 = vmatpush1.msra.mxu0 0.0
      %1568 = vmatprep.subr.mxu0 0.0
      %1569 = vmatpush1.msra.mxu0 0.0
      %1570 = vmatprep.subr.mxu0 0.0
      %1571 = vmatpush1.msra.mxu0 0.0
      %1572 = vmatprep.subr.mxu0 0.0
      %1573 = vmatpush1.msra.mxu0 0.0
      %1574 = vmatprep.subr.mxu0 0.0
      %1575 = vmatpush1.msra.mxu0 0.0
      %1576 = vmatprep.subr.mxu0 0.0
      %1577 = vmatpush1.msra.mxu0 0.0
      %1578 = vmatprep.subr.mxu0 0.0
      %1579 = vmatpush1.msra.mxu0 0.0
      %1580 = vmatprep.subr.mxu0 0.0
      %1581 = vmatpush1.msra.mxu0 0.0
      %1582 = vmatprep.subr.mxu0 0.0
      %1583 = vmatpush1.msra.mxu0 0.0
      %1584 = vmatprep.subr.mxu0 0.0
      %1585 = vmatpush1.msra.mxu0 0.0
      %1586 = vmatprep.subr.mxu0 0.0
      %1587 = vmatpush1.msra.mxu0 0.0
      %1588 = vmatprep.subr.mxu0 0.0
      %1589 = vmatpush1.msra.mxu0 0.0
      %1590 = vmatprep.subr.mxu0 0.0
      %1591 = vmatpush1.msra.mxu0 0.0
      %1592 = vmatprep.subr.mxu0 0.0
      %1593 = vmatpush1.msra.mxu0 0.0
      %1594 = vmatprep.mubr.f32.mxu0 0.0
      %1595 = vmatmul.mubr.f32.gmra.mrb[0].mxu0 %v1501
      %v1596 = vpop.f32.mrb[0].mxu0
      %v1597 = vadd.f32 0.0, %v1596
      %v1598 = vpop.f32.mrb[0].mxu0
      %1599 = vmatprep.mubr.f32.mxu0 0.0
      %1600 = vmatmul.mubr.f32.gmra.mrb[0].mxu0 %v1504
      %v1601 = vpop.f32.mrb[0].mxu0
      %v1602 = vadd.f32 0.0, %v1601
      %v1603 = vpop.f32.mrb[0].mxu0
      %1604 = vmatprep.mubr.f32.mxu0 0.0
      %1605 = vmatmul.mubr.f32.gmra.mrb[0].mxu0 %v1507
      %v1606 = vpop.f32.mrb[0].mxu0
      %v1607 = vadd.f32 0.0, %v1606
      %v1608 = vpop.f32.mrb[0].mxu0
      %1609 = vmatprep.mubr.f32.mxu0 0.0
      %1610 = vmatmul.mubr.f32.gmra.mrb[0].mxu0 %v1510
      %v1611 = vpop.f32.mrb[0].mxu0
      %v1612 = vadd.f32 0.0, %v1611
      %v1613 = vpop.f32.mrb[0].mxu0
      %1614 = vmatprep.mubr.f32.mxu0 0.0
      %1615 = vmatmul.mubr.f32.gmra.mrb[0].mxu0 %v1513
      %v1616 = vpop.f32.mrb[0].mxu0
      %v1617 = vadd.f32 0.0, %v1616
      %v1618 = vpop.f32.mrb[0].mxu0
      %1619 = vmatprep.mubr.f32.mxu0 0.0
      %1620 = vmatmul.mubr.f32.gmra.mrb[0].mxu0 %v1516
      %v1621 = vpop.f32.mrb[0].mxu0
      %v1622 = vadd.f32 0.0, %v1621
      %v1623 = vpop.f32.mrb[0].mxu0
      %1624 = vmatprep.mubr.f32.mxu0 0.0
      %1625 = vmatmul.mubr.f32.gmra.mrb[0].mxu0 %v1519
      %v1626 = vpop.f32.mrb[0].mxu0
      %v1627 = vadd.f32 0.0, %v1626
      %v1628 = vpop.f32.mrb[0].mxu0
      %1629 = vmatprep.mubr.f32.mxu0 0.0
      %1630 = vmatmul.mubr.f32.gmra.mrb[0].mxu0 %v1522
      %v1631 = vpop.f32.mrb[0].mxu0
      %v1632 = vadd.f32 0.0, %v1631
      %v1633 = vpop.f32.mrb[0].mxu0
      %1634 = vmatprep.mubr.f32.mxu0 0.0
      %1635 = vmatmul.mubr.f32.gmra.mrb[0].mxu0 %v1525
      %v1636 = vpop.f32.mrb[0].mxu0
      %v1637 = vadd.f32 0.0, %v1636
      %v1638 = vpop.f32.mrb[0].mxu0
      %1639 = vmatprep.mubr.f32.mxu0 0.0
      %1640 = vmatmul.mubr.f32.gmra.mrb[0].mxu0 %v1528
      %v1641 = vpop.f32.mrb[0].mxu0
      %v1642 = vadd.f32 0.0, %v1641
      %v1643 = vpop.f32.mrb[0].mxu0
      %1644 = vdwg.mxu0
      %v1645 = vadd.f32 %v1478, %v1597
      %v1646 = vadd.f32 %v1479, %v1602
      %v1647 = vadd.f32 %v1480, %v1607
      %v1648 = vadd.f32 %v1481, %v1612
      %v1649 = vadd.f32 %v1482, %v1617
      %v1650 = vadd.f32 %v1483, %v1622
      %v1651 = vadd.f32 %v1484, %v1627
      %v1652 = vadd.f32 %v1485, %v1632
      %v1653 = vadd.f32 %v1486, %v1637
      %v1654 = vadd.f32 %v1487, %v1642
      %v1655 = vld [vmem:[%s2] sm:$0x1]
      %v1657 = vlaneseq
      %v1658 = vshrl.u32 %v1657, 7
      %v1659 = vsub.s32 0, %v1658
      %v1660 = vrot.slane %v1655, %v1659
      %v1662 = vadd.f32 %v1645, %v1660
      %v1663 = vadd.f32 %v1646, %v1660
      %v1664 = vadd.f32 %v1647, %v1660
      %v1665 = vadd.f32 %v1648, %v1660
      %v1666 = vadd.f32 %v1649, %v1660
      %v1667 = vadd.f32 %v1650, %v1660
      %v1668 = vadd.f32 %v1651, %v1660
      %v1669 = vadd.f32 %v1652, %v1660
      %v1670 = vadd.f32 %v1653, %v1660
      %v1671 = vadd.f32 %v1654, %v1660
      %v1672 = vmax.f32 %v1662, 0.0
      %v1673 = vmax.f32 %v1663, 0.0
      %v1674 = vmax.f32 %v1664, 0.0
      %v1675 = vmax.f32 %v1665, 0.0
      %v1676 = vmax.f32 %v1666, 0.0
      %v1677 = vmax.f32 %v1667, 0.0
      %v1678 = vmax.f32 %v1668, 0.0
      %v1679 = vmax.f32 %v1669, 0.0
      %v1680 = vmax.f32 %v1670, 0.0
      %v1681 = vmax.f32 %v1671, 0.0
      %vm1682 = vcmask 261120
      %1683 = vst.msk [vmem:[%s170] sm:$0xff] %vm1682, %v1672
      %1684 = vst.msk [vmem:[%s170 + $0x8] sm:$0xff] %vm1682, %v1673
      %1685 = vst.msk [vmem:[%s170 + $0x10] sm:$0xff] %vm1682, %v1674
      %1686 = vst.msk [vmem:[%s170 + $0x18] sm:$0xff] %vm1682, %v1675
      %1687 = vst.msk [vmem:[%s170 + $0x20] sm:$0xff] %vm1682, %v1676
      %1688 = vst.msk [vmem:[%s170 + $0x28] sm:$0xff] %vm1682, %v1677
      %1689 = vst.msk [vmem:[%s170 + $0x30] sm:$0xff] %vm1682, %v1678
      %1690 = vst.msk [vmem:[%s170 + $0x38] sm:$0xff] %vm1682, %v1679
      %1691 = vst.msk [vmem:[%s170 + $0x40] sm:$0xff] %vm1682, %v1680
      %1692 = vst.msk [vmem:[%s170 + $0x48] sm:$0xff] %vm1682, %v1681
      %p1693 = scmp.lt.s32.totalorder %s14, 15
      %s1694 = scalar_select %p1693, %s14, 15
      %s1695 = smul.addr %s1694, 10
      %s1696 = smul.addr %s1695, 8
      %s1697 = scalar_lea.vmem %s3, %s1696
      // Predicated region
      $region33: #{tonic_ssn_forward.5} parent=31 // pred_check
        %p1698 = pneg %p100
      $region34: #{tonic_ssn_forward.5} parent=31 // pred_check_branch
        %1700 = sbr.rel (%p1698) target = $region36
      $region35: #{tonic_ssn_forward.5} parent=31 // pred_region
        _
      $region36: #{tonic_ssn_forward.5} parent=31 // pred_fallthru
        _
    $region32: #{tonic_ssn_forward.5} parent=5 // pred_fallthru
      _
    %p1701 = scmp.le.s32.totalorder 2, %s9
    // Predicated region
    $region37: #{tonic_ssn_forward.5} parent=5 // pred_check
      %p1702 = pneg %p1701
    $region38: #{tonic_ssn_forward.5} parent=5 // pred_check_branch
      %1704 = sbr.rel (%p1702) target = $region40
    $region39: #{tonic_ssn_forward.5} parent=5 // pred_region
      %s1705 = ssub.s32 %s9, 2
      // Predicated region
      $region41: #{tonic_ssn_forward.5} parent=39 // pred_check
        %p1706 = pneg %p106
      $region42: #{tonic_ssn_forward.5} parent=39 // pred_check_branch
        %1708 = sbr.rel (%p1706) target = $region44
      $region43: #{tonic_ssn_forward.5} parent=39 // pred_region
        %p1709 = scmp.lt.s32.totalorder %s15, 15
        %s1710 = scalar_select %p1709, %s15, 15
        %s1711 = smul.addr %s1710, 10
        %s1712 = smul.addr %s1711, 8
        %s1713 = scalar_lea.vmem %s3, %s1712
      $region44: #{tonic_ssn_forward.5} parent=39 // pred_fallthru
        _
    $region40: #{tonic_ssn_forward.5} parent=5 // pred_fallthru
      _
  $region6: #{tonic_ssn_forward.5} parent=0 // loop_footer
    %s13 = sadd.s32 1, %s9
  $region7: #{tonic_ssn_forward.5} parent=0 // loop_footer_branch
    %8 = sbr.rel target = $region3
  $region8: #{tonic_ssn_forward.5} parent=0 // loop_exit
    _

// kernel: tonic_ssn_forward.6
$region0: #{tonic_ssn_forward.6}
  #allocation0 [shape = 'u32[]', space=smem, size = 0x4, offset = 0x4, fixed_abs, tag = 'smem constant byte address 0x4 - core index']
  #allocation1 [shape = 'u32[144,128]{1,0:T(1,128)}', space=vmem, size = 0x12000, scoped, tag = 'internal scratch']
  #allocation2 [shape = 'f32[16,128]{1,0:T(8,128)}', space=vmem, size = 0x2000, scoped, tag = 'scratch operand']
  %s0 = inlined_call_operand.vmem [shape: f32[16,2048], index: 0, kind: input, shape index: {}]
  %s1 = inlined_call_operand.vmem [shape: f32[2048,128], index: 1, kind: input, shape index: {}]
  %s2 = inlined_call_operand.vmem [shape: f32[1,128], index: 2, kind: input, shape index: {}]
  %s3 = inlined_call_operand.vmem [shape: f32[16,128], index: 3, kind: output, shape index: {}]
  %s4 = sld [smem:[#allocation0]]
  $region76: #{tonic_ssn_forward.6} parent=0
    _
  %s6 = ssub.s32 1, %s4
  %s7 = scalar_select 0, %s6, %s4
  $region1: #{tonic_ssn_forward.6} parent=0
    #allocation3 [shape = 'u8[65536]{0}', space=vmem, size = 0x10000, scoped, tag = 'input window, operand 0']
    loop: start=0, step=1, limit=6
    $region2: #{tonic_ssn_forward.6} parent=1 // loop_pre_header
      _
    $region3: #{tonic_ssn_forward.6} parent=1 // loop_header
      %s9 = sphi 0, %s13
      %p10 = scmp.ge.s32.totalorder %s9, 6
      %s16 = sphi 0, %s35
      %s17 = sphi 0, %s31
      %s18 = sphi 0, %s27
      %s19 = sphi 0, %s16
      %s20 = sphi 0, %s17
      %s21 = sphi 0, %s18
      %s22 = sphi 0, %s19
      %s23 = sphi 0, %s20
      %s24 = sphi 0, %s21
      %s40 = sphi 0, %s42
      %s43 = sphi 0, %s40
      %s44 = sphi 0, %s43
      %s60 = sphi 0, %s44
      %s68 = sphi 0, %s70
      %s71 = sphi 0, %s68
      %s72 = sphi 0, %s71
      %s88 = sphi 0, %s72
      %s94 = sphi 0, %s96
      %s97 = sphi 0, %s94
      %s98 = sphi 0, %s97
      %s114 = sphi 0, %s98
      %s122 = sphi 0, %s124
      %s125 = sphi 0, %s122
      %s126 = sphi 0, %s125
      %s142 = sphi 0, %s126
    $region4: #{tonic_ssn_forward.6} parent=1 // loop_header_branch
      %12 = sbr.rel (%p10) target = $region8
    $region5: #{tonic_ssn_forward.6} parent=1 // loop_body
      %s14 = ssub.s32 %s9, 1
      %s15 = ssub.s32 %s9, 2
      %s25 = sadd.s32 1, %s18
      %p26 = scmp.ge.s32.totalorder %s25, 4
      %s27 = scalar_select %p26, 0, %s25
      %s28 = sadd.s32 1, %s17
      %s29 = scalar_select %p26, %s28, %s17
      %p30 = scmp.ge.s32.totalorder %s29, 1
      %s31 = scalar_select %p30, 0, %s29
      %s32 = sadd.s32 1, %s16
      %s33 = scalar_select %p30, %s32, %s16
      %p34 = scmp.ge.s32.totalorder %s33, 1
      %s35 = scalar_select %p34, 0, %s33
      %s36 = ssub.s32 %s16, %s35
      %s37 = ssub.s32 %s18, %s27
      %s38 = sor.u32 %s36, %s37
      %p39 = scmp.eq.s32.totalorder %s38, 0
      %s41 = sadd.s32 %s40, 1
      %s42 = scalar_select %p39, %s40, %s41
      %p45 = pneg %p39
      %p46 = scmp.eq.s32.totalorder %s9, 3
      %p47 = por %p45, %p46
      %p48 = scmp.ne.s32.totalorder %s40, %s43
      %p49 = scmp.eq.s32.totalorder %s9, 0
      %p50 = por %p48, %p49
      %p51 = scmp.ne.s32.totalorder %s40, %s43
      %p52 = scmp.eq.s32.totalorder %s14, 3
      %p53 = por %p51, %p52
      %p54 = scmp.ne.s32.totalorder %s43, %s44
      %p55 = scmp.eq.s32.totalorder %s14, 0
      %p56 = por %p54, %p55
      %p57 = scmp.ne.s32.totalorder %s43, %s44
      %p58 = scmp.eq.s32.totalorder %s15, 3
      %p59 = por %p57, %p58
      %p61 = scmp.ne.s32.totalorder %s44, %s60
      %p62 = scmp.eq.s32.totalorder %s15, 0
      %p63 = por %p61, %p62
      %s64 = ssub.s32 %s18, %s27
      %s65 = ssub.s32 %s17, %s31
      %s66 = sor.u32 %s64, %s65
      %p67 = scmp.eq.s32.totalorder %s66, 0
      %s69 = sadd.s32 %s68, 1
      %s70 = scalar_select %p67, %s68, %s69
      %p73 = pneg %p67
      %p74 = scmp.eq.s32.totalorder %s9, 3
      %p75 = por %p73, %p74
      %p76 = scmp.ne.s32.totalorder %s68, %s71
      %p77 = scmp.eq.s32.totalorder %s9, 0
      %p78 = por %p76, %p77
      %p79 = scmp.ne.s32.totalorder %s68, %s71
      %p80 = scmp.eq.s32.totalorder %s14, 3
      %p81 = por %p79, %p80
      %p82 = scmp.ne.s32.totalorder %s71, %s72
      %p83 = scmp.eq.s32.totalorder %s14, 0
      %p84 = por %p82, %p83
      %p85 = scmp.ne.s32.totalorder %s71, %s72
      %p86 = scmp.eq.s32.totalorder %s15, 3
      %p87 = por %p85, %p86
      %p89 = scmp.ne.s32.totalorder %s72, %s88
      %p90 = scmp.eq.s32.totalorder %s15, 0
      %p91 = por %p89, %p90
      %s92 = ssub.s32 %s17, %s31
      %p93 = scmp.eq.s32.totalorder %s92, 0
      %s95 = sadd.s32 %s94, 1
      %s96 = scalar_select %p93, %s94, %s95
      %p99 = pneg %p93
      %p100 = scmp.eq.s32.totalorder %s9, 3
      %p101 = por %p99, %p100
      %p102 = scmp.ne.s32.totalorder %s94, %s97
      %p103 = scmp.eq.s32.totalorder %s9, 0
      %p104 = por %p102, %p103
      %p105 = scmp.ne.s32.totalorder %s94, %s97
      %p106 = scmp.eq.s32.totalorder %s14, 3
      %p107 = por %p105, %p106
      %p108 = scmp.ne.s32.totalorder %s97, %s98
      %p109 = scmp.eq.s32.totalorder %s14, 0
      %p110 = por %p108, %p109
      %p111 = scmp.ne.s32.totalorder %s97, %s98
      %p112 = scmp.eq.s32.totalorder %s15, 3
      %p113 = por %p111, %p112
      %p115 = scmp.ne.s32.totalorder %s98, %s114
      %p116 = scmp.eq.s32.totalorder %s15, 0
      %p117 = por %p115, %p116
      %s118 = ssub.s32 %s16, %s35
      %s119 = ssub.s32 %s17, %s31
      %s120 = sor.u32 %s118, %s119
      %p121 = scmp.eq.s32.totalorder %s120, 0
      %s123 = sadd.s32 %s122, 1
      %s124 = scalar_select %p121, %s122, %s123
      %p127 = pneg %p121
      %p128 = scmp.eq.s32.totalorder %s9, 3
      %p129 = por %p127, %p128
      %p130 = scmp.ne.s32.totalorder %s122, %s125
      %p131 = scmp.eq.s32.totalorder %s9, 0
      %p132 = por %p130, %p131
      %p133 = scmp.ne.s32.totalorder %s122, %s125
      %p134 = scmp.eq.s32.totalorder %s14, 3
      %p135 = por %p133, %p134
      %p136 = scmp.ne.s32.totalorder %s125, %s126
      %p137 = scmp.eq.s32.totalorder %s14, 0
      %p138 = por %p136, %p137
      %p139 = scmp.ne.s32.totalorder %s125, %s126
      %p140 = scmp.eq.s32.totalorder %s15, 3
      %p141 = por %p139, %p140
      %p143 = scmp.ne.s32.totalorder %s126, %s142
      %p144 = scmp.eq.s32.totalorder %s15, 0
      %p145 = por %p143, %p144
      %p146 = scmp.le.s32.totalorder 1, %s9
      %p147 = scmp.lt.s32.totalorder %s9, 5
      %p148 = pnand %p146, %p147
      %p149 = pneg %p148
      // Predicated region
      $region9: #{tonic_ssn_forward.6} parent=5 // pred_check
        _
      $region10: #{tonic_ssn_forward.6} parent=5 // pred_check_branch
        %151 = sbr.rel (%p148) target = $region12
      $region11: #{tonic_ssn_forward.6} parent=5 // pred_region
        %s152 = ssub.s32 %s9, 1
        // Predicated region
        $region13: #{tonic_ssn_forward.6} parent=11 // pred_check
          %p153 = pneg %p110
        $region14: #{tonic_ssn_forward.6} parent=11 // pred_check_branch
          %155 = sbr.rel (%p153) target = $region16
        $region15: #{tonic_ssn_forward.6} parent=11 // pred_region
          %p156 = scmp.lt.s32.totalorder %s20, 0
          %s157 = scalar_select %p156, %s20, 0
          %s158 = scalar_lea.vmem %s2, %s157
        $region16: #{tonic_ssn_forward.6} parent=11 // pred_fallthru
          _
      $region12: #{tonic_ssn_forward.6} parent=5 // pred_fallthru
        _
      %p159 = scmp.lt.s32.totalorder %s9, 4
      // Predicated region
      $region17: #{tonic_ssn_forward.6} parent=5 // pred_check
        %p160 = pneg %p159
      $region18: #{tonic_ssn_forward.6} parent=5 // pred_check_branch
        %162 = sbr.rel (%p160) target = $region20
      $region19: #{tonic_ssn_forward.6} parent=5 // pred_region
        // Predicated region
        $region21: #{tonic_ssn_forward.6} parent=19 // pred_check
          %p163 = pneg %p50
        $region22: #{tonic_ssn_forward.6} parent=19 // pred_check_branch
          %165 = sbr.rel (%p163) target = $region24
        $region23: #{tonic_ssn_forward.6} parent=19 // pred_region
          %s166 = sand.u32 %s40, 1
          %s167 = sand.u32 %s40, 1
          %s168 = smul.addr %s167, 64
          %s169 = scalar_lea.vmem [#allocation3], %s168
          %s170 = smul.u32 2, %s16
          %s171 = smul.u32 4, %s18
          %s172 = smul.addr %s170, 16
          %s173 = sadd.s32 %s171, %s172
          %s174 = smul.addr %s173, 8
          %s175 = scalar_lea.vmem %s0, %s174
          // Predicated region
          $region25: #{tonic_ssn_forward.6} parent=23 // pred_check
            _
          $region26: #{tonic_ssn_forward.6} parent=23 // pred_check_branch
            %177 = sbr.rel (0) target = $region28
          $region27: #{tonic_ssn_forward.6} parent=23 // pred_region
            // Predicated region
            $region29: #{tonic_ssn_forward.6} parent=27 // pred_check
              _
            $region30: #{tonic_ssn_forward.6} parent=27 // pred_check_branch
              %179 = sbr.rel (0) target = $region32
            $region31: #{tonic_ssn_forward.6} parent=27 // pred_region
              loop: start=0, step=1, limit=1
              $region33: #{tonic_ssn_forward.6} parent=31 // loop_pre_header
                _
              $region34: #{tonic_ssn_forward.6} parent=31 // loop_header
                %s181 = sphi 0, %s185
                %p182 = scmp.ge.s32.totalorder %s181, 1
                %s186 = sphi %s175, %s175
                %s187 = sphi %s169, %s169
              $region35: #{tonic_ssn_forward.6} parent=31 // loop_header_branch
                %184 = sbr.rel (%p182) target = $region39
              $region36: #{tonic_ssn_forward.6} parent=31 // loop_body
                %v188 = vld [vmem:[%s186] sm:$0xff]
                %189 = vst [vmem:[%s187] sm:$0xff] %v188
                %v190 = vld [vmem:[%s186 + $0x8] sm:$0xff]
                %191 = vst [vmem:[%s187 + $0x8] sm:$0xff] %v190
                %v192 = vld [vmem:[%s186 + $0x10] sm:$0xff]
                %193 = vst [vmem:[%s187 + $0x10] sm:$0xff] %v192
                %v194 = vld [vmem:[%s186 + $0x18] sm:$0xff]
                %195 = vst [vmem:[%s187 + $0x18] sm:$0xff] %v194
                %v196 = vld [vmem:[%s186 + $0x80] sm:$0xff]
                %197 = vst [vmem:[%s187 + $0x20] sm:$0xff] %v196
                %v198 = vld [vmem:[%s186 + $0x88] sm:$0xff]
                %199 = vst [vmem:[%s187 + $0x28] sm:$0xff] %v198
                %v200 = vld [vmem:[%s186 + $0x90] sm:$0xff]
                %201 = vst [vmem:[%s187 + $0x30] sm:$0xff] %v200
                %v202 = vld [vmem:[%s186 + $0x98] sm:$0xff]
                %203 = vst [vmem:[%s187 + $0x38] sm:$0xff] %v202
              $region37: #{tonic_ssn_forward.6} parent=31 // loop_footer
                %s185 = sadd.s32 1, %s181
              $region38: #{tonic_ssn_forward.6} parent=31 // loop_footer_branch
                %180 = sbr.rel target = $region34
              $region39: #{tonic_ssn_forward.6} parent=31 // loop_exit
                _
            $region32: #{tonic_ssn_forward.6} parent=27 // pred_fallthru
              _
            // Predicated region
            $region40: #{tonic_ssn_forward.6} parent=27 // pred_check
              _
            $region41: #{tonic_ssn_forward.6} parent=27 // pred_check_branch
              %205 = sbr.rel target = $region43
            $region42: #{tonic_ssn_forward.6} parent=27 // pred_region
              _
            $region43: #{tonic_ssn_forward.6} parent=27 // pred_fallthru
              _
          $region28: #{tonic_ssn_forward.6} parent=23 // pred_fallthru
            _
          %206 = vnop
        $region24: #{tonic_ssn_forward.6} parent=19 // pred_fallthru
          _
        // Predicated region
        $region44: #{tonic_ssn_forward.6} parent=19 // pred_check
          %p207 = pneg %p78
        $region45: #{tonic_ssn_forward.6} parent=19 // pred_check_branch
          %209 = sbr.rel (%p207) target = $region47
        $region46: #{tonic_ssn_forward.6} parent=19 // pred_region
          %s210 = smul.u32 64, %s18
          %p211 = scmp.lt.s32.totalorder %s210, 255
          %s212 = scalar_select %p211, %s210, 255
          %p213 = scmp.lt.s32.totalorder %s17, 0
          %s214 = scalar_select %p213, %s17, 0
          %s215 = sadd.s32 %s214, %s212
          %s216 = smul.addr %s215, 8
          %s217 = scalar_lea.vmem %s1, %s216
          %s218 = smul.u32 64, %s18
        $region47: #{tonic_ssn_forward.6} parent=19 // pred_fallthru
          _
      $region20: #{tonic_ssn_forward.6} parent=5 // pred_fallthru
        _
      %p219 = scmp.le.s32.totalorder 1, %s9
      %p220 = scmp.lt.s32.totalorder %s9, 5
      %p221 = pnand %p219, %p220
      %p222 = pneg %p221
      // Predicated region
      $region48: #{tonic_ssn_forward.6} parent=5 // pred_check
        _
      $region49: #{tonic_ssn_forward.6} parent=5 // pred_check_branch
        %224 = sbr.rel (%p221) target = $region51
      $region50: #{tonic_ssn_forward.6} parent=5 // pred_region
        %s225 = ssub.s32 %s9, 1
        %s226 = sand.u32 %s43, 1
        %s227 = sand.u32 %s43, 1
        %s228 = smul.addr %s227, 64
        %s229 = scalar_lea.vmem [#allocation3], %s228
        // Predicated region
        $region52: #{tonic_ssn_forward.6} parent=50 // pred_check
          %p230 = pneg %p56
        $region53: #{tonic_ssn_forward.6} parent=50 // pred_check_branch
          %232 = sbr.rel (%p230) target = $region55
        $region54: #{tonic_ssn_forward.6} parent=50 // pred_region
          _
        $region55: #{tonic_ssn_forward.6} parent=50 // pred_fallthru
          _
        %s233 = sand.u32 %s43, 1
        %s234 = sand.u32 %s43, 1
        %s235 = smul.addr %s234, 64
        %s236 = scalar_lea.vmem [#allocation3], %s235
        %p237 = pneg %p56
        %p238 = pneg %p53
        %s239 = smul.u32 64, %s21
        %p240 = scmp.lt.s32.totalorder %s239, 255
        %s241 = scalar_select %p240, %s239, 255
        %p242 = scmp.lt.s32.totalorder %s20, 0
        %s243 = scalar_select %p242, %s20, 0
        %s244 = sadd.s32 %s243, %s241
        %s245 = smul.addr %s244, 8
        %s246 = scalar_lea.vmem %s1, %s245
        %p247 = pneg %p84
        %p248 = pneg %p81
        %p249 = scmp.lt.s32.totalorder %s20, 0
        %s250 = scalar_select %p249, %s20, 0
        %s251 = scalar_lea.vmem %s2, %s250
        %p252 = pneg %p110
        %p253 = pneg %p107
        %p254 = pneg %p138
        %p255 = pneg %p135
        %s256 = smul.u32 2, %s19
        %p257 = scmp.lt.s32.totalorder %s256, 1
        %s258 = scalar_select %p257, %s256, 1
        %p259 = scmp.lt.s32.totalorder %s20, 0
        %s260 = scalar_select %p259, %s20, 0
        %s261 = sadd.s32 %s260, %s258
        %s262 = smul.addr %s261, 8
        %s263 = scalar_lea.vmem %s3, %s262
        %s264 = smul.u32 2, %s19
        %s265 = smul.u32 4, %s21
        %s266 = smul.u32 64, %s21
        %p267 = scmp.lt.s32.totalorder %s266, 255
        %s268 = scalar_select %p267, %s266, 255
        %p269 = scmp.lt.s32.totalorder %s20, 0
        %s270 = scalar_select %p269, %s20, 0
        %s271 = sadd.s32 %s270, %s268
        %s272 = smul.addr %s271, 8
        %s273 = scalar_lea.vmem %s1, %s272
        %s274 = smul.u32 64, %s21
        %p275 = scmp.lt.s32.totalorder %s20, 0
        %s276 = scalar_select %p275, %s20, 0
        %s277 = scalar_lea.vmem %s2, %s276
        %s278 = smul.u32 2, %s19
        %p279 = scmp.lt.s32.totalorder %s278, 1
        %s280 = scalar_select %p279, %s278, 1
        %p281 = scmp.lt.s32.totalorder %s20, 0
        %s282 = scalar_select %p281, %s20, 0
        %s283 = sadd.s32 %s282, %s280
        %s284 = smul.addr %s283, 8
        %s285 = scalar_lea.vmem %s3, %s284
        %s286 = smul.u32 2, %s19
        %p287 = scmp.eq.s32.totalorder %s21, 0
        // Predicated region
        $region56: #{tonic_ssn_forward.6} parent=50 // pred_check
          %p288 = pneg %p287
        $region57: #{tonic_ssn_forward.6} parent=50 // pred_check_branch
          %290 = sbr.rel (%p288) target = $region59
        $region58: #{tonic_ssn_forward.6} parent=50 // pred_region
          %291 = vst [vmem:[#allocation2] sm:$0xff] 0.0
          %292 = vst [vmem:[#allocation2 + $0x8] sm:$0xff] 0.0
        $region59: #{tonic_ssn_forward.6} parent=50 // pred_fallthru
          _
        %v293 = vld [vmem:[#allocation2] sm:$0xff]
        %v294 = vld [vmem:[#allocation2 + $0x8] sm:$0xff]
        %v295 = vld [vmem:[%s229] sm:$0xff]
        %v296 = vld [vmem:[%s229 + $0x8] sm:$0xff]
        %v297 = vld [vmem:[%s229 + $0x10] sm:$0xff]
        %v298 = vld [vmem:[%s229 + $0x18] sm:$0xff]
        %v299 = vld [vmem:[%s229 + $0x20] sm:$0xff]
        %v300 = vld [vmem:[%s229 + $0x28] sm:$0xff]
        %v301 = vld [vmem:[%s229 + $0x30] sm:$0xff]
        %v302 = vld [vmem:[%s229 + $0x38] sm:$0xff]
        %v303 = vld [vmem:[%s273] sm:$0xff]
        %v304 = vld [vmem:[%s273 + $0x8] sm:$0xff]
        %v305 = vld [vmem:[%s273 + $0x10] sm:$0xff]
        %v306 = vld [vmem:[%s273 + $0x18] sm:$0xff]
        %v307 = vld [vmem:[%s273 + $0x20] sm:$0xff]
        %v308 = vld [vmem:[%s273 + $0x28] sm:$0xff]
        %v309 = vld [vmem:[%s273 + $0x30] sm:$0xff]
        %v310 = vld [vmem:[%s273 + $0x38] sm:$0xff]
        %v311 = vld [vmem:[%s273 + $0x40] sm:$0xff]
        %v312 = vld [vmem:[%s273 + $0x48] sm:$0xff]
        %v313 = vld [vmem:[%s273 + $0x50] sm:$0xff]
        %v314 = vld [vmem:[%s273 + $0x58] sm:$0xff]
        %v315 = vld [vmem:[%s273 + $0x60] sm:$0xff]
        %v316 = vld [vmem:[%s273 + $0x68] sm:$0xff]
        %v317 = vld [vmem:[%s273 + $0x70] sm:$0xff]
        %v318 = vld [vmem:[%s273 + $0x78] sm:$0xff]
        %v319 = vld [vmem:[%s273 + $0x80] sm:$0xff]
        %v320 = vld [vmem:[%s273 + $0x88] sm:$0xff]
        %v321 = vld [vmem:[%s273 + $0x90] sm:$0xff]
        %v322 = vld [vmem:[%s273 + $0x98] sm:$0xff]
        %v323 = vld [vmem:[%s273 + $0xa0] sm:$0xff]
        %v324 = vld [vmem:[%s273 + $0xa8] sm:$0xff]
        %v325 = vld [vmem:[%s273 + $0xb0] sm:$0xff]
        %v326 = vld [vmem:[%s273 + $0xb8] sm:$0xff]
        %v327 = vld [vmem:[%s273 + $0xc0] sm:$0xff]
        %v328 = vld [vmem:[%s273 + $0xc8] sm:$0xff]
        %v329 = vld [vmem:[%s273 + $0xd0] sm:$0xff]
        %v330 = vld [vmem:[%s273 + $0xd8] sm:$0xff]
        %v331 = vld [vmem:[%s273 + $0xe0] sm:$0xff]
        %v332 = vld [vmem:[%s273 + $0xe8] sm:$0xff]
        %v333 = vld [vmem:[%s273 + $0xf0] sm:$0xff]
        %v334 = vld [vmem:[%s273 + $0xf8] sm:$0xff]
        %v335 = vld [vmem:[%s273 + $0x100] sm:$0xff]
        %v336 = vld [vmem:[%s273 + $0x108] sm:$0xff]
        %v337 = vld [vmem:[%s273 + $0x110] sm:$0xff]
        %v338 = vld [vmem:[%s273 + $0x118] sm:$0xff]
        %v339 = vld [vmem:[%s273 + $0x120] sm:$0xff]
        %v340 = vld [vmem:[%s273 + $0x128] sm:$0xff]
        %v341 = vld [vmem:[%s273 + $0x130] sm:$0xff]
        %v342 = vld [vmem:[%s273 + $0x138] sm:$0xff]
        %v343 = vld [vmem:[%s273 + $0x140] sm:$0xff]
        %v344 = vld [vmem:[%s273 + $0x148] sm:$0xff]
        %v345 = vld [vmem:[%s273 + $0x150] sm:$0xff]
        %v346 = vld [vmem:[%s273 + $0x158] sm:$0xff]
        %v347 = vld [vmem:[%s273 + $0x160] sm:$0xff]
        %v348 = vld [vmem:[%s273 + $0x168] sm:$0xff]
        %v349 = vld [vmem:[%s273 + $0x170] sm:$0xff]
        %v350 = vld [vmem:[%s273 + $0x178] sm:$0xff]
        %v351 = vld [vmem:[%s273 + $0x180] sm:$0xff]
        %v352 = vld [vmem:[%s273 + $0x188] sm:$0xff]
        %v353 = vld [vmem:[%s273 + $0x190] sm:$0xff]
        %v354 = vld [vmem:[%s273 + $0x198] sm:$0xff]
        %v355 = vld [vmem:[%s273 + $0x1a0] sm:$0xff]
        %v356 = vld [vmem:[%s273 + $0x1a8] sm:$0xff]
        %v357 = vld [vmem:[%s273 + $0x1b0] sm:$0xff]
        %v358 = vld [vmem:[%s273 + $0x1b8] sm:$0xff]
        %v359 = vld [vmem:[%s273 + $0x1c0] sm:$0xff]
        %v360 = vld [vmem:[%s273 + $0x1c8] sm:$0xff]
        %v361 = vld [vmem:[%s273 + $0x1d0] sm:$0xff]
        %v362 = vld [vmem:[%s273 + $0x1d8] sm:$0xff]
        %v363 = vld [vmem:[%s273 + $0x1e0] sm:$0xff]
        %v364 = vld [vmem:[%s273 + $0x1e8] sm:$0xff]
        %v365 = vld [vmem:[%s273 + $0x1f0] sm:$0xff]
        %v366 = vld [vmem:[%s273 + $0x1f8] sm:$0xff]
        %367 = vmatprep.subr.mxu0 0.0
        %368 = vmatpush1.msra.mxu0 %v303
        %369 = vmatprep.subr.mxu0 0.0
        %370 = vmatpush1.msra.mxu0 %v304
        %371 = vmatprep.subr.mxu0 0.0
        %372 = vmatpush1.msra.mxu0 %v305
        %373 = vmatprep.subr.mxu0 0.0
        %374 = vmatpush1.msra.mxu0 %v306
        %375 = vmatprep.subr.mxu0 0.0
        %376 = vmatpush1.msra.mxu0 %v307
        %377 = vmatprep.subr.mxu0 0.0
        %378 = vmatpush1.msra.mxu0 %v308
        %379 = vmatprep.subr.mxu0 0.0
        %380 = vmatpush1.msra.mxu0 %v309
        %381 = vmatprep.subr.mxu0 0.0
        %382 = vmatpush1.msra.mxu0 %v310
        %383 = vmatprep.subr.mxu0 0.0
        %384 = vmatpush1.msra.mxu0 %v311
        %385 = vmatprep.subr.mxu0 0.0
        %386 = vmatpush1.msra.mxu0 %v312
        %387 = vmatprep.subr.mxu0 0.0
        %388 = vmatpush1.msra.mxu0 %v313
        %389 = vmatprep.subr.mxu0 0.0
        %390 = vmatpush1.msra.mxu0 %v314
        %391 = vmatprep.subr.mxu0 0.0
        %392 = vmatpush1.msra.mxu0 %v315
        %393 = vmatprep.subr.mxu0 0.0
        %394 = vmatpush1.msra.mxu0 %v316
        %395 = vmatprep.subr.mxu0 0.0
        %396 = vmatpush1.msra.mxu0 %v317
        %397 = vmatprep.subr.mxu0 0.0
        %398 = vmatpush1.msra.mxu0 %v318
        %399 = vmatprep.subr.mxu0 0.0
        %400 = vmatpush1.msra.mxu0 %v319
        %401 = vmatprep.subr.mxu0 0.0
        %402 = vmatpush1.msra.mxu0 %v320
        %403 = vmatprep.subr.mxu0 0.0
        %404 = vmatpush1.msra.mxu0 %v321
        %405 = vmatprep.subr.mxu0 0.0
        %406 = vmatpush1.msra.mxu0 %v322
        %407 = vmatprep.subr.mxu0 0.0
        %408 = vmatpush1.msra.mxu0 %v323
        %409 = vmatprep.subr.mxu0 0.0
        %410 = vmatpush1.msra.mxu0 %v324
        %411 = vmatprep.subr.mxu0 0.0
        %412 = vmatpush1.msra.mxu0 %v325
        %413 = vmatprep.subr.mxu0 0.0
        %414 = vmatpush1.msra.mxu0 %v326
        %415 = vmatprep.subr.mxu0 0.0
        %416 = vmatpush1.msra.mxu0 %v327
        %417 = vmatprep.subr.mxu0 0.0
        %418 = vmatpush1.msra.mxu0 %v328
        %419 = vmatprep.subr.mxu0 0.0
        %420 = vmatpush1.msra.mxu0 %v329
        %421 = vmatprep.subr.mxu0 0.0
        %422 = vmatpush1.msra.mxu0 %v330
        %423 = vmatprep.subr.mxu0 0.0
        %424 = vmatpush1.msra.mxu0 %v331
        %425 = vmatprep.subr.mxu0 0.0
        %426 = vmatpush1.msra.mxu0 %v332
        %427 = vmatprep.subr.mxu0 0.0
        %428 = vmatpush1.msra.mxu0 %v333
        %429 = vmatprep.subr.mxu0 0.0
        %430 = vmatpush1.msra.mxu0 %v334
        %431 = vmatprep.mubr.f32.mxu0 %v296
        %432 = vmatmul.mubr.f32.gmra.mrb[0].mxu0 %v295
        %v433 = vpop.f32.mrb[0].mxu0
        %v434 = vadd.f32 0.0, %v433
        %v435 = vpop.f32.mrb[0].mxu0
        %436 = vmatprep.mubr.f32.mxu0 %v300
        %437 = vmatmul.mubr.f32.gmra.mrb[0].mxu0 %v299
        %v438 = vpop.f32.mrb[0].mxu0
        %v439 = vadd.f32 0.0, %v438
        %v440 = vpop.f32.mrb[0].mxu0
        %441 = vdwg.mxu0
        %442 = vmatprep.subr.mxu0 0.0
        %443 = vmatpush1.msra.mxu0 %v335
        %444 = vmatprep.subr.mxu0 0.0
        %445 = vmatpush1.msra.mxu0 %v336
        %446 = vmatprep.subr.mxu0 0.0
        %447 = vmatpush1.msra.mxu0 %v337
        %448 = vmatprep.subr.mxu0 0.0
        %449 = vmatpush1.msra.mxu0 %v338
        %450 = vmatprep.subr.mxu0 0.0
        %451 = vmatpush1.msra.mxu0 %v339
        %452 = vmatprep.subr.mxu0 0.0
        %453 = vmatpush1.msra.mxu0 %v340
        %454 = vmatprep.subr.mxu0 0.0
        %455 = vmatpush1.msra.mxu0 %v341
        %456 = vmatprep.subr.mxu0 0.0
        %457 = vmatpush1.msra.mxu0 %v342
        %458 = vmatprep.subr.mxu0 0.0
        %459 = vmatpush1.msra.mxu0 %v343
        %460 = vmatprep.subr.mxu0 0.0
        %461 = vmatpush1.msra.mxu0 %v344
        %462 = vmatprep.subr.mxu0 0.0
        %463 = vmatpush1.msra.mxu0 %v345
        %464 = vmatprep.subr.mxu0 0.0
        %465 = vmatpush1.msra.mxu0 %v346
        %466 = vmatprep.subr.mxu0 0.0
        %467 = vmatpush1.msra.mxu0 %v347
        %468 = vmatprep.subr.mxu0 0.0
        %469 = vmatpush1.msra.mxu0 %v348
        %470 = vmatprep.subr.mxu0 0.0
        %471 = vmatpush1.msra.mxu0 %v349
        %472 = vmatprep.subr.mxu0 0.0
        %473 = vmatpush1.msra.mxu0 %v350
        %474 = vmatprep.subr.mxu0 0.0
        %475 = vmatpush1.msra.mxu0 %v351
        %476 = vmatprep.subr.mxu0 0.0
        %477 = vmatpush1.msra.mxu0 %v352
        %478 = vmatprep.subr.mxu0 0.0
        %479 = vmatpush1.msra.mxu0 %v353
        %480 = vmatprep.subr.mxu0 0.0
        %481 = vmatpush1.msra.mxu0 %v354
        %482 = vmatprep.subr.mxu0 0.0
        %483 = vmatpush1.msra.mxu0 %v355
        %484 = vmatprep.subr.mxu0 0.0
        %485 = vmatpush1.msra.mxu0 %v356
        %486 = vmatprep.subr.mxu0 0.0
        %487 = vmatpush1.msra.mxu0 %v357
        %488 = vmatprep.subr.mxu0 0.0
        %489 = vmatpush1.msra.mxu0 %v358
        %490 = vmatprep.subr.mxu0 0.0
        %491 = vmatpush1.msra.mxu0 %v359
        %492 = vmatprep.subr.mxu0 0.0
        %493 = vmatpush1.msra.mxu0 %v360
        %494 = vmatprep.subr.mxu0 0.0
        %495 = vmatpush1.msra.mxu0 %v361
        %496 = vmatprep.subr.mxu0 0.0
        %497 = vmatpush1.msra.mxu0 %v362
        %498 = vmatprep.subr.mxu0 0.0
        %499 = vmatpush1.msra.mxu0 %v363
        %500 = vmatprep.subr.mxu0 0.0
        %501 = vmatpush1.msra.mxu0 %v364
        %502 = vmatprep.subr.mxu0 0.0
        %503 = vmatpush1.msra.mxu0 %v365
        %504 = vmatprep.subr.mxu0 0.0
        %505 = vmatpush1.msra.mxu0 %v366
        %506 = vmatprep.mubr.f32.mxu0 %v298
        %507 = vmatmul.mubr.f32.gmra.mrb[0].mxu0 %v297
        %v508 = vpop.f32.mrb[0].mxu0
        %v509 = vadd.f32 %v434, %v508
        %v510 = vpop.f32.mrb[0].mxu0
        %511 = vmatprep.mubr.f32.mxu0 %v302
        %512 = vmatmul.mubr.f32.gmra.mrb[0].mxu0 %v301
        %v513 = vpop.f32.mrb[0].mxu0
        %v514 = vadd.f32 %v439, %v513
        %v515 = vpop.f32.mrb[0].mxu0
        %516 = vdwg.mxu0
        %v517 = vadd.f32 %v293, %v509
        %v518 = vadd.f32 %v294, %v514
        %519 = vst [vmem:[#allocation2] sm:$0xff] %v517
        %520 = vst [vmem:[#allocation2 + $0x8] sm:$0xff] %v518
        %p521 = scmp.eq.s32.totalorder %s21, 3
        // Predicated region
        $region60: #{tonic_ssn_forward.6} parent=50 // pred_check
          %p522 = pneg %p521
        $region61: #{tonic_ssn_forward.6} parent=50 // pred_check_branch
          %524 = sbr.rel (%p522) target = $region63
        $region62: #{tonic_ssn_forward.6} parent=50 // pred_region
          %v525 = vld [vmem:[#allocation2] sm:$0xff]
          %v526 = vld [vmem:[#allocation2 + $0x8] sm:$0xff]
          %v527 = vld [vmem:[%s277] sm:$0x1]
          %v529 = vlaneseq
          %v530 = vshrl.u32 %v529, 7
          %v531 = vsub.s32 0, %v530
          %v532 = vrot.slane %v527, %v531
          %v534 = vadd.f32 %v525, %v532
          %v535 = vadd.f32 %v526, %v532
          %536 = vst [vmem:[%s285] sm:$0xff] %v534
          %537 = vst [vmem:[%s285 + $0x8] sm:$0xff] %v535
        $region63: #{tonic_ssn_forward.6} parent=50 // pred_fallthru
          _
        %s538 = smul.u32 2, %s19
        %p539 = scmp.lt.s32.totalorder %s538, 1
        %s540 = scalar_select %p539, %s538, 1
        %p541 = scmp.lt.s32.totalorder %s20, 0
        %s542 = scalar_select %p541, %s20, 0
        %s543 = sadd.s32 %s542, %s540
        %s544 = smul.addr %s543, 8
        %s545 = scalar_lea.vmem %s3, %s544
        // Predicated region
        $region64: #{tonic_ssn_forward.6} parent=50 // pred_check
          %p546 = pneg %p135
        $region65: #{tonic_ssn_forward.6} parent=50 // pred_check_branch
          %548 = sbr.rel (%p546) target = $region67
        $region66: #{tonic_ssn_forward.6} parent=50 // pred_region
          %s549 = smul.u32 2, %s19
        $region67: #{tonic_ssn_forward.6} parent=50 // pred_fallthru
          _
        // Predicated region
        $region68: #{tonic_ssn_forward.6} parent=50 // pred_check
          %p550 = pneg %p135
        $region69: #{tonic_ssn_forward.6} parent=50 // pred_check_branch
          %552 = sbr.rel (%p550) target = $region71
        $region70: #{tonic_ssn_forward.6} parent=50 // pred_region
          %s553 = smul.u32 2, %s19
          %p554 = scmp.lt.s32.totalorder %s553, 1
          %s555 = scalar_select %p554, %s553, 1
          %p556 = scmp.lt.s32.totalorder %s20, 0
          %s557 = scalar_select %p556, %s20, 0
          %s558 = sadd.s32 %s557, %s555
          %s559 = smul.addr %s558, 8
          %s560 = scalar_lea.vmem %s3, %s559
        $region71: #{tonic_ssn_forward.6} parent=50 // pred_fallthru
          _
      $region51: #{tonic_ssn_forward.6} parent=5 // pred_fallthru
        _
      %p561 = scmp.le.s32.totalorder 2, %s9
      // Predicated region
      $region72: #{tonic_ssn_forward.6} parent=5 // pred_check
        %p562 = pneg %p561
      $region73: #{tonic_ssn_forward.6} parent=5 // pred_check_branch
        %564 = sbr.rel (%p562) target = $region75
      $region74: #{tonic_ssn_forward.6} parent=5 // pred_region
        %s565 = ssub.s32 %s9, 2
      $region75: #{tonic_ssn_forward.6} parent=5 // pred_fallthru
        _
    $region6: #{tonic_ssn_forward.6} parent=1 // loop_footer
      %s13 = sadd.s32 1, %s9
    $region7: #{tonic_ssn_forward.6} parent=1 // loop_footer_branch
      %8 = sbr.rel target = $region3
    $region8: #{tonic_ssn_forward.6} parent=1 // loop_exit
      _

// kernel: tonic_ssn_forward.7
$region0: #{tonic_ssn_forward.7}
  #allocation0 [shape = 'u32[]', space=smem, size = 0x4, offset = 0x4, fixed_abs, tag = 'smem constant byte address 0x4 - core index']
  #allocation1 [shape = 'u32[144,128]{1,0:T(1,128)}', space=vmem, size = 0x12000, scoped, tag = 'internal scratch']
  %s0 = inlined_call_operand.vmem [shape: f32[8,8,128], index: 0, kind: input, shape index: {}]
  %s1 = inlined_call_operand.vmem [shape: f32[128,128], index: 1, kind: input, shape index: {}]
  %s2 = inlined_call_operand.vmem [shape: f32[1,128], index: 2, kind: input, shape index: {}]
  %s3 = inlined_call_operand.vmem [shape: f32[128,128], index: 3, kind: input, shape index: {}]
  %s4 = inlined_call_operand.vmem [shape: f32[1,128], index: 4, kind: input, shape index: {}]
  %s5 = inlined_call_operand.vmem [shape: f32[128,128], index: 5, kind: input, shape index: {}]
  %s6 = inlined_call_operand.vmem [shape: f32[1,128], index: 6, kind: input, shape index: {}]
  %s7 = inlined_call_operand.vmem [shape: f32[1,128], index: 7, kind: input, shape index: {}]
  %s8 = inlined_call_operand.vmem [shape: f32[1,128], index: 8, kind: input, shape index: {}]
  %s9 = inlined_call_operand.vmem [shape: f32[1,128], index: 9, kind: input, shape index: {}]
  %s10 = inlined_call_operand.vmem [shape: f32[1,128], index: 10, kind: input, shape index: {}]
  %s11 = inlined_call_operand.vmem [shape: f32[1,128], index: 11, kind: input, shape index: {}]
  %s12 = inlined_call_operand.vmem [shape: f32[1,128], index: 12, kind: input, shape index: {}]
  %s13 = inlined_call_operand.vmem [shape: f32[1,128], index: 13, kind: input, shape index: {}]
  %s14 = inlined_call_operand.vmem [shape: f32[8,8,128], index: 14, kind: output, shape index: {}]
  %s15 = sld [smem:[#allocation0]]
  $region66: #{tonic_ssn_forward.7} parent=0
    _
  %s17 = ssub.s32 1, %s15
  %s18 = scalar_select 0, %s17, %s15
  // Predicated region
  $region2: #{tonic_ssn_forward.7} parent=0 // pred_check
    _
  $region3: #{tonic_ssn_forward.7} parent=0 // pred_check_branch
    %20 = sbr.rel (0) target = $region5
  $region4: #{tonic_ssn_forward.7} parent=0 // pred_region
    _
  $region5: #{tonic_ssn_forward.7} parent=0 // pred_fallthru
    _
  // Predicated region
  $region6: #{tonic_ssn_forward.7} parent=0 // pred_check
    _
  $region7: #{tonic_ssn_forward.7} parent=0 // pred_check_branch
    %22 = sbr.rel (0) target = $region9
  $region8: #{tonic_ssn_forward.7} parent=0 // pred_region
    _
  $region9: #{tonic_ssn_forward.7} parent=0 // pred_fallthru
    _
  // Predicated region
  $region10: #{tonic_ssn_forward.7} parent=0 // pred_check
    _
  $region11: #{tonic_ssn_forward.7} parent=0 // pred_check_branch
    %24 = sbr.rel (0) target = $region13
  $region12: #{tonic_ssn_forward.7} parent=0 // pred_region
    _
  $region13: #{tonic_ssn_forward.7} parent=0 // pred_fallthru
    _
  // Predicated region
  $region14: #{tonic_ssn_forward.7} parent=0 // pred_check
    _
  $region15: #{tonic_ssn_forward.7} parent=0 // pred_check_branch
    %26 = sbr.rel (0) target = $region17
  $region16: #{tonic_ssn_forward.7} parent=0 // pred_region
    _
  $region17: #{tonic_ssn_forward.7} parent=0 // pred_fallthru
    _
  // Predicated region
  $region18: #{tonic_ssn_forward.7} parent=0 // pred_check
    _
  $region19: #{tonic_ssn_forward.7} parent=0 // pred_check_branch
    %28 = sbr.rel (0) target = $region21
  $region20: #{tonic_ssn_forward.7} parent=0 // pred_region
    _
  $region21: #{tonic_ssn_forward.7} parent=0 // pred_fallthru
    _
  // Predicated region
  $region22: #{tonic_ssn_forward.7} parent=0 // pred_check
    _
  $region23: #{tonic_ssn_forward.7} parent=0 // pred_check_branch
    %30 = sbr.rel (0) target = $region25
  $region24: #{tonic_ssn_forward.7} parent=0 // pred_region
    _
  $region25: #{tonic_ssn_forward.7} parent=0 // pred_fallthru
    _
  // Predicated region
  $region26: #{tonic_ssn_forward.7} parent=0 // pred_check
    _
  $region27: #{tonic_ssn_forward.7} parent=0 // pred_check_branch
    %32 = sbr.rel (0) target = $region29
  $region28: #{tonic_ssn_forward.7} parent=0 // pred_region
    _
  $region29: #{tonic_ssn_forward.7} parent=0 // pred_fallthru
    _
  // Predicated region
  $region30: #{tonic_ssn_forward.7} parent=0 // pred_check
    _
  $region31: #{tonic_ssn_forward.7} parent=0 // pred_check_branch
    %34 = sbr.rel (0) target = $region33
  $region32: #{tonic_ssn_forward.7} parent=0 // pred_region
    _
  $region33: #{tonic_ssn_forward.7} parent=0 // pred_fallthru
    _
  // Predicated region
  $region34: #{tonic_ssn_forward.7} parent=0 // pred_check
    _
  $region35: #{tonic_ssn_forward.7} parent=0 // pred_check_branch
    %36 = sbr.rel (0) target = $region37
  $region36: #{tonic_ssn_forward.7} parent=0 // pred_region
    _
  $region37: #{tonic_ssn_forward.7} parent=0 // pred_fallthru
    _
  // Predicated region
  $region38: #{tonic_ssn_forward.7} parent=0 // pred_check
    _
  $region39: #{tonic_ssn_forward.7} parent=0 // pred_check_branch
    %38 = sbr.rel (0) target = $region41
  $region40: #{tonic_ssn_forward.7} parent=0 // pred_region
    _
  $region41: #{tonic_ssn_forward.7} parent=0 // pred_fallthru
    _
  // Predicated region
  $region42: #{tonic_ssn_forward.7} parent=0 // pred_check
    _
  $region43: #{tonic_ssn_forward.7} parent=0 // pred_check_branch
    %40 = sbr.rel (0) target = $region45
  $region44: #{tonic_ssn_forward.7} parent=0 // pred_region
    _
  $region45: #{tonic_ssn_forward.7} parent=0 // pred_fallthru
    _
  // Predicated region
  $region46: #{tonic_ssn_forward.7} parent=0 // pred_check
    _
  $region47: #{tonic_ssn_forward.7} parent=0 // pred_check_branch
    %42 = sbr.rel (0) target = $region49
  $region48: #{tonic_ssn_forward.7} parent=0 // pred_region
    _
  $region49: #{tonic_ssn_forward.7} parent=0 // pred_fallthru
    _
  // Predicated region
  $region50: #{tonic_ssn_forward.7} parent=0 // pred_check
    _
  $region51: #{tonic_ssn_forward.7} parent=0 // pred_check_branch
    %44 = sbr.rel (0) target = $region53
  $region52: #{tonic_ssn_forward.7} parent=0 // pred_region
    _
  $region53: #{tonic_ssn_forward.7} parent=0 // pred_fallthru
    _
  // Predicated region
  $region54: #{tonic_ssn_forward.7} parent=0 // pred_check
    _
  $region55: #{tonic_ssn_forward.7} parent=0 // pred_check_branch
    %46 = sbr.rel (0) target = $region57
  $region56: #{tonic_ssn_forward.7} parent=0 // pred_region
    _
  $region57: #{tonic_ssn_forward.7} parent=0 // pred_fallthru
    _
  %v47 = vld [vmem:[%s1] sm:$0xff]
  %v48 = vld [vmem:[%s1 + $0x8] sm:$0xff]
  %v49 = vld [vmem:[%s1 + $0x10] sm:$0xff]
  %v50 = vld [vmem:[%s1 + $0x18] sm:$0xff]
  %v51 = vld [vmem:[%s1 + $0x20] sm:$0xff]
  %v52 = vld [vmem:[%s1 + $0x28] sm:$0xff]
  %v53 = vld [vmem:[%s1 + $0x30] sm:$0xff]
  %v54 = vld [vmem:[%s1 + $0x38] sm:$0xff]
  %v55 = vld [vmem:[%s1 + $0x40] sm:$0xff]
  %v56 = vld [vmem:[%s1 + $0x48] sm:$0xff]
  %v57 = vld [vmem:[%s1 + $0x50] sm:$0xff]
  %v58 = vld [vmem:[%s1 + $0x58] sm:$0xff]
  %v59 = vld [vmem:[%s1 + $0x60] sm:$0xff]
  %v60 = vld [vmem:[%s1 + $0x68] sm:$0xff]
  %v61 = vld [vmem:[%s1 + $0x70] sm:$0xff]
  %v62 = vld [vmem:[%s1 + $0x78] sm:$0xff]
  %v63 = vld [vmem:[%s2] sm:$0x1]
  %v64 = vld [vmem:[%s3] sm:$0xff]
  %v65 = vld [vmem:[%s3 + $0x8] sm:$0xff]
  %v66 = vld [vmem:[%s3 + $0x10] sm:$0xff]
  %v67 = vld [vmem:[%s3 + $0x18] sm:$0xff]
  %v68 = vld [vmem:[%s3 + $0x20] sm:$0xff]
  %v69 = vld [vmem:[%s3 + $0x28] sm:$0xff]
  %v70 = vld [vmem:[%s3 + $0x30] sm:$0xff]
  %v71 = vld [vmem:[%s3 + $0x38] sm:$0xff]
  %v72 = vld [vmem:[%s3 + $0x40] sm:$0xff]
  %v73 = vld [vmem:[%s3 + $0x48] sm:$0xff]
  %v74 = vld [vmem:[%s3 + $0x50] sm:$0xff]
  %v75 = vld [vmem:[%s3 + $0x58] sm:$0xff]
  %v76 = vld [vmem:[%s3 + $0x60] sm:$0xff]
  %v77 = vld [vmem:[%s3 + $0x68] sm:$0xff]
  %v78 = vld [vmem:[%s3 + $0x70] sm:$0xff]
  %v79 = vld [vmem:[%s3 + $0x78] sm:$0xff]
  %v80 = vld [vmem:[%s4] sm:$0x1]
  %v81 = vld [vmem:[%s5] sm:$0xff]
  %v82 = vld [vmem:[%s5 + $0x8] sm:$0xff]
  %v83 = vld [vmem:[%s5 + $0x10] sm:$0xff]
  %v84 = vld [vmem:[%s5 + $0x18] sm:$0xff]
  %v85 = vld [vmem:[%s5 + $0x20] sm:$0xff]
  %v86 = vld [vmem:[%s5 + $0x28] sm:$0xff]
  %v87 = vld [vmem:[%s5 + $0x30] sm:$0xff]
  %v88 = vld [vmem:[%s5 + $0x38] sm:$0xff]
  %v89 = vld [vmem:[%s5 + $0x40] sm:$0xff]
  %v90 = vld [vmem:[%s5 + $0x48] sm:$0xff]
  %v91 = vld [vmem:[%s5 + $0x50] sm:$0xff]
  %v92 = vld [vmem:[%s5 + $0x58] sm:$0xff]
  %v93 = vld [vmem:[%s5 + $0x60] sm:$0xff]
  %v94 = vld [vmem:[%s5 + $0x68] sm:$0xff]
  %v95 = vld [vmem:[%s5 + $0x70] sm:$0xff]
  %v96 = vld [vmem:[%s5 + $0x78] sm:$0xff]
  %v97 = vld [vmem:[%s6] sm:$0x1]
  %v98 = vld [vmem:[%s7] sm:$0x1]
  %v100 = vlaneseq
  %v101 = vshrl.u32 %v100, 7
  %v102 = vsub.s32 0, %v101
  %v103 = vrot.slane %v98, %v102
  %v105 = vld [vmem:[%s8] sm:$0x1]
  %v107 = vlaneseq
  %v108 = vshrl.u32 %v107, 7
  %v109 = vsub.s32 0, %v108
  %v110 = vrot.slane %v105, %v109
  %v112 = vld [vmem:[%s9] sm:$0x1]
  %v114 = vlaneseq
  %v115 = vshrl.u32 %v114, 7
  %v116 = vsub.s32 0, %v115
  %v117 = vrot.slane %v112, %v116
  %v119 = vld [vmem:[%s10] sm:$0x1]
  %v121 = vlaneseq
  %v122 = vshrl.u32 %v121, 7
  %v123 = vsub.s32 0, %v122
  %v124 = vrot.slane %v119, %v123
  %v126 = vld [vmem:[%s11] sm:$0x1]
  %v128 = vlaneseq
  %v129 = vshrl.u32 %v128, 7
  %v130 = vsub.s32 0, %v129
  %v131 = vrot.slane %v126, %v130
  %v133 = vld [vmem:[%s12] sm:$0x1]
  %v135 = vlaneseq
  %v136 = vshrl.u32 %v135, 7
  %v137 = vsub.s32 0, %v136
  %v138 = vrot.slane %v133, %v137
  %v140 = vld [vmem:[%s13] sm:$0x1]
  %v142 = vlaneseq
  %v143 = vshrl.u32 %v142, 7
  %v144 = vsub.s32 0, %v143
  %v145 = vrot.slane %v140, %v144
  %v147 = vld [vmem:[%s0] sm:$0x1]
  %v148 = vld [vmem:[%s0 + $0x8] sm:$0x1]
  %v149 = vld [vmem:[%s0 + $0x10] sm:$0x1]
  %v150 = vld [vmem:[%s0 + $0x18] sm:$0x1]
  %v151 = vld [vmem:[%s0 + $0x20] sm:$0x1]
  %v152 = vld [vmem:[%s0 + $0x28] sm:$0x1]
  %v153 = vld [vmem:[%s0 + $0x30] sm:$0x1]
  %v154 = vld [vmem:[%s0 + $0x38] sm:$0x1]
  %vm155 = vcmp.gt.f32.partialorder 0.0, %v110
  %v156 = vsel %vm155, 1, 0
  %v157 = vcvt.s32.f32 %v156
  %v158 = vmul.f32 %v103, 0.0
  %v167 = vrot.slane %v148, 7
  %vm168 = vcmask 1041409
  %v169 = vsel %vm168, %v167, %v147
  %v170 = vrot.slane %v149, 6
  %vm171 = vcmask 1042434
  %v172 = vsel %vm171, %v170, %v169
  %v173 = vrot.slane %v150, 5
  %vm174 = vcmask 1043459
  %v175 = vsel %vm174, %v173, %v172
  %v176 = vrot.slane %v151, 4
  %vm177 = vcmask 1044484
  %v178 = vsel %vm177, %v176, %v175
  %v179 = vrot.slane %v152, 3
  %vm180 = vcmask 1045509
  %v181 = vsel %vm180, %v179, %v178
  %v182 = vrot.slane %v153, 2
  %vm183 = vcmask 1046534
  %v184 = vsel %vm183, %v182, %v181
  %v185 = vrot.slane %v154, 1
  %vm186 = vcmask 1047559
  %v187 = vsel %vm186, %v185, %v184
  %v189 = vadd.f32 %v158, %v187
  %v190 = vmul.f32 %v157, %v110
  %v191 = vsub.f32 %v189, %v190
  %vm192 = vcmp.gt.f32.partialorder %v191, %v110
  %v193 = vsel %vm192, 1, 0
  %v194 = vcvt.s32.f32 %v193
  %v196 = vlaneseq
  %v197 = vshrl.u32 %v196, 7
  %v198 = vsub.s32 0, %v197
  %v199 = vrot.slane %v63, %v198
  %201 = vmatprep.subr.mxu0 0.0
  %202 = vmatpush1.msra.mxu0 %v47
  %203 = vmatprep.subr.mxu0 0.0
  %204 = vmatpush1.msra.mxu0 %v48
  %205 = vmatprep.subr.mxu0 0.0
  %206 = vmatpush1.msra.mxu0 %v49
  %207 = vmatprep.subr.mxu0 0.0
  %208 = vmatpush1.msra.mxu0 %v50
  %209 = vmatprep.subr.mxu0 0.0
  %210 = vmatpush1.msra.mxu0 %v51
  %211 = vmatprep.subr.mxu0 0.0
  %212 = vmatpush1.msra.mxu0 %v52
  %213 = vmatprep.subr.mxu0 0.0
  %214 = vmatpush1.msra.mxu0 %v53
  %215 = vmatprep.subr.mxu0 0.0
  %216 = vmatpush1.msra.mxu0 %v54
  %217 = vmatprep.subr.mxu0 0.0
  %218 = vmatpush1.msra.mxu0 %v55
  %219 = vmatprep.subr.mxu0 0.0
  %220 = vmatpush1.msra.mxu0 %v56
  %221 = vmatprep.subr.mxu0 0.0
  %222 = vmatpush1.msra.mxu0 %v57
  %223 = vmatprep.subr.mxu0 0.0
  %224 = vmatpush1.msra.mxu0 %v58
  %225 = vmatprep.subr.mxu0 0.0
  %226 = vmatpush1.msra.mxu0 %v59
  %227 = vmatprep.subr.mxu0 0.0
  %228 = vmatpush1.msra.mxu0 %v60
  %229 = vmatprep.subr.mxu0 0.0
  %230 = vmatpush1.msra.mxu0 %v61
  %231 = vmatprep.subr.mxu0 0.0
  %232 = vmatpush1.msra.mxu0 %v62
  %233 = vmatprep.subr.mxu0 0.0
  %234 = vmatpush1.msra.mxu0 0.0
  %235 = vmatprep.subr.mxu0 0.0
  %236 = vmatpush1.msra.mxu0 0.0
  %237 = vmatprep.subr.mxu0 0.0
  %238 = vmatpush1.msra.mxu0 0.0
  %239 = vmatprep.subr.mxu0 0.0
  %240 = vmatpush1.msra.mxu0 0.0
  %241 = vmatprep.subr.mxu0 0.0
  %242 = vmatpush1.msra.mxu0 0.0
  %243 = vmatprep.subr.mxu0 0.0
  %244 = vmatpush1.msra.mxu0 0.0
  %245 = vmatprep.subr.mxu0 0.0
  %246 = vmatpush1.msra.mxu0 0.0
  %247 = vmatprep.subr.mxu0 0.0
  %248 = vmatpush1.msra.mxu0 0.0
  %249 = vmatprep.subr.mxu0 0.0
  %250 = vmatpush1.msra.mxu0 0.0
  %251 = vmatprep.subr.mxu0 0.0
  %252 = vmatpush1.msra.mxu0 0.0
  %253 = vmatprep.subr.mxu0 0.0
  %254 = vmatpush1.msra.mxu0 0.0
  %255 = vmatprep.subr.mxu0 0.0
  %256 = vmatpush1.msra.mxu0 0.0
  %257 = vmatprep.subr.mxu0 0.0
  %258 = vmatpush1.msra.mxu0 0.0
  %259 = vmatprep.subr.mxu0 0.0
  %260 = vmatpush1.msra.mxu0 0.0
  %261 = vmatprep.subr.mxu0 0.0
  %262 = vmatpush1.msra.mxu0 0.0
  %263 = vmatprep.subr.mxu0 0.0
  %264 = vmatpush1.msra.mxu0 0.0
  %265 = vmatprep.mubr.f32.mxu0 0.0
  %266 = vmatmul.mubr.f32.gmra.mrb[0].mxu0 %v194
  %v267 = vpop.f32.mrb[0].mxu0
  %v268 = vadd.f32 %v199, %v267
  %v269 = vpop.f32.mrb[0].mxu0
  %270 = vdwg.mxu0
  %vm271 = vcmp.gt.f32.partialorder 0.0, %v124
  %v272 = vsel %vm271, 1, 0
  %v273 = vcvt.s32.f32 %v272
  %v274 = vmul.f32 %v117, 0.0
  %v275 = vadd.f32 %v274, %v268
  %v276 = vmul.f32 %v273, %v124
  %v277 = vsub.f32 %v275, %v276
  %vm278 = vcmp.gt.f32.partialorder %v277, %v124
  %v279 = vsel %vm278, 1, 0
  %v280 = vcvt.s32.f32 %v279
  %v282 = vlaneseq
  %v283 = vshrl.u32 %v282, 7
  %v284 = vsub.s32 0, %v283
  %v285 = vrot.slane %v80, %v284
  %287 = vmatprep.subr.mxu0 0.0
  %288 = vmatpush1.msra.mxu0 %v64
  %289 = vmatprep.subr.mxu0 0.0
  %290 = vmatpush1.msra.mxu0 %v65
  %291 = vmatprep.subr.mxu0 0.0
  %292 = vmatpush1.msra.mxu0 %v66
  %293 = vmatprep.subr.mxu0 0.0
  %294 = vmatpush1.msra.mxu0 %v67
  %295 = vmatprep.subr.mxu0 0.0
  %296 = vmatpush1.msra.mxu0 %v68
  %297 = vmatprep.subr.mxu0 0.0
  %298 = vmatpush1.msra.mxu0 %v69
  %299 = vmatprep.subr.mxu0 0.0
  %300 = vmatpush1.msra.mxu0 %v70
  %301 = vmatprep.subr.mxu0 0.0
  %302 = vmatpush1.msra.mxu0 %v71
  %303 = vmatprep.subr.mxu0 0.0
  %304 = vmatpush1.msra.mxu0 %v72
  %305 = vmatprep.subr.mxu0 0.0
  %306 = vmatpush1.msra.mxu0 %v73
  %307 = vmatprep.subr.mxu0 0.0
  %308 = vmatpush1.msra.mxu0 %v74
  %309 = vmatprep.subr.mxu0 0.0
  %310 = vmatpush1.msra.mxu0 %v75
  %311 = vmatprep.subr.mxu0 0.0
  %312 = vmatpush1.msra.mxu0 %v76
  %313 = vmatprep.subr.mxu0 0.0
  %314 = vmatpush1.msra.mxu0 %v77
  %315 = vmatprep.subr.mxu0 0.0
  %316 = vmatpush1.msra.mxu0 %v78
  %317 = vmatprep.subr.mxu0 0.0
  %318 = vmatpush1.msra.mxu0 %v79
  %319 = vmatprep.subr.mxu0 0.0
  %320 = vmatpush1.msra.mxu0 0.0
  %321 = vmatprep.subr.mxu0 0.0
  %322 = vmatpush1.msra.mxu0 0.0
  %323 = vmatprep.subr.mxu0 0.0
  %324 = vmatpush1.msra.mxu0 0.0
  %325 = vmatprep.subr.mxu0 0.0
  %326 = vmatpush1.msra.mxu0 0.0
  %327 = vmatprep.subr.mxu0 0.0
  %328 = vmatpush1.msra.mxu0 0.0
  %329 = vmatprep.subr.mxu0 0.0
  %330 = vmatpush1.msra.mxu0 0.0
  %331 = vmatprep.subr.mxu0 0.0
  %332 = vmatpush1.msra.mxu0 0.0
  %333 = vmatprep.subr.mxu0 0.0
  %334 = vmatpush1.msra.mxu0 0.0
  %335 = vmatprep.subr.mxu0 0.0
  %336 = vmatpush1.msra.mxu0 0.0
  %337 = vmatprep.subr.mxu0 0.0
  %338 = vmatpush1.msra.mxu0 0.0
  %339 = vmatprep.subr.mxu0 0.0
  %340 = vmatpush1.msra.mxu0 0.0
  %341 = vmatprep.subr.mxu0 0.0
  %342 = vmatpush1.msra.mxu0 0.0
  %343 = vmatprep.subr.mxu0 0.0
  %344 = vmatpush1.msra.mxu0 0.0
  %345 = vmatprep.subr.mxu0 0.0
  %346 = vmatpush1.msra.mxu0 0.0
  %347 = vmatprep.subr.mxu0 0.0
  %348 = vmatpush1.msra.mxu0 0.0
  %349 = vmatprep.subr.mxu0 0.0
  %350 = vmatpush1.msra.mxu0 0.0
  %351 = vmatprep.mubr.f32.mxu0 0.0
  %352 = vmatmul.mubr.f32.gmra.mrb[0].mxu0 %v280
  %v353 = vpop.f32.mrb[0].mxu0
  %v354 = vadd.f32 %v285, %v353
  %v355 = vpop.f32.mrb[0].mxu0
  %356 = vdwg.mxu0
  %vm357 = vcmp.gt.f32.partialorder 0.0, %v138
  %v358 = vsel %vm357, 1, 0
  %v359 = vcvt.s32.f32 %v358
  %v360 = vmul.f32 %v131, 0.0
  %v361 = vadd.f32 %v360, %v354
  %v362 = vmul.f32 %v359, %v138
  %v363 = vsub.f32 %v361, %v362
  %vm364 = vcmp.gt.f32.partialorder %v363, %v138
  %v365 = vsel %vm364, 1, 0
  %v366 = vcvt.s32.f32 %v365
  %v368 = vlaneseq
  %v369 = vshrl.u32 %v368, 7
  %v370 = vsub.s32 0, %v369
  %v371 = vrot.slane %v97, %v370
  %373 = vmatprep.subr.mxu0 0.0
  %374 = vmatpush1.msra.mxu0 %v81
  %375 = vmatprep.subr.mxu0 0.0
  %376 = vmatpush1.msra.mxu0 %v82
  %377 = vmatprep.subr.mxu0 0.0
  %378 = vmatpush1.msra.mxu0 %v83
  %379 = vmatprep.subr.mxu0 0.0
  %380 = vmatpush1.msra.mxu0 %v84
  %381 = vmatprep.subr.mxu0 0.0
  %382 = vmatpush1.msra.mxu0 %v85
  %383 = vmatprep.subr.mxu0 0.0
  %384 = vmatpush1.msra.mxu0 %v86
  %385 = vmatprep.subr.mxu0 0.0
  %386 = vmatpush1.msra.mxu0 %v87
  %387 = vmatprep.subr.mxu0 0.0
  %388 = vmatpush1.msra.mxu0 %v88
  %389 = vmatprep.subr.mxu0 0.0
  %390 = vmatpush1.msra.mxu0 %v89
  %391 = vmatprep.subr.mxu0 0.0
  %392 = vmatpush1.msra.mxu0 %v90
  %393 = vmatprep.subr.mxu0 0.0
  %394 = vmatpush1.msra.mxu0 %v91
  %395 = vmatprep.subr.mxu0 0.0
  %396 = vmatpush1.msra.mxu0 %v92
  %397 = vmatprep.subr.mxu0 0.0
  %398 = vmatpush1.msra.mxu0 %v93
  %399 = vmatprep.subr.mxu0 0.0
  %400 = vmatpush1.msra.mxu0 %v94
  %401 = vmatprep.subr.mxu0 0.0
  %402 = vmatpush1.msra.mxu0 %v95
  %403 = vmatprep.subr.mxu0 0.0
  %404 = vmatpush1.msra.mxu0 %v96
  %405 = vmatprep.subr.mxu0 0.0
  %406 = vmatpush1.msra.mxu0 0.0
  %407 = vmatprep.subr.mxu0 0.0
  %408 = vmatpush1.msra.mxu0 0.0
  %409 = vmatprep.subr.mxu0 0.0
  %410 = vmatpush1.msra.mxu0 0.0
  %411 = vmatprep.subr.mxu0 0.0
  %412 = vmatpush1.msra.mxu0 0.0
  %413 = vmatprep.subr.mxu0 0.0
  %414 = vmatpush1.msra.mxu0 0.0
  %415 = vmatprep.subr.mxu0 0.0
  %416 = vmatpush1.msra.mxu0 0.0
  %417 = vmatprep.subr.mxu0 0.0
  %418 = vmatpush1.msra.mxu0 0.0
  %419 = vmatprep.subr.mxu0 0.0
  %420 = vmatpush1.msra.mxu0 0.0
  %421 = vmatprep.subr.mxu0 0.0
  %422 = vmatpush1.msra.mxu0 0.0
  %423 = vmatprep.subr.mxu0 0.0
  %424 = vmatpush1.msra.mxu0 0.0
  %425 = vmatprep.subr.mxu0 0.0
  %426 = vmatpush1.msra.mxu0 0.0
  %427 = vmatprep.subr.mxu0 0.0
  %428 = vmatpush1.msra.mxu0 0.0
  %429 = vmatprep.subr.mxu0 0.0
  %430 = vmatpush1.msra.mxu0 0.0
  %431 = vmatprep.subr.mxu0 0.0
  %432 = vmatpush1.msra.mxu0 0.0
  %433 = vmatprep.subr.mxu0 0.0
  %434 = vmatpush1.msra.mxu0 0.0
  %435 = vmatprep.subr.mxu0 0.0
  %436 = vmatpush1.msra.mxu0 0.0
  %437 = vmatprep.mubr.f32.mxu0 0.0
  %438 = vmatmul.mubr.f32.gmra.mrb[0].mxu0 %v366
  %v439 = vpop.f32.mrb[0].mxu0
  %v440 = vadd.f32 %v371, %v439
  %v441 = vpop.f32.mrb[0].mxu0
  %442 = vdwg.mxu0
  %v443 = vmul.f32 %v145, 0.0
  %v444 = vadd.f32 %v443, %v440
  %vm445 = vcmp.gt.f32.partialorder %v444, 1.0
  %v446 = vsel %vm445, 1, 0
  %v447 = vcvt.s32.f32 %v446
  %v449 = vcombine.high %v447, %v447
  %v451 = vunpack.c.l.s4 1966171168
  %v452 = vunpack.c.0.s8 %v451
  %v453 = vlaneseq
  %v454 = vshrl.u32 %v453, 7
  %v455 = vsub.s32 %v452, %v454
  %v456 = vrot.slane %v447, %v455
  %v458 = vunpack.c.l.s4 1966171168
  %v459 = vunpack.c.0.s8 %v458
  %v460 = vlaneseq
  %v461 = vshrl.u32 %v460, 7
  %v462 = vsub.s32 %v459, %v461
  %v463 = vrot.slane %v449, %v462
  %v464 = vcombine.high %v456, %v456
  %v465 = vcombine.high %v463, %v463
  %v467 = vunpack.c.l.s4 1966171168
  %v468 = vunpack.c.0.s8 %v467
  %v469 = vlaneseq
  %v470 = vshrl.u32 %v469, 7
  %v471 = vsub.s32 %v468, %v470
  %v472 = vrot.slane %v456, %v471
  %v474 = vunpack.c.l.s4 1966171168
  %v475 = vunpack.c.0.s8 %v474
  %v476 = vlaneseq
  %v477 = vshrl.u32 %v476, 7
  %v478 = vsub.s32 %v475, %v477
  %v479 = vrot.slane %v463, %v478
  %v481 = vunpack.c.l.s4 1966171168
  %v482 = vunpack.c.0.s8 %v481
  %v483 = vlaneseq
  %v484 = vshrl.u32 %v483, 7
  %v485 = vsub.s32 %v482, %v484
  %v486 = vrot.slane %v464, %v485
  %v488 = vunpack.c.l.s4 1966171168
  %v489 = vunpack.c.0.s8 %v488
  %v490 = vlaneseq
  %v491 = vshrl.u32 %v490, 7
  %v492 = vsub.s32 %v489, %v491
  %v493 = vrot.slane %v465, %v492
  %v494 = vcombine.high %v472, %v472
  %v495 = vcombine.high %v479, %v479
  %v496 = vcombine.high %v486, %v486
  %v497 = vcombine.high %v493, %v493
  %506 = vst [vmem:[%s14] sm:$0x1] %v472
  %507 = vst [vmem:[%s14 + $0x8] sm:$0x1] %v486
  %508 = vst [vmem:[%s14 + $0x10] sm:$0x1] %v494
  %509 = vst [vmem:[%s14 + $0x18] sm:$0x1] %v496
  %510 = vst [vmem:[%s14 + $0x20] sm:$0x1] %v479
  %511 = vst [vmem:[%s14 + $0x28] sm:$0x1] %v493
  %512 = vst [vmem:[%s14 + $0x30] sm:$0x1] %v495
  %513 = vst [vmem:[%s14 + $0x38] sm:$0x1] %v497
  %v514 = vld [vmem:[%s0 + $0x1] sm:$0x1]
  %v515 = vld [vmem:[%s0 + $0x9] sm:$0x1]
  %v516 = vld [vmem:[%s0 + $0x11] sm:$0x1]
  %v517 = vld [vmem:[%s0 + $0x19] sm:$0x1]
  %v518 = vld [vmem:[%s0 + $0x21] sm:$0x1]
  %v519 = vld [vmem:[%s0 + $0x29] sm:$0x1]
  %v520 = vld [vmem:[%s0 + $0x31] sm:$0x1]
  %v521 = vld [vmem:[%s0 + $0x39] sm:$0x1]
  %v522 = vmul.f32 %v103, %v191
  %v531 = vrot.slane %v515, 7
  %v532 = vsel %vm168, %v531, %v514
  %v533 = vrot.slane %v516, 6
  %v534 = vsel %vm171, %v533, %v532
  %v535 = vrot.slane %v517, 5
  %v536 = vsel %vm174, %v535, %v534
  %v537 = vrot.slane %v518, 4
  %v538 = vsel %vm177, %v537, %v536
  %v539 = vrot.slane %v519, 3
  %v540 = vsel %vm180, %v539, %v538
  %v541 = vrot.slane %v520, 2
  %v542 = vsel %vm183, %v541, %v540
  %v543 = vrot.slane %v521, 1
  %v544 = vsel %vm186, %v543, %v542
  %v546 = vadd.f32 %v522, %v544
  %v547 = vmul.f32 %v194, %v110
  %v548 = vsub.f32 %v546, %v547
  %vm549 = vcmp.gt.f32.partialorder %v548, %v110
  %v550 = vsel %vm549, 1, 0
  %v551 = vcvt.s32.f32 %v550
  %552 = vmatprep.subr.mxu0 0.0
  %553 = vmatpush1.msra.mxu0 %v47
  %554 = vmatprep.subr.mxu0 0.0
  %555 = vmatpush1.msra.mxu0 %v48
  %556 = vmatprep.subr.mxu0 0.0
  %557 = vmatpush1.msra.mxu0 %v49
  %558 = vmatprep.subr.mxu0 0.0
  %559 = vmatpush1.msra.mxu0 %v50
  %560 = vmatprep.subr.mxu0 0.0
  %561 = vmatpush1.msra.mxu0 %v51
  %562 = vmatprep.subr.mxu0 0.0
  %563 = vmatpush1.msra.mxu0 %v52
  %564 = vmatprep.subr.mxu0 0.0
  %565 = vmatpush1.msra.mxu0 %v53
  %566 = vmatprep.subr.mxu0 0.0
  %567 = vmatpush1.msra.mxu0 %v54
  %568 = vmatprep.subr.mxu0 0.0
  %569 = vmatpush1.msra.mxu0 %v55
  %570 = vmatprep.subr.mxu0 0.0
  %571 = vmatpush1.msra.mxu0 %v56
  %572 = vmatprep.subr.mxu0 0.0
  %573 = vmatpush1.msra.mxu0 %v57
  %574 = vmatprep.subr.mxu0 0.0
  %575 = vmatpush1.msra.mxu0 %v58
  %576 = vmatprep.subr.mxu0 0.0
  %577 = vmatpush1.msra.mxu0 %v59
  %578 = vmatprep.subr.mxu0 0.0
  %579 = vmatpush1.msra.mxu0 %v60
  %580 = vmatprep.subr.mxu0 0.0
  %581 = vmatpush1.msra.mxu0 %v61
  %582 = vmatprep.subr.mxu0 0.0
  %583 = vmatpush1.msra.mxu0 %v62
  %584 = vmatprep.subr.mxu0 0.0
  %585 = vmatpush1.msra.mxu0 0.0
  %586 = vmatprep.subr.mxu0 0.0
  %587 = vmatpush1.msra.mxu0 0.0
  %588 = vmatprep.subr.mxu0 0.0
  %589 = vmatpush1.msra.mxu0 0.0
  %590 = vmatprep.subr.mxu0 0.0
  %591 = vmatpush1.msra.mxu0 0.0
  %592 = vmatprep.subr.mxu0 0.0
  %593 = vmatpush1.msra.mxu0 0.0
  %594 = vmatprep.subr.mxu0 0.0
  %595 = vmatpush1.msra.mxu0 0.0
  %596 = vmatprep.subr.mxu0 0.0
  %597 = vmatpush1.msra.mxu0 0.0
  %598 = vmatprep.subr.mxu0 0.0
  %599 = vmatpush1.msra.mxu0 0.0
  %600 = vmatprep.subr.mxu0 0.0
  %601 = vmatpush1.msra.mxu0 0.0
  %602 = vmatprep.subr.mxu0 0.0
  %603 = vmatpush1.msra.mxu0 0.0
  %604 = vmatprep.subr.mxu0 0.0
  %605 = vmatpush1.msra.mxu0 0.0
  %606 = vmatprep.subr.mxu0 0.0
  %607 = vmatpush1.msra.mxu0 0.0
  %608 = vmatprep.subr.mxu0 0.0
  %609 = vmatpush1.msra.mxu0 0.0
  %610 = vmatprep.subr.mxu0 0.0
  %611 = vmatpush1.msra.mxu0 0.0
  %612 = vmatprep.subr.mxu0 0.0
  %613 = vmatpush1.msra.mxu0 0.0
  %614 = vmatprep.subr.mxu0 0.0
  %615 = vmatpush1.msra.mxu0 0.0
  %616 = vmatprep.mubr.f32.mxu0 0.0
  %617 = vmatmul.mubr.f32.gmra.mrb[0].mxu0 %v551
  %v618 = vpop.f32.mrb[0].mxu0
  %v619 = vadd.f32 %v199, %v618
  %v620 = vpop.f32.mrb[0].mxu0
  %621 = vdwg.mxu0
  %v622 = vmul.f32 %v117, %v277
  %v623 = vadd.f32 %v622, %v619
  %v624 = vmul.f32 %v280, %v124
  %v625 = vsub.f32 %v623, %v624
  %vm626 = vcmp.gt.f32.partialorder %v625, %v124
  %v627 = vsel %vm626, 1, 0
  %v628 = vcvt.s32.f32 %v627
  %629 = vmatprep.subr.mxu0 0.0
  %630 = vmatpush1.msra.mxu0 %v64
  %631 = vmatprep.subr.mxu0 0.0
  %632 = vmatpush1.msra.mxu0 %v65
  %633 = vmatprep.subr.mxu0 0.0
  %634 = vmatpush1.msra.mxu0 %v66
  %635 = vmatprep.subr.mxu0 0.0
  %636 = vmatpush1.msra.mxu0 %v67
  %637 = vmatprep.subr.mxu0 0.0
  %638 = vmatpush1.msra.mxu0 %v68
  %639 = vmatprep.subr.mxu0 0.0
  %640 = vmatpush1.msra.mxu0 %v69
  %641 = vmatprep.subr.mxu0 0.0
  %642 = vmatpush1.msra.mxu0 %v70
  %643 = vmatprep.subr.mxu0 0.0
  %644 = vmatpush1.msra.mxu0 %v71
  %645 = vmatprep.subr.mxu0 0.0
  %646 = vmatpush1.msra.mxu0 %v72
  %647 = vmatprep.subr.mxu0 0.0
  %648 = vmatpush1.msra.mxu0 %v73
  %649 = vmatprep.subr.mxu0 0.0
  %650 = vmatpush1.msra.mxu0 %v74
  %651 = vmatprep.subr.mxu0 0.0
  %652 = vmatpush1.msra.mxu0 %v75
  %653 = vmatprep.subr.mxu0 0.0
  %654 = vmatpush1.msra.mxu0 %v76
  %655 = vmatprep.subr.mxu0 0.0
  %656 = vmatpush1.msra.mxu0 %v77
  %657 = vmatprep.subr.mxu0 0.0
  %658 = vmatpush1.msra.mxu0 %v78
  %659 = vmatprep.subr.mxu0 0.0
  %660 = vmatpush1.msra.mxu0 %v79
  %661 = vmatprep.subr.mxu0 0.0
  %662 = vmatpush1.msra.mxu0 0.0
  %663 = vmatprep.subr.mxu0 0.0
  %664 = vmatpush1.msra.mxu0 0.0
  %665 = vmatprep.subr.mxu0 0.0
  %666 = vmatpush1.msra.mxu0 0.0
  %667 = vmatprep.subr.mxu0 0.0
  %668 = vmatpush1.msra.mxu0 0.0
  %669 = vmatprep.subr.mxu0 0.0
  %670 = vmatpush1.msra.mxu0 0.0
  %671 = vmatprep.subr.mxu0 0.0
  %672 = vmatpush1.msra.mxu0 0.0
  %673 = vmatprep.subr.mxu0 0.0
  %674 = vmatpush1.msra.mxu0 0.0
  %675 = vmatprep.subr.mxu0 0.0
  %676 = vmatpush1.msra.mxu0 0.0
  %677 = vmatprep.subr.mxu0 0.0
  %678 = vmatpush1.msra.mxu0 0.0
  %679 = vmatprep.subr.mxu0 0.0
  %680 = vmatpush1.msra.mxu0 0.0
  %681 = vmatprep.subr.mxu0 0.0
  %682 = vmatpush1.msra.mxu0 0.0
  %683 = vmatprep.subr.mxu0 0.0
  %684 = vmatpush1.msra.mxu0 0.0
  %685 = vmatprep.subr.mxu0 0.0
  %686 = vmatpush1.msra.mxu0 0.0
  %687 = vmatprep.subr.mxu0 0.0
  %688 = vmatpush1.msra.mxu0 0.0
  %689 = vmatprep.subr.mxu0 0.0
  %690 = vmatpush1.msra.mxu0 0.0
  %691 = vmatprep.subr.mxu0 0.0
  %692 = vmatpush1.msra.mxu0 0.0
  %693 = vmatprep.mubr.f32.mxu0 0.0
  %694 = vmatmul.mubr.f32.gmra.mrb[0].mxu0 %v628
  %v695 = vpop.f32.mrb[0].mxu0
  %v696 = vadd.f32 %v285, %v695
  %v697 = vpop.f32.mrb[0].mxu0
  %698 = vdwg.mxu0
  %v699 = vmul.f32 %v131, %v363
  %v700 = vadd.f32 %v699, %v696
  %v701 = vmul.f32 %v366, %v138
  %v702 = vsub.f32 %v700, %v701
  %vm703 = vcmp.gt.f32.partialorder %v702, %v138
  %v704 = vsel %vm703, 1, 0
  %v705 = vcvt.s32.f32 %v704
  %706 = vmatprep.subr.mxu0 0.0
  %707 = vmatpush1.msra.mxu0 %v81
  %708 = vmatprep.subr.mxu0 0.0
  %709 = vmatpush1.msra.mxu0 %v82
  %710 = vmatprep.subr.mxu0 0.0
  %711 = vmatpush1.msra.mxu0 %v83
  %712 = vmatprep.subr.mxu0 0.0
  %713 = vmatpush1.msra.mxu0 %v84
  %714 = vmatprep.subr.mxu0 0.0
  %715 = vmatpush1.msra.mxu0 %v85
  %716 = vmatprep.subr.mxu0 0.0
  %717 = vmatpush1.msra.mxu0 %v86
  %718 = vmatprep.subr.mxu0 0.0
  %719 = vmatpush1.msra.mxu0 %v87
  %720 = vmatprep.subr.mxu0 0.0
  %721 = vmatpush1.msra.mxu0 %v88
  %722 = vmatprep.subr.mxu0 0.0
  %723 = vmatpush1.msra.mxu0 %v89
  %724 = vmatprep.subr.mxu0 0.0
  %725 = vmatpush1.msra.mxu0 %v90
  %726 = vmatprep.subr.mxu0 0.0
  %727 = vmatpush1.msra.mxu0 %v91
  %728 = vmatprep.subr.mxu0 0.0
  %729 = vmatpush1.msra.mxu0 %v92
  %730 = vmatprep.subr.mxu0 0.0
  %731 = vmatpush1.msra.mxu0 %v93
  %732 = vmatprep.subr.mxu0 0.0
  %733 = vmatpush1.msra.mxu0 %v94
  %734 = vmatprep.subr.mxu0 0.0
  %735 = vmatpush1.msra.mxu0 %v95
  %736 = vmatprep.subr.mxu0 0.0
  %737 = vmatpush1.msra.mxu0 %v96
  %738 = vmatprep.subr.mxu0 0.0
  %739 = vmatpush1.msra.mxu0 0.0
  %740 = vmatprep.subr.mxu0 0.0
  %741 = vmatpush1.msra.mxu0 0.0
  %742 = vmatprep.subr.mxu0 0.0
  %743 = vmatpush1.msra.mxu0 0.0
  %744 = vmatprep.subr.mxu0 0.0
  %745 = vmatpush1.msra.mxu0 0.0
  %746 = vmatprep.subr.mxu0 0.0
  %747 = vmatpush1.msra.mxu0 0.0
  %748 = vmatprep.subr.mxu0 0.0
  %749 = vmatpush1.msra.mxu0 0.0
  %750 = vmatprep.subr.mxu0 0.0
  %751 = vmatpush1.msra.mxu0 0.0
  %752 = vmatprep.subr.mxu0 0.0
  %753 = vmatpush1.msra.mxu0 0.0
  %754 = vmatprep.subr.mxu0 0.0
  %755 = vmatpush1.msra.mxu0 0.0
  %756 = vmatprep.subr.mxu0 0.0
  %757 = vmatpush1.msra.mxu0 0.0
  %758 = vmatprep.subr.mxu0 0.0
  %759 = vmatpush1.msra.mxu0 0.0
  %760 = vmatprep.subr.mxu0 0.0
  %761 = vmatpush1.msra.mxu0 0.0
  %762 = vmatprep.subr.mxu0 0.0
  %763 = vmatpush1.msra.mxu0 0.0
  %764 = vmatprep.subr.mxu0 0.0
  %765 = vmatpush1.msra.mxu0 0.0
  %766 = vmatprep.subr.mxu0 0.0
  %767 = vmatpush1.msra.mxu0 0.0
  %768 = vmatprep.subr.mxu0 0.0
  %769 = vmatpush1.msra.mxu0 0.0
  %770 = vmatprep.mubr.f32.mxu0 0.0
  %771 = vmatmul.mubr.f32.gmra.mrb[0].mxu0 %v705
  %v772 = vpop.f32.mrb[0].mxu0
  %v773 = vadd.f32 %v371, %v772
  %v774 = vpop.f32.mrb[0].mxu0
  %775 = vdwg.mxu0
  %v776 = vmul.f32 %v145, %v444
  %v777 = vadd.f32 %v776, %v773
  %vm778 = vcmp.gt.f32.partialorder %v777, 1.0
  %v779 = vsel %vm778, 1, 0
  %v780 = vcvt.s32.f32 %v779
  %v782 = vcombine.high %v780, %v780
  %v784 = vunpack.c.l.s4 1966171168
  %v785 = vunpack.c.0.s8 %v784
  %v786 = vlaneseq
  %v787 = vshrl.u32 %v786, 7
  %v788 = vsub.s32 %v785, %v787
  %v789 = vrot.slane %v780, %v788
  %v791 = vunpack.c.l.s4 1966171168
  %v792 = vunpack.c.0.s8 %v791
  %v793 = vlaneseq
  %v794 = vshrl.u32 %v793, 7
  %v795 = vsub.s32 %v792, %v794
  %v796 = vrot.slane %v782, %v795
  %v797 = vcombine.high %v789, %v789
  %v798 = vcombine.high %v796, %v796
  %v800 = vunpack.c.l.s4 1966171168
  %v801 = vunpack.c.0.s8 %v800
  %v802 = vlaneseq
  %v803 = vshrl.u32 %v802, 7
  %v804 = vsub.s32 %v801, %v803
  %v805 = vrot.slane %v789, %v804
  %v807 = vunpack.c.l.s4 1966171168
  %v808 = vunpack.c.0.s8 %v807
  %v809 = vlaneseq
  %v810 = vshrl.u32 %v809, 7
  %v811 = vsub.s32 %v808, %v810
  %v812 = vrot.slane %v796, %v811
  %v814 = vunpack.c.l.s4 1966171168
  %v815 = vunpack.c.0.s8 %v814
  %v816 = vlaneseq
  %v817 = vshrl.u32 %v816, 7
  %v818 = vsub.s32 %v815, %v817
  %v819 = vrot.slane %v797, %v818
  %v821 = vunpack.c.l.s4 1966171168
  %v822 = vunpack.c.0.s8 %v821
  %v823 = vlaneseq
  %v824 = vshrl.u32 %v823, 7
  %v825 = vsub.s32 %v822, %v824
  %v826 = vrot.slane %v798, %v825
  %v827 = vcombine.high %v805, %v805
  %v828 = vcombine.high %v812, %v812
  %v829 = vcombine.high %v819, %v819
  %v830 = vcombine.high %v826, %v826
  %839 = vst [vmem:[%s14 + $0x1] sm:$0x1] %v805
  %840 = vst [vmem:[%s14 + $0x9] sm:$0x1] %v819
  %841 = vst [vmem:[%s14 + $0x11] sm:$0x1] %v827
  %842 = vst [vmem:[%s14 + $0x19] sm:$0x1] %v829
  %843 = vst [vmem:[%s14 + $0x21] sm:$0x1] %v812
  %844 = vst [vmem:[%s14 + $0x29] sm:$0x1] %v826
  %845 = vst [vmem:[%s14 + $0x31] sm:$0x1] %v828
  %846 = vst [vmem:[%s14 + $0x39] sm:$0x1] %v830
  %v847 = vld [vmem:[%s0 + $0x2] sm:$0x1]
  %v848 = vld [vmem:[%s0 + $0xa] sm:$0x1]
  %v849 = vld [vmem:[%s0 + $0x12] sm:$0x1]
  %v850 = vld [vmem:[%s0 + $0x1a] sm:$0x1]
  %v851 = vld [vmem:[%s0 + $0x22] sm:$0x1]
  %v852 = vld [vmem:[%s0 + $0x2a] sm:$0x1]
  %v853 = vld [vmem:[%s0 + $0x32] sm:$0x1]
  %v854 = vld [vmem:[%s0 + $0x3a] sm:$0x1]
  %v855 = vmul.f32 %v103, %v548
  %v864 = vrot.slane %v848, 7
  %v865 = vsel %vm168, %v864, %v847
  %v866 = vrot.slane %v849, 6
  %v867 = vsel %vm171, %v866, %v865
  %v868 = vrot.slane %v850, 5
  %v869 = vsel %vm174, %v868, %v867
  %v870 = vrot.slane %v851, 4
  %v871 = vsel %vm177, %v870, %v869
  %v872 = vrot.slane %v852, 3
  %v873 = vsel %vm180, %v872, %v871
  %v874 = vrot.slane %v853, 2
  %v875 = vsel %vm183, %v874, %v873
  %v876 = vrot.slane %v854, 1
  %v877 = vsel %vm186, %v876, %v875
  %v879 = vadd.f32 %v855, %v877
  %v880 = vmul.f32 %v551, %v110
  %v881 = vsub.f32 %v879, %v880
  %vm882 = vcmp.gt.f32.partialorder %v881, %v110
  %v883 = vsel %vm882, 1, 0
  %v884 = vcvt.s32.f32 %v883
  %885 = vmatprep.subr.mxu0 0.0
  %886 = vmatpush1.msra.mxu0 %v47
  %887 = vmatprep.subr.mxu0 0.0
  %888 = vmatpush1.msra.mxu0 %v48
  %889 = vmatprep.subr.mxu0 0.0
  %890 = vmatpush1.msra.mxu0 %v49
  %891 = vmatprep.subr.mxu0 0.0
  %892 = vmatpush1.msra.mxu0 %v50
  %893 = vmatprep.subr.mxu0 0.0
  %894 = vmatpush1.msra.mxu0 %v51
  %895 = vmatprep.subr.mxu0 0.0
  %896 = vmatpush1.msra.mxu0 %v52
  %897 = vmatprep.subr.mxu0 0.0
  %898 = vmatpush1.msra.mxu0 %v53
  %899 = vmatprep.subr.mxu0 0.0
  %900 = vmatpush1.msra.mxu0 %v54
  %901 = vmatprep.subr.mxu0 0.0
  %902 = vmatpush1.msra.mxu0 %v55
  %903 = vmatprep.subr.mxu0 0.0
  %904 = vmatpush1.msra.mxu0 %v56
  %905 = vmatprep.subr.mxu0 0.0
  %906 = vmatpush1.msra.mxu0 %v57
  %907 = vmatprep.subr.mxu0 0.0
  %908 = vmatpush1.msra.mxu0 %v58
  %909 = vmatprep.subr.mxu0 0.0
  %910 = vmatpush1.msra.mxu0 %v59
  %911 = vmatprep.subr.mxu0 0.0
  %912 = vmatpush1.msra.mxu0 %v60
  %913 = vmatprep.subr.mxu0 0.0
  %914 = vmatpush1.msra.mxu0 %v61
  %915 = vmatprep.subr.mxu0 0.0
  %916 = vmatpush1.msra.mxu0 %v62
  %917 = vmatprep.subr.mxu0 0.0
  %918 = vmatpush1.msra.mxu0 0.0
  %919 = vmatprep.subr.mxu0 0.0
  %920 = vmatpush1.msra.mxu0 0.0
  %921 = vmatprep.subr.mxu0 0.0
  %922 = vmatpush1.msra.mxu0 0.0
  %923 = vmatprep.subr.mxu0 0.0
  %924 = vmatpush1.msra.mxu0 0.0
  %925 = vmatprep.subr.mxu0 0.0
  %926 = vmatpush1.msra.mxu0 0.0
  %927 = vmatprep.subr.mxu0 0.0
  %928 = vmatpush1.msra.mxu0 0.0
  %929 = vmatprep.subr.mxu0 0.0
  %930 = vmatpush1.msra.mxu0 0.0
  %931 = vmatprep.subr.mxu0 0.0
  %932 = vmatpush1.msra.mxu0 0.0
  %933 = vmatprep.subr.mxu0 0.0
  %934 = vmatpush1.msra.mxu0 0.0
  %935 = vmatprep.subr.mxu0 0.0
  %936 = vmatpush1.msra.mxu0 0.0
  %937 = vmatprep.subr.mxu0 0.0
  %938 = vmatpush1.msra.mxu0 0.0
  %939 = vmatprep.subr.mxu0 0.0
  %940 = vmatpush1.msra.mxu0 0.0
  %941 = vmatprep.subr.mxu0 0.0
  %942 = vmatpush1.msra.mxu0 0.0
  %943 = vmatprep.subr.mxu0 0.0
  %944 = vmatpush1.msra.mxu0 0.0
  %945 = vmatprep.subr.mxu0 0.0
  %946 = vmatpush1.msra.mxu0 0.0
  %947 = vmatprep.subr.mxu0 0.0
  %948 = vmatpush1.msra.mxu0 0.0
  %949 = vmatprep.mubr.f32.mxu0 0.0
  %950 = vmatmul.mubr.f32.gmra.mrb[0].mxu0 %v884
  %v951 = vpop.f32.mrb[0].mxu0
  %v952 = vadd.f32 %v199, %v951
  %v953 = vpop.f32.mrb[0].mxu0
  %954 = vdwg.mxu0
  %v955 = vmul.f32 %v117, %v625
  %v956 = vadd.f32 %v955, %v952
  %v957 = vmul.f32 %v628, %v124
  %v958 = vsub.f32 %v956, %v957
  %vm959 = vcmp.gt.f32.partialorder %v958, %v124
  %v960 = vsel %vm959, 1, 0
  %v961 = vcvt.s32.f32 %v960
  %962 = vmatprep.subr.mxu0 0.0
  %963 = vmatpush1.msra.mxu0 %v64
  %964 = vmatprep.subr.mxu0 0.0
  %965 = vmatpush1.msra.mxu0 %v65
  %966 = vmatprep.subr.mxu0 0.0
  %967 = vmatpush1.msra.mxu0 %v66
  %968 = vmatprep.subr.mxu0 0.0
  %969 = vmatpush1.msra.mxu0 %v67
  %970 = vmatprep.subr.mxu0 0.0
  %971 = vmatpush1.msra.mxu0 %v68
  %972 = vmatprep.subr.mxu0 0.0
  %973 = vmatpush1.msra.mxu0 %v69
  %974 = vmatprep.subr.mxu0 0.0
  %975 = vmatpush1.msra.mxu0 %v70
  %976 = vmatprep.subr.mxu0 0.0
  %977 = vmatpush1.msra.mxu0 %v71
  %978 = vmatprep.subr.mxu0 0.0
  %979 = vmatpush1.msra.mxu0 %v72
  %980 = vmatprep.subr.mxu0 0.0
  %981 = vmatpush1.msra.mxu0 %v73
  %982 = vmatprep.subr.mxu0 0.0
  %983 = vmatpush1.msra.mxu0 %v74
  %984 = vmatprep.subr.mxu0 0.0
  %985 = vmatpush1.msra.mxu0 %v75
  %986 = vmatprep.subr.mxu0 0.0
  %987 = vmatpush1.msra.mxu0 %v76
  %988 = vmatprep.subr.mxu0 0.0
  %989 = vmatpush1.msra.mxu0 %v77
  %990 = vmatprep.subr.mxu0 0.0
  %991 = vmatpush1.msra.mxu0 %v78
  %992 = vmatprep.subr.mxu0 0.0
  %993 = vmatpush1.msra.mxu0 %v79
  %994 = vmatprep.subr.mxu0 0.0
  %995 = vmatpush1.msra.mxu0 0.0
  %996 = vmatprep.subr.mxu0 0.0
  %997 = vmatpush1.msra.mxu0 0.0
  %998 = vmatprep.subr.mxu0 0.0
  %999 = vmatpush1.msra.mxu0 0.0
  %1000 = vmatprep.subr.mxu0 0.0
  %1001 = vmatpush1.msra.mxu0 0.0
  %1002 = vmatprep.subr.mxu0 0.0
  %1003 = vmatpush1.msra.mxu0 0.0
  %1004 = vmatprep.subr.mxu0 0.0
  %1005 = vmatpush1.msra.mxu0 0.0
  %1006 = vmatprep.subr.mxu0 0.0
  %1007 = vmatpush1.msra.mxu0 0.0
  %1008 = vmatprep.subr.mxu0 0.0
  %1009 = vmatpush1.msra.mxu0 0.0
  %1010 = vmatprep.subr.mxu0 0.0
  %1011 = vmatpush1.msra.mxu0 0.0
  %1012 = vmatprep.subr.mxu0 0.0
  %1013 = vmatpush1.msra.mxu0 0.0
  %1014 = vmatprep.subr.mxu0 0.0
  %1015 = vmatpush1.msra.mxu0 0.0
  %1016 = vmatprep.subr.mxu0 0.0
  %1017 = vmatpush1.msra.mxu0 0.0
  %1018 = vmatprep.subr.mxu0 0.0
  %1019 = vmatpush1.msra.mxu0 0.0
  %1020 = vmatprep.subr.mxu0 0.0
  %1021 = vmatpush1.msra.mxu0 0.0
  %1022 = vmatprep.subr.mxu0 0.0
  %1023 = vmatpush1.msra.mxu0 0.0
  %1024 = vmatprep.subr.mxu0 0.0
  %1025 = vmatpush1.msra.mxu0 0.0
  %1026 = vmatprep.mubr.f32.mxu0 0.0
  %1027 = vmatmul.mubr.f32.gmra.mrb[0].mxu0 %v961
  %v1028 = vpop.f32.mrb[0].mxu0
  %v1029 = vadd.f32 %v285, %v1028
  %v1030 = vpop.f32.mrb[0].mxu0
  %1031 = vdwg.mxu0
  %v1032 = vmul.f32 %v131, %v702
  %v1033 = vadd.f32 %v1032, %v1029
  %v1034 = vmul.f32 %v705, %v138
  %v1035 = vsub.f32 %v1033, %v1034
  %vm1036 = vcmp.gt.f32.partialorder %v1035, %v138
  %v1037 = vsel %vm1036, 1, 0
  %v1038 = vcvt.s32.f32 %v1037
  %1039 = vmatprep.subr.mxu0 0.0
  %1040 = vmatpush1.msra.mxu0 %v81
  %1041 = vmatprep.subr.mxu0 0.0
  %1042 = vmatpush1.msra.mxu0 %v82
  %1043 = vmatprep.subr.mxu0 0.0
  %1044 = vmatpush1.msra.mxu0 %v83
  %1045 = vmatprep.subr.mxu0 0.0
  %1046 = vmatpush1.msra.mxu0 %v84
  %1047 = vmatprep.subr.mxu0 0.0
  %1048 = vmatpush1.msra.mxu0 %v85
  %1049 = vmatprep.subr.mxu0 0.0
  %1050 = vmatpush1.msra.mxu0 %v86
  %1051 = vmatprep.subr.mxu0 0.0
  %1052 = vmatpush1.msra.mxu0 %v87
  %1053 = vmatprep.subr.mxu0 0.0
  %1054 = vmatpush1.msra.mxu0 %v88
  %1055 = vmatprep.subr.mxu0 0.0
  %1056 = vmatpush1.msra.mxu0 %v89
  %1057 = vmatprep.subr.mxu0 0.0
  %1058 = vmatpush1.msra.mxu0 %v90
  %1059 = vmatprep.subr.mxu0 0.0
  %1060 = vmatpush1.msra.mxu0 %v91
  %1061 = vmatprep.subr.mxu0 0.0
  %1062 = vmatpush1.msra.mxu0 %v92
  %1063 = vmatprep.subr.mxu0 0.0
  %1064 = vmatpush1.msra.mxu0 %v93
  %1065 = vmatprep.subr.mxu0 0.0
  %1066 = vmatpush1.msra.mxu0 %v94
  %1067 = vmatprep.subr.mxu0 0.0
  %1068 = vmatpush1.msra.mxu0 %v95
  %1069 = vmatprep.subr.mxu0 0.0
  %1070 = vmatpush1.msra.mxu0 %v96
  %1071 = vmatprep.subr.mxu0 0.0
  %1072 = vmatpush1.msra.mxu0 0.0
  %1073 = vmatprep.subr.mxu0 0.0
  %1074 = vmatpush1.msra.mxu0 0.0
  %1075 = vmatprep.subr.mxu0 0.0
  %1076 = vmatpush1.msra.mxu0 0.0
  %1077 = vmatprep.subr.mxu0 0.0
  %1078 = vmatpush1.msra.mxu0 0.0
  %1079 = vmatprep.subr.mxu0 0.0
  %1080 = vmatpush1.msra.mxu0 0.0
  %1081 = vmatprep.subr.mxu0 0.0
  %1082 = vmatpush1.msra.mxu0 0.0
  %1083 = vmatprep.subr.mxu0 0.0
  %1084 = vmatpush1.msra.mxu0 0.0
  %1085 = vmatprep.subr.mxu0 0.0
  %1086 = vmatpush1.msra.mxu0 0.0
  %1087 = vmatprep.subr.mxu0 0.0
  %1088 = vmatpush1.msra.mxu0 0.0
  %1089 = vmatprep.subr.mxu0 0.0
  %1090 = vmatpush1.msra.mxu0 0.0
  %1091 = vmatprep.subr.mxu0 0.0
  %1092 = vmatpush1.msra.mxu0 0.0
  %1093 = vmatprep.subr.mxu0 0.0
  %1094 = vmatpush1.msra.mxu0 0.0
  %1095 = vmatprep.subr.mxu0 0.0
  %1096 = vmatpush1.msra.mxu0 0.0
  %1097 = vmatprep.subr.mxu0 0.0
  %1098 = vmatpush1.msra.mxu0 0.0
  %1099 = vmatprep.subr.mxu0 0.0
  %1100 = vmatpush1.msra.mxu0 0.0
  %1101 = vmatprep.subr.mxu0 0.0
  %1102 = vmatpush1.msra.mxu0 0.0
  %1103 = vmatprep.mubr.f32.mxu0 0.0
  %1104 = vmatmul.mubr.f32.gmra.mrb[0].mxu0 %v1038
  %v1105 = vpop.f32.mrb[0].mxu0
  %v1106 = vadd.f32 %v371, %v1105
  %v1107 = vpop.f32.mrb[0].mxu0
  %1108 = vdwg.mxu0
  %v1109 = vmul.f32 %v145, %v777
  %v1110 = vadd.f32 %v1109, %v1106
  %vm1111 = vcmp.gt.f32.partialorder %v1110, 1.0
  %v1112 = vsel %vm1111, 1, 0
  %v1113 = vcvt.s32.f32 %v1112
  %v1115 = vcombine.high %v1113, %v1113
  %v1117 = vunpack.c.l.s4 1966171168
  %v1118 = vunpack.c.0.s8 %v1117
  %v1119 = vlaneseq
  %v1120 = vshrl.u32 %v1119, 7
  %v1121 = vsub.s32 %v1118, %v1120
  %v1122 = vrot.slane %v1113, %v1121
  %v1124 = vunpack.c.l.s4 1966171168
  %v1125 = vunpack.c.0.s8 %v1124
  %v1126 = vlaneseq
  %v1127 = vshrl.u32 %v1126, 7
  %v1128 = vsub.s32 %v1125, %v1127
  %v1129 = vrot.slane %v1115, %v1128
  %v1130 = vcombine.high %v1122, %v1122
  %v1131 = vcombine.high %v1129, %v1129
  %v1133 = vunpack.c.l.s4 1966171168
  %v1134 = vunpack.c.0.s8 %v1133
  %v1135 = vlaneseq
  %v1136 = vshrl.u32 %v1135, 7
  %v1137 = vsub.s32 %v1134, %v1136
  %v1138 = vrot.slane %v1122, %v1137
  %v1140 = vunpack.c.l.s4 1966171168
  %v1141 = vunpack.c.0.s8 %v1140
  %v1142 = vlaneseq
  %v1143 = vshrl.u32 %v1142, 7
  %v1144 = vsub.s32 %v1141, %v1143
  %v1145 = vrot.slane %v1129, %v1144
  %v1147 = vunpack.c.l.s4 1966171168
  %v1148 = vunpack.c.0.s8 %v1147
  %v1149 = vlaneseq
  %v1150 = vshrl.u32 %v1149, 7
  %v1151 = vsub.s32 %v1148, %v1150
  %v1152 = vrot.slane %v1130, %v1151
  %v1154 = vunpack.c.l.s4 1966171168
  %v1155 = vunpack.c.0.s8 %v1154
  %v1156 = vlaneseq
  %v1157 = vshrl.u32 %v1156, 7
  %v1158 = vsub.s32 %v1155, %v1157
  %v1159 = vrot.slane %v1131, %v1158
  %v1160 = vcombine.high %v1138, %v1138
  %v1161 = vcombine.high %v1145, %v1145
  %v1162 = vcombine.high %v1152, %v1152
  %v1163 = vcombine.high %v1159, %v1159
  %1172 = vst [vmem:[%s14 + $0x2] sm:$0x1] %v1138
  %1173 = vst [vmem:[%s14 + $0xa] sm:$0x1] %v1152
  %1174 = vst [vmem:[%s14 + $0x12] sm:$0x1] %v1160
  %1175 = vst [vmem:[%s14 + $0x1a] sm:$0x1] %v1162
  %1176 = vst [vmem:[%s14 + $0x22] sm:$0x1] %v1145
  %1177 = vst [vmem:[%s14 + $0x2a] sm:$0x1] %v1159
  %1178 = vst [vmem:[%s14 + $0x32] sm:$0x1] %v1161
  %1179 = vst [vmem:[%s14 + $0x3a] sm:$0x1] %v1163
  %v1180 = vld [vmem:[%s0 + $0x3] sm:$0x1]
  %v1181 = vld [vmem:[%s0 + $0xb] sm:$0x1]
  %v1182 = vld [vmem:[%s0 + $0x13] sm:$0x1]
  %v1183 = vld [vmem:[%s0 + $0x1b] sm:$0x1]
  %v1184 = vld [vmem:[%s0 + $0x23] sm:$0x1]
  %v1185 = vld [vmem:[%s0 + $0x2b] sm:$0x1]
  %v1186 = vld [vmem:[%s0 + $0x33] sm:$0x1]
  %v1187 = vld [vmem:[%s0 + $0x3b] sm:$0x1]
  %v1188 = vmul.f32 %v103, %v881
  %v1197 = vrot.slane %v1181, 7
  %v1198 = vsel %vm168, %v1197, %v1180
  %v1199 = vrot.slane %v1182, 6
  %v1200 = vsel %vm171, %v1199, %v1198
  %v1201 = vrot.slane %v1183, 5
  %v1202 = vsel %vm174, %v1201, %v1200
  %v1203 = vrot.slane %v1184, 4
  %v1204 = vsel %vm177, %v1203, %v1202
  %v1205 = vrot.slane %v1185, 3
  %v1206 = vsel %vm180, %v1205, %v1204
  %v1207 = vrot.slane %v1186, 2
  %v1208 = vsel %vm183, %v1207, %v1206
  %v1209 = vrot.slane %v1187, 1
  %v1210 = vsel %vm186, %v1209, %v1208
  %v1212 = vadd.f32 %v1188, %v1210
  %v1213 = vmul.f32 %v884, %v110
  %v1214 = vsub.f32 %v1212, %v1213
  %vm1215 = vcmp.gt.f32.partialorder %v1214, %v110
  %v1216 = vsel %vm1215, 1, 0
  %v1217 = vcvt.s32.f32 %v1216
  %1218 = vmatprep.subr.mxu0 0.0
  %1219 = vmatpush1.msra.mxu0 %v47
  %1220 = vmatprep.subr.mxu0 0.0
  %1221 = vmatpush1.msra.mxu0 %v48
  %1222 = vmatprep.subr.mxu0 0.0
  %1223 = vmatpush1.msra.mxu0 %v49
  %1224 = vmatprep.subr.mxu0 0.0
  %1225 = vmatpush1.msra.mxu0 %v50
  %1226 = vmatprep.subr.mxu0 0.0
  %1227 = vmatpush1.msra.mxu0 %v51
  %1228 = vmatprep.subr.mxu0 0.0
  %1229 = vmatpush1.msra.mxu0 %v52
  %1230 = vmatprep.subr.mxu0 0.0
  %1231 = vmatpush1.msra.mxu0 %v53
  %1232 = vmatprep.subr.mxu0 0.0
  %1233 = vmatpush1.msra.mxu0 %v54
  %1234 = vmatprep.subr.mxu0 0.0
  %1235 = vmatpush1.msra.mxu0 %v55
  %1236 = vmatprep.subr.mxu0 0.0
  %1237 = vmatpush1.msra.mxu0 %v56
  %1238 = vmatprep.subr.mxu0 0.0
  %1239 = vmatpush1.msra.mxu0 %v57
  %1240 = vmatprep.subr.mxu0 0.0
  %1241 = vmatpush1.msra.mxu0 %v58
  %1242 = vmatprep.subr.mxu0 0.0
  %1243 = vmatpush1.msra.mxu0 %v59
  %1244 = vmatprep.subr.mxu0 0.0
  %1245 = vmatpush1.msra.mxu0 %v60
  %1246 = vmatprep.subr.mxu0 0.0
  %1247 = vmatpush1.msra.mxu0 %v61
  %1248 = vmatprep.subr.mxu0 0.0
  %1249 = vmatpush1.msra.mxu0 %v62
  %1250 = vmatprep.subr.mxu0 0.0
  %1251 = vmatpush1.msra.mxu0 0.0
  %1252 = vmatprep.subr.mxu0 0.0
  %1253 = vmatpush1.msra.mxu0 0.0
  %1254 = vmatprep.subr.mxu0 0.0
  %1255 = vmatpush1.msra.mxu0 0.0
  %1256 = vmatprep.subr.mxu0 0.0
  %1257 = vmatpush1.msra.mxu0 0.0
  %1258 = vmatprep.subr.mxu0 0.0
  %1259 = vmatpush1.msra.mxu0 0.0
  %1260 = vmatprep.subr.mxu0 0.0
  %1261 = vmatpush1.msra.mxu0 0.0
  %1262 = vmatprep.subr.mxu0 0.0
  %1263 = vmatpush1.msra.mxu0 0.0
  %1264 = vmatprep.subr.mxu0 0.0
  %1265 = vmatpush1.msra.mxu0 0.0
  %1266 = vmatprep.subr.mxu0 0.0
  %1267 = vmatpush1.msra.mxu0 0.0
  %1268 = vmatprep.subr.mxu0 0.0
  %1269 = vmatpush1.msra.mxu0 0.0
  %1270 = vmatprep.subr.mxu0 0.0
  %1271 = vmatpush1.msra.mxu0 0.0
  %1272 = vmatprep.subr.mxu0 0.0
  %1273 = vmatpush1.msra.mxu0 0.0
  %1274 = vmatprep.subr.mxu0 0.0
  %1275 = vmatpush1.msra.mxu0 0.0
  %1276 = vmatprep.subr.mxu0 0.0
  %1277 = vmatpush1.msra.mxu0 0.0
  %1278 = vmatprep.subr.mxu0 0.0
  %1279 = vmatpush1.msra.mxu0 0.0
  %1280 = vmatprep.subr.mxu0 0.0
  %1281 = vmatpush1.msra.mxu0 0.0
  %1282 = vmatprep.mubr.f32.mxu0 0.0
  %1283 = vmatmul.mubr.f32.gmra.mrb[0].mxu0 %v1217
  %v1284 = vpop.f32.mrb[0].mxu0
  %v1285 = vadd.f32 %v199, %v1284
  %v1286 = vpop.f32.mrb[0].mxu0
  %1287 = vdwg.mxu0
  %v1288 = vmul.f32 %v117, %v958
  %v1289 = vadd.f32 %v1288, %v1285
  %v1290 = vmul.f32 %v961, %v124
  %v1291 = vsub.f32 %v1289, %v1290
  %vm1292 = vcmp.gt.f32.partialorder %v1291, %v124
  %v1293 = vsel %vm1292, 1, 0
  %v1294 = vcvt.s32.f32 %v1293
  %1295 = vmatprep.subr.mxu0 0.0
  %1296 = vmatpush1.msra.mxu0 %v64
  %1297 = vmatprep.subr.mxu0 0.0
  %1298 = vmatpush1.msra.mxu0 %v65
  %1299 = vmatprep.subr.mxu0 0.0
  %1300 = vmatpush1.msra.mxu0 %v66
  %1301 = vmatprep.subr.mxu0 0.0
  %1302 = vmatpush1.msra.mxu0 %v67
  %1303 = vmatprep.subr.mxu0 0.0
  %1304 = vmatpush1.msra.mxu0 %v68
  %1305 = vmatprep.subr.mxu0 0.0
  %1306 = vmatpush1.msra.mxu0 %v69
  %1307 = vmatprep.subr.mxu0 0.0
  %1308 = vmatpush1.msra.mxu0 %v70
  %1309 = vmatprep.subr.mxu0 0.0
  %1310 = vmatpush1.msra.mxu0 %v71
  %1311 = vmatprep.subr.mxu0 0.0
  %1312 = vmatpush1.msra.mxu0 %v72
  %1313 = vmatprep.subr.mxu0 0.0
  %1314 = vmatpush1.msra.mxu0 %v73
  %1315 = vmatprep.subr.mxu0 0.0
  %1316 = vmatpush1.msra.mxu0 %v74
  %1317 = vmatprep.subr.mxu0 0.0
  %1318 = vmatpush1.msra.mxu0 %v75
  %1319 = vmatprep.subr.mxu0 0.0
  %1320 = vmatpush1.msra.mxu0 %v76
  %1321 = vmatprep.subr.mxu0 0.0
  %1322 = vmatpush1.msra.mxu0 %v77
  %1323 = vmatprep.subr.mxu0 0.0
  %1324 = vmatpush1.msra.mxu0 %v78
  %1325 = vmatprep.subr.mxu0 0.0
  %1326 = vmatpush1.msra.mxu0 %v79
  %1327 = vmatprep.subr.mxu0 0.0
  %1328 = vmatpush1.msra.mxu0 0.0
  %1329 = vmatprep.subr.mxu0 0.0
  %1330 = vmatpush1.msra.mxu0 0.0
  %1331 = vmatprep.subr.mxu0 0.0
  %1332 = vmatpush1.msra.mxu0 0.0
  %1333 = vmatprep.subr.mxu0 0.0
  %1334 = vmatpush1.msra.mxu0 0.0
  %1335 = vmatprep.subr.mxu0 0.0
  %1336 = vmatpush1.msra.mxu0 0.0
  %1337 = vmatprep.subr.mxu0 0.0
  %1338 = vmatpush1.msra.mxu0 0.0
  %1339 = vmatprep.subr.mxu0 0.0
  %1340 = vmatpush1.msra.mxu0 0.0
  %1341 = vmatprep.subr.mxu0 0.0
  %1342 = vmatpush1.msra.mxu0 0.0
  %1343 = vmatprep.subr.mxu0 0.0
  %1344 = vmatpush1.msra.mxu0 0.0
  %1345 = vmatprep.subr.mxu0 0.0
  %1346 = vmatpush1.msra.mxu0 0.0
  %1347 = vmatprep.subr.mxu0 0.0
  %1348 = vmatpush1.msra.mxu0 0.0
  %1349 = vmatprep.subr.mxu0 0.0
  %1350 = vmatpush1.msra.mxu0 0.0
  %1351 = vmatprep.subr.mxu0 0.0
  %1352 = vmatpush1.msra.mxu0 0.0
  %1353 = vmatprep.subr.mxu0 0.0
  %1354 = vmatpush1.msra.mxu0 0.0
  %1355 = vmatprep.subr.mxu0 0.0
  %1356 = vmatpush1.msra.mxu0 0.0
  %1357 = vmatprep.subr.mxu0 0.0
  %1358 = vmatpush1.msra.mxu0 0.0
  %1359 = vmatprep.mubr.f32.mxu0 0.0
  %1360 = vmatmul.mubr.f32.gmra.mrb[0].mxu0 %v1294
  %v1361 = vpop.f32.mrb[0].mxu0
  %v1362 = vadd.f32 %v285, %v1361
  %v1363 = vpop.f32.mrb[0].mxu0
  %1364 = vdwg.mxu0
  %v1365 = vmul.f32 %v131, %v1035
  %v1366 = vadd.f32 %v1365, %v1362
  %v1367 = vmul.f32 %v1038, %v138
  %v1368 = vsub.f32 %v1366, %v1367
  %vm1369 = vcmp.gt.f32.partialorder %v1368, %v138
  %v1370 = vsel %vm1369, 1, 0
  %v1371 = vcvt.s32.f32 %v1370
  %1372 = vmatprep.subr.mxu0 0.0
  %1373 = vmatpush1.msra.mxu0 %v81
  %1374 = vmatprep.subr.mxu0 0.0
  %1375 = vmatpush1.msra.mxu0 %v82
  %1376 = vmatprep.subr.mxu0 0.0
  %1377 = vmatpush1.msra.mxu0 %v83
  %1378 = vmatprep.subr.mxu0 0.0
  %1379 = vmatpush1.msra.mxu0 %v84
  %1380 = vmatprep.subr.mxu0 0.0
  %1381 = vmatpush1.msra.mxu0 %v85
  %1382 = vmatprep.subr.mxu0 0.0
  %1383 = vmatpush1.msra.mxu0 %v86
  %1384 = vmatprep.subr.mxu0 0.0
  %1385 = vmatpush1.msra.mxu0 %v87
  %1386 = vmatprep.subr.mxu0 0.0
  %1387 = vmatpush1.msra.mxu0 %v88
  %1388 = vmatprep.subr.mxu0 0.0
  %1389 = vmatpush1.msra.mxu0 %v89
  %1390 = vmatprep.subr.mxu0 0.0
  %1391 = vmatpush1.msra.mxu0 %v90
  %1392 = vmatprep.subr.mxu0 0.0
  %1393 = vmatpush1.msra.mxu0 %v91
  %1394 = vmatprep.subr.mxu0 0.0
  %1395 = vmatpush1.msra.mxu0 %v92
  %1396 = vmatprep.subr.mxu0 0.0
  %1397 = vmatpush1.msra.mxu0 %v93
  %1398 = vmatprep.subr.mxu0 0.0
  %1399 = vmatpush1.msra.mxu0 %v94
  %1400 = vmatprep.subr.mxu0 0.0
  %1401 = vmatpush1.msra.mxu0 %v95
  %1402 = vmatprep.subr.mxu0 0.0
  %1403 = vmatpush1.msra.mxu0 %v96
  %1404 = vmatprep.subr.mxu0 0.0
  %1405 = vmatpush1.msra.mxu0 0.0
  %1406 = vmatprep.subr.mxu0 0.0
  %1407 = vmatpush1.msra.mxu0 0.0
  %1408 = vmatprep.subr.mxu0 0.0
  %1409 = vmatpush1.msra.mxu0 0.0
  %1410 = vmatprep.subr.mxu0 0.0
  %1411 = vmatpush1.msra.mxu0 0.0
  %1412 = vmatprep.subr.mxu0 0.0
  %1413 = vmatpush1.msra.mxu0 0.0
  %1414 = vmatprep.subr.mxu0 0.0
  %1415 = vmatpush1.msra.mxu0 0.0
  %1416 = vmatprep.subr.mxu0 0.0
  %1417 = vmatpush1.msra.mxu0 0.0
  %1418 = vmatprep.subr.mxu0 0.0
  %1419 = vmatpush1.msra.mxu0 0.0
  %1420 = vmatprep.subr.mxu0 0.0
  %1421 = vmatpush1.msra.mxu0 0.0
  %1422 = vmatprep.subr.mxu0 0.0
  %1423 = vmatpush1.msra.mxu0 0.0
  %1424 = vmatprep.subr.mxu0 0.0
  %1425 = vmatpush1.msra.mxu0 0.0
  %1426 = vmatprep.subr.mxu0 0.0
  %1427 = vmatpush1.msra.mxu0 0.0
  %1428 = vmatprep.subr.mxu0 0.0
  %1429 = vmatpush1.msra.mxu0 0.0
  %1430 = vmatprep.subr.mxu0 0.0
  %1431 = vmatpush1.msra.mxu0 0.0
  %1432 = vmatprep.subr.mxu0 0.0
  %1433 = vmatpush1.msra.mxu0 0.0
  %1434 = vmatprep.subr.mxu0 0.0
  %1435 = vmatpush1.msra.mxu0 0.0
  %1436 = vmatprep.mubr.f32.mxu0 0.0
  %1437 = vmatmul.mubr.f32.gmra.mrb[0].mxu0 %v1371
  %v1438 = vpop.f32.mrb[0].mxu0
  %v1439 = vadd.f32 %v371, %v1438
  %v1440 = vpop.f32.mrb[0].mxu0
  %1441 = vdwg.mxu0
  %v1442 = vmul.f32 %v145, %v1110
  %v1443 = vadd.f32 %v1442, %v1439
  %vm1444 = vcmp.gt.f32.partialorder %v1443, 1.0
  %v1445 = vsel %vm1444, 1, 0
  %v1446 = vcvt.s32.f32 %v1445
  %v1448 = vcombine.high %v1446, %v1446
  %v1450 = vunpack.c.l.s4 1966171168
  %v1451 = vunpack.c.0.s8 %v1450
  %v1452 = vlaneseq
  %v1453 = vshrl.u32 %v1452, 7
  %v1454 = vsub.s32 %v1451, %v1453
  %v1455 = vrot.slane %v1446, %v1454
  %v1457 = vunpack.c.l.s4 1966171168
  %v1458 = vunpack.c.0.s8 %v1457
  %v1459 = vlaneseq
  %v1460 = vshrl.u32 %v1459, 7
  %v1461 = vsub.s32 %v1458, %v1460
  %v1462 = vrot.slane %v1448, %v1461
  %v1463 = vcombine.high %v1455, %v1455
  %v1464 = vcombine.high %v1462, %v1462
  %v1466 = vunpack.c.l.s4 1966171168
  %v1467 = vunpack.c.0.s8 %v1466
  %v1468 = vlaneseq
  %v1469 = vshrl.u32 %v1468, 7
  %v1470 = vsub.s32 %v1467, %v1469
  %v1471 = vrot.slane %v1455, %v1470
  %v1473 = vunpack.c.l.s4 1966171168
  %v1474 = vunpack.c.0.s8 %v1473
  %v1475 = vlaneseq
  %v1476 = vshrl.u32 %v1475, 7
  %v1477 = vsub.s32 %v1474, %v1476
  %v1478 = vrot.slane %v1462, %v1477
  %v1480 = vunpack.c.l.s4 1966171168
  %v1481 = vunpack.c.0.s8 %v1480
  %v1482 = vlaneseq
  %v1483 = vshrl.u32 %v1482, 7
  %v1484 = vsub.s32 %v1481, %v1483
  %v1485 = vrot.slane %v1463, %v1484
  %v1487 = vunpack.c.l.s4 1966171168
  %v1488 = vunpack.c.0.s8 %v1487
  %v1489 = vlaneseq
  %v1490 = vshrl.u32 %v1489, 7
  %v1491 = vsub.s32 %v1488, %v1490
  %v1492 = vrot.slane %v1464, %v1491
  %v1493 = vcombine.high %v1471, %v1471
  %v1494 = vcombine.high %v1478, %v1478
  %v1495 = vcombine.high %v1485, %v1485
  %v1496 = vcombine.high %v1492, %v1492
  %1505 = vst [vmem:[%s14 + $0x3] sm:$0x1] %v1471
  %1506 = vst [vmem:[%s14 + $0xb] sm:$0x1] %v1485
  %1507 = vst [vmem:[%s14 + $0x13] sm:$0x1] %v1493
  %1508 = vst [vmem:[%s14 + $0x1b] sm:$0x1] %v1495
  %1509 = vst [vmem:[%s14 + $0x23] sm:$0x1] %v1478
  %1510 = vst [vmem:[%s14 + $0x2b] sm:$0x1] %v1492
  %1511 = vst [vmem:[%s14 + $0x33] sm:$0x1] %v1494
  %1512 = vst [vmem:[%s14 + $0x3b] sm:$0x1] %v1496
  %v1513 = vld [vmem:[%s0 + $0x4] sm:$0x1]
  %v1514 = vld [vmem:[%s0 + $0xc] sm:$0x1]
  %v1515 = vld [vmem:[%s0 + $0x14] sm:$0x1]
  %v1516 = vld [vmem:[%s0 + $0x1c] sm:$0x1]
  %v1517 = vld [vmem:[%s0 + $0x24] sm:$0x1]
  %v1518 = vld [vmem:[%s0 + $0x2c] sm:$0x1]
  %v1519 = vld [vmem:[%s0 + $0x34] sm:$0x1]
  %v1520 = vld [vmem:[%s0 + $0x3c] sm:$0x1]
  %v1521 = vmul.f32 %v103, %v1214
  %v1530 = vrot.slane %v1514, 7
  %v1531 = vsel %vm168, %v1530, %v1513
  %v1532 = vrot.slane %v1515, 6
  %v1533 = vsel %vm171, %v1532, %v1531
  %v1534 = vrot.slane %v1516, 5
  %v1535 = vsel %vm174, %v1534, %v1533
  %v1536 = vrot.slane %v1517, 4
  %v1537 = vsel %vm177, %v1536, %v1535
  %v1538 = vrot.slane %v1518, 3
  %v1539 = vsel %vm180, %v1538, %v1537
  %v1540 = vrot.slane %v1519, 2
  %v1541 = vsel %vm183, %v1540, %v1539
  %v1542 = vrot.slane %v1520, 1
  %v1543 = vsel %vm186, %v1542, %v1541
  %v1545 = vadd.f32 %v1521, %v1543
  %v1546 = vmul.f32 %v1217, %v110
  %v1547 = vsub.f32 %v1545, %v1546
  %vm1548 = vcmp.gt.f32.partialorder %v1547, %v110
  %v1549 = vsel %vm1548, 1, 0
  %v1550 = vcvt.s32.f32 %v1549
  %1551 = vmatprep.subr.mxu0 0.0
  %1552 = vmatpush1.msra.mxu0 %v47
  %1553 = vmatprep.subr.mxu0 0.0
  %1554 = vmatpush1.msra.mxu0 %v48
  %1555 = vmatprep.subr.mxu0 0.0
  %1556 = vmatpush1.msra.mxu0 %v49
  %1557 = vmatprep.subr.mxu0 0.0
  %1558 = vmatpush1.msra.mxu0 %v50
  %1559 = vmatprep.subr.mxu0 0.0
  %1560 = vmatpush1.msra.mxu0 %v51
  %1561 = vmatprep.subr.mxu0 0.0
  %1562 = vmatpush1.msra.mxu0 %v52
  %1563 = vmatprep.subr.mxu0 0.0
  %1564 = vmatpush1.msra.mxu0 %v53
  %1565 = vmatprep.subr.mxu0 0.0
  %1566 = vmatpush1.msra.mxu0 %v54
  %1567 = vmatprep.subr.mxu0 0.0
  %1568 = vmatpush1.msra.mxu0 %v55
  %1569 = vmatprep.subr.mxu0 0.0
  %1570 = vmatpush1.msra.mxu0 %v56
  %1571 = vmatprep.subr.mxu0 0.0
  %1572 = vmatpush1.msra.mxu0 %v57
  %1573 = vmatprep.subr.mxu0 0.0
  %1574 = vmatpush1.msra.mxu0 %v58
  %1575 = vmatprep.subr.mxu0 0.0
  %1576 = vmatpush1.msra.mxu0 %v59
  %1577 = vmatprep.subr.mxu0 0.0
  %1578 = vmatpush1.msra.mxu0 %v60
  %1579 = vmatprep.subr.mxu0 0.0
  %1580 = vmatpush1.msra.mxu0 %v61
  %1581 = vmatprep.subr.mxu0 0.0
  %1582 = vmatpush1.msra.mxu0 %v62
  %1583 = vmatprep.subr.mxu0 0.0
  %1584 = vmatpush1.msra.mxu0 0.0
  %1585 = vmatprep.subr.mxu0 0.0
  %1586 = vmatpush1.msra.mxu0 0.0
  %1587 = vmatprep.subr.mxu0 0.0
  %1588 = vmatpush1.msra.mxu0 0.0
  %1589 = vmatprep.subr.mxu0 0.0
  %1590 = vmatpush1.msra.mxu0 0.0
  %1591 = vmatprep.subr.mxu0 0.0
  %1592 = vmatpush1.msra.mxu0 0.0
  %1593 = vmatprep.subr.mxu0 0.0
  %1594 = vmatpush1.msra.mxu0 0.0
  %1595 = vmatprep.subr.mxu0 0.0
  %1596 = vmatpush1.msra.mxu0 0.0
  %1597 = vmatprep.subr.mxu0 0.0
  %1598 = vmatpush1.msra.mxu0 0.0
  %1599 = vmatprep.subr.mxu0 0.0
  %1600 = vmatpush1.msra.mxu0 0.0
  %1601 = vmatprep.subr.mxu0 0.0
  %1602 = vmatpush1.msra.mxu0 0.0
  %1603 = vmatprep.subr.mxu0 0.0
  %1604 = vmatpush1.msra.mxu0 0.0
  %1605 = vmatprep.subr.mxu0 0.0
  %1606 = vmatpush1.msra.mxu0 0.0
  %1607 = vmatprep.subr.mxu0 0.0
  %1608 = vmatpush1.msra.mxu0 0.0
  %1609 = vmatprep.subr.mxu0 0.0
  %1610 = vmatpush1.msra.mxu0 0.0
  %1611 = vmatprep.subr.mxu0 0.0
  %1612 = vmatpush1.msra.mxu0 0.0
  %1613 = vmatprep.subr.mxu0 0.0
  %1614 = vmatpush1.msra.mxu0 0.0
  %1615 = vmatprep.mubr.f32.mxu0 0.0
  %1616 = vmatmul.mubr.f32.gmra.mrb[0].mxu0 %v1550
  %v1617 = vpop.f32.mrb[0].mxu0
  %v1618 = vadd.f32 %v199, %v1617
  %v1619 = vpop.f32.mrb[0].mxu0
  %1620 = vdwg.mxu0
  %v1621 = vmul.f32 %v117, %v1291
  %v1622 = vadd.f32 %v1621, %v1618
  %v1623 = vmul.f32 %v1294, %v124
  %v1624 = vsub.f32 %v1622, %v1623
  %vm1625 = vcmp.gt.f32.partialorder %v1624, %v124
  %v1626 = vsel %vm1625, 1, 0
  %v1627 = vcvt.s32.f32 %v1626
  %1628 = vmatprep.subr.mxu0 0.0
  %1629 = vmatpush1.msra.mxu0 %v64
  %1630 = vmatprep.subr.mxu0 0.0
  %1631 = vmatpush1.msra.mxu0 %v65
  %1632 = vmatprep.subr.mxu0 0.0
  %1633 = vmatpush1.msra.mxu0 %v66
  %1634 = vmatprep.subr.mxu0 0.0
  %1635 = vmatpush1.msra.mxu0 %v67
  %1636 = vmatprep.subr.mxu0 0.0
  %1637 = vmatpush1.msra.mxu0 %v68
  %1638 = vmatprep.subr.mxu0 0.0
  %1639 = vmatpush1.msra.mxu0 %v69
  %1640 = vmatprep.subr.mxu0 0.0
  %1641 = vmatpush1.msra.mxu0 %v70
  %1642 = vmatprep.subr.mxu0 0.0
  %1643 = vmatpush1.msra.mxu0 %v71
  %1644 = vmatprep.subr.mxu0 0.0
  %1645 = vmatpush1.msra.mxu0 %v72
  %1646 = vmatprep.subr.mxu0 0.0
  %1647 = vmatpush1.msra.mxu0 %v73
  %1648 = vmatprep.subr.mxu0 0.0
  %1649 = vmatpush1.msra.mxu0 %v74
  %1650 = vmatprep.subr.mxu0 0.0
  %1651 = vmatpush1.msra.mxu0 %v75
  %1652 = vmatprep.subr.mxu0 0.0
  %1653 = vmatpush1.msra.mxu0 %v76
  %1654 = vmatprep.subr.mxu0 0.0
  %1655 = vmatpush1.msra.mxu0 %v77
  %1656 = vmatprep.subr.mxu0 0.0
  %1657 = vmatpush1.msra.mxu0 %v78
  %1658 = vmatprep.subr.mxu0 0.0
  %1659 = vmatpush1.msra.mxu0 %v79
  %1660 = vmatprep.subr.mxu0 0.0
  %1661 = vmatpush1.msra.mxu0 0.0
  %1662 = vmatprep.subr.mxu0 0.0
  %1663 = vmatpush1.msra.mxu0 0.0
  %1664 = vmatprep.subr.mxu0 0.0
  %1665 = vmatpush1.msra.mxu0 0.0
  %1666 = vmatprep.subr.mxu0 0.0
  %1667 = vmatpush1.msra.mxu0 0.0
  %1668 = vmatprep.subr.mxu0 0.0
  %1669 = vmatpush1.msra.mxu0 0.0
  %1670 = vmatprep.subr.mxu0 0.0
  %1671 = vmatpush1.msra.mxu0 0.0
  %1672 = vmatprep.subr.mxu0 0.0
  %1673 = vmatpush1.msra.mxu0 0.0
  %1674 = vmatprep.subr.mxu0 0.0
  %1675 = vmatpush1.msra.mxu0 0.0
  %1676 = vmatprep.subr.mxu0 0.0
  %1677 = vmatpush1.msra.mxu0 0.0
  %1678 = vmatprep.subr.mxu0 0.0
  %1679 = vmatpush1.msra.mxu0 0.0
  %1680 = vmatprep.subr.mxu0 0.0
  %1681 = vmatpush1.msra.mxu0 0.0
  %1682 = vmatprep.subr.mxu0 0.0
  %1683 = vmatpush1.msra.mxu0 0.0
  %1684 = vmatprep.subr.mxu0 0.0
  %1685 = vmatpush1.msra.mxu0 0.0
  %1686 = vmatprep.subr.mxu0 0.0
  %1687 = vmatpush1.msra.mxu0 0.0
  %1688 = vmatprep.subr.mxu0 0.0
  %1689 = vmatpush1.msra.mxu0 0.0
  %1690 = vmatprep.subr.mxu0 0.0
  %1691 = vmatpush1.msra.mxu0 0.0
  %1692 = vmatprep.mubr.f32.mxu0 0.0
  %1693 = vmatmul.mubr.f32.gmra.mrb[0].mxu0 %v1627
  %v1694 = vpop.f32.mrb[0].mxu0
  %v1695 = vadd.f32 %v285, %v1694
  %v1696 = vpop.f32.mrb[0].mxu0
  %1697 = vdwg.mxu0
  %v1698 = vmul.f32 %v131, %v1368
  %v1699 = vadd.f32 %v1698, %v1695
  %v1700 = vmul.f32 %v1371, %v138
  %v1701 = vsub.f32 %v1699, %v1700
  %vm1702 = vcmp.gt.f32.partialorder %v1701, %v138
  %v1703 = vsel %vm1702, 1, 0
  %v1704 = vcvt.s32.f32 %v1703
  %1705 = vmatprep.subr.mxu0 0.0
  %1706 = vmatpush1.msra.mxu0 %v81
  %1707 = vmatprep.subr.mxu0 0.0
  %1708 = vmatpush1.msra.mxu0 %v82
  %1709 = vmatprep.subr.mxu0 0.0
  %1710 = vmatpush1.msra.mxu0 %v83
  %1711 = vmatprep.subr.mxu0 0.0
  %1712 = vmatpush1.msra.mxu0 %v84
  %1713 = vmatprep.subr.mxu0 0.0
  %1714 = vmatpush1.msra.mxu0 %v85
  %1715 = vmatprep.subr.mxu0 0.0
  %1716 = vmatpush1.msra.mxu0 %v86
  %1717 = vmatprep.subr.mxu0 0.0
  %1718 = vmatpush1.msra.mxu0 %v87
  %1719 = vmatprep.subr.mxu0 0.0
  %1720 = vmatpush1.msra.mxu0 %v88
  %1721 = vmatprep.subr.mxu0 0.0
  %1722 = vmatpush1.msra.mxu0 %v89
  %1723 = vmatprep.subr.mxu0 0.0
  %1724 = vmatpush1.msra.mxu0 %v90
  %1725 = vmatprep.subr.mxu0 0.0
  %1726 = vmatpush1.msra.mxu0 %v91
  %1727 = vmatprep.subr.mxu0 0.0
  %1728 = vmatpush1.msra.mxu0 %v92
  %1729 = vmatprep.subr.mxu0 0.0
  %1730 = vmatpush1.msra.mxu0 %v93
  %1731 = vmatprep.subr.mxu0 0.0
  %1732 = vmatpush1.msra.mxu0 %v94
  %1733 = vmatprep.subr.mxu0 0.0
  %1734 = vmatpush1.msra.mxu0 %v95
  %1735 = vmatprep.subr.mxu0 0.0
  %1736 = vmatpush1.msra.mxu0 %v96
  %1737 = vmatprep.subr.mxu0 0.0
  %1738 = vmatpush1.msra.mxu0 0.0
  %1739 = vmatprep.subr.mxu0 0.0
  %1740 = vmatpush1.msra.mxu0 0.0
  %1741 = vmatprep.subr.mxu0 0.0
  %1742 = vmatpush1.msra.mxu0 0.0
  %1743 = vmatprep.subr.mxu0 0.0
  %1744 = vmatpush1.msra.mxu0 0.0
  %1745 = vmatprep.subr.mxu0 0.0
  %1746 = vmatpush1.msra.mxu0 0.0
  %1747 = vmatprep.subr.mxu0 0.0
  %1748 = vmatpush1.msra.mxu0 0.0
  %1749 = vmatprep.subr.mxu0 0.0
  %1750 = vmatpush1.msra.mxu0 0.0
  %1751 = vmatprep.subr.mxu0 0.0
  %1752 = vmatpush1.msra.mxu0 0.0
  %1753 = vmatprep.subr.mxu0 0.0
  %1754 = vmatpush1.msra.mxu0 0.0
  %1755 = vmatprep.subr.mxu0 0.0
  %1756 = vmatpush1.msra.mxu0 0.0
  %1757 = vmatprep.subr.mxu0 0.0
  %1758 = vmatpush1.msra.mxu0 0.0
  %1759 = vmatprep.subr.mxu0 0.0
  %1760 = vmatpush1.msra.mxu0 0.0
  %1761 = vmatprep.subr.mxu0 0.0
  %1762 = vmatpush1.msra.mxu0 0.0
  %1763 = vmatprep.subr.mxu0 0.0
  %1764 = vmatpush1.msra.mxu0 0.0
  %1765 = vmatprep.subr.mxu0 0.0
  %1766 = vmatpush1.msra.mxu0 0.0
  %1767 = vmatprep.subr.mxu0 0.0
  %1768 = vmatpush1.msra.mxu0 0.0
  %1769 = vmatprep.mubr.f32.mxu0 0.0
  %1770 = vmatmul.mubr.f32.gmra.mrb[0].mxu0 %v1704
  %v1771 = vpop.f32.mrb[0].mxu0
  %v1772 = vadd.f32 %v371, %v1771
  %v1773 = vpop.f32.mrb[0].mxu0
  %1774 = vdwg.mxu0
  %v1775 = vmul.f32 %v145, %v1443
  %v1776 = vadd.f32 %v1775, %v1772
  %vm1777 = vcmp.gt.f32.partialorder %v1776, 1.0
  %v1778 = vsel %vm1777, 1, 0
  %v1779 = vcvt.s32.f32 %v1778
  %v1781 = vcombine.high %v1779, %v1779
  %v1783 = vunpack.c.l.s4 1966171168
  %v1784 = vunpack.c.0.s8 %v1783
  %v1785 = vlaneseq
  %v1786 = vshrl.u32 %v1785, 7
  %v1787 = vsub.s32 %v1784, %v1786
  %v1788 = vrot.slane %v1779, %v1787
  %v1790 = vunpack.c.l.s4 1966171168
  %v1791 = vunpack.c.0.s8 %v1790
  %v1792 = vlaneseq
  %v1793 = vshrl.u32 %v1792, 7
  %v1794 = vsub.s32 %v1791, %v1793
  %v1795 = vrot.slane %v1781, %v1794
  %v1796 = vcombine.high %v1788, %v1788
  %v1797 = vcombine.high %v1795, %v1795
  %v1799 = vunpack.c.l.s4 1966171168
  %v1800 = vunpack.c.0.s8 %v1799
  %v1801 = vlaneseq
  %v1802 = vshrl.u32 %v1801, 7
  %v1803 = vsub.s32 %v1800, %v1802
  %v1804 = vrot.slane %v1788, %v1803
  %v1806 = vunpack.c.l.s4 1966171168
  %v1807 = vunpack.c.0.s8 %v1806
  %v1808 = vlaneseq
  %v1809 = vshrl.u32 %v1808, 7
  %v1810 = vsub.s32 %v1807, %v1809
  %v1811 = vrot.slane %v1795, %v1810
  %v1813 = vunpack.c.l.s4 1966171168
  %v1814 = vunpack.c.0.s8 %v1813
  %v1815 = vlaneseq
  %v1816 = vshrl.u32 %v1815, 7
  %v1817 = vsub.s32 %v1814, %v1816
  %v1818 = vrot.slane %v1796, %v1817
  %v1820 = vunpack.c.l.s4 1966171168
  %v1821 = vunpack.c.0.s8 %v1820
  %v1822 = vlaneseq
  %v1823 = vshrl.u32 %v1822, 7
  %v1824 = vsub.s32 %v1821, %v1823
  %v1825 = vrot.slane %v1797, %v1824
  %v1826 = vcombine.high %v1804, %v1804
  %v1827 = vcombine.high %v1811, %v1811
  %v1828 = vcombine.high %v1818, %v1818
  %v1829 = vcombine.high %v1825, %v1825
  %1838 = vst [vmem:[%s14 + $0x4] sm:$0x1] %v1804
  %1839 = vst [vmem:[%s14 + $0xc] sm:$0x1] %v1818
  %1840 = vst [vmem:[%s14 + $0x14] sm:$0x1] %v1826
  %1841 = vst [vmem:[%s14 + $0x1c] sm:$0x1] %v1828
  %1842 = vst [vmem:[%s14 + $0x24] sm:$0x1] %v1811
  %1843 = vst [vmem:[%s14 + $0x2c] sm:$0x1] %v1825
  %1844 = vst [vmem:[%s14 + $0x34] sm:$0x1] %v1827
  %1845 = vst [vmem:[%s14 + $0x3c] sm:$0x1] %v1829
  %v1846 = vld [vmem:[%s0 + $0x5] sm:$0x1]
  %v1847 = vld [vmem:[%s0 + $0xd] sm:$0x1]
  %v1848 = vld [vmem:[%s0 + $0x15] sm:$0x1]
  %v1849 = vld [vmem:[%s0 + $0x1d] sm:$0x1]
  %v1850 = vld [vmem:[%s0 + $0x25] sm:$0x1]
  %v1851 = vld [vmem:[%s0 + $0x2d] sm:$0x1]
  %v1852 = vld [vmem:[%s0 + $0x35] sm:$0x1]
  %v1853 = vld [vmem:[%s0 + $0x3d] sm:$0x1]
  %v1854 = vmul.f32 %v103, %v1547
  %v1863 = vrot.slane %v1847, 7
  %v1864 = vsel %vm168, %v1863, %v1846
  %v1865 = vrot.slane %v1848, 6
  %v1866 = vsel %vm171, %v1865, %v1864
  %v1867 = vrot.slane %v1849, 5
  %v1868 = vsel %vm174, %v1867, %v1866
  %v1869 = vrot.slane %v1850, 4
  %v1870 = vsel %vm177, %v1869, %v1868
  %v1871 = vrot.slane %v1851, 3
  %v1872 = vsel %vm180, %v1871, %v1870
  %v1873 = vrot.slane %v1852, 2
  %v1874 = vsel %vm183, %v1873, %v1872
  %v1875 = vrot.slane %v1853, 1
  %v1876 = vsel %vm186, %v1875, %v1874
  %v1878 = vadd.f32 %v1854, %v1876
  %v1879 = vmul.f32 %v1550, %v110
  %v1880 = vsub.f32 %v1878, %v1879
  %vm1881 = vcmp.gt.f32.partialorder %v1880, %v110
  %v1882 = vsel %vm1881, 1, 0
  %v1883 = vcvt.s32.f32 %v1882
  %1884 = vmatprep.subr.mxu0 0.0
  %1885 = vmatpush1.msra.mxu0 %v47
  %1886 = vmatprep.subr.mxu0 0.0
  %1887 = vmatpush1.msra.mxu0 %v48
  %1888 = vmatprep.subr.mxu0 0.0
  %1889 = vmatpush1.msra.mxu0 %v49
  %1890 = vmatprep.subr.mxu0 0.0
  %1891 = vmatpush1.msra.mxu0 %v50
  %1892 = vmatprep.subr.mxu0 0.0
  %1893 = vmatpush1.msra.mxu0 %v51
  %1894 = vmatprep.subr.mxu0 0.0
  %1895 = vmatpush1.msra.mxu0 %v52
  %1896 = vmatprep.subr.mxu0 0.0
  %1897 = vmatpush1.msra.mxu0 %v53
  %1898 = vmatprep.subr.mxu0 0.0
  %1899 = vmatpush1.msra.mxu0 %v54
  %1900 = vmatprep.subr.mxu0 0.0
  %1901 = vmatpush1.msra.mxu0 %v55
  %1902 = vmatprep.subr.mxu0 0.0
  %1903 = vmatpush1.msra.mxu0 %v56
  %1904 = vmatprep.subr.mxu0 0.0
  %1905 = vmatpush1.msra.mxu0 %v57
  %1906 = vmatprep.subr.mxu0 0.0
  %1907 = vmatpush1.msra.mxu0 %v58
  %1908 = vmatprep.subr.mxu0 0.0
  %1909 = vmatpush1.msra.mxu0 %v59
  %1910 = vmatprep.subr.mxu0 0.0
  %1911 = vmatpush1.msra.mxu0 %v60
  %1912 = vmatprep.subr.mxu0 0.0
  %1913 = vmatpush1.msra.mxu0 %v61
  %1914 = vmatprep.subr.mxu0 0.0
  %1915 = vmatpush1.msra.mxu0 %v62
  %1916 = vmatprep.subr.mxu0 0.0
  %1917 = vmatpush1.msra.mxu0 0.0
  %1918 = vmatprep.subr.mxu0 0.0
  %1919 = vmatpush1.msra.mxu0 0.0
  %1920 = vmatprep.subr.mxu0 0.0
  %1921 = vmatpush1.msra.mxu0 0.0
  %1922 = vmatprep.subr.mxu0 0.0
  %1923 = vmatpush1.msra.mxu0 0.0
  %1924 = vmatprep.subr.mxu0 0.0
  %1925 = vmatpush1.msra.mxu0 0.0
  %1926 = vmatprep.subr.mxu0 0.0
  %1927 = vmatpush1.msra.mxu0 0.0
  %1928 = vmatprep.subr.mxu0 0.0
  %1929 = vmatpush1.msra.mxu0 0.0
  %1930 = vmatprep.subr.mxu0 0.0
  %1931 = vmatpush1.msra.mxu0 0.0
  %1932 = vmatprep.subr.mxu0 0.0
  %1933 = vmatpush1.msra.mxu0 0.0
  %1934 = vmatprep.subr.mxu0 0.0
  %1935 = vmatpush1.msra.mxu0 0.0
  %1936 = vmatprep.subr.mxu0 0.0
  %1937 = vmatpush1.msra.mxu0 0.0
  %1938 = vmatprep.subr.mxu0 0.0
  %1939 = vmatpush1.msra.mxu0 0.0
  %1940 = vmatprep.subr.mxu0 0.0
  %1941 = vmatpush1.msra.mxu0 0.0
  %1942 = vmatprep.subr.mxu0 0.0
  %1943 = vmatpush1.msra.mxu0 0.0
  %1944 = vmatprep.subr.mxu0 0.0
  %1945 = vmatpush1.msra.mxu0 0.0
  %1946 = vmatprep.subr.mxu0 0.0
  %1947 = vmatpush1.msra.mxu0 0.0
  %1948 = vmatprep.mubr.f32.mxu0 0.0
  %1949 = vmatmul.mubr.f32.gmra.mrb[0].mxu0 %v1883
  %v1950 = vpop.f32.mrb[0].mxu0
  %v1951 = vadd.f32 %v199, %v1950
  %v1952 = vpop.f32.mrb[0].mxu0
  %1953 = vdwg.mxu0
  %v1954 = vmul.f32 %v117, %v1624
  %v1955 = vadd.f32 %v1954, %v1951
  %v1956 = vmul.f32 %v1627, %v124
  %v1957 = vsub.f32 %v1955, %v1956
  %vm1958 = vcmp.gt.f32.partialorder %v1957, %v124
  %v1959 = vsel %vm1958, 1, 0
  %v1960 = vcvt.s32.f32 %v1959
  %1961 = vmatprep.subr.mxu0 0.0
  %1962 = vmatpush1.msra.mxu0 %v64
  %1963 = vmatprep.subr.mxu0 0.0
  %1964 = vmatpush1.msra.mxu0 %v65
  %1965 = vmatprep.subr.mxu0 0.0
  %1966 = vmatpush1.msra.mxu0 %v66
  %1967 = vmatprep.subr.mxu0 0.0
  %1968 = vmatpush1.msra.mxu0 %v67
  %1969 = vmatprep.subr.mxu0 0.0
  %1970 = vmatpush1.msra.mxu0 %v68
  %1971 = vmatprep.subr.mxu0 0.0
  %1972 = vmatpush1.msra.mxu0 %v69
  %1973 = vmatprep.subr.mxu0 0.0
  %1974 = vmatpush1.msra.mxu0 %v70
  %1975 = vmatprep.subr.mxu0 0.0
  %1976 = vmatpush1.msra.mxu0 %v71
  %1977 = vmatprep.subr.mxu0 0.0
  %1978 = vmatpush1.msra.mxu0 %v72
  %1979 = vmatprep.subr.mxu0 0.0
  %1980 = vmatpush1.msra.mxu0 %v73
  %1981 = vmatprep.subr.mxu0 0.0
  %1982 = vmatpush1.msra.mxu0 %v74
  %1983 = vmatprep.subr.mxu0 0.0
  %1984 = vmatpush1.msra.mxu0 %v75
  %1985 = vmatprep.subr.mxu0 0.0
  %1986 = vmatpush1.msra.mxu0 %v76
  %1987 = vmatprep.subr.mxu0 0.0
  %1988 = vmatpush1.msra.mxu0 %v77
  %1989 = vmatprep.subr.mxu0 0.0
  %1990 = vmatpush1.msra.mxu0 %v78
  %1991 = vmatprep.subr.mxu0 0.0
  %1992 = vmatpush1.msra.mxu0 %v79
  %1993 = vmatprep.subr.mxu0 0.0
  %1994 = vmatpush1.msra.mxu0 0.0
  %1995 = vmatprep.subr.mxu0 0.0
  %1996 = vmatpush1.msra.mxu0 0.0
  %1997 = vmatprep.subr.mxu0 0.0
  %1998 = vmatpush1.msra.mxu0 0.0
  %1999 = vmatprep.subr.mxu0 0.0
  %2000 = vmatpush1.msra.mxu0 0.0
  %2001 = vmatprep.subr.mxu0 0.0
  %2002 = vmatpush1.msra.mxu0 0.0
  %2003 = vmatprep.subr.mxu0 0.0
  %2004 = vmatpush1.msra.mxu0 0.0
  %2005 = vmatprep.subr.mxu0 0.0
  %2006 = vmatpush1.msra.mxu0 0.0
  %2007 = vmatprep.subr.mxu0 0.0
  %2008 = vmatpush1.msra.mxu0 0.0
  %2009 = vmatprep.subr.mxu0 0.0
  %2010 = vmatpush1.msra.mxu0 0.0
  %2011 = vmatprep.subr.mxu0 0.0
  %2012 = vmatpush1.msra.mxu0 0.0
  %2013 = vmatprep.subr.mxu0 0.0
  %2014 = vmatpush1.msra.mxu0 0.0
  %2015 = vmatprep.subr.mxu0 0.0
  %2016 = vmatpush1.msra.mxu0 0.0
  %2017 = vmatprep.subr.mxu0 0.0
  %2018 = vmatpush1.msra.mxu0 0.0
  %2019 = vmatprep.subr.mxu0 0.0
  %2020 = vmatpush1.msra.mxu0 0.0
  %2021 = vmatprep.subr.mxu0 0.0
  %2022 = vmatpush1.msra.mxu0 0.0
  %2023 = vmatprep.subr.mxu0 0.0
  %2024 = vmatpush1.msra.mxu0 0.0
  %2025 = vmatprep.mubr.f32.mxu0 0.0
  %2026 = vmatmul.mubr.f32.gmra.mrb[0].mxu0 %v1960
  %v2027 = vpop.f32.mrb[0].mxu0
  %v2028 = vadd.f32 %v285, %v2027
  %v2029 = vpop.f32.mrb[0].mxu0
  %2030 = vdwg.mxu0
  %v2031 = vmul.f32 %v131, %v1701
  %v2032 = vadd.f32 %v2031, %v2028
  %v2033 = vmul.f32 %v1704, %v138
  %v2034 = vsub.f32 %v2032, %v2033
  %vm2035 = vcmp.gt.f32.partialorder %v2034, %v138
  %v2036 = vsel %vm2035, 1, 0
  %v2037 = vcvt.s32.f32 %v2036
  %2038 = vmatprep.subr.mxu0 0.0
  %2039 = vmatpush1.msra.mxu0 %v81
  %2040 = vmatprep.subr.mxu0 0.0
  %2041 = vmatpush1.msra.mxu0 %v82
  %2042 = vmatprep.subr.mxu0 0.0
  %2043 = vmatpush1.msra.mxu0 %v83
  %2044 = vmatprep.subr.mxu0 0.0
  %2045 = vmatpush1.msra.mxu0 %v84
  %2046 = vmatprep.subr.mxu0 0.0
  %2047 = vmatpush1.msra.mxu0 %v85
  %2048 = vmatprep.subr.mxu0 0.0
  %2049 = vmatpush1.msra.mxu0 %v86
  %2050 = vmatprep.subr.mxu0 0.0
  %2051 = vmatpush1.msra.mxu0 %v87
  %2052 = vmatprep.subr.mxu0 0.0
  %2053 = vmatpush1.msra.mxu0 %v88
  %2054 = vmatprep.subr.mxu0 0.0
  %2055 = vmatpush1.msra.mxu0 %v89
  %2056 = vmatprep.subr.mxu0 0.0
  %2057 = vmatpush1.msra.mxu0 %v90
  %2058 = vmatprep.subr.mxu0 0.0
  %2059 = vmatpush1.msra.mxu0 %v91
  %2060 = vmatprep.subr.mxu0 0.0
  %2061 = vmatpush1.msra.mxu0 %v92
  %2062 = vmatprep.subr.mxu0 0.0
  %2063 = vmatpush1.msra.mxu0 %v93
  %2064 = vmatprep.subr.mxu0 0.0
  %2065 = vmatpush1.msra.mxu0 %v94
  %2066 = vmatprep.subr.mxu0 0.0
  %2067 = vmatpush1.msra.mxu0 %v95
  %2068 = vmatprep.subr.mxu0 0.0
  %2069 = vmatpush1.msra.mxu0 %v96
  %2070 = vmatprep.subr.mxu0 0.0
  %2071 = vmatpush1.msra.mxu0 0.0
  %2072 = vmatprep.subr.mxu0 0.0
  %2073 = vmatpush1.msra.mxu0 0.0
  %2074 = vmatprep.subr.mxu0 0.0
  %2075 = vmatpush1.msra.mxu0 0.0
  %2076 = vmatprep.subr.mxu0 0.0
  %2077 = vmatpush1.msra.mxu0 0.0
  %2078 = vmatprep.subr.mxu0 0.0
  %2079 = vmatpush1.msra.mxu0 0.0
  %2080 = vmatprep.subr.mxu0 0.0
  %2081 = vmatpush1.msra.mxu0 0.0
  %2082 = vmatprep.subr.mxu0 0.0
  %2083 = vmatpush1.msra.mxu0 0.0
  %2084 = vmatprep.subr.mxu0 0.0
  %2085 = vmatpush1.msra.mxu0 0.0
  %2086 = vmatprep.subr.mxu0 0.0
  %2087 = vmatpush1.msra.mxu0 0.0
  %2088 = vmatprep.subr.mxu0 0.0
  %2089 = vmatpush1.msra.mxu0 0.0
  %2090 = vmatprep.subr.mxu0 0.0
  %2091 = vmatpush1.msra.mxu0 0.0
  %2092 = vmatprep.subr.mxu0 0.0
  %2093 = vmatpush1.msra.mxu0 0.0
  %2094 = vmatprep.subr.mxu0 0.0
  %2095 = vmatpush1.msra.mxu0 0.0
  %2096 = vmatprep.subr.mxu0 0.0
  %2097 = vmatpush1.msra.mxu0 0.0
  %2098 = vmatprep.subr.mxu0 0.0
  %2099 = vmatpush1.msra.mxu0 0.0
  %2100 = vmatprep.subr.mxu0 0.0
  %2101 = vmatpush1.msra.mxu0 0.0
  %2102 = vmatprep.mubr.f32.mxu0 0.0
  %2103 = vmatmul.mubr.f32.gmra.mrb[0].mxu0 %v2037
  %v2104 = vpop.f32.mrb[0].mxu0
  %v2105 = vadd.f32 %v371, %v2104
  %v2106 = vpop.f32.mrb[0].mxu0
  %2107 = vdwg.mxu0
  %v2108 = vmul.f32 %v145, %v1776
  %v2109 = vadd.f32 %v2108, %v2105
  %vm2110 = vcmp.gt.f32.partialorder %v2109, 1.0
  %v2111 = vsel %vm2110, 1, 0
  %v2112 = vcvt.s32.f32 %v2111
  %v2114 = vcombine.high %v2112, %v2112
  %v2116 = vunpack.c.l.s4 1966171168
  %v2117 = vunpack.c.0.s8 %v2116
  %v2118 = vlaneseq
  %v2119 = vshrl.u32 %v2118, 7
  %v2120 = vsub.s32 %v2117, %v2119
  %v2121 = vrot.slane %v2112, %v2120
  %v2123 = vunpack.c.l.s4 1966171168
  %v2124 = vunpack.c.0.s8 %v2123
  %v2125 = vlaneseq
  %v2126 = vshrl.u32 %v2125, 7
  %v2127 = vsub.s32 %v2124, %v2126
  %v2128 = vrot.slane %v2114, %v2127
  %v2129 = vcombine.high %v2121, %v2121
  %v2130 = vcombine.high %v2128, %v2128
  %v2132 = vunpack.c.l.s4 1966171168
  %v2133 = vunpack.c.0.s8 %v2132
  %v2134 = vlaneseq
  %v2135 = vshrl.u32 %v2134, 7
  %v2136 = vsub.s32 %v2133, %v2135
  %v2137 = vrot.slane %v2121, %v2136
  %v2139 = vunpack.c.l.s4 1966171168
  %v2140 = vunpack.c.0.s8 %v2139
  %v2141 = vlaneseq
  %v2142 = vshrl.u32 %v2141, 7
  %v2143 = vsub.s32 %v2140, %v2142
  %v2144 = vrot.slane %v2128, %v2143
  %v2146 = vunpack.c.l.s4 1966171168
  %v2147 = vunpack.c.0.s8 %v2146
  %v2148 = vlaneseq
  %v2149 = vshrl.u32 %v2148, 7
  %v2150 = vsub.s32 %v2147, %v2149
  %v2151 = vrot.slane %v2129, %v2150
  %v2153 = vunpack.c.l.s4 1966171168
  %v2154 = vunpack.c.0.s8 %v2153
  %v2155 = vlaneseq
  %v2156 = vshrl.u32 %v2155, 7
  %v2157 = vsub.s32 %v2154, %v2156
  %v2158 = vrot.slane %v2130, %v2157
  %v2159 = vcombine.high %v2137, %v2137
  %v2160 = vcombine.high %v2144, %v2144
  %v2161 = vcombine.high %v2151, %v2151
  %v2162 = vcombine.high %v2158, %v2158
  %2171 = vst [vmem:[%s14 + $0x5] sm:$0x1] %v2137
  %2172 = vst [vmem:[%s14 + $0xd] sm:$0x1] %v2151
  %2173 = vst [vmem:[%s14 + $0x15] sm:$0x1] %v2159
  %2174 = vst [vmem:[%s14 + $0x1d] sm:$0x1] %v2161
  %2175 = vst [vmem:[%s14 + $0x25] sm:$0x1] %v2144
  %2176 = vst [vmem:[%s14 + $0x2d] sm:$0x1] %v2158
  %2177 = vst [vmem:[%s14 + $0x35] sm:$0x1] %v2160
  %2178 = vst [vmem:[%s14 + $0x3d] sm:$0x1] %v2162
  %v2179 = vld [vmem:[%s0 + $0x6] sm:$0x1]
  %v2180 = vld [vmem:[%s0 + $0xe] sm:$0x1]
  %v2181 = vld [vmem:[%s0 + $0x16] sm:$0x1]
  %v2182 = vld [vmem:[%s0 + $0x1e] sm:$0x1]
  %v2183 = vld [vmem:[%s0 + $0x26] sm:$0x1]
  %v2184 = vld [vmem:[%s0 + $0x2e] sm:$0x1]
  %v2185 = vld [vmem:[%s0 + $0x36] sm:$0x1]
  %v2186 = vld [vmem:[%s0 + $0x3e] sm:$0x1]
  %v2187 = vmul.f32 %v103, %v1880
  %v2196 = vrot.slane %v2180, 7
  %v2197 = vsel %vm168, %v2196, %v2179
  %v2198 = vrot.slane %v2181, 6
  %v2199 = vsel %vm171, %v2198, %v2197
  %v2200 = vrot.slane %v2182, 5
  %v2201 = vsel %vm174, %v2200, %v2199
  %v2202 = vrot.slane %v2183, 4
  %v2203 = vsel %vm177, %v2202, %v2201
  %v2204 = vrot.slane %v2184, 3
  %v2205 = vsel %vm180, %v2204, %v2203
  %v2206 = vrot.slane %v2185, 2
  %v2207 = vsel %vm183, %v2206, %v2205
  %v2208 = vrot.slane %v2186, 1
  %v2209 = vsel %vm186, %v2208, %v2207
  %v2211 = vadd.f32 %v2187, %v2209
  %v2212 = vmul.f32 %v1883, %v110
  %v2213 = vsub.f32 %v2211, %v2212
  %vm2214 = vcmp.gt.f32.partialorder %v2213, %v110
  %v2215 = vsel %vm2214, 1, 0
  %v2216 = vcvt.s32.f32 %v2215
  %2217 = vmatprep.subr.mxu0 0.0
  %2218 = vmatpush1.msra.mxu0 %v47
  %2219 = vmatprep.subr.mxu0 0.0
  %2220 = vmatpush1.msra.mxu0 %v48
  %2221 = vmatprep.subr.mxu0 0.0
  %2222 = vmatpush1.msra.mxu0 %v49
  %2223 = vmatprep.subr.mxu0 0.0
  %2224 = vmatpush1.msra.mxu0 %v50
  %2225 = vmatprep.subr.mxu0 0.0
  %2226 = vmatpush1.msra.mxu0 %v51
  %2227 = vmatprep.subr.mxu0 0.0
  %2228 = vmatpush1.msra.mxu0 %v52
  %2229 = vmatprep.subr.mxu0 0.0
  %2230 = vmatpush1.msra.mxu0 %v53
  %2231 = vmatprep.subr.mxu0 0.0
  %2232 = vmatpush1.msra.mxu0 %v54
  %2233 = vmatprep.subr.mxu0 0.0
  %2234 = vmatpush1.msra.mxu0 %v55
  %2235 = vmatprep.subr.mxu0 0.0
  %2236 = vmatpush1.msra.mxu0 %v56
  %2237 = vmatprep.subr.mxu0 0.0
  %2238 = vmatpush1.msra.mxu0 %v57
  %2239 = vmatprep.subr.mxu0 0.0
  %2240 = vmatpush1.msra.mxu0 %v58
  %2241 = vmatprep.subr.mxu0 0.0
  %2242 = vmatpush1.msra.mxu0 %v59
  %2243 = vmatprep.subr.mxu0 0.0
  %2244 = vmatpush1.msra.mxu0 %v60
  %2245 = vmatprep.subr.mxu0 0.0
  %2246 = vmatpush1.msra.mxu0 %v61
  %2247 = vmatprep.subr.mxu0 0.0
  %2248 = vmatpush1.msra.mxu0 %v62
  %2249 = vmatprep.subr.mxu0 0.0
  %2250 = vmatpush1.msra.mxu0 0.0
  %2251 = vmatprep.subr.mxu0 0.0
  %2252 = vmatpush1.msra.mxu0 0.0
  %2253 = vmatprep.subr.mxu0 0.0
  %2254 = vmatpush1.msra.mxu0 0.0
  %2255 = vmatprep.subr.mxu0 0.0
  %2256 = vmatpush1.msra.mxu0 0.0
  %2257 = vmatprep.subr.mxu0 0.0
  %2258 = vmatpush1.msra.mxu0 0.0
  %2259 = vmatprep.subr.mxu0 0.0
  %2260 = vmatpush1.msra.mxu0 0.0
  %2261 = vmatprep.subr.mxu0 0.0
  %2262 = vmatpush1.msra.mxu0 0.0
  %2263 = vmatprep.subr.mxu0 0.0
  %2264 = vmatpush1.msra.mxu0 0.0
  %2265 = vmatprep.subr.mxu0 0.0
  %2266 = vmatpush1.msra.mxu0 0.0
  %2267 = vmatprep.subr.mxu0 0.0
  %2268 = vmatpush1.msra.mxu0 0.0
  %2269 = vmatprep.subr.mxu0 0.0
  %2270 = vmatpush1.msra.mxu0 0.0
  %2271 = vmatprep.subr.mxu0 0.0
  %2272 = vmatpush1.msra.mxu0 0.0
  %2273 = vmatprep.subr.mxu0 0.0
  %2274 = vmatpush1.msra.mxu0 0.0
  %2275 = vmatprep.subr.mxu0 0.0
  %2276 = vmatpush1.msra.mxu0 0.0
  %2277 = vmatprep.subr.mxu0 0.0
  %2278 = vmatpush1.msra.mxu0 0.0
  %2279 = vmatprep.subr.mxu0 0.0
  %2280 = vmatpush1.msra.mxu0 0.0
  %2281 = vmatprep.mubr.f32.mxu0 0.0
  %2282 = vmatmul.mubr.f32.gmra.mrb[0].mxu0 %v2216
  %v2283 = vpop.f32.mrb[0].mxu0
  %v2284 = vadd.f32 %v199, %v2283
  %v2285 = vpop.f32.mrb[0].mxu0
  %2286 = vdwg.mxu0
  %v2287 = vmul.f32 %v117, %v1957
  %v2288 = vadd.f32 %v2287, %v2284
  %v2289 = vmul.f32 %v1960, %v124
  %v2290 = vsub.f32 %v2288, %v2289
  %vm2291 = vcmp.gt.f32.partialorder %v2290, %v124
  %v2292 = vsel %vm2291, 1, 0
  %v2293 = vcvt.s32.f32 %v2292
  %2294 = vmatprep.subr.mxu0 0.0
  %2295 = vmatpush1.msra.mxu0 %v64
  %2296 = vmatprep.subr.mxu0 0.0
  %2297 = vmatpush1.msra.mxu0 %v65
  %2298 = vmatprep.subr.mxu0 0.0
  %2299 = vmatpush1.msra.mxu0 %v66
  %2300 = vmatprep.subr.mxu0 0.0
  %2301 = vmatpush1.msra.mxu0 %v67
  %2302 = vmatprep.subr.mxu0 0.0
  %2303 = vmatpush1.msra.mxu0 %v68
  %2304 = vmatprep.subr.mxu0 0.0
  %2305 = vmatpush1.msra.mxu0 %v69
  %2306 = vmatprep.subr.mxu0 0.0
  %2307 = vmatpush1.msra.mxu0 %v70
  %2308 = vmatprep.subr.mxu0 0.0
  %2309 = vmatpush1.msra.mxu0 %v71
  %2310 = vmatprep.subr.mxu0 0.0
  %2311 = vmatpush1.msra.mxu0 %v72
  %2312 = vmatprep.subr.mxu0 0.0
  %2313 = vmatpush1.msra.mxu0 %v73
  %2314 = vmatprep.subr.mxu0 0.0
  %2315 = vmatpush1.msra.mxu0 %v74
  %2316 = vmatprep.subr.mxu0 0.0
  %2317 = vmatpush1.msra.mxu0 %v75
  %2318 = vmatprep.subr.mxu0 0.0
  %2319 = vmatpush1.msra.mxu0 %v76
  %2320 = vmatprep.subr.mxu0 0.0
  %2321 = vmatpush1.msra.mxu0 %v77
  %2322 = vmatprep.subr.mxu0 0.0
  %2323 = vmatpush1.msra.mxu0 %v78
  %2324 = vmatprep.subr.mxu0 0.0
  %2325 = vmatpush1.msra.mxu0 %v79
  %2326 = vmatprep.subr.mxu0 0.0
  %2327 = vmatpush1.msra.mxu0 0.0
  %2328 = vmatprep.subr.mxu0 0.0
  %2329 = vmatpush1.msra.mxu0 0.0
  %2330 = vmatprep.subr.mxu0 0.0
  %2331 = vmatpush1.msra.mxu0 0.0
  %2332 = vmatprep.subr.mxu0 0.0
  %2333 = vmatpush1.msra.mxu0 0.0
  %2334 = vmatprep.subr.mxu0 0.0
  %2335 = vmatpush1.msra.mxu0 0.0
  %2336 = vmatprep.subr.mxu0 0.0
  %2337 = vmatpush1.msra.mxu0 0.0
  %2338 = vmatprep.subr.mxu0 0.0
  %2339 = vmatpush1.msra.mxu0 0.0
  %2340 = vmatprep.subr.mxu0 0.0
  %2341 = vmatpush1.msra.mxu0 0.0
  %2342 = vmatprep.subr.mxu0 0.0
  %2343 = vmatpush1.msra.mxu0 0.0
  %2344 = vmatprep.subr.mxu0 0.0
  %2345 = vmatpush1.msra.mxu0 0.0
  %2346 = vmatprep.subr.mxu0 0.0
  %2347 = vmatpush1.msra.mxu0 0.0
  %2348 = vmatprep.subr.mxu0 0.0
  %2349 = vmatpush1.msra.mxu0 0.0
  %2350 = vmatprep.subr.mxu0 0.0
  %2351 = vmatpush1.msra.mxu0 0.0
  %2352 = vmatprep.subr.mxu0 0.0
  %2353 = vmatpush1.msra.mxu0 0.0
  %2354 = vmatprep.subr.mxu0 0.0
  %2355 = vmatpush1.msra.mxu0 0.0
  %2356 = vmatprep.subr.mxu0 0.0
  %2357 = vmatpush1.msra.mxu0 0.0
  %2358 = vmatprep.mubr.f32.mxu0 0.0
  %2359 = vmatmul.mubr.f32.gmra.mrb[0].mxu0 %v2293
  %v2360 = vpop.f32.mrb[0].mxu0
  %v2361 = vadd.f32 %v285, %v2360
  %v2362 = vpop.f32.mrb[0].mxu0
  %2363 = vdwg.mxu0
  %v2364 = vmul.f32 %v131, %v2034
  %v2365 = vadd.f32 %v2364, %v2361
  %v2366 = vmul.f32 %v2037, %v138
  %v2367 = vsub.f32 %v2365, %v2366
  %vm2368 = vcmp.gt.f32.partialorder %v2367, %v138
  %v2369 = vsel %vm2368, 1, 0
  %v2370 = vcvt.s32.f32 %v2369
  %2371 = vmatprep.subr.mxu0 0.0
  %2372 = vmatpush1.msra.mxu0 %v81
  %2373 = vmatprep.subr.mxu0 0.0
  %2374 = vmatpush1.msra.mxu0 %v82
  %2375 = vmatprep.subr.mxu0 0.0
  %2376 = vmatpush1.msra.mxu0 %v83
  %2377 = vmatprep.subr.mxu0 0.0
  %2378 = vmatpush1.msra.mxu0 %v84
  %2379 = vmatprep.subr.mxu0 0.0
  %2380 = vmatpush1.msra.mxu0 %v85
  %2381 = vmatprep.subr.mxu0 0.0
  %2382 = vmatpush1.msra.mxu0 %v86
  %2383 = vmatprep.subr.mxu0 0.0
  %2384 = vmatpush1.msra.mxu0 %v87
  %2385 = vmatprep.subr.mxu0 0.0
  %2386 = vmatpush1.msra.mxu0 %v88
  %2387 = vmatprep.subr.mxu0 0.0
  %2388 = vmatpush1.msra.mxu0 %v89
  %2389 = vmatprep.subr.mxu0 0.0
  %2390 = vmatpush1.msra.mxu0 %v90
  %2391 = vmatprep.subr.mxu0 0.0
  %2392 = vmatpush1.msra.mxu0 %v91
  %2393 = vmatprep.subr.mxu0 0.0
  %2394 = vmatpush1.msra.mxu0 %v92
  %2395 = vmatprep.subr.mxu0 0.0
  %2396 = vmatpush1.msra.mxu0 %v93
  %2397 = vmatprep.subr.mxu0 0.0
  %2398 = vmatpush1.msra.mxu0 %v94
  %2399 = vmatprep.subr.mxu0 0.0
  %2400 = vmatpush1.msra.mxu0 %v95
  %2401 = vmatprep.subr.mxu0 0.0
  %2402 = vmatpush1.msra.mxu0 %v96
  %2403 = vmatprep.subr.mxu0 0.0
  %2404 = vmatpush1.msra.mxu0 0.0
  %2405 = vmatprep.subr.mxu0 0.0
  %2406 = vmatpush1.msra.mxu0 0.0
  %2407 = vmatprep.subr.mxu0 0.0
  %2408 = vmatpush1.msra.mxu0 0.0
  %2409 = vmatprep.subr.mxu0 0.0
  %2410 = vmatpush1.msra.mxu0 0.0
  %2411 = vmatprep.subr.mxu0 0.0
  %2412 = vmatpush1.msra.mxu0 0.0
  %2413 = vmatprep.subr.mxu0 0.0
  %2414 = vmatpush1.msra.mxu0 0.0
  %2415 = vmatprep.subr.mxu0 0.0
  %2416 = vmatpush1.msra.mxu0 0.0
  %2417 = vmatprep.subr.mxu0 0.0
  %2418 = vmatpush1.msra.mxu0 0.0
  %2419 = vmatprep.subr.mxu0 0.0
  %2420 = vmatpush1.msra.mxu0 0.0
  %2421 = vmatprep.subr.mxu0 0.0
  %2422 = vmatpush1.msra.mxu0 0.0
  %2423 = vmatprep.subr.mxu0 0.0
  %2424 = vmatpush1.msra.mxu0 0.0
  %2425 = vmatprep.subr.mxu0 0.0
  %2426 = vmatpush1.msra.mxu0 0.0
  %2427 = vmatprep.subr.mxu0 0.0
  %2428 = vmatpush1.msra.mxu0 0.0
  %2429 = vmatprep.subr.mxu0 0.0
  %2430 = vmatpush1.msra.mxu0 0.0
  %2431 = vmatprep.subr.mxu0 0.0
  %2432 = vmatpush1.msra.mxu0 0.0
  %2433 = vmatprep.subr.mxu0 0.0
  %2434 = vmatpush1.msra.mxu0 0.0
  %2435 = vmatprep.mubr.f32.mxu0 0.0
  %2436 = vmatmul.mubr.f32.gmra.mrb[0].mxu0 %v2370
  %v2437 = vpop.f32.mrb[0].mxu0
  %v2438 = vadd.f32 %v371, %v2437
  %v2439 = vpop.f32.mrb[0].mxu0
  %2440 = vdwg.mxu0
  %v2441 = vmul.f32 %v145, %v2109
  %v2442 = vadd.f32 %v2441, %v2438
  %vm2443 = vcmp.gt.f32.partialorder %v2442, 1.0
  %v2444 = vsel %vm2443, 1, 0
  %v2445 = vcvt.s32.f32 %v2444
  %v2447 = vcombine.high %v2445, %v2445
  %v2449 = vunpack.c.l.s4 1966171168
  %v2450 = vunpack.c.0.s8 %v2449
  %v2451 = vlaneseq
  %v2452 = vshrl.u32 %v2451, 7
  %v2453 = vsub.s32 %v2450, %v2452
  %v2454 = vrot.slane %v2445, %v2453
  %v2456 = vunpack.c.l.s4 1966171168
  %v2457 = vunpack.c.0.s8 %v2456
  %v2458 = vlaneseq
  %v2459 = vshrl.u32 %v2458, 7
  %v2460 = vsub.s32 %v2457, %v2459
  %v2461 = vrot.slane %v2447, %v2460
  %v2462 = vcombine.high %v2454, %v2454
  %v2463 = vcombine.high %v2461, %v2461
  %v2465 = vunpack.c.l.s4 1966171168
  %v2466 = vunpack.c.0.s8 %v2465
  %v2467 = vlaneseq
  %v2468 = vshrl.u32 %v2467, 7
  %v2469 = vsub.s32 %v2466, %v2468
  %v2470 = vrot.slane %v2454, %v2469
  %v2472 = vunpack.c.l.s4 1966171168
  %v2473 = vunpack.c.0.s8 %v2472
  %v2474 = vlaneseq
  %v2475 = vshrl.u32 %v2474, 7
  %v2476 = vsub.s32 %v2473, %v2475
  %v2477 = vrot.slane %v2461, %v2476
  %v2479 = vunpack.c.l.s4 1966171168
  %v2480 = vunpack.c.0.s8 %v2479
  %v2481 = vlaneseq
  %v2482 = vshrl.u32 %v2481, 7
  %v2483 = vsub.s32 %v2480, %v2482
  %v2484 = vrot.slane %v2462, %v2483
  %v2486 = vunpack.c.l.s4 1966171168
  %v2487 = vunpack.c.0.s8 %v2486
  %v2488 = vlaneseq
  %v2489 = vshrl.u32 %v2488, 7
  %v2490 = vsub.s32 %v2487, %v2489
  %v2491 = vrot.slane %v2463, %v2490
  %v2492 = vcombine.high %v2470, %v2470
  %v2493 = vcombine.high %v2477, %v2477
  %v2494 = vcombine.high %v2484, %v2484
  %v2495 = vcombine.high %v2491, %v2491
  %2504 = vst [vmem:[%s14 + $0x6] sm:$0x1] %v2470
  %2505 = vst [vmem:[%s14 + $0xe] sm:$0x1] %v2484
  %2506 = vst [vmem:[%s14 + $0x16] sm:$0x1] %v2492
  %2507 = vst [vmem:[%s14 + $0x1e] sm:$0x1] %v2494
  %2508 = vst [vmem:[%s14 + $0x26] sm:$0x1] %v2477
  %2509 = vst [vmem:[%s14 + $0x2e] sm:$0x1] %v2491
  %2510 = vst [vmem:[%s14 + $0x36] sm:$0x1] %v2493
  %2511 = vst [vmem:[%s14 + $0x3e] sm:$0x1] %v2495
  %v2512 = vld [vmem:[%s0 + $0x7] sm:$0x1]
  %v2513 = vld [vmem:[%s0 + $0xf] sm:$0x1]
  %v2514 = vld [vmem:[%s0 + $0x17] sm:$0x1]
  %v2515 = vld [vmem:[%s0 + $0x1f] sm:$0x1]
  %v2516 = vld [vmem:[%s0 + $0x27] sm:$0x1]
  %v2517 = vld [vmem:[%s0 + $0x2f] sm:$0x1]
  %v2518 = vld [vmem:[%s0 + $0x37] sm:$0x1]
  %v2519 = vld [vmem:[%s0 + $0x3f] sm:$0x1]
  %v2520 = vmul.f32 %v103, %v2213
  %v2529 = vrot.slane %v2513, 7
  %v2530 = vsel %vm168, %v2529, %v2512
  %v2531 = vrot.slane %v2514, 6
  %v2532 = vsel %vm171, %v2531, %v2530
  %v2533 = vrot.slane %v2515, 5
  %v2534 = vsel %vm174, %v2533, %v2532
  %v2535 = vrot.slane %v2516, 4
  %v2536 = vsel %vm177, %v2535, %v2534
  %v2537 = vrot.slane %v2517, 3
  %v2538 = vsel %vm180, %v2537, %v2536
  %v2539 = vrot.slane %v2518, 2
  %v2540 = vsel %vm183, %v2539, %v2538
  %v2541 = vrot.slane %v2519, 1
  %v2542 = vsel %vm186, %v2541, %v2540
  %v2544 = vadd.f32 %v2520, %v2542
  %v2545 = vmul.f32 %v2216, %v110
  %v2546 = vsub.f32 %v2544, %v2545
  %vm2547 = vcmp.gt.f32.partialorder %v2546, %v110
  %v2548 = vsel %vm2547, 1, 0
  %v2549 = vcvt.s32.f32 %v2548
  %2550 = vmatprep.subr.mxu0 0.0
  %2551 = vmatpush1.msra.mxu0 %v47
  %2552 = vmatprep.subr.mxu0 0.0
  %2553 = vmatpush1.msra.mxu0 %v48
  %2554 = vmatprep.subr.mxu0 0.0
  %2555 = vmatpush1.msra.mxu0 %v49
  %2556 = vmatprep.subr.mxu0 0.0
  %2557 = vmatpush1.msra.mxu0 %v50
  %2558 = vmatprep.subr.mxu0 0.0
  %2559 = vmatpush1.msra.mxu0 %v51
  %2560 = vmatprep.subr.mxu0 0.0
  %2561 = vmatpush1.msra.mxu0 %v52
  %2562 = vmatprep.subr.mxu0 0.0
  %2563 = vmatpush1.msra.mxu0 %v53
  %2564 = vmatprep.subr.mxu0 0.0
  %2565 = vmatpush1.msra.mxu0 %v54
  %2566 = vmatprep.subr.mxu0 0.0
  %2567 = vmatpush1.msra.mxu0 %v55
  %2568 = vmatprep.subr.mxu0 0.0
  %2569 = vmatpush1.msra.mxu0 %v56
  %2570 = vmatprep.subr.mxu0 0.0
  %2571 = vmatpush1.msra.mxu0 %v57
  %2572 = vmatprep.subr.mxu0 0.0
  %2573 = vmatpush1.msra.mxu0 %v58
  %2574 = vmatprep.subr.mxu0 0.0
  %2575 = vmatpush1.msra.mxu0 %v59
  %2576 = vmatprep.subr.mxu0 0.0
  %2577 = vmatpush1.msra.mxu0 %v60
  %2578 = vmatprep.subr.mxu0 0.0
  %2579 = vmatpush1.msra.mxu0 %v61
  %2580 = vmatprep.subr.mxu0 0.0
  %2581 = vmatpush1.msra.mxu0 %v62
  %2582 = vmatprep.subr.mxu0 0.0
  %2583 = vmatpush1.msra.mxu0 0.0
  %2584 = vmatprep.subr.mxu0 0.0
  %2585 = vmatpush1.msra.mxu0 0.0
  %2586 = vmatprep.subr.mxu0 0.0
  %2587 = vmatpush1.msra.mxu0 0.0
  %2588 = vmatprep.subr.mxu0 0.0
  %2589 = vmatpush1.msra.mxu0 0.0
  %2590 = vmatprep.subr.mxu0 0.0
  %2591 = vmatpush1.msra.mxu0 0.0
  %2592 = vmatprep.subr.mxu0 0.0
  %2593 = vmatpush1.msra.mxu0 0.0
  %2594 = vmatprep.subr.mxu0 0.0
  %2595 = vmatpush1.msra.mxu0 0.0
  %2596 = vmatprep.subr.mxu0 0.0
  %2597 = vmatpush1.msra.mxu0 0.0
  %2598 = vmatprep.subr.mxu0 0.0
  %2599 = vmatpush1.msra.mxu0 0.0
  %2600 = vmatprep.subr.mxu0 0.0
  %2601 = vmatpush1.msra.mxu0 0.0
  %2602 = vmatprep.subr.mxu0 0.0
  %2603 = vmatpush1.msra.mxu0 0.0
  %2604 = vmatprep.subr.mxu0 0.0
  %2605 = vmatpush1.msra.mxu0 0.0
  %2606 = vmatprep.subr.mxu0 0.0
  %2607 = vmatpush1.msra.mxu0 0.0
  %2608 = vmatprep.subr.mxu0 0.0
  %2609 = vmatpush1.msra.mxu0 0.0
  %2610 = vmatprep.subr.mxu0 0.0
  %2611 = vmatpush1.msra.mxu0 0.0
  %2612 = vmatprep.subr.mxu0 0.0
  %2613 = vmatpush1.msra.mxu0 0.0
  %2614 = vmatprep.mubr.f32.mxu0 0.0
  %2615 = vmatmul.mubr.f32.gmra.mrb[0].mxu0 %v2549
  %v2616 = vpop.f32.mrb[0].mxu0
  %v2617 = vadd.f32 %v199, %v2616
  %v2618 = vpop.f32.mrb[0].mxu0
  %2619 = vdwg.mxu0
  %v2620 = vmul.f32 %v117, %v2290
  %v2621 = vadd.f32 %v2620, %v2617
  %v2622 = vmul.f32 %v2293, %v124
  %v2623 = vsub.f32 %v2621, %v2622
  %vm2624 = vcmp.gt.f32.partialorder %v2623, %v124
  %v2625 = vsel %vm2624, 1, 0
  %v2626 = vcvt.s32.f32 %v2625
  %2627 = vmatprep.subr.mxu0 0.0
  %2628 = vmatpush1.msra.mxu0 %v64
  %2629 = vmatprep.subr.mxu0 0.0
  %2630 = vmatpush1.msra.mxu0 %v65
  %2631 = vmatprep.subr.mxu0 0.0
  %2632 = vmatpush1.msra.mxu0 %v66
  %2633 = vmatprep.subr.mxu0 0.0
  %2634 = vmatpush1.msra.mxu0 %v67
  %2635 = vmatprep.subr.mxu0 0.0
  %2636 = vmatpush1.msra.mxu0 %v68
  %2637 = vmatprep.subr.mxu0 0.0
  %2638 = vmatpush1.msra.mxu0 %v69
  %2639 = vmatprep.subr.mxu0 0.0
  %2640 = vmatpush1.msra.mxu0 %v70
  %2641 = vmatprep.subr.mxu0 0.0
  %2642 = vmatpush1.msra.mxu0 %v71
  %2643 = vmatprep.subr.mxu0 0.0
  %2644 = vmatpush1.msra.mxu0 %v72
  %2645 = vmatprep.subr.mxu0 0.0
  %2646 = vmatpush1.msra.mxu0 %v73
  %2647 = vmatprep.subr.mxu0 0.0
  %2648 = vmatpush1.msra.mxu0 %v74
  %2649 = vmatprep.subr.mxu0 0.0
  %2650 = vmatpush1.msra.mxu0 %v75
  %2651 = vmatprep.subr.mxu0 0.0
  %2652 = vmatpush1.msra.mxu0 %v76
  %2653 = vmatprep.subr.mxu0 0.0
  %2654 = vmatpush1.msra.mxu0 %v77
  %2655 = vmatprep.subr.mxu0 0.0
  %2656 = vmatpush1.msra.mxu0 %v78
  %2657 = vmatprep.subr.mxu0 0.0
  %2658 = vmatpush1.msra.mxu0 %v79
  %2659 = vmatprep.subr.mxu0 0.0
  %2660 = vmatpush1.msra.mxu0 0.0
  %2661 = vmatprep.subr.mxu0 0.0
  %2662 = vmatpush1.msra.mxu0 0.0
  %2663 = vmatprep.subr.mxu0 0.0
  %2664 = vmatpush1.msra.mxu0 0.0
  %2665 = vmatprep.subr.mxu0 0.0
  %2666 = vmatpush1.msra.mxu0 0.0
  %2667 = vmatprep.subr.mxu0 0.0
  %2668 = vmatpush1.msra.mxu0 0.0
  %2669 = vmatprep.subr.mxu0 0.0
  %2670 = vmatpush1.msra.mxu0 0.0
  %2671 = vmatprep.subr.mxu0 0.0
  %2672 = vmatpush1.msra.mxu0 0.0
  %2673 = vmatprep.subr.mxu0 0.0
  %2674 = vmatpush1.msra.mxu0 0.0
  %2675 = vmatprep.subr.mxu0 0.0
  %2676 = vmatpush1.msra.mxu0 0.0
  %2677 = vmatprep.subr.mxu0 0.0
  %2678 = vmatpush1.msra.mxu0 0.0
  %2679 = vmatprep.subr.mxu0 0.0
  %2680 = vmatpush1.msra.mxu0 0.0
  %2681 = vmatprep.subr.mxu0 0.0
  %2682 = vmatpush1.msra.mxu0 0.0
  %2683 = vmatprep.subr.mxu0 0.0
  %2684 = vmatpush1.msra.mxu0 0.0
  %2685 = vmatprep.subr.mxu0 0.0
  %2686 = vmatpush1.msra.mxu0 0.0
  %2687 = vmatprep.subr.mxu0 0.0
  %2688 = vmatpush1.msra.mxu0 0.0
  %2689 = vmatprep.subr.mxu0 0.0
  %2690 = vmatpush1.msra.mxu0 0.0
  %2691 = vmatprep.mubr.f32.mxu0 0.0
  %2692 = vmatmul.mubr.f32.gmra.mrb[0].mxu0 %v2626
  %v2693 = vpop.f32.mrb[0].mxu0
  %v2694 = vadd.f32 %v285, %v2693
  %v2695 = vpop.f32.mrb[0].mxu0
  %2696 = vdwg.mxu0
  %v2697 = vmul.f32 %v131, %v2367
  %v2698 = vadd.f32 %v2697, %v2694
  %v2699 = vmul.f32 %v2370, %v138
  %v2700 = vsub.f32 %v2698, %v2699
  %vm2701 = vcmp.gt.f32.partialorder %v2700, %v138
  %v2702 = vsel %vm2701, 1, 0
  %v2703 = vcvt.s32.f32 %v2702
  %2704 = vmatprep.subr.mxu0 0.0
  %2705 = vmatpush1.msra.mxu0 %v81
  %2706 = vmatprep.subr.mxu0 0.0
  %2707 = vmatpush1.msra.mxu0 %v82
  %2708 = vmatprep.subr.mxu0 0.0
  %2709 = vmatpush1.msra.mxu0 %v83
  %2710 = vmatprep.subr.mxu0 0.0
  %2711 = vmatpush1.msra.mxu0 %v84
  %2712 = vmatprep.subr.mxu0 0.0
  %2713 = vmatpush1.msra.mxu0 %v85
  %2714 = vmatprep.subr.mxu0 0.0
  %2715 = vmatpush1.msra.mxu0 %v86
  %2716 = vmatprep.subr.mxu0 0.0
  %2717 = vmatpush1.msra.mxu0 %v87
  %2718 = vmatprep.subr.mxu0 0.0
  %2719 = vmatpush1.msra.mxu0 %v88
  %2720 = vmatprep.subr.mxu0 0.0
  %2721 = vmatpush1.msra.mxu0 %v89
  %2722 = vmatprep.subr.mxu0 0.0
  %2723 = vmatpush1.msra.mxu0 %v90
  %2724 = vmatprep.subr.mxu0 0.0
  %2725 = vmatpush1.msra.mxu0 %v91
  %2726 = vmatprep.subr.mxu0 0.0
  %2727 = vmatpush1.msra.mxu0 %v92
  %2728 = vmatprep.subr.mxu0 0.0
  %2729 = vmatpush1.msra.mxu0 %v93
  %2730 = vmatprep.subr.mxu0 0.0
  %2731 = vmatpush1.msra.mxu0 %v94
  %2732 = vmatprep.subr.mxu0 0.0
  %2733 = vmatpush1.msra.mxu0 %v95
  %2734 = vmatprep.subr.mxu0 0.0
  %2735 = vmatpush1.msra.mxu0 %v96
  %2736 = vmatprep.subr.mxu0 0.0
  %2737 = vmatpush1.msra.mxu0 0.0
  %2738 = vmatprep.subr.mxu0 0.0
  %2739 = vmatpush1.msra.mxu0 0.0
  %2740 = vmatprep.subr.mxu0 0.0
  %2741 = vmatpush1.msra.mxu0 0.0
  %2742 = vmatprep.subr.mxu0 0.0
  %2743 = vmatpush1.msra.mxu0 0.0
  %2744 = vmatprep.subr.mxu0 0.0
  %2745 = vmatpush1.msra.mxu0 0.0
  %2746 = vmatprep.subr.mxu0 0.0
  %2747 = vmatpush1.msra.mxu0 0.0
  %2748 = vmatprep.subr.mxu0 0.0
  %2749 = vmatpush1.msra.mxu0 0.0
  %2750 = vmatprep.subr.mxu0 0.0
  %2751 = vmatpush1.msra.mxu0 0.0
  %2752 = vmatprep.subr.mxu0 0.0
  %2753 = vmatpush1.msra.mxu0 0.0
  %2754 = vmatprep.subr.mxu0 0.0
  %2755 = vmatpush1.msra.mxu0 0.0
  %2756 = vmatprep.subr.mxu0 0.0
  %2757 = vmatpush1.msra.mxu0 0.0
  %2758 = vmatprep.subr.mxu0 0.0
  %2759 = vmatpush1.msra.mxu0 0.0
  %2760 = vmatprep.subr.mxu0 0.0
  %2761 = vmatpush1.msra.mxu0 0.0
  %2762 = vmatprep.subr.mxu0 0.0
  %2763 = vmatpush1.msra.mxu0 0.0
  %2764 = vmatprep.subr.mxu0 0.0
  %2765 = vmatpush1.msra.mxu0 0.0
  %2766 = vmatprep.subr.mxu0 0.0
  %2767 = vmatpush1.msra.mxu0 0.0
  %2768 = vmatprep.mubr.f32.mxu0 0.0
  %2769 = vmatmul.mubr.f32.gmra.mrb[0].mxu0 %v2703
  %v2770 = vpop.f32.mrb[0].mxu0
  %v2771 = vadd.f32 %v371, %v2770
  %v2772 = vpop.f32.mrb[0].mxu0
  %2773 = vdwg.mxu0
  %v2774 = vmul.f32 %v145, %v2442
  %v2775 = vadd.f32 %v2774, %v2771
  %vm2776 = vcmp.gt.f32.partialorder %v2775, 1.0
  %v2777 = vsel %vm2776, 1, 0
  %v2778 = vcvt.s32.f32 %v2777
  %v2780 = vcombine.high %v2778, %v2778
  %v2782 = vunpack.c.l.s4 1966171168
  %v2783 = vunpack.c.0.s8 %v2782
  %v2784 = vlaneseq
  %v2785 = vshrl.u32 %v2784, 7
  %v2786 = vsub.s32 %v2783, %v2785
  %v2787 = vrot.slane %v2778, %v2786
  %v2789 = vunpack.c.l.s4 1966171168
  %v2790 = vunpack.c.0.s8 %v2789
  %v2791 = vlaneseq
  %v2792 = vshrl.u32 %v2791, 7
  %v2793 = vsub.s32 %v2790, %v2792
  %v2794 = vrot.slane %v2780, %v2793
  %v2795 = vcombine.high %v2787, %v2787
  %v2796 = vcombine.high %v2794, %v2794
  %v2798 = vunpack.c.l.s4 1966171168
  %v2799 = vunpack.c.0.s8 %v2798
  %v2800 = vlaneseq
  %v2801 = vshrl.u32 %v2800, 7
  %v2802 = vsub.s32 %v2799, %v2801
  %v2803 = vrot.slane %v2787, %v2802
  %v2805 = vunpack.c.l.s4 1966171168
  %v2806 = vunpack.c.0.s8 %v2805
  %v2807 = vlaneseq
  %v2808 = vshrl.u32 %v2807, 7
  %v2809 = vsub.s32 %v2806, %v2808
  %v2810 = vrot.slane %v2794, %v2809
  %v2812 = vunpack.c.l.s4 1966171168
  %v2813 = vunpack.c.0.s8 %v2812
  %v2814 = vlaneseq
  %v2815 = vshrl.u32 %v2814, 7
  %v2816 = vsub.s32 %v2813, %v2815
  %v2817 = vrot.slane %v2795, %v2816
  %v2819 = vunpack.c.l.s4 1966171168
  %v2820 = vunpack.c.0.s8 %v2819
  %v2821 = vlaneseq
  %v2822 = vshrl.u32 %v2821, 7
  %v2823 = vsub.s32 %v2820, %v2822
  %v2824 = vrot.slane %v2796, %v2823
  %v2825 = vcombine.high %v2803, %v2803
  %v2826 = vcombine.high %v2810, %v2810
  %v2827 = vcombine.high %v2817, %v2817
  %v2828 = vcombine.high %v2824, %v2824
  %2837 = vst [vmem:[%s14 + $0x7] sm:$0x1] %v2803
  %2838 = vst [vmem:[%s14 + $0xf] sm:$0x1] %v2817
  %2839 = vst [vmem:[%s14 + $0x17] sm:$0x1] %v2825
  %2840 = vst [vmem:[%s14 + $0x1f] sm:$0x1] %v2827
  %2841 = vst [vmem:[%s14 + $0x27] sm:$0x1] %v2810
  %2842 = vst [vmem:[%s14 + $0x2f] sm:$0x1] %v2824
  %2843 = vst [vmem:[%s14 + $0x37] sm:$0x1] %v2826
  %2844 = vst [vmem:[%s14 + $0x3f] sm:$0x1] %v2828
  // Predicated region
  $region58: #{tonic_ssn_forward.7} parent=0 // pred_check
    _
  $region59: #{tonic_ssn_forward.7} parent=0 // pred_check_branch
    %2846 = sbr.rel (0) target = $region61
  $region60: #{tonic_ssn_forward.7} parent=0 // pred_region
    _
  $region61: #{tonic_ssn_forward.7} parent=0 // pred_fallthru
    _
  // Predicated region
  $region62: #{tonic_ssn_forward.7} parent=0 // pred_check
    _
  $region63: #{tonic_ssn_forward.7} parent=0 // pred_check_branch
    %2848 = sbr.rel (0) target = $region65
  $region64: #{tonic_ssn_forward.7} parent=0 // pred_region
    _
  $region65: #{tonic_ssn_forward.7} parent=0 // pred_fallthru
    _

</llo_original>
